<compile_context>
chip_gen: v6e
topology: v6e:2x2x1
jax: 0.10.0
libtpu: 0.0.40
codegen_flags: <defaults>
</compile_context>

<pallas_src>
import jax
import jax.numpy as jnp
from jax import lax
from jax.experimental import pallas as pl
from jax.experimental.pallas import tpu as pltpu


def feb_kernel(x_ref, y_ref, w_ref, b_ref, out_ref, pad_ref):
    _, H, W, C = x_ref.shape
    _, Hh, Wh, _ = y_ref.shape
    C2 = 2 * C
    M = H * W

    x = x_ref[0].astype(jnp.float32)          # (H, W, C)
    y = y_ref[0].astype(jnp.float32)          # (Hh, Wh, C)

    # ---- bilinear 2x upsample (align_corners=False), separable, f32 ----
    # out row 2k   = 0.25*y[k-1] + 0.75*y[k]   (k-1 clamped to 0)
    # out row 2k+1 = 0.75*y[k]   + 0.25*y[k+1] (k+1 clamped to Hh-1)
    y_prev = jnp.concatenate([y[:1], y[:-1]], axis=0)
    y_next = jnp.concatenate([y[1:], y[-1:]], axis=0)
    even_h = 0.75 * y + 0.25 * y_prev
    odd_h = 0.75 * y + 0.25 * y_next
    yh = jnp.stack([even_h, odd_h], axis=1).reshape(H, Wh, C)

    yh_prev = jnp.concatenate([yh[:, :1], yh[:, :-1]], axis=1)
    yh_next = jnp.concatenate([yh[:, 1:], yh[:, -1:]], axis=1)
    even_w = 0.75 * yh + 0.25 * yh_prev
    odd_w = 0.75 * yh + 0.25 * yh_next
    y_up = jnp.stack([even_w, odd_w], axis=2).reshape(H, W, C)

    # ---- write zero-padded [x ‖ y_up] (bf16) into the conv scratch ----
    # Border is re-zeroed every grid step (cheap) so the kernel stays correct
    # when the "parallel" batch axis is split across TensorCores.
    zero_row = jnp.zeros((1, W + 2, C2), jnp.bfloat16)
    zero_col = jnp.zeros((H + 2, 1, C2), jnp.bfloat16)
    pad_ref[0, 0:1, :, :] = zero_row
    pad_ref[0, H + 1:H + 2, :, :] = zero_row
    pad_ref[0, :, 0:1, :] = zero_col
    pad_ref[0, :, W + 1:W + 2, :] = zero_col
    xy_bf = jnp.concatenate([x, y_up], axis=-1).astype(jnp.bfloat16)  # (H, W, 2C)
    pad_ref[0, 1:H + 1, 1:W + 1, :] = xy_bf

    # ---- 3x3 conv: 9 shifted bf16 matmuls, K = 2C, f32 accumulation ----
    acc = jnp.zeros((M, C), jnp.float32)
    for t in range(9):
        dy, dx = t // 3, t % 3
        tap = pad_ref[0, dy:dy + H, dx:dx + W, :].reshape(M, C2)
        acc = acc + jnp.dot(tap, w_ref[t], preferred_element_type=jnp.float32)

    # ---- sigmoid + fused residual epilogue (f32) ----
    o = acc + b_ref[...].astype(jnp.float32)          # (M, C) + (1, C)
    m = 1.0 / (1.0 + jnp.exp(-o))
    s = (x + y_up).reshape(M, C)
    out = s * m + s                                   # x*m + x + y_up*m + y_up
    out_ref[...] = out.reshape(1, H, W, C).astype(out_ref.dtype)


def feb_pallas(x_nchw, y_nchw, w_hwio, bias):
    N, C, H, W = x_nchw.shape
    Ny, Cy, Hh, Wh = y_nchw.shape
    assert (Ny, Cy) == (N, C) and (2 * Hh, 2 * Wh) == (H, W)
    assert w_hwio.shape == (3, 3, 2 * C, C) and bias.shape == (C,)
    C2 = 2 * C

    x = jnp.transpose(x_nchw, (0, 2, 3, 1))           # NCHW -> NHWC
    y = jnp.transpose(y_nchw, (0, 2, 3, 1))
    w = w_hwio.reshape(9, C2, C).astype(jnp.bfloat16)  # (ky*kx, Cin, Cout), bf16
    b = bias.reshape(1, C).astype(jnp.float32)

    flops = N * H * W * (2 * 9 * C2 * C + 12 * C)
    transcendentals = N * H * W * C
    bytes_accessed = (x.size + y.size + N * H * W * C + b.size) * 4 + w.size * 2

    out_nhwc = pl.pallas_call(
        feb_kernel,
        out_shape=jax.ShapeDtypeStruct((N, H, W, C), x.dtype),
        grid_spec=pltpu.PrefetchScalarGridSpec(
            num_scalar_prefetch=0,
            grid=(N,),
            in_specs=[
                pl.BlockSpec((1, H, W, C), lambda n: (n, 0, 0, 0)),
                pl.BlockSpec((1, Hh, Wh, C), lambda n: (n, 0, 0, 0)),
                pl.BlockSpec((9, C2, C), lambda n: (0, 0, 0)),
                pl.BlockSpec((1, C), lambda n: (0, 0)),
            ],
            out_specs=pl.BlockSpec((1, H, W, C), lambda n: (n, 0, 0, 0)),
            scratch_shapes=[pltpu.VMEM((1, H + 2, W + 2, C2), jnp.bfloat16)],
        ),
        compiler_params=pltpu.CompilerParams(
            dimension_semantics=("parallel",),
            vmem_limit_bytes=32 * 1024 * 1024,
        ),
        cost_estimate=pl.CostEstimate(
            flops=flops,
            transcendentals=transcendentals,
            bytes_accessed=bytes_accessed),
    )(x, y, w, b)

    return jnp.transpose(out_nhwc, (0, 3, 1, 2))      # NHWC -> NCHW


# ----------------------------- pure-JAX reference ---------------------------

def _upsample2x_ref(y_nhwc):
    # Exact PyTorch F.interpolate(scale_factor=2, mode='bilinear',
    # align_corners=False): half-pixel centers, src clamped at 0, idx+1 clamped.
    _, Hh, Wh, _ = y_nhwc.shape

    def coords(in_size):
        o = jnp.arange(2 * in_size, dtype=jnp.float32)
        s = jnp.maximum((o + 0.5) * 0.5 - 0.5, 0.0)
        i0 = jnp.floor(s).astype(jnp.int32)
        i1 = jnp.minimum(i0 + 1, in_size - 1)
        f = s - i0.astype(jnp.float32)
        return i0, i1, f

    h0, h1, fh = coords(Hh)
    w0, w1, fw = coords(Wh)
    fh = fh[None, :, None, None]
    fw = fw[None, None, :, None]
    yr = y_nhwc[:, h0] * (1.0 - fh) + y_nhwc[:, h1] * fh
    return yr[:, :, w0] * (1.0 - fw) + yr[:, :, w1] * fw


def feb_ref(x_nchw, y_nchw, w_hwio, bias):
    x = jnp.transpose(x_nchw, (0, 2, 3, 1))
    yy = jnp.transpose(y_nchw, (0, 2, 3, 1))
    y_up = _upsample2x_ref(yy)
    xy = jnp.concatenate([x, y_up], axis=-1)
    o = lax.conv_general_dilated(
        xy, w_hwio, window_strides=(1, 1), padding="SAME",
        dimension_numbers=("NHWC", "HWIO", "NHWC"),
        precision=lax.Precision.HIGHEST)
    m = jax.nn.sigmoid(o + bias.reshape(1, 1, 1, -1))
    out = x * m + x + y_up * m + y_up
    return jnp.transpose(out, (0, 3, 1, 2))


if __name__ == "__main__":
    channel = 64                     # conv input = 2*channel = 128 (lane-dense K)
    N, H, W = 2, 16, 16
    Hh, Wh = H // 2, W // 2

    key = jax.random.PRNGKey(0)
    kx, ky, kw, kb = jax.random.split(key, 4)

    x = jax.random.normal(kx, (N, channel, H, W), jnp.float32)          # NCHW
    y = jax.random.normal(ky, (N, channel, Hh, Wh), jnp.float32)        # NCHW (half res)
    w = 0.03 * jax.random.normal(kw, (3, 3, 2 * channel, channel), jnp.float32)  # HWIO
    b = 0.1 * jax.random.normal(kb, (channel,), jnp.float32)

    out = feb_pallas(x, y, w, b)
    out = jax.block_until_ready(out)

    ref = feb_ref(x, y, w, b)
    assert out.shape == (N, channel, H, W)
    max_err = float(jnp.max(jnp.abs(out - ref)))
    assert bool(jnp.allclose(out, ref, atol=1e-2, rtol=1e-2)), \
        f"mismatch vs reference (max abs err {max_err})"

    print("KERNEL_OK")
</pallas_src>

<mosaic_0001>
module attributes {stable_mosaic.version = 11 : i64} {
  func.func @feb_kernel(%arg0: i32, %arg1: memref<1x16x16x64xf32, #tpu.memory_space<vmem>>, %arg2: memref<1x8x8x64xf32, #tpu.memory_space<vmem>>, %arg3: memref<9x128x64xbf16, #tpu.memory_space<vmem>>, %arg4: memref<1x64xf32, #tpu.memory_space<vmem>>, %arg5: memref<1x16x16x64xf32, #tpu.memory_space<vmem>>, %arg6: memref<1x18x18x128xbf16, #tpu.memory_space<vmem>>) attributes {dimension_semantics = [#tpu.dimension_semantics<parallel>], iteration_bounds = array<i64: 2>, scalar_prefetch = 0 : i64, scratch_operands = 1 : i64, tpu.core_type = #tpu.core_type<tc>, window_params = [{transform_indices = @transform_0, window_bounds = array<i64: 1, 16, 16, 64>}, {transform_indices = @transform_1, window_bounds = array<i64: 1, 8, 8, 64>}, {pipeline_mode = #tpu.pipeline_mode<synchronous>, transform_indices = @transform_2, window_bounds = array<i64: 9, 128, 64>}, {pipeline_mode = #tpu.pipeline_mode<synchronous>, transform_indices = @transform_3, window_bounds = array<i64: 1, 64>}, {transform_indices = @transform_4, window_bounds = array<i64: 1, 16, 16, 64>}]} {
    %c0 = arith.constant 0 : index
    %c0_0 = arith.constant 0 : index
    %c0_1 = arith.constant 0 : index
    %c0_2 = arith.constant 0 : index
    %0 = vector.load %arg1[%c0, %c0_0, %c0_1, %c0_2] : memref<1x16x16x64xf32, #tpu.memory_space<vmem>>, vector<1x16x16x64xf32>
    %1 = vector.shape_cast %0 : vector<1x16x16x64xf32> to vector<16x16x64xf32>
    %c0_3 = arith.constant 0 : index
    %c0_4 = arith.constant 0 : index
    %c0_5 = arith.constant 0 : index
    %c0_6 = arith.constant 0 : index
    %2 = vector.load %arg2[%c0_3, %c0_4, %c0_5, %c0_6] : memref<1x8x8x64xf32, #tpu.memory_space<vmem>>, vector<1x8x8x64xf32>
    %3 = vector.shape_cast %2 : vector<1x8x8x64xf32> to vector<8x8x64xf32>
    %4 = vector.extract_strided_slice %3 {offsets = [0, 0, 0], sizes = [1, 8, 64], strides = [1, 1, 1]} : vector<8x8x64xf32> to vector<1x8x64xf32>
    %5 = vector.extract_strided_slice %3 {offsets = [0, 0, 0], sizes = [7, 8, 64], strides = [1, 1, 1]} : vector<8x8x64xf32> to vector<7x8x64xf32>
    %6 = tpu.concatenate %4, %5 in 0 : vector<1x8x64xf32>, vector<7x8x64xf32> -> vector<8x8x64xf32>
    %7 = vector.extract_strided_slice %3 {offsets = [1, 0, 0], sizes = [7, 8, 64], strides = [1, 1, 1]} : vector<8x8x64xf32> to vector<7x8x64xf32>
    %8 = vector.extract_strided_slice %3 {offsets = [7, 0, 0], sizes = [1, 8, 64], strides = [1, 1, 1]} : vector<8x8x64xf32> to vector<1x8x64xf32>
    %9 = tpu.concatenate %7, %8 in 0 : vector<7x8x64xf32>, vector<1x8x64xf32> -> vector<8x8x64xf32>
    %cst = arith.constant 7.500000e-01 : f32
    %10 = vector.broadcast %cst : f32 to vector<8x8x64xf32>
    %11 = arith.mulf %10, %3 : vector<8x8x64xf32>
    %cst_7 = arith.constant 2.500000e-01 : f32
    %12 = vector.broadcast %cst_7 : f32 to vector<8x8x64xf32>
    %13 = arith.mulf %12, %6 : vector<8x8x64xf32>
    %14 = arith.addf %11, %13 : vector<8x8x64xf32>
    %cst_8 = arith.constant 7.500000e-01 : f32
    %15 = vector.broadcast %cst_8 : f32 to vector<8x8x64xf32>
    %16 = arith.mulf %15, %3 : vector<8x8x64xf32>
    %cst_9 = arith.constant 2.500000e-01 : f32
    %17 = vector.broadcast %cst_9 : f32 to vector<8x8x64xf32>
    %18 = arith.mulf %17, %9 : vector<8x8x64xf32>
    %19 = arith.addf %16, %18 : vector<8x8x64xf32>
    %20 = vector.shape_cast %14 : vector<8x8x64xf32> to vector<8x1x8x64xf32>
    %21 = vector.shape_cast %19 : vector<8x8x64xf32> to vector<8x1x8x64xf32>
    %22 = tpu.concatenate %20, %21 in 1 : vector<8x1x8x64xf32>, vector<8x1x8x64xf32> -> vector<8x2x8x64xf32>
    %23 = vector.shape_cast %22 : vector<8x2x8x64xf32> to vector<16x8x64xf32>
    %24 = vector.extract_strided_slice %23 {offsets = [0, 0, 0], sizes = [16, 1, 64], strides = [1, 1, 1]} : vector<16x8x64xf32> to vector<16x1x64xf32>
    %25 = vector.extract_strided_slice %23 {offsets = [0, 0, 0], sizes = [16, 7, 64], strides = [1, 1, 1]} : vector<16x8x64xf32> to vector<16x7x64xf32>
    %26 = tpu.concatenate %24, %25 in 1 : vector<16x1x64xf32>, vector<16x7x64xf32> -> vector<16x8x64xf32>
    %27 = vector.extract_strided_slice %23 {offsets = [0, 1, 0], sizes = [16, 7, 64], strides = [1, 1, 1]} : vector<16x8x64xf32> to vector<16x7x64xf32>
    %28 = vector.extract_strided_slice %23 {offsets = [0, 7, 0], sizes = [16, 1, 64], strides = [1, 1, 1]} : vector<16x8x64xf32> to vector<16x1x64xf32>
    %29 = tpu.concatenate %27, %28 in 1 : vector<16x7x64xf32>, vector<16x1x64xf32> -> vector<16x8x64xf32>
    %cst_10 = arith.constant 7.500000e-01 : f32
    %30 = vector.broadcast %cst_10 : f32 to vector<16x8x64xf32>
    %31 = arith.mulf %30, %23 : vector<16x8x64xf32>
    %cst_11 = arith.constant 2.500000e-01 : f32
    %32 = vector.broadcast %cst_11 : f32 to vector<16x8x64xf32>
    %33 = arith.mulf %32, %26 : vector<16x8x64xf32>
    %34 = arith.addf %31, %33 : vector<16x8x64xf32>
    %cst_12 = arith.constant 7.500000e-01 : f32
    %35 = vector.broadcast %cst_12 : f32 to vector<16x8x64xf32>
    %36 = arith.mulf %35, %23 : vector<16x8x64xf32>
    %cst_13 = arith.constant 2.500000e-01 : f32
    %37 = vector.broadcast %cst_13 : f32 to vector<16x8x64xf32>
    %38 = arith.mulf %37, %29 : vector<16x8x64xf32>
    %39 = arith.addf %36, %38 : vector<16x8x64xf32>
    %40 = vector.shape_cast %34 : vector<16x8x64xf32> to vector<16x8x1x64xf32>
    %41 = vector.shape_cast %39 : vector<16x8x64xf32> to vector<16x8x1x64xf32>
    %42 = tpu.concatenate %40, %41 in 2 : vector<16x8x1x64xf32>, vector<16x8x1x64xf32> -> vector<16x8x2x64xf32>
    %43 = vector.shape_cast %42 : vector<16x8x2x64xf32> to vector<16x16x64xf32>
    %cst_14 = arith.constant 0.000000e+00 : bf16
    %44 = vector.broadcast %cst_14 : bf16 to vector<1x18x128xbf16>
    %cst_15 = arith.constant 0.000000e+00 : bf16
    %45 = vector.broadcast %cst_15 : bf16 to vector<18x1x128xbf16>
    %c0_16 = arith.constant 0 : index
    %c0_17 = arith.constant 0 : index
    %c0_18 = arith.constant 0 : index
    %c0_19 = arith.constant 0 : index
    %46 = vector.load %arg6[%c0_16, %c0_17, %c0_18, %c0_19] : memref<1x18x18x128xbf16, #tpu.memory_space<vmem>>, vector<1x1x18x128xbf16>
    %47 = vector.shape_cast %46 : vector<1x1x18x128xbf16> to vector<1x18x128xbf16>
    %48 = vector.shape_cast %44 : vector<1x18x128xbf16> to vector<1x1x18x128xbf16>
    tpu.vector_store %arg6[%c0_16, %c0_17, %c0_18, %c0_19], %48 {strides = array<i32>} : memref<1x18x18x128xbf16, #tpu.memory_space<vmem>>, vector<1x1x18x128xbf16>,
    %c0_20 = arith.constant 0 : index
    %c17 = arith.constant 17 : index
    %c0_21 = arith.constant 0 : index
    %c0_22 = arith.constant 0 : index
    %49 = vector.load %arg6[%c0_20, %c17, %c0_21, %c0_22] : memref<1x18x18x128xbf16, #tpu.memory_space<vmem>>, vector<1x1x18x128xbf16>
    %50 = vector.shape_cast %49 : vector<1x1x18x128xbf16> to vector<1x18x128xbf16>
    %51 = vector.shape_cast %44 : vector<1x18x128xbf16> to vector<1x1x18x128xbf16>
    tpu.vector_store %arg6[%c0_20, %c17, %c0_21, %c0_22], %51 {strides = array<i32>} : memref<1x18x18x128xbf16, #tpu.memory_space<vmem>>, vector<1x1x18x128xbf16>,
    %c0_23 = arith.constant 0 : index
    %c0_24 = arith.constant 0 : index
    %c0_25 = arith.constant 0 : index
    %c0_26 = arith.constant 0 : index
    %52 = vector.load %arg6[%c0_23, %c0_24, %c0_25, %c0_26] : memref<1x18x18x128xbf16, #tpu.memory_space<vmem>>, vector<1x18x1x128xbf16>
    %53 = vector.shape_cast %52 : vector<1x18x1x128xbf16> to vector<18x1x128xbf16>
    %54 = vector.shape_cast %45 : vector<18x1x128xbf16> to vector<1x18x1x128xbf16>
    tpu.vector_store %arg6[%c0_23, %c0_24, %c0_25, %c0_26], %54 {strides = array<i32>} : memref<1x18x18x128xbf16, #tpu.memory_space<vmem>>, vector<1x18x1x128xbf16>,
    %c0_27 = arith.constant 0 : index
    %c0_28 = arith.constant 0 : index
    %c17_29 = arith.constant 17 : index
    %c0_30 = arith.constant 0 : index
    %55 = vector.load %arg6[%c0_27, %c0_28, %c17_29, %c0_30] : memref<1x18x18x128xbf16, #tpu.memory_space<vmem>>, vector<1x18x1x128xbf16>
    %56 = vector.shape_cast %55 : vector<1x18x1x128xbf16> to vector<18x1x128xbf16>
    %57 = vector.shape_cast %45 : vector<18x1x128xbf16> to vector<1x18x1x128xbf16>
    tpu.vector_store %arg6[%c0_27, %c0_28, %c17_29, %c0_30], %57 {strides = array<i32>} : memref<1x18x18x128xbf16, #tpu.memory_space<vmem>>, vector<1x18x1x128xbf16>,
    %58 = tpu.concatenate %1, %43 in 2 : vector<16x16x64xf32>, vector<16x16x64xf32> -> vector<16x16x128xf32>
    %59 = arith.truncf %58 : vector<16x16x128xf32> to vector<16x16x128xbf16>
    %c0_31 = arith.constant 0 : index
    %c1 = arith.constant 1 : index
    %c1_32 = arith.constant 1 : index
    %c0_33 = arith.constant 0 : index
    %60 = vector.load %arg6[%c0_31, %c1, %c1_32, %c0_33] : memref<1x18x18x128xbf16, #tpu.memory_space<vmem>>, vector<1x16x16x128xbf16>
    %61 = vector.shape_cast %60 : vector<1x16x16x128xbf16> to vector<16x16x128xbf16>
    %62 = vector.shape_cast %59 : vector<16x16x128xbf16> to vector<1x16x16x128xbf16>
    tpu.vector_store %arg6[%c0_31, %c1, %c1_32, %c0_33], %62 {strides = array<i32>} : memref<1x18x18x128xbf16, #tpu.memory_space<vmem>>, vector<1x16x16x128xbf16>,
    %cst_34 = arith.constant 0.000000e+00 : f32
    %63 = vector.broadcast %cst_34 : f32 to vector<256x64xf32>
    %c0_35 = arith.constant 0 : index
    %c0_36 = arith.constant 0 : index
    %c0_37 = arith.constant 0 : index
    %c0_38 = arith.constant 0 : index
    %64 = vector.load %arg6[%c0_35, %c0_36, %c0_37, %c0_38] : memref<1x18x18x128xbf16, #tpu.memory_space<vmem>>, vector<1x16x16x128xbf16>
    %65 = vector.shape_cast %64 : vector<1x16x16x128xbf16> to vector<16x16x128xbf16>
    %66 = vector.shape_cast %65 : vector<16x16x128xbf16> to vector<256x128xbf16>
    %c0_39 = arith.constant 0 : index
    %c0_40 = arith.constant 0 : index
    %c0_41 = arith.constant 0 : index
    %67 = vector.load %arg3[%c0_39, %c0_40, %c0_41] : memref<9x128x64xbf16, #tpu.memory_space<vmem>>, vector<1x128x64xbf16>
    %68 = vector.shape_cast %67 : vector<1x128x64xbf16> to vector<128x64xbf16>
    %cst_42 = arith.constant dense<0.000000e+00> : vector<256x64xf32>
    %69 = tpu.matmul %66, %68, %cst_42 {dimension_numbers = #tpu.dot_dimension_numbers<[1], [0], [0], [1], [0, 0, 1, 1], [], []>} : vector<256x128xbf16>, vector<128x64xbf16>, vector<256x64xf32> -> vector<256x64xf32>
    %70 = arith.addf %63, %69 : vector<256x64xf32>
    %c0_43 = arith.constant 0 : index
    %c0_44 = arith.constant 0 : index
    %c1_45 = arith.constant 1 : index
    %c0_46 = arith.constant 0 : index
    %71 = vector.load %arg6[%c0_43, %c0_44, %c1_45, %c0_46] : memref<1x18x18x128xbf16, #tpu.memory_space<vmem>>, vector<1x16x16x128xbf16>
    %72 = vector.shape_cast %71 : vector<1x16x16x128xbf16> to vector<16x16x128xbf16>
    %73 = vector.shape_cast %72 : vector<16x16x128xbf16> to vector<256x128xbf16>
    %c1_47 = arith.constant 1 : index
    %c0_48 = arith.constant 0 : index
    %c0_49 = arith.constant 0 : index
    %74 = vector.load %arg3[%c1_47, %c0_48, %c0_49] : memref<9x128x64xbf16, #tpu.memory_space<vmem>>, vector<1x128x64xbf16>
    %75 = vector.shape_cast %74 : vector<1x128x64xbf16> to vector<128x64xbf16>
    %cst_50 = arith.constant dense<0.000000e+00> : vector<256x64xf32>
    %76 = tpu.matmul %73, %75, %cst_50 {dimension_numbers = #tpu.dot_dimension_numbers<[1], [0], [0], [1], [0, 0, 1, 1], [], []>} : vector<256x128xbf16>, vector<128x64xbf16>, vector<256x64xf32> -> vector<256x64xf32>
    %77 = arith.addf %70, %76 : vector<256x64xf32>
    %c0_51 = arith.constant 0 : index
    %c0_52 = arith.constant 0 : index
    %c2 = arith.constant 2 : index
    %c0_53 = arith.constant 0 : index
    %78 = vector.load %arg6[%c0_51, %c0_52, %c2, %c0_53] : memref<1x18x18x128xbf16, #tpu.memory_space<vmem>>, vector<1x16x16x128xbf16>
    %79 = vector.shape_cast %78 : vector<1x16x16x128xbf16> to vector<16x16x128xbf16>
    %80 = vector.shape_cast %79 : vector<16x16x128xbf16> to vector<256x128xbf16>
    %c2_54 = arith.constant 2 : index
    %c0_55 = arith.constant 0 : index
    %c0_56 = arith.constant 0 : index
    %81 = vector.load %arg3[%c2_54, %c0_55, %c0_56] : memref<9x128x64xbf16, #tpu.memory_space<vmem>>, vector<1x128x64xbf16>
    %82 = vector.shape_cast %81 : vector<1x128x64xbf16> to vector<128x64xbf16>
    %cst_57 = arith.constant dense<0.000000e+00> : vector<256x64xf32>
    %83 = tpu.matmul %80, %82, %cst_57 {dimension_numbers = #tpu.dot_dimension_numbers<[1], [0], [0], [1], [0, 0, 1, 1], [], []>} : vector<256x128xbf16>, vector<128x64xbf16>, vector<256x64xf32> -> vector<256x64xf32>
    %84 = arith.addf %77, %83 : vector<256x64xf32>
    %c0_58 = arith.constant 0 : index
    %c1_59 = arith.constant 1 : index
    %c0_60 = arith.constant 0 : index
    %c0_61 = arith.constant 0 : index
    %85 = vector.load %arg6[%c0_58, %c1_59, %c0_60, %c0_61] : memref<1x18x18x128xbf16, #tpu.memory_space<vmem>>, vector<1x16x16x128xbf16>
    %86 = vector.shape_cast %85 : vector<1x16x16x128xbf16> to vector<16x16x128xbf16>
    %87 = vector.shape_cast %86 : vector<16x16x128xbf16> to vector<256x128xbf16>
    %c3 = arith.constant 3 : index
    %c0_62 = arith.constant 0 : index
    %c0_63 = arith.constant 0 : index
    %88 = vector.load %arg3[%c3, %c0_62, %c0_63] : memref<9x128x64xbf16, #tpu.memory_space<vmem>>, vector<1x128x64xbf16>
    %89 = vector.shape_cast %88 : vector<1x128x64xbf16> to vector<128x64xbf16>
    %cst_64 = arith.constant dense<0.000000e+00> : vector<256x64xf32>
    %90 = tpu.matmul %87, %89, %cst_64 {dimension_numbers = #tpu.dot_dimension_numbers<[1], [0], [0], [1], [0, 0, 1, 1], [], []>} : vector<256x128xbf16>, vector<128x64xbf16>, vector<256x64xf32> -> vector<256x64xf32>
    %91 = arith.addf %84, %90 : vector<256x64xf32>
    %c0_65 = arith.constant 0 : index
    %c1_66 = arith.constant 1 : index
    %c1_67 = arith.constant 1 : index
    %c0_68 = arith.constant 0 : index
    %92 = vector.load %arg6[%c0_65, %c1_66, %c1_67, %c0_68] : memref<1x18x18x128xbf16, #tpu.memory_space<vmem>>, vector<1x16x16x128xbf16>
    %93 = vector.shape_cast %92 : vector<1x16x16x128xbf16> to vector<16x16x128xbf16>
    %94 = vector.shape_cast %93 : vector<16x16x128xbf16> to vector<256x128xbf16>
    %c4 = arith.constant 4 : index
    %c0_69 = arith.constant 0 : index
    %c0_70 = arith.constant 0 : index
    %95 = vector.load %arg3[%c4, %c0_69, %c0_70] : memref<9x128x64xbf16, #tpu.memory_space<vmem>>, vector<1x128x64xbf16>
    %96 = vector.shape_cast %95 : vector<1x128x64xbf16> to vector<128x64xbf16>
    %cst_71 = arith.constant dense<0.000000e+00> : vector<256x64xf32>
    %97 = tpu.matmul %94, %96, %cst_71 {dimension_numbers = #tpu.dot_dimension_numbers<[1], [0], [0], [1], [0, 0, 1, 1], [], []>} : vector<256x128xbf16>, vector<128x64xbf16>, vector<256x64xf32> -> vector<256x64xf32>
    %98 = arith.addf %91, %97 : vector<256x64xf32>
    %c0_72 = arith.constant 0 : index
    %c1_73 = arith.constant 1 : index
    %c2_74 = arith.constant 2 : index
    %c0_75 = arith.constant 0 : index
    %99 = vector.load %arg6[%c0_72, %c1_73, %c2_74, %c0_75] : memref<1x18x18x128xbf16, #tpu.memory_space<vmem>>, vector<1x16x16x128xbf16>
    %100 = vector.shape_cast %99 : vector<1x16x16x128xbf16> to vector<16x16x128xbf16>
    %101 = vector.shape_cast %100 : vector<16x16x128xbf16> to vector<256x128xbf16>
    %c5 = arith.constant 5 : index
    %c0_76 = arith.constant 0 : index
    %c0_77 = arith.constant 0 : index
    %102 = vector.load %arg3[%c5, %c0_76, %c0_77] : memref<9x128x64xbf16, #tpu.memory_space<vmem>>, vector<1x128x64xbf16>
    %103 = vector.shape_cast %102 : vector<1x128x64xbf16> to vector<128x64xbf16>
    %cst_78 = arith.constant dense<0.000000e+00> : vector<256x64xf32>
    %104 = tpu.matmul %101, %103, %cst_78 {dimension_numbers = #tpu.dot_dimension_numbers<[1], [0], [0], [1], [0, 0, 1, 1], [], []>} : vector<256x128xbf16>, vector<128x64xbf16>, vector<256x64xf32> -> vector<256x64xf32>
    %105 = arith.addf %98, %104 : vector<256x64xf32>
    %c0_79 = arith.constant 0 : index
    %c2_80 = arith.constant 2 : index
    %c0_81 = arith.constant 0 : index
    %c0_82 = arith.constant 0 : index
    %106 = vector.load %arg6[%c0_79, %c2_80, %c0_81, %c0_82] : memref<1x18x18x128xbf16, #tpu.memory_space<vmem>>, vector<1x16x16x128xbf16>
    %107 = vector.shape_cast %106 : vector<1x16x16x128xbf16> to vector<16x16x128xbf16>
    %108 = vector.shape_cast %107 : vector<16x16x128xbf16> to vector<256x128xbf16>
    %c6 = arith.constant 6 : index
    %c0_83 = arith.constant 0 : index
    %c0_84 = arith.constant 0 : index
    %109 = vector.load %arg3[%c6, %c0_83, %c0_84] : memref<9x128x64xbf16, #tpu.memory_space<vmem>>, vector<1x128x64xbf16>
    %110 = vector.shape_cast %109 : vector<1x128x64xbf16> to vector<128x64xbf16>
    %cst_85 = arith.constant dense<0.000000e+00> : vector<256x64xf32>
    %111 = tpu.matmul %108, %110, %cst_85 {dimension_numbers = #tpu.dot_dimension_numbers<[1], [0], [0], [1], [0, 0, 1, 1], [], []>} : vector<256x128xbf16>, vector<128x64xbf16>, vector<256x64xf32> -> vector<256x64xf32>
    %112 = arith.addf %105, %111 : vector<256x64xf32>
    %c0_86 = arith.constant 0 : index
    %c2_87 = arith.constant 2 : index
    %c1_88 = arith.constant 1 : index
    %c0_89 = arith.constant 0 : index
    %113 = vector.load %arg6[%c0_86, %c2_87, %c1_88, %c0_89] : memref<1x18x18x128xbf16, #tpu.memory_space<vmem>>, vector<1x16x16x128xbf16>
    %114 = vector.shape_cast %113 : vector<1x16x16x128xbf16> to vector<16x16x128xbf16>
    %115 = vector.shape_cast %114 : vector<16x16x128xbf16> to vector<256x128xbf16>
    %c7 = arith.constant 7 : index
    %c0_90 = arith.constant 0 : index
    %c0_91 = arith.constant 0 : index
    %116 = vector.load %arg3[%c7, %c0_90, %c0_91] : memref<9x128x64xbf16, #tpu.memory_space<vmem>>, vector<1x128x64xbf16>
    %117 = vector.shape_cast %116 : vector<1x128x64xbf16> to vector<128x64xbf16>
    %cst_92 = arith.constant dense<0.000000e+00> : vector<256x64xf32>
    %118 = tpu.matmul %115, %117, %cst_92 {dimension_numbers = #tpu.dot_dimension_numbers<[1], [0], [0], [1], [0, 0, 1, 1], [], []>} : vector<256x128xbf16>, vector<128x64xbf16>, vector<256x64xf32> -> vector<256x64xf32>
    %119 = arith.addf %112, %118 : vector<256x64xf32>
    %c0_93 = arith.constant 0 : index
    %c2_94 = arith.constant 2 : index
    %c2_95 = arith.constant 2 : index
    %c0_96 = arith.constant 0 : index
    %120 = vector.load %arg6[%c0_93, %c2_94, %c2_95, %c0_96] : memref<1x18x18x128xbf16, #tpu.memory_space<vmem>>, vector<1x16x16x128xbf16>
    %121 = vector.shape_cast %120 : vector<1x16x16x128xbf16> to vector<16x16x128xbf16>
    %122 = vector.shape_cast %121 : vector<16x16x128xbf16> to vector<256x128xbf16>
    %c8 = arith.constant 8 : index
    %c0_97 = arith.constant 0 : index
    %c0_98 = arith.constant 0 : index
    %123 = vector.load %arg3[%c8, %c0_97, %c0_98] : memref<9x128x64xbf16, #tpu.memory_space<vmem>>, vector<1x128x64xbf16>
    %124 = vector.shape_cast %123 : vector<1x128x64xbf16> to vector<128x64xbf16>
    %cst_99 = arith.constant dense<0.000000e+00> : vector<256x64xf32>
    %125 = tpu.matmul %122, %124, %cst_99 {dimension_numbers = #tpu.dot_dimension_numbers<[1], [0], [0], [1], [0, 0, 1, 1], [], []>} : vector<256x128xbf16>, vector<128x64xbf16>, vector<256x64xf32> -> vector<256x64xf32>
    %126 = arith.addf %119, %125 : vector<256x64xf32>
    %c0_100 = arith.constant 0 : index
    %c0_101 = arith.constant 0 : index
    %127 = vector.load %arg4[%c0_100, %c0_101] : memref<1x64xf32, #tpu.memory_space<vmem>>, vector<1x64xf32>
    %128 = vector.broadcast %127 : vector<1x64xf32> to vector<256x64xf32>
    %129 = arith.addf %126, %128 : vector<256x64xf32>
    %cst_102 = arith.constant 0.000000e+00 : f32
    %130 = vector.broadcast %cst_102 : f32 to vector<256x64xf32>
    %131 = arith.subf %130, %129 : vector<256x64xf32>
    %132 = math.exp %131 : vector<256x64xf32>
    %cst_103 = arith.constant 1.000000e+00 : f32
    %133 = vector.broadcast %cst_103 : f32 to vector<256x64xf32>
    %134 = arith.addf %133, %132 : vector<256x64xf32>
    %cst_104 = arith.constant 1.000000e+00 : f32
    %135 = vector.broadcast %cst_104 : f32 to vector<256x64xf32>
    %136 = arith.divf %135, %134 : vector<256x64xf32>
    %137 = arith.addf %1, %43 : vector<16x16x64xf32>
    %138 = vector.shape_cast %137 : vector<16x16x64xf32> to vector<256x64xf32>
    %139 = arith.mulf %138, %136 : vector<256x64xf32>
    %140 = arith.addf %139, %138 : vector<256x64xf32>
    %141 = vector.shape_cast %140 : vector<256x64xf32> to vector<1x16x16x64xf32>
    %c0_105 = arith.constant 0 : index
    %c0_106 = arith.constant 0 : index
    %c0_107 = arith.constant 0 : index
    %c0_108 = arith.constant 0 : index
    %142 = vector.load %arg5[%c0_105, %c0_106, %c0_107, %c0_108] : memref<1x16x16x64xf32, #tpu.memory_space<vmem>>, vector<1x16x16x64xf32>
    tpu.vector_store %arg5[%c0_105, %c0_106, %c0_107, %c0_108], %141 {strides = array<i32>} : memref<1x16x16x64xf32, #tpu.memory_space<vmem>>, vector<1x16x16x64xf32>,
    return
  }
  func.func @transform_0(%arg0: i32) -> (i32, i32, i32, i32) {
    %c0_i32 = arith.constant 0 : i32
    %c0_i32_0 = arith.constant 0 : i32
    %c0_i32_1 = arith.constant 0 : i32
    %c0_i32_2 = arith.constant 0 : i32
    return %arg0, %c0_i32, %c0_i32_0, %c0_i32_1 : i32, i32, i32, i32
  }
  func.func @transform_1(%arg0: i32) -> (i32, i32, i32, i32) {
    %c0_i32 = arith.constant 0 : i32
    %c0_i32_0 = arith.constant 0 : i32
    %c0_i32_1 = arith.constant 0 : i32
    %c0_i32_2 = arith.constant 0 : i32
    return %arg0, %c0_i32, %c0_i32_0, %c0_i32_1 : i32, i32, i32, i32
  }
  func.func @transform_2(%arg0: i32) -> (i32, i32, i32) {
    %c0_i32 = arith.constant 0 : i32
    %c0_i32_0 = arith.constant 0 : i32
    %c0_i32_1 = arith.constant 0 : i32
    %c0_i32_2 = arith.constant 0 : i32
    return %c0_i32, %c0_i32_0, %c0_i32_1 : i32, i32, i32
  }
  func.func @transform_3(%arg0: i32) -> (i32, i32) {
    %c0_i32 = arith.constant 0 : i32
    %c0_i32_0 = arith.constant 0 : i32
    %c0_i32_1 = arith.constant 0 : i32
    return %c0_i32, %c0_i32_0 : i32, i32
  }
  func.func @transform_4(%arg0: i32) -> (i32, i32, i32, i32) {
    %c0_i32 = arith.constant 0 : i32
    %c0_i32_0 = arith.constant 0 : i32
    %c0_i32_1 = arith.constant 0 : i32
    %c0_i32_2 = arith.constant 0 : i32
    return %arg0, %c0_i32, %c0_i32_0, %c0_i32_1 : i32, i32, i32, i32
  }
}

</mosaic_0001>

<llo_original>
// kernel: tpu_custom_call.1
$region0: #{tpu_custom_call.1}
  #allocation0 [shape = 'u32[]', space=smem, size = 0x4, offset = 0x4, fixed_abs, tag = 'smem constant byte address 0x4 - core index']
  #allocation1 [shape = 'u32[144,128]{1,0:T(1,128)}', space=vmem, size = 0x12000, scoped, tag = 'internal scratch']
  #allocation2 [shape = 'bf16[1,18,18,128]{3,2,1,0:T(8,128)(2,1)}', space=vmem, size = 0x1b000, scoped, tag = 'scratch operand']
  %s0 = inlined_call_operand.vmem [shape: f32[2,16,16,64], index: 0, kind: input, shape index: {}]
  %s1 = inlined_call_operand.vmem [shape: f32[2,8,8,64], index: 1, kind: input, shape index: {}]
  %s2 = inlined_call_operand.vmem [shape: bf16[9,128,64], index: 2, kind: input, shape index: {}]
  %s3 = inlined_call_operand.vmem [shape: f32[1,64], index: 3, kind: input, shape index: {}]
  %s4 = inlined_call_operand.hbm [shape: f32[2,16,16,64], index: 4, kind: output, shape index: {}]
  %s5 = sld [smem:[#allocation0]]
  $region49: #{tpu_custom_call.1} parent=0
    _
  %s7 = ssub.s32 1, %s5
  %s8 = scalar_select 0, %s7, %s5
  $region1: #{tpu_custom_call.1} parent=0
    #allocation3 [shape = 'u8[262144]{0}', space=vmem, size = 0x40000, scoped, tag = 'output window, operand 0']
    #allocation4 [shape = 's32[2]{0}', space=sflag, size = 0x8, scoped, tag = 'scoped memory for tpu_custom_call.1']
    %9 = vsyncpa [#allocation4], 0
    %s10 = scalar_lea.sflag [#allocation4], 1
    %11 = vsyncpa %s10, 0
    loop: start=0, step=1, limit=4
    $region2: #{tpu_custom_call.1} parent=1 // loop_pre_header
      _
    $region3: #{tpu_custom_call.1} parent=1 // loop_header
      %s13 = sphi 0, %s17
      %p14 = scmp.ge.s32.totalorder %s13, 4
      %s23 = sphi 0, %s25
      %s26 = sphi 0, %s23
      %s27 = sphi 0, %s26
      %s43 = sphi 0, %s27
      %s49 = sphi 0, %s51
      %s52 = sphi 0, %s49
      %s53 = sphi 0, %s52
      %s69 = sphi 0, %s53
      %s73 = sphi 0, %s73
      %s75 = sphi 0, %s73
      %s76 = sphi 0, %s75
      %s90 = sphi 0, %s76
      %s94 = sphi 0, %s94
      %s96 = sphi 0, %s94
      %s97 = sphi 0, %s96
      %s111 = sphi 0, %s97
      %s117 = sphi 0, %s119
      %s120 = sphi 0, %s117
      %s121 = sphi 0, %s120
      %s137 = sphi 0, %s121
    $region4: #{tpu_custom_call.1} parent=1 // loop_header_branch
      %16 = sbr.rel (%p14) target = $region8
    $region5: #{tpu_custom_call.1} parent=1 // loop_body
      %s18 = ssub.s32 %s13, 1
      %s19 = ssub.s32 %s13, 2
      %s20 = sadd.s32 %s13, 1
      %s21 = ssub.s32 %s13, %s20
      %p22 = scmp.eq.s32.totalorder %s21, 0
      %s24 = sadd.s32 %s23, 1
      %s25 = scalar_select %p22, %s23, %s24
      %p28 = pneg %p22
      %p29 = scmp.eq.s32.totalorder %s13, 1
      %p30 = por %p28, %p29
      %p31 = scmp.ne.s32.totalorder %s23, %s26
      %p32 = scmp.eq.s32.totalorder %s13, 0
      %p33 = por %p31, %p32
      %p34 = scmp.ne.s32.totalorder %s23, %s26
      %p35 = scmp.eq.s32.totalorder %s18, 1
      %p36 = por %p34, %p35
      %p37 = scmp.ne.s32.totalorder %s26, %s27
      %p38 = scmp.eq.s32.totalorder %s18, 0
      %p39 = por %p37, %p38
      %p40 = scmp.ne.s32.totalorder %s26, %s27
      %p41 = scmp.eq.s32.totalorder %s19, 1
      %p42 = por %p40, %p41
      %p44 = scmp.ne.s32.totalorder %s27, %s43
      %p45 = scmp.eq.s32.totalorder %s19, 0
      %p46 = por %p44, %p45
      %s47 = ssub.s32 %s13, %s20
      %p48 = scmp.eq.s32.totalorder %s47, 0
      %s50 = sadd.s32 %s49, 1
      %s51 = scalar_select %p48, %s49, %s50
      %p54 = pneg %p48
      %p55 = scmp.eq.s32.totalorder %s13, 1
      %p56 = por %p54, %p55
      %p57 = scmp.ne.s32.totalorder %s49, %s52
      %p58 = scmp.eq.s32.totalorder %s13, 0
      %p59 = por %p57, %p58
      %p60 = scmp.ne.s32.totalorder %s49, %s52
      %p61 = scmp.eq.s32.totalorder %s18, 1
      %p62 = por %p60, %p61
      %p63 = scmp.ne.s32.totalorder %s52, %s53
      %p64 = scmp.eq.s32.totalorder %s18, 0
      %p65 = por %p63, %p64
      %p66 = scmp.ne.s32.totalorder %s52, %s53
      %p67 = scmp.eq.s32.totalorder %s19, 1
      %p68 = por %p66, %p67
      %p70 = scmp.ne.s32.totalorder %s53, %s69
      %p71 = scmp.eq.s32.totalorder %s19, 0
      %p72 = por %p70, %p71
      %s74 = sadd.s32 %s73, 1
      %p77 = scmp.eq.s32.totalorder %s13, 1
      %p78 = scmp.ne.s32.totalorder %s73, %s75
      %p79 = scmp.eq.s32.totalorder %s13, 0
      %p80 = por %p78, %p79
      %p81 = scmp.ne.s32.totalorder %s73, %s75
      %p82 = scmp.eq.s32.totalorder %s18, 1
      %p83 = por %p81, %p82
      %p84 = scmp.ne.s32.totalorder %s75, %s76
      %p85 = scmp.eq.s32.totalorder %s18, 0
      %p86 = por %p84, %p85
      %p87 = scmp.ne.s32.totalorder %s75, %s76
      %p88 = scmp.eq.s32.totalorder %s19, 1
      %p89 = por %p87, %p88
      %p91 = scmp.ne.s32.totalorder %s76, %s90
      %p92 = scmp.eq.s32.totalorder %s19, 0
      %p93 = por %p91, %p92
      %s95 = sadd.s32 %s94, 1
      %p98 = scmp.eq.s32.totalorder %s13, 1
      %p99 = scmp.ne.s32.totalorder %s94, %s96
      %p100 = scmp.eq.s32.totalorder %s13, 0
      %p101 = por %p99, %p100
      %p102 = scmp.ne.s32.totalorder %s94, %s96
      %p103 = scmp.eq.s32.totalorder %s18, 1
      %p104 = por %p102, %p103
      %p105 = scmp.ne.s32.totalorder %s96, %s97
      %p106 = scmp.eq.s32.totalorder %s18, 0
      %p107 = por %p105, %p106
      %p108 = scmp.ne.s32.totalorder %s96, %s97
      %p109 = scmp.eq.s32.totalorder %s19, 1
      %p110 = por %p108, %p109
      %p112 = scmp.ne.s32.totalorder %s97, %s111
      %p113 = scmp.eq.s32.totalorder %s19, 0
      %p114 = por %p112, %p113
      %s115 = ssub.s32 %s13, %s20
      %p116 = scmp.eq.s32.totalorder %s115, 0
      %s118 = sadd.s32 %s117, 1
      %s119 = scalar_select %p116, %s117, %s118
      %p122 = pneg %p116
      %p123 = scmp.eq.s32.totalorder %s13, 1
      %p124 = por %p122, %p123
      %p125 = scmp.ne.s32.totalorder %s117, %s120
      %p126 = scmp.eq.s32.totalorder %s13, 0
      %p127 = por %p125, %p126
      %p128 = scmp.ne.s32.totalorder %s117, %s120
      %p129 = scmp.eq.s32.totalorder %s18, 1
      %p130 = por %p128, %p129
      %p131 = scmp.ne.s32.totalorder %s120, %s121
      %p132 = scmp.eq.s32.totalorder %s18, 0
      %p133 = por %p131, %p132
      %p134 = scmp.ne.s32.totalorder %s120, %s121
      %p135 = scmp.eq.s32.totalorder %s19, 1
      %p136 = por %p134, %p135
      %p138 = scmp.ne.s32.totalorder %s121, %s137
      %p139 = scmp.eq.s32.totalorder %s19, 0
      %p140 = por %p138, %p139
      %p141 = scmp.le.s32.totalorder 1, %s13
      %p142 = scmp.lt.s32.totalorder %s13, 3
      %p143 = pnand %p141, %p142
      %p144 = pneg %p143
      // Predicated region
      $region9: #{tpu_custom_call.1} parent=5 // pred_check
        _
      $region10: #{tpu_custom_call.1} parent=5 // pred_check_branch
        %146 = sbr.rel (%p143) target = $region12
      $region11: #{tpu_custom_call.1} parent=5 // pred_region
        %s147 = ssub.s32 %s13, 1
        // Predicated region
        $region13: #{tpu_custom_call.1} parent=11 // pred_check
          %p148 = pneg %p86
        $region14: #{tpu_custom_call.1} parent=11 // pred_check_branch
          %150 = sbr.rel (%p148) target = $region16
        $region15: #{tpu_custom_call.1} parent=11 // pred_region
          _
        $region16: #{tpu_custom_call.1} parent=11 // pred_fallthru
          _
        // Predicated region
        $region17: #{tpu_custom_call.1} parent=11 // pred_check
          %p151 = pneg %p107
        $region18: #{tpu_custom_call.1} parent=11 // pred_check_branch
          %153 = sbr.rel (%p151) target = $region20
        $region19: #{tpu_custom_call.1} parent=11 // pred_region
          _
        $region20: #{tpu_custom_call.1} parent=11 // pred_fallthru
          _
      $region12: #{tpu_custom_call.1} parent=5 // pred_fallthru
        _
      %p154 = scmp.lt.s32.totalorder %s13, 2
      // Predicated region
      $region21: #{tpu_custom_call.1} parent=5 // pred_check
        %p155 = pneg %p154
      $region22: #{tpu_custom_call.1} parent=5 // pred_check_branch
        %157 = sbr.rel (%p155) target = $region24
      $region23: #{tpu_custom_call.1} parent=5 // pred_region
        // Predicated region
        $region25: #{tpu_custom_call.1} parent=23 // pred_check
          %p158 = pneg %p33
        $region26: #{tpu_custom_call.1} parent=23 // pred_check_branch
          %160 = sbr.rel (%p158) target = $region28
        $region27: #{tpu_custom_call.1} parent=23 // pred_region
          %p161 = scmp.lt.s32.totalorder %s13, 1
          %s162 = scalar_select %p161, %s13, 1
          %s163 = smul.addr %s162, 32
          %s164 = smul.addr %s163, 8
          %s165 = scalar_lea.vmem %s0, %s164
        $region28: #{tpu_custom_call.1} parent=23 // pred_fallthru
          _
        // Predicated region
        $region29: #{tpu_custom_call.1} parent=23 // pred_check
          %p166 = pneg %p59
        $region30: #{tpu_custom_call.1} parent=23 // pred_check_branch
          %168 = sbr.rel (%p166) target = $region32
        $region31: #{tpu_custom_call.1} parent=23 // pred_region
          %p169 = scmp.lt.s32.totalorder %s13, 1
          %s170 = scalar_select %p169, %s13, 1
          %s171 = smul.addr %s170, 8
          %s172 = smul.addr %s171, 8
          %s173 = scalar_lea.vmem %s1, %s172
        $region32: #{tpu_custom_call.1} parent=23 // pred_fallthru
          _
      $region24: #{tpu_custom_call.1} parent=5 // pred_fallthru
        _
      %p174 = scmp.le.s32.totalorder 1, %s13
      %p175 = scmp.lt.s32.totalorder %s13, 3
      %p176 = pnand %p174, %p175
      %p177 = pneg %p176
      // Predicated region
      $region33: #{tpu_custom_call.1} parent=5 // pred_check
        _
      $region34: #{tpu_custom_call.1} parent=5 // pred_check_branch
        %179 = sbr.rel (%p176) target = $region36
      $region35: #{tpu_custom_call.1} parent=5 // pred_region
        %s180 = ssub.s32 %s13, 1
        %p181 = scmp.lt.s32.totalorder %s18, 1
        %s182 = scalar_select %p181, %s18, 1
        %s183 = smul.addr %s182, 32
        %s184 = smul.addr %s183, 8
        %s185 = scalar_lea.vmem %s0, %s184
        %p186 = pneg %p39
        %p187 = pneg %p36
        %p188 = scmp.lt.s32.totalorder %s18, 1
        %s189 = scalar_select %p188, %s18, 1
        %s190 = smul.addr %s189, 8
        %s191 = smul.addr %s190, 8
        %s192 = scalar_lea.vmem %s1, %s191
        %p193 = pneg %p65
        %p194 = pneg %p62
        %p195 = pneg %p86
        %p196 = pneg %p83
        %p197 = pneg %p107
        %p198 = pneg %p104
        %p199 = pneg %p133
        %p200 = pneg %p130
        %s201 = sand.u32 %s120, 1
        %s202 = scalar_lea.sflag [#allocation4], %s201
        %s203 = sand.u32 %s120, 1
        %s204 = smul.addr %s203, 256
        %s205 = scalar_lea.vmem [#allocation3], %s204
        %p206 = scmp.lt.s32.totalorder %s18, 1
        %s207 = scalar_select %p206, %s18, 1
        %s208 = smul.addr %s207, 32
        %s209 = smul.addr %s208, 8
        %s210 = scalar_lea.vmem %s0, %s209
        %p211 = scmp.lt.s32.totalorder %s18, 1
        %s212 = scalar_select %p211, %s18, 1
        %s213 = smul.addr %s212, 8
        %s214 = smul.addr %s213, 8
        %s215 = scalar_lea.vmem %s1, %s214
        %v217 = vld [vmem:[%s210] sm:$0xff]
        %v218 = vld [vmem:[%s210 + $0x8] sm:$0xff]
        %v219 = vld [vmem:[%s210 + $0x10] sm:$0xff]
        %v220 = vld [vmem:[%s210 + $0x18] sm:$0xff]
        %v221 = vld [vmem:[%s210 + $0x20] sm:$0xff]
        %v222 = vld [vmem:[%s210 + $0x28] sm:$0xff]
        %v223 = vld [vmem:[%s210 + $0x30] sm:$0xff]
        %v224 = vld [vmem:[%s210 + $0x38] sm:$0xff]
        %v225 = vld [vmem:[%s210 + $0x40] sm:$0xff]
        %v226 = vld [vmem:[%s210 + $0x48] sm:$0xff]
        %v227 = vld [vmem:[%s210 + $0x50] sm:$0xff]
        %v228 = vld [vmem:[%s210 + $0x58] sm:$0xff]
        %v229 = vld [vmem:[%s210 + $0x60] sm:$0xff]
        %v230 = vld [vmem:[%s210 + $0x68] sm:$0xff]
        %v231 = vld [vmem:[%s210 + $0x70] sm:$0xff]
        %v232 = vld [vmem:[%s210 + $0x78] sm:$0xff]
        %v233 = vld [vmem:[%s210 + $0x80] sm:$0xff]
        %v234 = vld [vmem:[%s210 + $0x88] sm:$0xff]
        %v235 = vld [vmem:[%s210 + $0x90] sm:$0xff]
        %v236 = vld [vmem:[%s210 + $0x98] sm:$0xff]
        %v237 = vld [vmem:[%s210 + $0xa0] sm:$0xff]
        %v238 = vld [vmem:[%s210 + $0xa8] sm:$0xff]
        %v239 = vld [vmem:[%s210 + $0xb0] sm:$0xff]
        %v240 = vld [vmem:[%s210 + $0xb8] sm:$0xff]
        %v241 = vld [vmem:[%s210 + $0xc0] sm:$0xff]
        %v242 = vld [vmem:[%s210 + $0xc8] sm:$0xff]
        %v243 = vld [vmem:[%s210 + $0xd0] sm:$0xff]
        %v244 = vld [vmem:[%s210 + $0xd8] sm:$0xff]
        %v245 = vld [vmem:[%s210 + $0xe0] sm:$0xff]
        %v246 = vld [vmem:[%s210 + $0xe8] sm:$0xff]
        %v247 = vld [vmem:[%s210 + $0xf0] sm:$0xff]
        %v248 = vld [vmem:[%s210 + $0xf8] sm:$0xff]
        %v249 = vld [vmem:[%s215] sm:$0xff]
        %v250 = vld [vmem:[%s215 + $0x8] sm:$0xff]
        %v251 = vld [vmem:[%s215 + $0x10] sm:$0xff]
        %v252 = vld [vmem:[%s215 + $0x18] sm:$0xff]
        %v253 = vld [vmem:[%s215 + $0x20] sm:$0xff]
        %v254 = vld [vmem:[%s215 + $0x28] sm:$0xff]
        %v255 = vld [vmem:[%s215 + $0x30] sm:$0xff]
        %v256 = vld [vmem:[%s215 + $0x38] sm:$0xff]
        %v257 = vmul.f32 %v249, 0.75
        %v258 = vmul.f32 %v250, 0.75
        %v259 = vmul.f32 %v251, 0.75
        %v260 = vmul.f32 %v252, 0.75
        %v261 = vmul.f32 %v253, 0.75
        %v262 = vmul.f32 %v254, 0.75
        %v263 = vmul.f32 %v255, 0.75
        %v264 = vmul.f32 %v256, 0.75
        %v265 = vmul.f32 %v249, 0.25
        %v266 = vmul.f32 %v250, 0.25
        %v267 = vmul.f32 %v251, 0.25
        %v268 = vmul.f32 %v252, 0.25
        %v269 = vmul.f32 %v253, 0.25
        %v270 = vmul.f32 %v254, 0.25
        %v271 = vmul.f32 %v255, 0.25
        %v272 = vadd.f32 %v257, %v265
        %v273 = vadd.f32 %v258, %v265
        %v274 = vadd.f32 %v259, %v266
        %v275 = vadd.f32 %v260, %v267
        %v276 = vadd.f32 %v261, %v268
        %v277 = vadd.f32 %v262, %v269
        %v278 = vadd.f32 %v263, %v270
        %v279 = vadd.f32 %v264, %v271
        %v280 = vmul.f32 %v256, 0.25
        %v281 = vadd.f32 %v257, %v266
        %v282 = vadd.f32 %v258, %v267
        %v283 = vadd.f32 %v259, %v268
        %v284 = vadd.f32 %v260, %v269
        %v285 = vadd.f32 %v261, %v270
        %v286 = vadd.f32 %v262, %v271
        %v287 = vadd.f32 %v263, %v280
        %v288 = vadd.f32 %v264, %v280
        %v305 = vrot.slane %v272, 7
        %v306 = vrot.slane %v281, 7
        %v307 = vrot.slane %v273, 7
        %v308 = vrot.slane %v282, 7
        %v309 = vrot.slane %v274, 7
        %v310 = vrot.slane %v283, 7
        %v311 = vrot.slane %v275, 7
        %v312 = vrot.slane %v284, 7
        %v313 = vrot.slane %v276, 7
        %v314 = vrot.slane %v285, 7
        %v315 = vrot.slane %v277, 7
        %v316 = vrot.slane %v286, 7
        %v317 = vrot.slane %v278, 7
        %v318 = vrot.slane %v287, 7
        %v319 = vrot.slane %v279, 7
        %v320 = vrot.slane %v288, 7
        %vm337 = vcmask 1040384
        %v338 = vsel %vm337, %v272, %v305
        %v339 = vsel %vm337, %v281, %v306
        %v340 = vsel %vm337, %v273, %v307
        %v341 = vsel %vm337, %v282, %v308
        %v342 = vsel %vm337, %v274, %v309
        %v343 = vsel %vm337, %v283, %v310
        %v344 = vsel %vm337, %v275, %v311
        %v345 = vsel %vm337, %v284, %v312
        %v346 = vsel %vm337, %v276, %v313
        %v347 = vsel %vm337, %v285, %v314
        %v348 = vsel %vm337, %v277, %v315
        %v349 = vsel %vm337, %v286, %v316
        %v350 = vsel %vm337, %v278, %v317
        %v351 = vsel %vm337, %v287, %v318
        %v352 = vsel %vm337, %v279, %v319
        %v353 = vsel %vm337, %v288, %v320
        %v354 = vrot.slane %v272, 1
        %v355 = vrot.slane %v281, 1
        %v356 = vrot.slane %v273, 1
        %v357 = vrot.slane %v282, 1
        %v358 = vrot.slane %v274, 1
        %v359 = vrot.slane %v283, 1
        %v360 = vrot.slane %v275, 1
        %v361 = vrot.slane %v284, 1
        %v362 = vrot.slane %v276, 1
        %v363 = vrot.slane %v285, 1
        %v364 = vrot.slane %v277, 1
        %v365 = vrot.slane %v286, 1
        %v366 = vrot.slane %v278, 1
        %v367 = vrot.slane %v287, 1
        %v368 = vrot.slane %v279, 1
        %v369 = vrot.slane %v288, 1
        %vm386 = vcmask 1046528
        %v387 = vsel %vm386, %v354, %v272
        %v388 = vsel %vm386, %v355, %v281
        %v389 = vsel %vm386, %v356, %v273
        %v390 = vsel %vm386, %v357, %v282
        %v391 = vsel %vm386, %v358, %v274
        %v392 = vsel %vm386, %v359, %v283
        %v393 = vsel %vm386, %v360, %v275
        %v394 = vsel %vm386, %v361, %v284
        %v395 = vsel %vm386, %v362, %v276
        %v396 = vsel %vm386, %v363, %v285
        %v397 = vsel %vm386, %v364, %v277
        %v398 = vsel %vm386, %v365, %v286
        %v399 = vsel %vm386, %v366, %v278
        %v400 = vsel %vm386, %v367, %v287
        %v401 = vsel %vm386, %v368, %v279
        %v402 = vsel %vm386, %v369, %v288
        %v403 = vmul.f32 %v272, 0.75
        %v404 = vmul.f32 %v281, 0.75
        %v405 = vmul.f32 %v273, 0.75
        %v406 = vmul.f32 %v282, 0.75
        %v407 = vmul.f32 %v274, 0.75
        %v408 = vmul.f32 %v283, 0.75
        %v409 = vmul.f32 %v275, 0.75
        %v410 = vmul.f32 %v284, 0.75
        %v411 = vmul.f32 %v276, 0.75
        %v412 = vmul.f32 %v285, 0.75
        %v413 = vmul.f32 %v277, 0.75
        %v414 = vmul.f32 %v286, 0.75
        %v415 = vmul.f32 %v278, 0.75
        %v416 = vmul.f32 %v287, 0.75
        %v417 = vmul.f32 %v279, 0.75
        %v418 = vmul.f32 %v288, 0.75
        %v419 = vmul.f32 %v338, 0.25
        %v420 = vmul.f32 %v339, 0.25
        %v421 = vmul.f32 %v340, 0.25
        %v422 = vmul.f32 %v341, 0.25
        %v423 = vmul.f32 %v342, 0.25
        %v424 = vmul.f32 %v343, 0.25
        %v425 = vmul.f32 %v344, 0.25
        %v426 = vmul.f32 %v345, 0.25
        %v427 = vmul.f32 %v346, 0.25
        %v428 = vmul.f32 %v347, 0.25
        %v429 = vmul.f32 %v348, 0.25
        %v430 = vmul.f32 %v349, 0.25
        %v431 = vmul.f32 %v350, 0.25
        %v432 = vmul.f32 %v351, 0.25
        %v433 = vmul.f32 %v352, 0.25
        %v434 = vmul.f32 %v353, 0.25
        %v435 = vadd.f32 %v403, %v419
        %v436 = vadd.f32 %v404, %v420
        %v437 = vadd.f32 %v405, %v421
        %v438 = vadd.f32 %v406, %v422
        %v439 = vadd.f32 %v407, %v423
        %v440 = vadd.f32 %v408, %v424
        %v441 = vadd.f32 %v409, %v425
        %v442 = vadd.f32 %v410, %v426
        %v443 = vadd.f32 %v411, %v427
        %v444 = vadd.f32 %v412, %v428
        %v445 = vadd.f32 %v413, %v429
        %v446 = vadd.f32 %v414, %v430
        %v447 = vadd.f32 %v415, %v431
        %v448 = vadd.f32 %v416, %v432
        %v449 = vadd.f32 %v417, %v433
        %v450 = vadd.f32 %v418, %v434
        %v451 = vmul.f32 %v387, 0.25
        %v452 = vmul.f32 %v388, 0.25
        %v453 = vmul.f32 %v389, 0.25
        %v454 = vmul.f32 %v390, 0.25
        %v455 = vmul.f32 %v391, 0.25
        %v456 = vmul.f32 %v392, 0.25
        %v457 = vmul.f32 %v393, 0.25
        %v458 = vmul.f32 %v394, 0.25
        %v459 = vmul.f32 %v395, 0.25
        %v460 = vmul.f32 %v396, 0.25
        %v461 = vmul.f32 %v397, 0.25
        %v462 = vmul.f32 %v398, 0.25
        %v463 = vmul.f32 %v399, 0.25
        %v464 = vmul.f32 %v400, 0.25
        %v465 = vmul.f32 %v401, 0.25
        %v466 = vmul.f32 %v402, 0.25
        %v467 = vadd.f32 %v403, %v451
        %v468 = vadd.f32 %v404, %v452
        %v469 = vadd.f32 %v405, %v453
        %v470 = vadd.f32 %v406, %v454
        %v471 = vadd.f32 %v407, %v455
        %v472 = vadd.f32 %v408, %v456
        %v473 = vadd.f32 %v409, %v457
        %v474 = vadd.f32 %v410, %v458
        %v475 = vadd.f32 %v411, %v459
        %v476 = vadd.f32 %v412, %v460
        %v477 = vadd.f32 %v413, %v461
        %v478 = vadd.f32 %v414, %v462
        %v479 = vadd.f32 %v415, %v463
        %v480 = vadd.f32 %v416, %v464
        %v481 = vadd.f32 %v417, %v465
        %v482 = vadd.f32 %v418, %v466
        %v499 = vcombine.high %v435, %v435
        %v501 = vunpack.c.l.s4 1966171168
        %v502 = vunpack.c.0.s8 %v501
        %v503 = vlaneseq
        %v504 = vshrl.u32 %v503, 7
        %v505 = vsub.s32 %v502, %v504
        %v506 = vrot.slane %v435, %v505
        %v508 = vunpack.c.l.s4 1966171168
        %v509 = vunpack.c.0.s8 %v508
        %v510 = vlaneseq
        %v511 = vshrl.u32 %v510, 7
        %v512 = vsub.s32 %v509, %v511
        %v513 = vrot.slane %v499, %v512
        %v514 = vcombine.high %v506, %v506
        %v515 = vcombine.high %v513, %v513
        %v517 = vunpack.c.l.s4 1966171168
        %v518 = vunpack.c.0.s8 %v517
        %v519 = vlaneseq
        %v520 = vshrl.u32 %v519, 7
        %v521 = vsub.s32 %v518, %v520
        %v522 = vrot.slane %v506, %v521
        %v524 = vunpack.c.l.s4 1966171168
        %v525 = vunpack.c.0.s8 %v524
        %v526 = vlaneseq
        %v527 = vshrl.u32 %v526, 7
        %v528 = vsub.s32 %v525, %v527
        %v529 = vrot.slane %v513, %v528
        %v531 = vunpack.c.l.s4 1966171168
        %v532 = vunpack.c.0.s8 %v531
        %v533 = vlaneseq
        %v534 = vshrl.u32 %v533, 7
        %v535 = vsub.s32 %v532, %v534
        %v536 = vrot.slane %v514, %v535
        %v538 = vunpack.c.l.s4 1966171168
        %v539 = vunpack.c.0.s8 %v538
        %v540 = vlaneseq
        %v541 = vshrl.u32 %v540, 7
        %v542 = vsub.s32 %v539, %v541
        %v543 = vrot.slane %v515, %v542
        %v544 = vcombine.high %v522, %v522
        %v545 = vcombine.high %v529, %v529
        %v546 = vcombine.high %v536, %v536
        %v547 = vcombine.high %v543, %v543
        %v548 = vcombine.high %v436, %v436
        %v550 = vunpack.c.l.s4 1966171168
        %v551 = vunpack.c.0.s8 %v550
        %v552 = vlaneseq
        %v553 = vshrl.u32 %v552, 7
        %v554 = vsub.s32 %v551, %v553
        %v555 = vrot.slane %v436, %v554
        %v557 = vunpack.c.l.s4 1966171168
        %v558 = vunpack.c.0.s8 %v557
        %v559 = vlaneseq
        %v560 = vshrl.u32 %v559, 7
        %v561 = vsub.s32 %v558, %v560
        %v562 = vrot.slane %v548, %v561
        %v563 = vcombine.high %v555, %v555
        %v564 = vcombine.high %v562, %v562
        %v566 = vunpack.c.l.s4 1966171168
        %v567 = vunpack.c.0.s8 %v566
        %v568 = vlaneseq
        %v569 = vshrl.u32 %v568, 7
        %v570 = vsub.s32 %v567, %v569
        %v571 = vrot.slane %v555, %v570
        %v573 = vunpack.c.l.s4 1966171168
        %v574 = vunpack.c.0.s8 %v573
        %v575 = vlaneseq
        %v576 = vshrl.u32 %v575, 7
        %v577 = vsub.s32 %v574, %v576
        %v578 = vrot.slane %v562, %v577
        %v580 = vunpack.c.l.s4 1966171168
        %v581 = vunpack.c.0.s8 %v580
        %v582 = vlaneseq
        %v583 = vshrl.u32 %v582, 7
        %v584 = vsub.s32 %v581, %v583
        %v585 = vrot.slane %v563, %v584
        %v587 = vunpack.c.l.s4 1966171168
        %v588 = vunpack.c.0.s8 %v587
        %v589 = vlaneseq
        %v590 = vshrl.u32 %v589, 7
        %v591 = vsub.s32 %v588, %v590
        %v592 = vrot.slane %v564, %v591
        %v593 = vcombine.high %v571, %v571
        %v594 = vcombine.high %v578, %v578
        %v595 = vcombine.high %v585, %v585
        %v596 = vcombine.high %v592, %v592
        %v597 = vcombine.high %v437, %v437
        %v599 = vunpack.c.l.s4 1966171168
        %v600 = vunpack.c.0.s8 %v599
        %v601 = vlaneseq
        %v602 = vshrl.u32 %v601, 7
        %v603 = vsub.s32 %v600, %v602
        %v604 = vrot.slane %v437, %v603
        %v606 = vunpack.c.l.s4 1966171168
        %v607 = vunpack.c.0.s8 %v606
        %v608 = vlaneseq
        %v609 = vshrl.u32 %v608, 7
        %v610 = vsub.s32 %v607, %v609
        %v611 = vrot.slane %v597, %v610
        %v612 = vcombine.high %v604, %v604
        %v613 = vcombine.high %v611, %v611
        %v615 = vunpack.c.l.s4 1966171168
        %v616 = vunpack.c.0.s8 %v615
        %v617 = vlaneseq
        %v618 = vshrl.u32 %v617, 7
        %v619 = vsub.s32 %v616, %v618
        %v620 = vrot.slane %v604, %v619
        %v622 = vunpack.c.l.s4 1966171168
        %v623 = vunpack.c.0.s8 %v622
        %v624 = vlaneseq
        %v625 = vshrl.u32 %v624, 7
        %v626 = vsub.s32 %v623, %v625
        %v627 = vrot.slane %v611, %v626
        %v629 = vunpack.c.l.s4 1966171168
        %v630 = vunpack.c.0.s8 %v629
        %v631 = vlaneseq
        %v632 = vshrl.u32 %v631, 7
        %v633 = vsub.s32 %v630, %v632
        %v634 = vrot.slane %v612, %v633
        %v636 = vunpack.c.l.s4 1966171168
        %v637 = vunpack.c.0.s8 %v636
        %v638 = vlaneseq
        %v639 = vshrl.u32 %v638, 7
        %v640 = vsub.s32 %v637, %v639
        %v641 = vrot.slane %v613, %v640
        %v642 = vcombine.high %v620, %v620
        %v643 = vcombine.high %v627, %v627
        %v644 = vcombine.high %v634, %v634
        %v645 = vcombine.high %v641, %v641
        %v646 = vcombine.high %v438, %v438
        %v648 = vunpack.c.l.s4 1966171168
        %v649 = vunpack.c.0.s8 %v648
        %v650 = vlaneseq
        %v651 = vshrl.u32 %v650, 7
        %v652 = vsub.s32 %v649, %v651
        %v653 = vrot.slane %v438, %v652
        %v655 = vunpack.c.l.s4 1966171168
        %v656 = vunpack.c.0.s8 %v655
        %v657 = vlaneseq
        %v658 = vshrl.u32 %v657, 7
        %v659 = vsub.s32 %v656, %v658
        %v660 = vrot.slane %v646, %v659
        %v661 = vcombine.high %v653, %v653
        %v662 = vcombine.high %v660, %v660
        %v664 = vunpack.c.l.s4 1966171168
        %v665 = vunpack.c.0.s8 %v664
        %v666 = vlaneseq
        %v667 = vshrl.u32 %v666, 7
        %v668 = vsub.s32 %v665, %v667
        %v669 = vrot.slane %v653, %v668
        %v671 = vunpack.c.l.s4 1966171168
        %v672 = vunpack.c.0.s8 %v671
        %v673 = vlaneseq
        %v674 = vshrl.u32 %v673, 7
        %v675 = vsub.s32 %v672, %v674
        %v676 = vrot.slane %v660, %v675
        %v678 = vunpack.c.l.s4 1966171168
        %v679 = vunpack.c.0.s8 %v678
        %v680 = vlaneseq
        %v681 = vshrl.u32 %v680, 7
        %v682 = vsub.s32 %v679, %v681
        %v683 = vrot.slane %v661, %v682
        %v685 = vunpack.c.l.s4 1966171168
        %v686 = vunpack.c.0.s8 %v685
        %v687 = vlaneseq
        %v688 = vshrl.u32 %v687, 7
        %v689 = vsub.s32 %v686, %v688
        %v690 = vrot.slane %v662, %v689
        %v691 = vcombine.high %v669, %v669
        %v692 = vcombine.high %v676, %v676
        %v693 = vcombine.high %v683, %v683
        %v694 = vcombine.high %v690, %v690
        %v695 = vcombine.high %v439, %v439
        %v697 = vunpack.c.l.s4 1966171168
        %v698 = vunpack.c.0.s8 %v697
        %v699 = vlaneseq
        %v700 = vshrl.u32 %v699, 7
        %v701 = vsub.s32 %v698, %v700
        %v702 = vrot.slane %v439, %v701
        %v704 = vunpack.c.l.s4 1966171168
        %v705 = vunpack.c.0.s8 %v704
        %v706 = vlaneseq
        %v707 = vshrl.u32 %v706, 7
        %v708 = vsub.s32 %v705, %v707
        %v709 = vrot.slane %v695, %v708
        %v710 = vcombine.high %v702, %v702
        %v711 = vcombine.high %v709, %v709
        %v713 = vunpack.c.l.s4 1966171168
        %v714 = vunpack.c.0.s8 %v713
        %v715 = vlaneseq
        %v716 = vshrl.u32 %v715, 7
        %v717 = vsub.s32 %v714, %v716
        %v718 = vrot.slane %v702, %v717
        %v720 = vunpack.c.l.s4 1966171168
        %v721 = vunpack.c.0.s8 %v720
        %v722 = vlaneseq
        %v723 = vshrl.u32 %v722, 7
        %v724 = vsub.s32 %v721, %v723
        %v725 = vrot.slane %v709, %v724
        %v727 = vunpack.c.l.s4 1966171168
        %v728 = vunpack.c.0.s8 %v727
        %v729 = vlaneseq
        %v730 = vshrl.u32 %v729, 7
        %v731 = vsub.s32 %v728, %v730
        %v732 = vrot.slane %v710, %v731
        %v734 = vunpack.c.l.s4 1966171168
        %v735 = vunpack.c.0.s8 %v734
        %v736 = vlaneseq
        %v737 = vshrl.u32 %v736, 7
        %v738 = vsub.s32 %v735, %v737
        %v739 = vrot.slane %v711, %v738
        %v740 = vcombine.high %v718, %v718
        %v741 = vcombine.high %v725, %v725
        %v742 = vcombine.high %v732, %v732
        %v743 = vcombine.high %v739, %v739
        %v744 = vcombine.high %v440, %v440
        %v746 = vunpack.c.l.s4 1966171168
        %v747 = vunpack.c.0.s8 %v746
        %v748 = vlaneseq
        %v749 = vshrl.u32 %v748, 7
        %v750 = vsub.s32 %v747, %v749
        %v751 = vrot.slane %v440, %v750
        %v753 = vunpack.c.l.s4 1966171168
        %v754 = vunpack.c.0.s8 %v753
        %v755 = vlaneseq
        %v756 = vshrl.u32 %v755, 7
        %v757 = vsub.s32 %v754, %v756
        %v758 = vrot.slane %v744, %v757
        %v759 = vcombine.high %v751, %v751
        %v760 = vcombine.high %v758, %v758
        %v762 = vunpack.c.l.s4 1966171168
        %v763 = vunpack.c.0.s8 %v762
        %v764 = vlaneseq
        %v765 = vshrl.u32 %v764, 7
        %v766 = vsub.s32 %v763, %v765
        %v767 = vrot.slane %v751, %v766
        %v769 = vunpack.c.l.s4 1966171168
        %v770 = vunpack.c.0.s8 %v769
        %v771 = vlaneseq
        %v772 = vshrl.u32 %v771, 7
        %v773 = vsub.s32 %v770, %v772
        %v774 = vrot.slane %v758, %v773
        %v776 = vunpack.c.l.s4 1966171168
        %v777 = vunpack.c.0.s8 %v776
        %v778 = vlaneseq
        %v779 = vshrl.u32 %v778, 7
        %v780 = vsub.s32 %v777, %v779
        %v781 = vrot.slane %v759, %v780
        %v783 = vunpack.c.l.s4 1966171168
        %v784 = vunpack.c.0.s8 %v783
        %v785 = vlaneseq
        %v786 = vshrl.u32 %v785, 7
        %v787 = vsub.s32 %v784, %v786
        %v788 = vrot.slane %v760, %v787
        %v789 = vcombine.high %v767, %v767
        %v790 = vcombine.high %v774, %v774
        %v791 = vcombine.high %v781, %v781
        %v792 = vcombine.high %v788, %v788
        %v793 = vcombine.high %v441, %v441
        %v795 = vunpack.c.l.s4 1966171168
        %v796 = vunpack.c.0.s8 %v795
        %v797 = vlaneseq
        %v798 = vshrl.u32 %v797, 7
        %v799 = vsub.s32 %v796, %v798
        %v800 = vrot.slane %v441, %v799
        %v802 = vunpack.c.l.s4 1966171168
        %v803 = vunpack.c.0.s8 %v802
        %v804 = vlaneseq
        %v805 = vshrl.u32 %v804, 7
        %v806 = vsub.s32 %v803, %v805
        %v807 = vrot.slane %v793, %v806
        %v808 = vcombine.high %v800, %v800
        %v809 = vcombine.high %v807, %v807
        %v811 = vunpack.c.l.s4 1966171168
        %v812 = vunpack.c.0.s8 %v811
        %v813 = vlaneseq
        %v814 = vshrl.u32 %v813, 7
        %v815 = vsub.s32 %v812, %v814
        %v816 = vrot.slane %v800, %v815
        %v818 = vunpack.c.l.s4 1966171168
        %v819 = vunpack.c.0.s8 %v818
        %v820 = vlaneseq
        %v821 = vshrl.u32 %v820, 7
        %v822 = vsub.s32 %v819, %v821
        %v823 = vrot.slane %v807, %v822
        %v825 = vunpack.c.l.s4 1966171168
        %v826 = vunpack.c.0.s8 %v825
        %v827 = vlaneseq
        %v828 = vshrl.u32 %v827, 7
        %v829 = vsub.s32 %v826, %v828
        %v830 = vrot.slane %v808, %v829
        %v832 = vunpack.c.l.s4 1966171168
        %v833 = vunpack.c.0.s8 %v832
        %v834 = vlaneseq
        %v835 = vshrl.u32 %v834, 7
        %v836 = vsub.s32 %v833, %v835
        %v837 = vrot.slane %v809, %v836
        %v838 = vcombine.high %v816, %v816
        %v839 = vcombine.high %v823, %v823
        %v840 = vcombine.high %v830, %v830
        %v841 = vcombine.high %v837, %v837
        %v842 = vcombine.high %v442, %v442
        %v844 = vunpack.c.l.s4 1966171168
        %v845 = vunpack.c.0.s8 %v844
        %v846 = vlaneseq
        %v847 = vshrl.u32 %v846, 7
        %v848 = vsub.s32 %v845, %v847
        %v849 = vrot.slane %v442, %v848
        %v851 = vunpack.c.l.s4 1966171168
        %v852 = vunpack.c.0.s8 %v851
        %v853 = vlaneseq
        %v854 = vshrl.u32 %v853, 7
        %v855 = vsub.s32 %v852, %v854
        %v856 = vrot.slane %v842, %v855
        %v857 = vcombine.high %v849, %v849
        %v858 = vcombine.high %v856, %v856
        %v860 = vunpack.c.l.s4 1966171168
        %v861 = vunpack.c.0.s8 %v860
        %v862 = vlaneseq
        %v863 = vshrl.u32 %v862, 7
        %v864 = vsub.s32 %v861, %v863
        %v865 = vrot.slane %v849, %v864
        %v867 = vunpack.c.l.s4 1966171168
        %v868 = vunpack.c.0.s8 %v867
        %v869 = vlaneseq
        %v870 = vshrl.u32 %v869, 7
        %v871 = vsub.s32 %v868, %v870
        %v872 = vrot.slane %v856, %v871
        %v874 = vunpack.c.l.s4 1966171168
        %v875 = vunpack.c.0.s8 %v874
        %v876 = vlaneseq
        %v877 = vshrl.u32 %v876, 7
        %v878 = vsub.s32 %v875, %v877
        %v879 = vrot.slane %v857, %v878
        %v881 = vunpack.c.l.s4 1966171168
        %v882 = vunpack.c.0.s8 %v881
        %v883 = vlaneseq
        %v884 = vshrl.u32 %v883, 7
        %v885 = vsub.s32 %v882, %v884
        %v886 = vrot.slane %v858, %v885
        %v887 = vcombine.high %v865, %v865
        %v888 = vcombine.high %v872, %v872
        %v889 = vcombine.high %v879, %v879
        %v890 = vcombine.high %v886, %v886
        %v891 = vcombine.high %v443, %v443
        %v893 = vunpack.c.l.s4 1966171168
        %v894 = vunpack.c.0.s8 %v893
        %v895 = vlaneseq
        %v896 = vshrl.u32 %v895, 7
        %v897 = vsub.s32 %v894, %v896
        %v898 = vrot.slane %v443, %v897
        %v900 = vunpack.c.l.s4 1966171168
        %v901 = vunpack.c.0.s8 %v900
        %v902 = vlaneseq
        %v903 = vshrl.u32 %v902, 7
        %v904 = vsub.s32 %v901, %v903
        %v905 = vrot.slane %v891, %v904
        %v906 = vcombine.high %v898, %v898
        %v907 = vcombine.high %v905, %v905
        %v909 = vunpack.c.l.s4 1966171168
        %v910 = vunpack.c.0.s8 %v909
        %v911 = vlaneseq
        %v912 = vshrl.u32 %v911, 7
        %v913 = vsub.s32 %v910, %v912
        %v914 = vrot.slane %v898, %v913
        %v916 = vunpack.c.l.s4 1966171168
        %v917 = vunpack.c.0.s8 %v916
        %v918 = vlaneseq
        %v919 = vshrl.u32 %v918, 7
        %v920 = vsub.s32 %v917, %v919
        %v921 = vrot.slane %v905, %v920
        %v923 = vunpack.c.l.s4 1966171168
        %v924 = vunpack.c.0.s8 %v923
        %v925 = vlaneseq
        %v926 = vshrl.u32 %v925, 7
        %v927 = vsub.s32 %v924, %v926
        %v928 = vrot.slane %v906, %v927
        %v930 = vunpack.c.l.s4 1966171168
        %v931 = vunpack.c.0.s8 %v930
        %v932 = vlaneseq
        %v933 = vshrl.u32 %v932, 7
        %v934 = vsub.s32 %v931, %v933
        %v935 = vrot.slane %v907, %v934
        %v936 = vcombine.high %v914, %v914
        %v937 = vcombine.high %v921, %v921
        %v938 = vcombine.high %v928, %v928
        %v939 = vcombine.high %v935, %v935
        %v940 = vcombine.high %v444, %v444
        %v942 = vunpack.c.l.s4 1966171168
        %v943 = vunpack.c.0.s8 %v942
        %v944 = vlaneseq
        %v945 = vshrl.u32 %v944, 7
        %v946 = vsub.s32 %v943, %v945
        %v947 = vrot.slane %v444, %v946
        %v949 = vunpack.c.l.s4 1966171168
        %v950 = vunpack.c.0.s8 %v949
        %v951 = vlaneseq
        %v952 = vshrl.u32 %v951, 7
        %v953 = vsub.s32 %v950, %v952
        %v954 = vrot.slane %v940, %v953
        %v955 = vcombine.high %v947, %v947
        %v956 = vcombine.high %v954, %v954
        %v958 = vunpack.c.l.s4 1966171168
        %v959 = vunpack.c.0.s8 %v958
        %v960 = vlaneseq
        %v961 = vshrl.u32 %v960, 7
        %v962 = vsub.s32 %v959, %v961
        %v963 = vrot.slane %v947, %v962
        %v965 = vunpack.c.l.s4 1966171168
        %v966 = vunpack.c.0.s8 %v965
        %v967 = vlaneseq
        %v968 = vshrl.u32 %v967, 7
        %v969 = vsub.s32 %v966, %v968
        %v970 = vrot.slane %v954, %v969
        %v972 = vunpack.c.l.s4 1966171168
        %v973 = vunpack.c.0.s8 %v972
        %v974 = vlaneseq
        %v975 = vshrl.u32 %v974, 7
        %v976 = vsub.s32 %v973, %v975
        %v977 = vrot.slane %v955, %v976
        %v979 = vunpack.c.l.s4 1966171168
        %v980 = vunpack.c.0.s8 %v979
        %v981 = vlaneseq
        %v982 = vshrl.u32 %v981, 7
        %v983 = vsub.s32 %v980, %v982
        %v984 = vrot.slane %v956, %v983
        %v985 = vcombine.high %v963, %v963
        %v986 = vcombine.high %v970, %v970
        %v987 = vcombine.high %v977, %v977
        %v988 = vcombine.high %v984, %v984
        %v989 = vcombine.high %v445, %v445
        %v991 = vunpack.c.l.s4 1966171168
        %v992 = vunpack.c.0.s8 %v991
        %v993 = vlaneseq
        %v994 = vshrl.u32 %v993, 7
        %v995 = vsub.s32 %v992, %v994
        %v996 = vrot.slane %v445, %v995
        %v998 = vunpack.c.l.s4 1966171168
        %v999 = vunpack.c.0.s8 %v998
        %v1000 = vlaneseq
        %v1001 = vshrl.u32 %v1000, 7
        %v1002 = vsub.s32 %v999, %v1001
        %v1003 = vrot.slane %v989, %v1002
        %v1004 = vcombine.high %v996, %v996
        %v1005 = vcombine.high %v1003, %v1003
        %v1007 = vunpack.c.l.s4 1966171168
        %v1008 = vunpack.c.0.s8 %v1007
        %v1009 = vlaneseq
        %v1010 = vshrl.u32 %v1009, 7
        %v1011 = vsub.s32 %v1008, %v1010
        %v1012 = vrot.slane %v996, %v1011
        %v1014 = vunpack.c.l.s4 1966171168
        %v1015 = vunpack.c.0.s8 %v1014
        %v1016 = vlaneseq
        %v1017 = vshrl.u32 %v1016, 7
        %v1018 = vsub.s32 %v1015, %v1017
        %v1019 = vrot.slane %v1003, %v1018
        %v1021 = vunpack.c.l.s4 1966171168
        %v1022 = vunpack.c.0.s8 %v1021
        %v1023 = vlaneseq
        %v1024 = vshrl.u32 %v1023, 7
        %v1025 = vsub.s32 %v1022, %v1024
        %v1026 = vrot.slane %v1004, %v1025
        %v1028 = vunpack.c.l.s4 1966171168
        %v1029 = vunpack.c.0.s8 %v1028
        %v1030 = vlaneseq
        %v1031 = vshrl.u32 %v1030, 7
        %v1032 = vsub.s32 %v1029, %v1031
        %v1033 = vrot.slane %v1005, %v1032
        %v1034 = vcombine.high %v1012, %v1012
        %v1035 = vcombine.high %v1019, %v1019
        %v1036 = vcombine.high %v1026, %v1026
        %v1037 = vcombine.high %v1033, %v1033
        %v1038 = vcombine.high %v446, %v446
        %v1040 = vunpack.c.l.s4 1966171168
        %v1041 = vunpack.c.0.s8 %v1040
        %v1042 = vlaneseq
        %v1043 = vshrl.u32 %v1042, 7
        %v1044 = vsub.s32 %v1041, %v1043
        %v1045 = vrot.slane %v446, %v1044
        %v1047 = vunpack.c.l.s4 1966171168
        %v1048 = vunpack.c.0.s8 %v1047
        %v1049 = vlaneseq
        %v1050 = vshrl.u32 %v1049, 7
        %v1051 = vsub.s32 %v1048, %v1050
        %v1052 = vrot.slane %v1038, %v1051
        %v1053 = vcombine.high %v1045, %v1045
        %v1054 = vcombine.high %v1052, %v1052
        %v1056 = vunpack.c.l.s4 1966171168
        %v1057 = vunpack.c.0.s8 %v1056
        %v1058 = vlaneseq
        %v1059 = vshrl.u32 %v1058, 7
        %v1060 = vsub.s32 %v1057, %v1059
        %v1061 = vrot.slane %v1045, %v1060
        %v1063 = vunpack.c.l.s4 1966171168
        %v1064 = vunpack.c.0.s8 %v1063
        %v1065 = vlaneseq
        %v1066 = vshrl.u32 %v1065, 7
        %v1067 = vsub.s32 %v1064, %v1066
        %v1068 = vrot.slane %v1052, %v1067
        %v1070 = vunpack.c.l.s4 1966171168
        %v1071 = vunpack.c.0.s8 %v1070
        %v1072 = vlaneseq
        %v1073 = vshrl.u32 %v1072, 7
        %v1074 = vsub.s32 %v1071, %v1073
        %v1075 = vrot.slane %v1053, %v1074
        %v1077 = vunpack.c.l.s4 1966171168
        %v1078 = vunpack.c.0.s8 %v1077
        %v1079 = vlaneseq
        %v1080 = vshrl.u32 %v1079, 7
        %v1081 = vsub.s32 %v1078, %v1080
        %v1082 = vrot.slane %v1054, %v1081
        %v1083 = vcombine.high %v1061, %v1061
        %v1084 = vcombine.high %v1068, %v1068
        %v1085 = vcombine.high %v1075, %v1075
        %v1086 = vcombine.high %v1082, %v1082
        %v1087 = vcombine.high %v447, %v447
        %v1089 = vunpack.c.l.s4 1966171168
        %v1090 = vunpack.c.0.s8 %v1089
        %v1091 = vlaneseq
        %v1092 = vshrl.u32 %v1091, 7
        %v1093 = vsub.s32 %v1090, %v1092
        %v1094 = vrot.slane %v447, %v1093
        %v1096 = vunpack.c.l.s4 1966171168
        %v1097 = vunpack.c.0.s8 %v1096
        %v1098 = vlaneseq
        %v1099 = vshrl.u32 %v1098, 7
        %v1100 = vsub.s32 %v1097, %v1099
        %v1101 = vrot.slane %v1087, %v1100
        %v1102 = vcombine.high %v1094, %v1094
        %v1103 = vcombine.high %v1101, %v1101
        %v1105 = vunpack.c.l.s4 1966171168
        %v1106 = vunpack.c.0.s8 %v1105
        %v1107 = vlaneseq
        %v1108 = vshrl.u32 %v1107, 7
        %v1109 = vsub.s32 %v1106, %v1108
        %v1110 = vrot.slane %v1094, %v1109
        %v1112 = vunpack.c.l.s4 1966171168
        %v1113 = vunpack.c.0.s8 %v1112
        %v1114 = vlaneseq
        %v1115 = vshrl.u32 %v1114, 7
        %v1116 = vsub.s32 %v1113, %v1115
        %v1117 = vrot.slane %v1101, %v1116
        %v1119 = vunpack.c.l.s4 1966171168
        %v1120 = vunpack.c.0.s8 %v1119
        %v1121 = vlaneseq
        %v1122 = vshrl.u32 %v1121, 7
        %v1123 = vsub.s32 %v1120, %v1122
        %v1124 = vrot.slane %v1102, %v1123
        %v1126 = vunpack.c.l.s4 1966171168
        %v1127 = vunpack.c.0.s8 %v1126
        %v1128 = vlaneseq
        %v1129 = vshrl.u32 %v1128, 7
        %v1130 = vsub.s32 %v1127, %v1129
        %v1131 = vrot.slane %v1103, %v1130
        %v1132 = vcombine.high %v1110, %v1110
        %v1133 = vcombine.high %v1117, %v1117
        %v1134 = vcombine.high %v1124, %v1124
        %v1135 = vcombine.high %v1131, %v1131
        %v1136 = vcombine.high %v448, %v448
        %v1138 = vunpack.c.l.s4 1966171168
        %v1139 = vunpack.c.0.s8 %v1138
        %v1140 = vlaneseq
        %v1141 = vshrl.u32 %v1140, 7
        %v1142 = vsub.s32 %v1139, %v1141
        %v1143 = vrot.slane %v448, %v1142
        %v1145 = vunpack.c.l.s4 1966171168
        %v1146 = vunpack.c.0.s8 %v1145
        %v1147 = vlaneseq
        %v1148 = vshrl.u32 %v1147, 7
        %v1149 = vsub.s32 %v1146, %v1148
        %v1150 = vrot.slane %v1136, %v1149
        %v1151 = vcombine.high %v1143, %v1143
        %v1152 = vcombine.high %v1150, %v1150
        %v1154 = vunpack.c.l.s4 1966171168
        %v1155 = vunpack.c.0.s8 %v1154
        %v1156 = vlaneseq
        %v1157 = vshrl.u32 %v1156, 7
        %v1158 = vsub.s32 %v1155, %v1157
        %v1159 = vrot.slane %v1143, %v1158
        %v1161 = vunpack.c.l.s4 1966171168
        %v1162 = vunpack.c.0.s8 %v1161
        %v1163 = vlaneseq
        %v1164 = vshrl.u32 %v1163, 7
        %v1165 = vsub.s32 %v1162, %v1164
        %v1166 = vrot.slane %v1150, %v1165
        %v1168 = vunpack.c.l.s4 1966171168
        %v1169 = vunpack.c.0.s8 %v1168
        %v1170 = vlaneseq
        %v1171 = vshrl.u32 %v1170, 7
        %v1172 = vsub.s32 %v1169, %v1171
        %v1173 = vrot.slane %v1151, %v1172
        %v1175 = vunpack.c.l.s4 1966171168
        %v1176 = vunpack.c.0.s8 %v1175
        %v1177 = vlaneseq
        %v1178 = vshrl.u32 %v1177, 7
        %v1179 = vsub.s32 %v1176, %v1178
        %v1180 = vrot.slane %v1152, %v1179
        %v1181 = vcombine.high %v1159, %v1159
        %v1182 = vcombine.high %v1166, %v1166
        %v1183 = vcombine.high %v1173, %v1173
        %v1184 = vcombine.high %v1180, %v1180
        %v1185 = vcombine.high %v449, %v449
        %v1187 = vunpack.c.l.s4 1966171168
        %v1188 = vunpack.c.0.s8 %v1187
        %v1189 = vlaneseq
        %v1190 = vshrl.u32 %v1189, 7
        %v1191 = vsub.s32 %v1188, %v1190
        %v1192 = vrot.slane %v449, %v1191
        %v1194 = vunpack.c.l.s4 1966171168
        %v1195 = vunpack.c.0.s8 %v1194
        %v1196 = vlaneseq
        %v1197 = vshrl.u32 %v1196, 7
        %v1198 = vsub.s32 %v1195, %v1197
        %v1199 = vrot.slane %v1185, %v1198
        %v1200 = vcombine.high %v1192, %v1192
        %v1201 = vcombine.high %v1199, %v1199
        %v1203 = vunpack.c.l.s4 1966171168
        %v1204 = vunpack.c.0.s8 %v1203
        %v1205 = vlaneseq
        %v1206 = vshrl.u32 %v1205, 7
        %v1207 = vsub.s32 %v1204, %v1206
        %v1208 = vrot.slane %v1192, %v1207
        %v1210 = vunpack.c.l.s4 1966171168
        %v1211 = vunpack.c.0.s8 %v1210
        %v1212 = vlaneseq
        %v1213 = vshrl.u32 %v1212, 7
        %v1214 = vsub.s32 %v1211, %v1213
        %v1215 = vrot.slane %v1199, %v1214
        %v1217 = vunpack.c.l.s4 1966171168
        %v1218 = vunpack.c.0.s8 %v1217
        %v1219 = vlaneseq
        %v1220 = vshrl.u32 %v1219, 7
        %v1221 = vsub.s32 %v1218, %v1220
        %v1222 = vrot.slane %v1200, %v1221
        %v1224 = vunpack.c.l.s4 1966171168
        %v1225 = vunpack.c.0.s8 %v1224
        %v1226 = vlaneseq
        %v1227 = vshrl.u32 %v1226, 7
        %v1228 = vsub.s32 %v1225, %v1227
        %v1229 = vrot.slane %v1201, %v1228
        %v1230 = vcombine.high %v1208, %v1208
        %v1231 = vcombine.high %v1215, %v1215
        %v1232 = vcombine.high %v1222, %v1222
        %v1233 = vcombine.high %v1229, %v1229
        %v1234 = vcombine.high %v450, %v450
        %v1236 = vunpack.c.l.s4 1966171168
        %v1237 = vunpack.c.0.s8 %v1236
        %v1238 = vlaneseq
        %v1239 = vshrl.u32 %v1238, 7
        %v1240 = vsub.s32 %v1237, %v1239
        %v1241 = vrot.slane %v450, %v1240
        %v1243 = vunpack.c.l.s4 1966171168
        %v1244 = vunpack.c.0.s8 %v1243
        %v1245 = vlaneseq
        %v1246 = vshrl.u32 %v1245, 7
        %v1247 = vsub.s32 %v1244, %v1246
        %v1248 = vrot.slane %v1234, %v1247
        %v1249 = vcombine.high %v1241, %v1241
        %v1250 = vcombine.high %v1248, %v1248
        %v1252 = vunpack.c.l.s4 1966171168
        %v1253 = vunpack.c.0.s8 %v1252
        %v1254 = vlaneseq
        %v1255 = vshrl.u32 %v1254, 7
        %v1256 = vsub.s32 %v1253, %v1255
        %v1257 = vrot.slane %v1241, %v1256
        %v1259 = vunpack.c.l.s4 1966171168
        %v1260 = vunpack.c.0.s8 %v1259
        %v1261 = vlaneseq
        %v1262 = vshrl.u32 %v1261, 7
        %v1263 = vsub.s32 %v1260, %v1262
        %v1264 = vrot.slane %v1248, %v1263
        %v1266 = vunpack.c.l.s4 1966171168
        %v1267 = vunpack.c.0.s8 %v1266
        %v1268 = vlaneseq
        %v1269 = vshrl.u32 %v1268, 7
        %v1270 = vsub.s32 %v1267, %v1269
        %v1271 = vrot.slane %v1249, %v1270
        %v1273 = vunpack.c.l.s4 1966171168
        %v1274 = vunpack.c.0.s8 %v1273
        %v1275 = vlaneseq
        %v1276 = vshrl.u32 %v1275, 7
        %v1277 = vsub.s32 %v1274, %v1276
        %v1278 = vrot.slane %v1250, %v1277
        %v1279 = vcombine.high %v1257, %v1257
        %v1280 = vcombine.high %v1264, %v1264
        %v1281 = vcombine.high %v1271, %v1271
        %v1282 = vcombine.high %v1278, %v1278
        %v1427 = vcombine.high %v467, %v467
        %v1429 = vunpack.c.l.s4 1966171168
        %v1430 = vunpack.c.0.s8 %v1429
        %v1431 = vlaneseq
        %v1432 = vshrl.u32 %v1431, 7
        %v1433 = vsub.s32 %v1430, %v1432
        %v1434 = vrot.slane %v467, %v1433
        %v1436 = vunpack.c.l.s4 1966171168
        %v1437 = vunpack.c.0.s8 %v1436
        %v1438 = vlaneseq
        %v1439 = vshrl.u32 %v1438, 7
        %v1440 = vsub.s32 %v1437, %v1439
        %v1441 = vrot.slane %v1427, %v1440
        %v1442 = vcombine.high %v1434, %v1434
        %v1443 = vcombine.high %v1441, %v1441
        %v1445 = vunpack.c.l.s4 1966171168
        %v1446 = vunpack.c.0.s8 %v1445
        %v1447 = vlaneseq
        %v1448 = vshrl.u32 %v1447, 7
        %v1449 = vsub.s32 %v1446, %v1448
        %v1450 = vrot.slane %v1434, %v1449
        %v1452 = vunpack.c.l.s4 1966171168
        %v1453 = vunpack.c.0.s8 %v1452
        %v1454 = vlaneseq
        %v1455 = vshrl.u32 %v1454, 7
        %v1456 = vsub.s32 %v1453, %v1455
        %v1457 = vrot.slane %v1441, %v1456
        %v1459 = vunpack.c.l.s4 1966171168
        %v1460 = vunpack.c.0.s8 %v1459
        %v1461 = vlaneseq
        %v1462 = vshrl.u32 %v1461, 7
        %v1463 = vsub.s32 %v1460, %v1462
        %v1464 = vrot.slane %v1442, %v1463
        %v1466 = vunpack.c.l.s4 1966171168
        %v1467 = vunpack.c.0.s8 %v1466
        %v1468 = vlaneseq
        %v1469 = vshrl.u32 %v1468, 7
        %v1470 = vsub.s32 %v1467, %v1469
        %v1471 = vrot.slane %v1443, %v1470
        %v1472 = vcombine.high %v1450, %v1450
        %v1473 = vcombine.high %v1457, %v1457
        %v1474 = vcombine.high %v1464, %v1464
        %v1475 = vcombine.high %v1471, %v1471
        %v1476 = vcombine.high %v468, %v468
        %v1478 = vunpack.c.l.s4 1966171168
        %v1479 = vunpack.c.0.s8 %v1478
        %v1480 = vlaneseq
        %v1481 = vshrl.u32 %v1480, 7
        %v1482 = vsub.s32 %v1479, %v1481
        %v1483 = vrot.slane %v468, %v1482
        %v1485 = vunpack.c.l.s4 1966171168
        %v1486 = vunpack.c.0.s8 %v1485
        %v1487 = vlaneseq
        %v1488 = vshrl.u32 %v1487, 7
        %v1489 = vsub.s32 %v1486, %v1488
        %v1490 = vrot.slane %v1476, %v1489
        %v1491 = vcombine.high %v1483, %v1483
        %v1492 = vcombine.high %v1490, %v1490
        %v1494 = vunpack.c.l.s4 1966171168
        %v1495 = vunpack.c.0.s8 %v1494
        %v1496 = vlaneseq
        %v1497 = vshrl.u32 %v1496, 7
        %v1498 = vsub.s32 %v1495, %v1497
        %v1499 = vrot.slane %v1483, %v1498
        %v1501 = vunpack.c.l.s4 1966171168
        %v1502 = vunpack.c.0.s8 %v1501
        %v1503 = vlaneseq
        %v1504 = vshrl.u32 %v1503, 7
        %v1505 = vsub.s32 %v1502, %v1504
        %v1506 = vrot.slane %v1490, %v1505
        %v1508 = vunpack.c.l.s4 1966171168
        %v1509 = vunpack.c.0.s8 %v1508
        %v1510 = vlaneseq
        %v1511 = vshrl.u32 %v1510, 7
        %v1512 = vsub.s32 %v1509, %v1511
        %v1513 = vrot.slane %v1491, %v1512
        %v1515 = vunpack.c.l.s4 1966171168
        %v1516 = vunpack.c.0.s8 %v1515
        %v1517 = vlaneseq
        %v1518 = vshrl.u32 %v1517, 7
        %v1519 = vsub.s32 %v1516, %v1518
        %v1520 = vrot.slane %v1492, %v1519
        %v1521 = vcombine.high %v1499, %v1499
        %v1522 = vcombine.high %v1506, %v1506
        %v1523 = vcombine.high %v1513, %v1513
        %v1524 = vcombine.high %v1520, %v1520
        %v1525 = vcombine.high %v469, %v469
        %v1527 = vunpack.c.l.s4 1966171168
        %v1528 = vunpack.c.0.s8 %v1527
        %v1529 = vlaneseq
        %v1530 = vshrl.u32 %v1529, 7
        %v1531 = vsub.s32 %v1528, %v1530
        %v1532 = vrot.slane %v469, %v1531
        %v1534 = vunpack.c.l.s4 1966171168
        %v1535 = vunpack.c.0.s8 %v1534
        %v1536 = vlaneseq
        %v1537 = vshrl.u32 %v1536, 7
        %v1538 = vsub.s32 %v1535, %v1537
        %v1539 = vrot.slane %v1525, %v1538
        %v1540 = vcombine.high %v1532, %v1532
        %v1541 = vcombine.high %v1539, %v1539
        %v1543 = vunpack.c.l.s4 1966171168
        %v1544 = vunpack.c.0.s8 %v1543
        %v1545 = vlaneseq
        %v1546 = vshrl.u32 %v1545, 7
        %v1547 = vsub.s32 %v1544, %v1546
        %v1548 = vrot.slane %v1532, %v1547
        %v1550 = vunpack.c.l.s4 1966171168
        %v1551 = vunpack.c.0.s8 %v1550
        %v1552 = vlaneseq
        %v1553 = vshrl.u32 %v1552, 7
        %v1554 = vsub.s32 %v1551, %v1553
        %v1555 = vrot.slane %v1539, %v1554
        %v1557 = vunpack.c.l.s4 1966171168
        %v1558 = vunpack.c.0.s8 %v1557
        %v1559 = vlaneseq
        %v1560 = vshrl.u32 %v1559, 7
        %v1561 = vsub.s32 %v1558, %v1560
        %v1562 = vrot.slane %v1540, %v1561
        %v1564 = vunpack.c.l.s4 1966171168
        %v1565 = vunpack.c.0.s8 %v1564
        %v1566 = vlaneseq
        %v1567 = vshrl.u32 %v1566, 7
        %v1568 = vsub.s32 %v1565, %v1567
        %v1569 = vrot.slane %v1541, %v1568
        %v1570 = vcombine.high %v1548, %v1548
        %v1571 = vcombine.high %v1555, %v1555
        %v1572 = vcombine.high %v1562, %v1562
        %v1573 = vcombine.high %v1569, %v1569
        %v1574 = vcombine.high %v470, %v470
        %v1576 = vunpack.c.l.s4 1966171168
        %v1577 = vunpack.c.0.s8 %v1576
        %v1578 = vlaneseq
        %v1579 = vshrl.u32 %v1578, 7
        %v1580 = vsub.s32 %v1577, %v1579
        %v1581 = vrot.slane %v470, %v1580
        %v1583 = vunpack.c.l.s4 1966171168
        %v1584 = vunpack.c.0.s8 %v1583
        %v1585 = vlaneseq
        %v1586 = vshrl.u32 %v1585, 7
        %v1587 = vsub.s32 %v1584, %v1586
        %v1588 = vrot.slane %v1574, %v1587
        %v1589 = vcombine.high %v1581, %v1581
        %v1590 = vcombine.high %v1588, %v1588
        %v1592 = vunpack.c.l.s4 1966171168
        %v1593 = vunpack.c.0.s8 %v1592
        %v1594 = vlaneseq
        %v1595 = vshrl.u32 %v1594, 7
        %v1596 = vsub.s32 %v1593, %v1595
        %v1597 = vrot.slane %v1581, %v1596
        %v1599 = vunpack.c.l.s4 1966171168
        %v1600 = vunpack.c.0.s8 %v1599
        %v1601 = vlaneseq
        %v1602 = vshrl.u32 %v1601, 7
        %v1603 = vsub.s32 %v1600, %v1602
        %v1604 = vrot.slane %v1588, %v1603
        %v1606 = vunpack.c.l.s4 1966171168
        %v1607 = vunpack.c.0.s8 %v1606
        %v1608 = vlaneseq
        %v1609 = vshrl.u32 %v1608, 7
        %v1610 = vsub.s32 %v1607, %v1609
        %v1611 = vrot.slane %v1589, %v1610
        %v1613 = vunpack.c.l.s4 1966171168
        %v1614 = vunpack.c.0.s8 %v1613
        %v1615 = vlaneseq
        %v1616 = vshrl.u32 %v1615, 7
        %v1617 = vsub.s32 %v1614, %v1616
        %v1618 = vrot.slane %v1590, %v1617
        %v1619 = vcombine.high %v1597, %v1597
        %v1620 = vcombine.high %v1604, %v1604
        %v1621 = vcombine.high %v1611, %v1611
        %v1622 = vcombine.high %v1618, %v1618
        %v1623 = vcombine.high %v471, %v471
        %v1625 = vunpack.c.l.s4 1966171168
        %v1626 = vunpack.c.0.s8 %v1625
        %v1627 = vlaneseq
        %v1628 = vshrl.u32 %v1627, 7
        %v1629 = vsub.s32 %v1626, %v1628
        %v1630 = vrot.slane %v471, %v1629
        %v1632 = vunpack.c.l.s4 1966171168
        %v1633 = vunpack.c.0.s8 %v1632
        %v1634 = vlaneseq
        %v1635 = vshrl.u32 %v1634, 7
        %v1636 = vsub.s32 %v1633, %v1635
        %v1637 = vrot.slane %v1623, %v1636
        %v1638 = vcombine.high %v1630, %v1630
        %v1639 = vcombine.high %v1637, %v1637
        %v1641 = vunpack.c.l.s4 1966171168
        %v1642 = vunpack.c.0.s8 %v1641
        %v1643 = vlaneseq
        %v1644 = vshrl.u32 %v1643, 7
        %v1645 = vsub.s32 %v1642, %v1644
        %v1646 = vrot.slane %v1630, %v1645
        %v1648 = vunpack.c.l.s4 1966171168
        %v1649 = vunpack.c.0.s8 %v1648
        %v1650 = vlaneseq
        %v1651 = vshrl.u32 %v1650, 7
        %v1652 = vsub.s32 %v1649, %v1651
        %v1653 = vrot.slane %v1637, %v1652
        %v1655 = vunpack.c.l.s4 1966171168
        %v1656 = vunpack.c.0.s8 %v1655
        %v1657 = vlaneseq
        %v1658 = vshrl.u32 %v1657, 7
        %v1659 = vsub.s32 %v1656, %v1658
        %v1660 = vrot.slane %v1638, %v1659
        %v1662 = vunpack.c.l.s4 1966171168
        %v1663 = vunpack.c.0.s8 %v1662
        %v1664 = vlaneseq
        %v1665 = vshrl.u32 %v1664, 7
        %v1666 = vsub.s32 %v1663, %v1665
        %v1667 = vrot.slane %v1639, %v1666
        %v1668 = vcombine.high %v1646, %v1646
        %v1669 = vcombine.high %v1653, %v1653
        %v1670 = vcombine.high %v1660, %v1660
        %v1671 = vcombine.high %v1667, %v1667
        %v1672 = vcombine.high %v472, %v472
        %v1674 = vunpack.c.l.s4 1966171168
        %v1675 = vunpack.c.0.s8 %v1674
        %v1676 = vlaneseq
        %v1677 = vshrl.u32 %v1676, 7
        %v1678 = vsub.s32 %v1675, %v1677
        %v1679 = vrot.slane %v472, %v1678
        %v1681 = vunpack.c.l.s4 1966171168
        %v1682 = vunpack.c.0.s8 %v1681
        %v1683 = vlaneseq
        %v1684 = vshrl.u32 %v1683, 7
        %v1685 = vsub.s32 %v1682, %v1684
        %v1686 = vrot.slane %v1672, %v1685
        %v1687 = vcombine.high %v1679, %v1679
        %v1688 = vcombine.high %v1686, %v1686
        %v1690 = vunpack.c.l.s4 1966171168
        %v1691 = vunpack.c.0.s8 %v1690
        %v1692 = vlaneseq
        %v1693 = vshrl.u32 %v1692, 7
        %v1694 = vsub.s32 %v1691, %v1693
        %v1695 = vrot.slane %v1679, %v1694
        %v1697 = vunpack.c.l.s4 1966171168
        %v1698 = vunpack.c.0.s8 %v1697
        %v1699 = vlaneseq
        %v1700 = vshrl.u32 %v1699, 7
        %v1701 = vsub.s32 %v1698, %v1700
        %v1702 = vrot.slane %v1686, %v1701
        %v1704 = vunpack.c.l.s4 1966171168
        %v1705 = vunpack.c.0.s8 %v1704
        %v1706 = vlaneseq
        %v1707 = vshrl.u32 %v1706, 7
        %v1708 = vsub.s32 %v1705, %v1707
        %v1709 = vrot.slane %v1687, %v1708
        %v1711 = vunpack.c.l.s4 1966171168
        %v1712 = vunpack.c.0.s8 %v1711
        %v1713 = vlaneseq
        %v1714 = vshrl.u32 %v1713, 7
        %v1715 = vsub.s32 %v1712, %v1714
        %v1716 = vrot.slane %v1688, %v1715
        %v1717 = vcombine.high %v1695, %v1695
        %v1718 = vcombine.high %v1702, %v1702
        %v1719 = vcombine.high %v1709, %v1709
        %v1720 = vcombine.high %v1716, %v1716
        %v1721 = vcombine.high %v473, %v473
        %v1723 = vunpack.c.l.s4 1966171168
        %v1724 = vunpack.c.0.s8 %v1723
        %v1725 = vlaneseq
        %v1726 = vshrl.u32 %v1725, 7
        %v1727 = vsub.s32 %v1724, %v1726
        %v1728 = vrot.slane %v473, %v1727
        %v1730 = vunpack.c.l.s4 1966171168
        %v1731 = vunpack.c.0.s8 %v1730
        %v1732 = vlaneseq
        %v1733 = vshrl.u32 %v1732, 7
        %v1734 = vsub.s32 %v1731, %v1733
        %v1735 = vrot.slane %v1721, %v1734
        %v1736 = vcombine.high %v1728, %v1728
        %v1737 = vcombine.high %v1735, %v1735
        %v1739 = vunpack.c.l.s4 1966171168
        %v1740 = vunpack.c.0.s8 %v1739
        %v1741 = vlaneseq
        %v1742 = vshrl.u32 %v1741, 7
        %v1743 = vsub.s32 %v1740, %v1742
        %v1744 = vrot.slane %v1728, %v1743
        %v1746 = vunpack.c.l.s4 1966171168
        %v1747 = vunpack.c.0.s8 %v1746
        %v1748 = vlaneseq
        %v1749 = vshrl.u32 %v1748, 7
        %v1750 = vsub.s32 %v1747, %v1749
        %v1751 = vrot.slane %v1735, %v1750
        %v1753 = vunpack.c.l.s4 1966171168
        %v1754 = vunpack.c.0.s8 %v1753
        %v1755 = vlaneseq
        %v1756 = vshrl.u32 %v1755, 7
        %v1757 = vsub.s32 %v1754, %v1756
        %v1758 = vrot.slane %v1736, %v1757
        %v1760 = vunpack.c.l.s4 1966171168
        %v1761 = vunpack.c.0.s8 %v1760
        %v1762 = vlaneseq
        %v1763 = vshrl.u32 %v1762, 7
        %v1764 = vsub.s32 %v1761, %v1763
        %v1765 = vrot.slane %v1737, %v1764
        %v1766 = vcombine.high %v1744, %v1744
        %v1767 = vcombine.high %v1751, %v1751
        %v1768 = vcombine.high %v1758, %v1758
        %v1769 = vcombine.high %v1765, %v1765
        %v1770 = vcombine.high %v474, %v474
        %v1772 = vunpack.c.l.s4 1966171168
        %v1773 = vunpack.c.0.s8 %v1772
        %v1774 = vlaneseq
        %v1775 = vshrl.u32 %v1774, 7
        %v1776 = vsub.s32 %v1773, %v1775
        %v1777 = vrot.slane %v474, %v1776
        %v1779 = vunpack.c.l.s4 1966171168
        %v1780 = vunpack.c.0.s8 %v1779
        %v1781 = vlaneseq
        %v1782 = vshrl.u32 %v1781, 7
        %v1783 = vsub.s32 %v1780, %v1782
        %v1784 = vrot.slane %v1770, %v1783
        %v1785 = vcombine.high %v1777, %v1777
        %v1786 = vcombine.high %v1784, %v1784
        %v1788 = vunpack.c.l.s4 1966171168
        %v1789 = vunpack.c.0.s8 %v1788
        %v1790 = vlaneseq
        %v1791 = vshrl.u32 %v1790, 7
        %v1792 = vsub.s32 %v1789, %v1791
        %v1793 = vrot.slane %v1777, %v1792
        %v1795 = vunpack.c.l.s4 1966171168
        %v1796 = vunpack.c.0.s8 %v1795
        %v1797 = vlaneseq
        %v1798 = vshrl.u32 %v1797, 7
        %v1799 = vsub.s32 %v1796, %v1798
        %v1800 = vrot.slane %v1784, %v1799
        %v1802 = vunpack.c.l.s4 1966171168
        %v1803 = vunpack.c.0.s8 %v1802
        %v1804 = vlaneseq
        %v1805 = vshrl.u32 %v1804, 7
        %v1806 = vsub.s32 %v1803, %v1805
        %v1807 = vrot.slane %v1785, %v1806
        %v1809 = vunpack.c.l.s4 1966171168
        %v1810 = vunpack.c.0.s8 %v1809
        %v1811 = vlaneseq
        %v1812 = vshrl.u32 %v1811, 7
        %v1813 = vsub.s32 %v1810, %v1812
        %v1814 = vrot.slane %v1786, %v1813
        %v1815 = vcombine.high %v1793, %v1793
        %v1816 = vcombine.high %v1800, %v1800
        %v1817 = vcombine.high %v1807, %v1807
        %v1818 = vcombine.high %v1814, %v1814
        %v1819 = vcombine.high %v475, %v475
        %v1821 = vunpack.c.l.s4 1966171168
        %v1822 = vunpack.c.0.s8 %v1821
        %v1823 = vlaneseq
        %v1824 = vshrl.u32 %v1823, 7
        %v1825 = vsub.s32 %v1822, %v1824
        %v1826 = vrot.slane %v475, %v1825
        %v1828 = vunpack.c.l.s4 1966171168
        %v1829 = vunpack.c.0.s8 %v1828
        %v1830 = vlaneseq
        %v1831 = vshrl.u32 %v1830, 7
        %v1832 = vsub.s32 %v1829, %v1831
        %v1833 = vrot.slane %v1819, %v1832
        %v1834 = vcombine.high %v1826, %v1826
        %v1835 = vcombine.high %v1833, %v1833
        %v1837 = vunpack.c.l.s4 1966171168
        %v1838 = vunpack.c.0.s8 %v1837
        %v1839 = vlaneseq
        %v1840 = vshrl.u32 %v1839, 7
        %v1841 = vsub.s32 %v1838, %v1840
        %v1842 = vrot.slane %v1826, %v1841
        %v1844 = vunpack.c.l.s4 1966171168
        %v1845 = vunpack.c.0.s8 %v1844
        %v1846 = vlaneseq
        %v1847 = vshrl.u32 %v1846, 7
        %v1848 = vsub.s32 %v1845, %v1847
        %v1849 = vrot.slane %v1833, %v1848
        %v1851 = vunpack.c.l.s4 1966171168
        %v1852 = vunpack.c.0.s8 %v1851
        %v1853 = vlaneseq
        %v1854 = vshrl.u32 %v1853, 7
        %v1855 = vsub.s32 %v1852, %v1854
        %v1856 = vrot.slane %v1834, %v1855
        %v1858 = vunpack.c.l.s4 1966171168
        %v1859 = vunpack.c.0.s8 %v1858
        %v1860 = vlaneseq
        %v1861 = vshrl.u32 %v1860, 7
        %v1862 = vsub.s32 %v1859, %v1861
        %v1863 = vrot.slane %v1835, %v1862
        %v1864 = vcombine.high %v1842, %v1842
        %v1865 = vcombine.high %v1849, %v1849
        %v1866 = vcombine.high %v1856, %v1856
        %v1867 = vcombine.high %v1863, %v1863
        %v1868 = vcombine.high %v476, %v476
        %v1870 = vunpack.c.l.s4 1966171168
        %v1871 = vunpack.c.0.s8 %v1870
        %v1872 = vlaneseq
        %v1873 = vshrl.u32 %v1872, 7
        %v1874 = vsub.s32 %v1871, %v1873
        %v1875 = vrot.slane %v476, %v1874
        %v1877 = vunpack.c.l.s4 1966171168
        %v1878 = vunpack.c.0.s8 %v1877
        %v1879 = vlaneseq
        %v1880 = vshrl.u32 %v1879, 7
        %v1881 = vsub.s32 %v1878, %v1880
        %v1882 = vrot.slane %v1868, %v1881
        %v1883 = vcombine.high %v1875, %v1875
        %v1884 = vcombine.high %v1882, %v1882
        %v1886 = vunpack.c.l.s4 1966171168
        %v1887 = vunpack.c.0.s8 %v1886
        %v1888 = vlaneseq
        %v1889 = vshrl.u32 %v1888, 7
        %v1890 = vsub.s32 %v1887, %v1889
        %v1891 = vrot.slane %v1875, %v1890
        %v1893 = vunpack.c.l.s4 1966171168
        %v1894 = vunpack.c.0.s8 %v1893
        %v1895 = vlaneseq
        %v1896 = vshrl.u32 %v1895, 7
        %v1897 = vsub.s32 %v1894, %v1896
        %v1898 = vrot.slane %v1882, %v1897
        %v1900 = vunpack.c.l.s4 1966171168
        %v1901 = vunpack.c.0.s8 %v1900
        %v1902 = vlaneseq
        %v1903 = vshrl.u32 %v1902, 7
        %v1904 = vsub.s32 %v1901, %v1903
        %v1905 = vrot.slane %v1883, %v1904
        %v1907 = vunpack.c.l.s4 1966171168
        %v1908 = vunpack.c.0.s8 %v1907
        %v1909 = vlaneseq
        %v1910 = vshrl.u32 %v1909, 7
        %v1911 = vsub.s32 %v1908, %v1910
        %v1912 = vrot.slane %v1884, %v1911
        %v1913 = vcombine.high %v1891, %v1891
        %v1914 = vcombine.high %v1898, %v1898
        %v1915 = vcombine.high %v1905, %v1905
        %v1916 = vcombine.high %v1912, %v1912
        %v1917 = vcombine.high %v477, %v477
        %v1919 = vunpack.c.l.s4 1966171168
        %v1920 = vunpack.c.0.s8 %v1919
        %v1921 = vlaneseq
        %v1922 = vshrl.u32 %v1921, 7
        %v1923 = vsub.s32 %v1920, %v1922
        %v1924 = vrot.slane %v477, %v1923
        %v1926 = vunpack.c.l.s4 1966171168
        %v1927 = vunpack.c.0.s8 %v1926
        %v1928 = vlaneseq
        %v1929 = vshrl.u32 %v1928, 7
        %v1930 = vsub.s32 %v1927, %v1929
        %v1931 = vrot.slane %v1917, %v1930
        %v1932 = vcombine.high %v1924, %v1924
        %v1933 = vcombine.high %v1931, %v1931
        %v1935 = vunpack.c.l.s4 1966171168
        %v1936 = vunpack.c.0.s8 %v1935
        %v1937 = vlaneseq
        %v1938 = vshrl.u32 %v1937, 7
        %v1939 = vsub.s32 %v1936, %v1938
        %v1940 = vrot.slane %v1924, %v1939
        %v1942 = vunpack.c.l.s4 1966171168
        %v1943 = vunpack.c.0.s8 %v1942
        %v1944 = vlaneseq
        %v1945 = vshrl.u32 %v1944, 7
        %v1946 = vsub.s32 %v1943, %v1945
        %v1947 = vrot.slane %v1931, %v1946
        %v1949 = vunpack.c.l.s4 1966171168
        %v1950 = vunpack.c.0.s8 %v1949
        %v1951 = vlaneseq
        %v1952 = vshrl.u32 %v1951, 7
        %v1953 = vsub.s32 %v1950, %v1952
        %v1954 = vrot.slane %v1932, %v1953
        %v1956 = vunpack.c.l.s4 1966171168
        %v1957 = vunpack.c.0.s8 %v1956
        %v1958 = vlaneseq
        %v1959 = vshrl.u32 %v1958, 7
        %v1960 = vsub.s32 %v1957, %v1959
        %v1961 = vrot.slane %v1933, %v1960
        %v1962 = vcombine.high %v1940, %v1940
        %v1963 = vcombine.high %v1947, %v1947
        %v1964 = vcombine.high %v1954, %v1954
        %v1965 = vcombine.high %v1961, %v1961
        %v1966 = vcombine.high %v478, %v478
        %v1968 = vunpack.c.l.s4 1966171168
        %v1969 = vunpack.c.0.s8 %v1968
        %v1970 = vlaneseq
        %v1971 = vshrl.u32 %v1970, 7
        %v1972 = vsub.s32 %v1969, %v1971
        %v1973 = vrot.slane %v478, %v1972
        %v1975 = vunpack.c.l.s4 1966171168
        %v1976 = vunpack.c.0.s8 %v1975
        %v1977 = vlaneseq
        %v1978 = vshrl.u32 %v1977, 7
        %v1979 = vsub.s32 %v1976, %v1978
        %v1980 = vrot.slane %v1966, %v1979
        %v1981 = vcombine.high %v1973, %v1973
        %v1982 = vcombine.high %v1980, %v1980
        %v1984 = vunpack.c.l.s4 1966171168
        %v1985 = vunpack.c.0.s8 %v1984
        %v1986 = vlaneseq
        %v1987 = vshrl.u32 %v1986, 7
        %v1988 = vsub.s32 %v1985, %v1987
        %v1989 = vrot.slane %v1973, %v1988
        %v1991 = vunpack.c.l.s4 1966171168
        %v1992 = vunpack.c.0.s8 %v1991
        %v1993 = vlaneseq
        %v1994 = vshrl.u32 %v1993, 7
        %v1995 = vsub.s32 %v1992, %v1994
        %v1996 = vrot.slane %v1980, %v1995
        %v1998 = vunpack.c.l.s4 1966171168
        %v1999 = vunpack.c.0.s8 %v1998
        %v2000 = vlaneseq
        %v2001 = vshrl.u32 %v2000, 7
        %v2002 = vsub.s32 %v1999, %v2001
        %v2003 = vrot.slane %v1981, %v2002
        %v2005 = vunpack.c.l.s4 1966171168
        %v2006 = vunpack.c.0.s8 %v2005
        %v2007 = vlaneseq
        %v2008 = vshrl.u32 %v2007, 7
        %v2009 = vsub.s32 %v2006, %v2008
        %v2010 = vrot.slane %v1982, %v2009
        %v2011 = vcombine.high %v1989, %v1989
        %v2012 = vcombine.high %v1996, %v1996
        %v2013 = vcombine.high %v2003, %v2003
        %v2014 = vcombine.high %v2010, %v2010
        %v2015 = vcombine.high %v479, %v479
        %v2017 = vunpack.c.l.s4 1966171168
        %v2018 = vunpack.c.0.s8 %v2017
        %v2019 = vlaneseq
        %v2020 = vshrl.u32 %v2019, 7
        %v2021 = vsub.s32 %v2018, %v2020
        %v2022 = vrot.slane %v479, %v2021
        %v2024 = vunpack.c.l.s4 1966171168
        %v2025 = vunpack.c.0.s8 %v2024
        %v2026 = vlaneseq
        %v2027 = vshrl.u32 %v2026, 7
        %v2028 = vsub.s32 %v2025, %v2027
        %v2029 = vrot.slane %v2015, %v2028
        %v2030 = vcombine.high %v2022, %v2022
        %v2031 = vcombine.high %v2029, %v2029
        %v2033 = vunpack.c.l.s4 1966171168
        %v2034 = vunpack.c.0.s8 %v2033
        %v2035 = vlaneseq
        %v2036 = vshrl.u32 %v2035, 7
        %v2037 = vsub.s32 %v2034, %v2036
        %v2038 = vrot.slane %v2022, %v2037
        %v2040 = vunpack.c.l.s4 1966171168
        %v2041 = vunpack.c.0.s8 %v2040
        %v2042 = vlaneseq
        %v2043 = vshrl.u32 %v2042, 7
        %v2044 = vsub.s32 %v2041, %v2043
        %v2045 = vrot.slane %v2029, %v2044
        %v2047 = vunpack.c.l.s4 1966171168
        %v2048 = vunpack.c.0.s8 %v2047
        %v2049 = vlaneseq
        %v2050 = vshrl.u32 %v2049, 7
        %v2051 = vsub.s32 %v2048, %v2050
        %v2052 = vrot.slane %v2030, %v2051
        %v2054 = vunpack.c.l.s4 1966171168
        %v2055 = vunpack.c.0.s8 %v2054
        %v2056 = vlaneseq
        %v2057 = vshrl.u32 %v2056, 7
        %v2058 = vsub.s32 %v2055, %v2057
        %v2059 = vrot.slane %v2031, %v2058
        %v2060 = vcombine.high %v2038, %v2038
        %v2061 = vcombine.high %v2045, %v2045
        %v2062 = vcombine.high %v2052, %v2052
        %v2063 = vcombine.high %v2059, %v2059
        %v2064 = vcombine.high %v480, %v480
        %v2066 = vunpack.c.l.s4 1966171168
        %v2067 = vunpack.c.0.s8 %v2066
        %v2068 = vlaneseq
        %v2069 = vshrl.u32 %v2068, 7
        %v2070 = vsub.s32 %v2067, %v2069
        %v2071 = vrot.slane %v480, %v2070
        %v2073 = vunpack.c.l.s4 1966171168
        %v2074 = vunpack.c.0.s8 %v2073
        %v2075 = vlaneseq
        %v2076 = vshrl.u32 %v2075, 7
        %v2077 = vsub.s32 %v2074, %v2076
        %v2078 = vrot.slane %v2064, %v2077
        %v2079 = vcombine.high %v2071, %v2071
        %v2080 = vcombine.high %v2078, %v2078
        %v2082 = vunpack.c.l.s4 1966171168
        %v2083 = vunpack.c.0.s8 %v2082
        %v2084 = vlaneseq
        %v2085 = vshrl.u32 %v2084, 7
        %v2086 = vsub.s32 %v2083, %v2085
        %v2087 = vrot.slane %v2071, %v2086
        %v2089 = vunpack.c.l.s4 1966171168
        %v2090 = vunpack.c.0.s8 %v2089
        %v2091 = vlaneseq
        %v2092 = vshrl.u32 %v2091, 7
        %v2093 = vsub.s32 %v2090, %v2092
        %v2094 = vrot.slane %v2078, %v2093
        %v2096 = vunpack.c.l.s4 1966171168
        %v2097 = vunpack.c.0.s8 %v2096
        %v2098 = vlaneseq
        %v2099 = vshrl.u32 %v2098, 7
        %v2100 = vsub.s32 %v2097, %v2099
        %v2101 = vrot.slane %v2079, %v2100
        %v2103 = vunpack.c.l.s4 1966171168
        %v2104 = vunpack.c.0.s8 %v2103
        %v2105 = vlaneseq
        %v2106 = vshrl.u32 %v2105, 7
        %v2107 = vsub.s32 %v2104, %v2106
        %v2108 = vrot.slane %v2080, %v2107
        %v2109 = vcombine.high %v2087, %v2087
        %v2110 = vcombine.high %v2094, %v2094
        %v2111 = vcombine.high %v2101, %v2101
        %v2112 = vcombine.high %v2108, %v2108
        %v2113 = vcombine.high %v481, %v481
        %v2115 = vunpack.c.l.s4 1966171168
        %v2116 = vunpack.c.0.s8 %v2115
        %v2117 = vlaneseq
        %v2118 = vshrl.u32 %v2117, 7
        %v2119 = vsub.s32 %v2116, %v2118
        %v2120 = vrot.slane %v481, %v2119
        %v2122 = vunpack.c.l.s4 1966171168
        %v2123 = vunpack.c.0.s8 %v2122
        %v2124 = vlaneseq
        %v2125 = vshrl.u32 %v2124, 7
        %v2126 = vsub.s32 %v2123, %v2125
        %v2127 = vrot.slane %v2113, %v2126
        %v2128 = vcombine.high %v2120, %v2120
        %v2129 = vcombine.high %v2127, %v2127
        %v2131 = vunpack.c.l.s4 1966171168
        %v2132 = vunpack.c.0.s8 %v2131
        %v2133 = vlaneseq
        %v2134 = vshrl.u32 %v2133, 7
        %v2135 = vsub.s32 %v2132, %v2134
        %v2136 = vrot.slane %v2120, %v2135
        %v2138 = vunpack.c.l.s4 1966171168
        %v2139 = vunpack.c.0.s8 %v2138
        %v2140 = vlaneseq
        %v2141 = vshrl.u32 %v2140, 7
        %v2142 = vsub.s32 %v2139, %v2141
        %v2143 = vrot.slane %v2127, %v2142
        %v2145 = vunpack.c.l.s4 1966171168
        %v2146 = vunpack.c.0.s8 %v2145
        %v2147 = vlaneseq
        %v2148 = vshrl.u32 %v2147, 7
        %v2149 = vsub.s32 %v2146, %v2148
        %v2150 = vrot.slane %v2128, %v2149
        %v2152 = vunpack.c.l.s4 1966171168
        %v2153 = vunpack.c.0.s8 %v2152
        %v2154 = vlaneseq
        %v2155 = vshrl.u32 %v2154, 7
        %v2156 = vsub.s32 %v2153, %v2155
        %v2157 = vrot.slane %v2129, %v2156
        %v2158 = vcombine.high %v2136, %v2136
        %v2159 = vcombine.high %v2143, %v2143
        %v2160 = vcombine.high %v2150, %v2150
        %v2161 = vcombine.high %v2157, %v2157
        %v2162 = vcombine.high %v482, %v482
        %v2164 = vunpack.c.l.s4 1966171168
        %v2165 = vunpack.c.0.s8 %v2164
        %v2166 = vlaneseq
        %v2167 = vshrl.u32 %v2166, 7
        %v2168 = vsub.s32 %v2165, %v2167
        %v2169 = vrot.slane %v482, %v2168
        %v2171 = vunpack.c.l.s4 1966171168
        %v2172 = vunpack.c.0.s8 %v2171
        %v2173 = vlaneseq
        %v2174 = vshrl.u32 %v2173, 7
        %v2175 = vsub.s32 %v2172, %v2174
        %v2176 = vrot.slane %v2162, %v2175
        %v2177 = vcombine.high %v2169, %v2169
        %v2178 = vcombine.high %v2176, %v2176
        %v2180 = vunpack.c.l.s4 1966171168
        %v2181 = vunpack.c.0.s8 %v2180
        %v2182 = vlaneseq
        %v2183 = vshrl.u32 %v2182, 7
        %v2184 = vsub.s32 %v2181, %v2183
        %v2185 = vrot.slane %v2169, %v2184
        %v2187 = vunpack.c.l.s4 1966171168
        %v2188 = vunpack.c.0.s8 %v2187
        %v2189 = vlaneseq
        %v2190 = vshrl.u32 %v2189, 7
        %v2191 = vsub.s32 %v2188, %v2190
        %v2192 = vrot.slane %v2176, %v2191
        %v2194 = vunpack.c.l.s4 1966171168
        %v2195 = vunpack.c.0.s8 %v2194
        %v2196 = vlaneseq
        %v2197 = vshrl.u32 %v2196, 7
        %v2198 = vsub.s32 %v2195, %v2197
        %v2199 = vrot.slane %v2177, %v2198
        %v2201 = vunpack.c.l.s4 1966171168
        %v2202 = vunpack.c.0.s8 %v2201
        %v2203 = vlaneseq
        %v2204 = vshrl.u32 %v2203, 7
        %v2205 = vsub.s32 %v2202, %v2204
        %v2206 = vrot.slane %v2178, %v2205
        %v2207 = vcombine.high %v2185, %v2185
        %v2208 = vcombine.high %v2192, %v2192
        %v2209 = vcombine.high %v2199, %v2199
        %v2210 = vcombine.high %v2206, %v2206
        %v2211 = vlaneseq
        %v2212 = vshrl.u32 %v2211, 7
        %v2213 = vsub.s32 0, %v2212
        %v2214 = vrot.slane %v1450, %v2213
        %v2215 = vlaneseq
        %v2216 = vshrl.u32 %v2215, 7
        %v2217 = vsub.s32 0, %v2216
        %v2218 = vrot.slane %v1464, %v2217
        %v2219 = vlaneseq
        %v2220 = vshrl.u32 %v2219, 7
        %v2221 = vsub.s32 0, %v2220
        %v2222 = vrot.slane %v1472, %v2221
        %v2223 = vlaneseq
        %v2224 = vshrl.u32 %v2223, 7
        %v2225 = vsub.s32 0, %v2224
        %v2226 = vrot.slane %v1474, %v2225
        %v2227 = vlaneseq
        %v2228 = vshrl.u32 %v2227, 7
        %v2229 = vsub.s32 0, %v2228
        %v2230 = vrot.slane %v1457, %v2229
        %v2231 = vlaneseq
        %v2232 = vshrl.u32 %v2231, 7
        %v2233 = vsub.s32 0, %v2232
        %v2234 = vrot.slane %v1471, %v2233
        %v2235 = vlaneseq
        %v2236 = vshrl.u32 %v2235, 7
        %v2237 = vsub.s32 0, %v2236
        %v2238 = vrot.slane %v1473, %v2237
        %v2239 = vlaneseq
        %v2240 = vshrl.u32 %v2239, 7
        %v2241 = vsub.s32 0, %v2240
        %v2242 = vrot.slane %v1475, %v2241
        %v2243 = vlaneseq
        %v2244 = vshrl.u32 %v2243, 7
        %v2245 = vsub.s32 0, %v2244
        %v2246 = vrot.slane %v1499, %v2245
        %v2247 = vlaneseq
        %v2248 = vshrl.u32 %v2247, 7
        %v2249 = vsub.s32 0, %v2248
        %v2250 = vrot.slane %v1513, %v2249
        %v2251 = vlaneseq
        %v2252 = vshrl.u32 %v2251, 7
        %v2253 = vsub.s32 0, %v2252
        %v2254 = vrot.slane %v1521, %v2253
        %v2255 = vlaneseq
        %v2256 = vshrl.u32 %v2255, 7
        %v2257 = vsub.s32 0, %v2256
        %v2258 = vrot.slane %v1523, %v2257
        %v2259 = vlaneseq
        %v2260 = vshrl.u32 %v2259, 7
        %v2261 = vsub.s32 0, %v2260
        %v2262 = vrot.slane %v1506, %v2261
        %v2263 = vlaneseq
        %v2264 = vshrl.u32 %v2263, 7
        %v2265 = vsub.s32 0, %v2264
        %v2266 = vrot.slane %v1520, %v2265
        %v2267 = vlaneseq
        %v2268 = vshrl.u32 %v2267, 7
        %v2269 = vsub.s32 0, %v2268
        %v2270 = vrot.slane %v1522, %v2269
        %v2271 = vlaneseq
        %v2272 = vshrl.u32 %v2271, 7
        %v2273 = vsub.s32 0, %v2272
        %v2274 = vrot.slane %v1524, %v2273
        %v2275 = vlaneseq
        %v2276 = vshrl.u32 %v2275, 7
        %v2277 = vsub.s32 0, %v2276
        %v2278 = vrot.slane %v1548, %v2277
        %v2279 = vlaneseq
        %v2280 = vshrl.u32 %v2279, 7
        %v2281 = vsub.s32 0, %v2280
        %v2282 = vrot.slane %v1562, %v2281
        %v2283 = vlaneseq
        %v2284 = vshrl.u32 %v2283, 7
        %v2285 = vsub.s32 0, %v2284
        %v2286 = vrot.slane %v1570, %v2285
        %v2287 = vlaneseq
        %v2288 = vshrl.u32 %v2287, 7
        %v2289 = vsub.s32 0, %v2288
        %v2290 = vrot.slane %v1572, %v2289
        %v2291 = vlaneseq
        %v2292 = vshrl.u32 %v2291, 7
        %v2293 = vsub.s32 0, %v2292
        %v2294 = vrot.slane %v1555, %v2293
        %v2295 = vlaneseq
        %v2296 = vshrl.u32 %v2295, 7
        %v2297 = vsub.s32 0, %v2296
        %v2298 = vrot.slane %v1569, %v2297
        %v2299 = vlaneseq
        %v2300 = vshrl.u32 %v2299, 7
        %v2301 = vsub.s32 0, %v2300
        %v2302 = vrot.slane %v1571, %v2301
        %v2303 = vlaneseq
        %v2304 = vshrl.u32 %v2303, 7
        %v2305 = vsub.s32 0, %v2304
        %v2306 = vrot.slane %v1573, %v2305
        %v2307 = vlaneseq
        %v2308 = vshrl.u32 %v2307, 7
        %v2309 = vsub.s32 0, %v2308
        %v2310 = vrot.slane %v1597, %v2309
        %v2311 = vlaneseq
        %v2312 = vshrl.u32 %v2311, 7
        %v2313 = vsub.s32 0, %v2312
        %v2314 = vrot.slane %v1611, %v2313
        %v2315 = vlaneseq
        %v2316 = vshrl.u32 %v2315, 7
        %v2317 = vsub.s32 0, %v2316
        %v2318 = vrot.slane %v1619, %v2317
        %v2319 = vlaneseq
        %v2320 = vshrl.u32 %v2319, 7
        %v2321 = vsub.s32 0, %v2320
        %v2322 = vrot.slane %v1621, %v2321
        %v2323 = vlaneseq
        %v2324 = vshrl.u32 %v2323, 7
        %v2325 = vsub.s32 0, %v2324
        %v2326 = vrot.slane %v1604, %v2325
        %v2327 = vlaneseq
        %v2328 = vshrl.u32 %v2327, 7
        %v2329 = vsub.s32 0, %v2328
        %v2330 = vrot.slane %v1618, %v2329
        %v2331 = vlaneseq
        %v2332 = vshrl.u32 %v2331, 7
        %v2333 = vsub.s32 0, %v2332
        %v2334 = vrot.slane %v1620, %v2333
        %v2335 = vlaneseq
        %v2336 = vshrl.u32 %v2335, 7
        %v2337 = vsub.s32 0, %v2336
        %v2338 = vrot.slane %v1622, %v2337
        %v2339 = vlaneseq
        %v2340 = vshrl.u32 %v2339, 7
        %v2341 = vsub.s32 0, %v2340
        %v2342 = vrot.slane %v1646, %v2341
        %v2343 = vlaneseq
        %v2344 = vshrl.u32 %v2343, 7
        %v2345 = vsub.s32 0, %v2344
        %v2346 = vrot.slane %v1660, %v2345
        %v2347 = vlaneseq
        %v2348 = vshrl.u32 %v2347, 7
        %v2349 = vsub.s32 0, %v2348
        %v2350 = vrot.slane %v1668, %v2349
        %v2351 = vlaneseq
        %v2352 = vshrl.u32 %v2351, 7
        %v2353 = vsub.s32 0, %v2352
        %v2354 = vrot.slane %v1670, %v2353
        %v2355 = vlaneseq
        %v2356 = vshrl.u32 %v2355, 7
        %v2357 = vsub.s32 0, %v2356
        %v2358 = vrot.slane %v1653, %v2357
        %v2359 = vlaneseq
        %v2360 = vshrl.u32 %v2359, 7
        %v2361 = vsub.s32 0, %v2360
        %v2362 = vrot.slane %v1667, %v2361
        %v2363 = vlaneseq
        %v2364 = vshrl.u32 %v2363, 7
        %v2365 = vsub.s32 0, %v2364
        %v2366 = vrot.slane %v1669, %v2365
        %v2367 = vlaneseq
        %v2368 = vshrl.u32 %v2367, 7
        %v2369 = vsub.s32 0, %v2368
        %v2370 = vrot.slane %v1671, %v2369
        %v2371 = vlaneseq
        %v2372 = vshrl.u32 %v2371, 7
        %v2373 = vsub.s32 0, %v2372
        %v2374 = vrot.slane %v1695, %v2373
        %v2375 = vlaneseq
        %v2376 = vshrl.u32 %v2375, 7
        %v2377 = vsub.s32 0, %v2376
        %v2378 = vrot.slane %v1709, %v2377
        %v2379 = vlaneseq
        %v2380 = vshrl.u32 %v2379, 7
        %v2381 = vsub.s32 0, %v2380
        %v2382 = vrot.slane %v1717, %v2381
        %v2383 = vlaneseq
        %v2384 = vshrl.u32 %v2383, 7
        %v2385 = vsub.s32 0, %v2384
        %v2386 = vrot.slane %v1719, %v2385
        %v2387 = vlaneseq
        %v2388 = vshrl.u32 %v2387, 7
        %v2389 = vsub.s32 0, %v2388
        %v2390 = vrot.slane %v1702, %v2389
        %v2391 = vlaneseq
        %v2392 = vshrl.u32 %v2391, 7
        %v2393 = vsub.s32 0, %v2392
        %v2394 = vrot.slane %v1716, %v2393
        %v2395 = vlaneseq
        %v2396 = vshrl.u32 %v2395, 7
        %v2397 = vsub.s32 0, %v2396
        %v2398 = vrot.slane %v1718, %v2397
        %v2399 = vlaneseq
        %v2400 = vshrl.u32 %v2399, 7
        %v2401 = vsub.s32 0, %v2400
        %v2402 = vrot.slane %v1720, %v2401
        %v2403 = vlaneseq
        %v2404 = vshrl.u32 %v2403, 7
        %v2405 = vsub.s32 0, %v2404
        %v2406 = vrot.slane %v1744, %v2405
        %v2407 = vlaneseq
        %v2408 = vshrl.u32 %v2407, 7
        %v2409 = vsub.s32 0, %v2408
        %v2410 = vrot.slane %v1758, %v2409
        %v2411 = vlaneseq
        %v2412 = vshrl.u32 %v2411, 7
        %v2413 = vsub.s32 0, %v2412
        %v2414 = vrot.slane %v1766, %v2413
        %v2415 = vlaneseq
        %v2416 = vshrl.u32 %v2415, 7
        %v2417 = vsub.s32 0, %v2416
        %v2418 = vrot.slane %v1768, %v2417
        %v2419 = vlaneseq
        %v2420 = vshrl.u32 %v2419, 7
        %v2421 = vsub.s32 0, %v2420
        %v2422 = vrot.slane %v1751, %v2421
        %v2423 = vlaneseq
        %v2424 = vshrl.u32 %v2423, 7
        %v2425 = vsub.s32 0, %v2424
        %v2426 = vrot.slane %v1765, %v2425
        %v2427 = vlaneseq
        %v2428 = vshrl.u32 %v2427, 7
        %v2429 = vsub.s32 0, %v2428
        %v2430 = vrot.slane %v1767, %v2429
        %v2431 = vlaneseq
        %v2432 = vshrl.u32 %v2431, 7
        %v2433 = vsub.s32 0, %v2432
        %v2434 = vrot.slane %v1769, %v2433
        %v2435 = vlaneseq
        %v2436 = vshrl.u32 %v2435, 7
        %v2437 = vsub.s32 0, %v2436
        %v2438 = vrot.slane %v1793, %v2437
        %v2439 = vlaneseq
        %v2440 = vshrl.u32 %v2439, 7
        %v2441 = vsub.s32 0, %v2440
        %v2442 = vrot.slane %v1807, %v2441
        %v2443 = vlaneseq
        %v2444 = vshrl.u32 %v2443, 7
        %v2445 = vsub.s32 0, %v2444
        %v2446 = vrot.slane %v1815, %v2445
        %v2447 = vlaneseq
        %v2448 = vshrl.u32 %v2447, 7
        %v2449 = vsub.s32 0, %v2448
        %v2450 = vrot.slane %v1817, %v2449
        %v2451 = vlaneseq
        %v2452 = vshrl.u32 %v2451, 7
        %v2453 = vsub.s32 0, %v2452
        %v2454 = vrot.slane %v1800, %v2453
        %v2455 = vlaneseq
        %v2456 = vshrl.u32 %v2455, 7
        %v2457 = vsub.s32 0, %v2456
        %v2458 = vrot.slane %v1814, %v2457
        %v2459 = vlaneseq
        %v2460 = vshrl.u32 %v2459, 7
        %v2461 = vsub.s32 0, %v2460
        %v2462 = vrot.slane %v1816, %v2461
        %v2463 = vlaneseq
        %v2464 = vshrl.u32 %v2463, 7
        %v2465 = vsub.s32 0, %v2464
        %v2466 = vrot.slane %v1818, %v2465
        %v2467 = vlaneseq
        %v2468 = vshrl.u32 %v2467, 7
        %v2469 = vsub.s32 0, %v2468
        %v2470 = vrot.slane %v1842, %v2469
        %v2471 = vlaneseq
        %v2472 = vshrl.u32 %v2471, 7
        %v2473 = vsub.s32 0, %v2472
        %v2474 = vrot.slane %v1856, %v2473
        %v2475 = vlaneseq
        %v2476 = vshrl.u32 %v2475, 7
        %v2477 = vsub.s32 0, %v2476
        %v2478 = vrot.slane %v1864, %v2477
        %v2479 = vlaneseq
        %v2480 = vshrl.u32 %v2479, 7
        %v2481 = vsub.s32 0, %v2480
        %v2482 = vrot.slane %v1866, %v2481
        %v2483 = vlaneseq
        %v2484 = vshrl.u32 %v2483, 7
        %v2485 = vsub.s32 0, %v2484
        %v2486 = vrot.slane %v1849, %v2485
        %v2487 = vlaneseq
        %v2488 = vshrl.u32 %v2487, 7
        %v2489 = vsub.s32 0, %v2488
        %v2490 = vrot.slane %v1863, %v2489
        %v2491 = vlaneseq
        %v2492 = vshrl.u32 %v2491, 7
        %v2493 = vsub.s32 0, %v2492
        %v2494 = vrot.slane %v1865, %v2493
        %v2495 = vlaneseq
        %v2496 = vshrl.u32 %v2495, 7
        %v2497 = vsub.s32 0, %v2496
        %v2498 = vrot.slane %v1867, %v2497
        %v2499 = vlaneseq
        %v2500 = vshrl.u32 %v2499, 7
        %v2501 = vsub.s32 0, %v2500
        %v2502 = vrot.slane %v1891, %v2501
        %v2503 = vlaneseq
        %v2504 = vshrl.u32 %v2503, 7
        %v2505 = vsub.s32 0, %v2504
        %v2506 = vrot.slane %v1905, %v2505
        %v2507 = vlaneseq
        %v2508 = vshrl.u32 %v2507, 7
        %v2509 = vsub.s32 0, %v2508
        %v2510 = vrot.slane %v1913, %v2509
        %v2511 = vlaneseq
        %v2512 = vshrl.u32 %v2511, 7
        %v2513 = vsub.s32 0, %v2512
        %v2514 = vrot.slane %v1915, %v2513
        %v2515 = vlaneseq
        %v2516 = vshrl.u32 %v2515, 7
        %v2517 = vsub.s32 0, %v2516
        %v2518 = vrot.slane %v1898, %v2517
        %v2519 = vlaneseq
        %v2520 = vshrl.u32 %v2519, 7
        %v2521 = vsub.s32 0, %v2520
        %v2522 = vrot.slane %v1912, %v2521
        %v2523 = vlaneseq
        %v2524 = vshrl.u32 %v2523, 7
        %v2525 = vsub.s32 0, %v2524
        %v2526 = vrot.slane %v1914, %v2525
        %v2527 = vlaneseq
        %v2528 = vshrl.u32 %v2527, 7
        %v2529 = vsub.s32 0, %v2528
        %v2530 = vrot.slane %v1916, %v2529
        %v2531 = vlaneseq
        %v2532 = vshrl.u32 %v2531, 7
        %v2533 = vsub.s32 0, %v2532
        %v2534 = vrot.slane %v1940, %v2533
        %v2535 = vlaneseq
        %v2536 = vshrl.u32 %v2535, 7
        %v2537 = vsub.s32 0, %v2536
        %v2538 = vrot.slane %v1954, %v2537
        %v2539 = vlaneseq
        %v2540 = vshrl.u32 %v2539, 7
        %v2541 = vsub.s32 0, %v2540
        %v2542 = vrot.slane %v1962, %v2541
        %v2543 = vlaneseq
        %v2544 = vshrl.u32 %v2543, 7
        %v2545 = vsub.s32 0, %v2544
        %v2546 = vrot.slane %v1964, %v2545
        %v2547 = vlaneseq
        %v2548 = vshrl.u32 %v2547, 7
        %v2549 = vsub.s32 0, %v2548
        %v2550 = vrot.slane %v1947, %v2549
        %v2551 = vlaneseq
        %v2552 = vshrl.u32 %v2551, 7
        %v2553 = vsub.s32 0, %v2552
        %v2554 = vrot.slane %v1961, %v2553
        %v2555 = vlaneseq
        %v2556 = vshrl.u32 %v2555, 7
        %v2557 = vsub.s32 0, %v2556
        %v2558 = vrot.slane %v1963, %v2557
        %v2559 = vlaneseq
        %v2560 = vshrl.u32 %v2559, 7
        %v2561 = vsub.s32 0, %v2560
        %v2562 = vrot.slane %v1965, %v2561
        %v2563 = vlaneseq
        %v2564 = vshrl.u32 %v2563, 7
        %v2565 = vsub.s32 0, %v2564
        %v2566 = vrot.slane %v1989, %v2565
        %v2567 = vlaneseq
        %v2568 = vshrl.u32 %v2567, 7
        %v2569 = vsub.s32 0, %v2568
        %v2570 = vrot.slane %v2003, %v2569
        %v2571 = vlaneseq
        %v2572 = vshrl.u32 %v2571, 7
        %v2573 = vsub.s32 0, %v2572
        %v2574 = vrot.slane %v2011, %v2573
        %v2575 = vlaneseq
        %v2576 = vshrl.u32 %v2575, 7
        %v2577 = vsub.s32 0, %v2576
        %v2578 = vrot.slane %v2013, %v2577
        %v2579 = vlaneseq
        %v2580 = vshrl.u32 %v2579, 7
        %v2581 = vsub.s32 0, %v2580
        %v2582 = vrot.slane %v1996, %v2581
        %v2583 = vlaneseq
        %v2584 = vshrl.u32 %v2583, 7
        %v2585 = vsub.s32 0, %v2584
        %v2586 = vrot.slane %v2010, %v2585
        %v2587 = vlaneseq
        %v2588 = vshrl.u32 %v2587, 7
        %v2589 = vsub.s32 0, %v2588
        %v2590 = vrot.slane %v2012, %v2589
        %v2591 = vlaneseq
        %v2592 = vshrl.u32 %v2591, 7
        %v2593 = vsub.s32 0, %v2592
        %v2594 = vrot.slane %v2014, %v2593
        %v2595 = vlaneseq
        %v2596 = vshrl.u32 %v2595, 7
        %v2597 = vsub.s32 0, %v2596
        %v2598 = vrot.slane %v2038, %v2597
        %v2599 = vlaneseq
        %v2600 = vshrl.u32 %v2599, 7
        %v2601 = vsub.s32 0, %v2600
        %v2602 = vrot.slane %v2052, %v2601
        %v2603 = vlaneseq
        %v2604 = vshrl.u32 %v2603, 7
        %v2605 = vsub.s32 0, %v2604
        %v2606 = vrot.slane %v2060, %v2605
        %v2607 = vlaneseq
        %v2608 = vshrl.u32 %v2607, 7
        %v2609 = vsub.s32 0, %v2608
        %v2610 = vrot.slane %v2062, %v2609
        %v2611 = vlaneseq
        %v2612 = vshrl.u32 %v2611, 7
        %v2613 = vsub.s32 0, %v2612
        %v2614 = vrot.slane %v2045, %v2613
        %v2615 = vlaneseq
        %v2616 = vshrl.u32 %v2615, 7
        %v2617 = vsub.s32 0, %v2616
        %v2618 = vrot.slane %v2059, %v2617
        %v2619 = vlaneseq
        %v2620 = vshrl.u32 %v2619, 7
        %v2621 = vsub.s32 0, %v2620
        %v2622 = vrot.slane %v2061, %v2621
        %v2623 = vlaneseq
        %v2624 = vshrl.u32 %v2623, 7
        %v2625 = vsub.s32 0, %v2624
        %v2626 = vrot.slane %v2063, %v2625
        %v2627 = vlaneseq
        %v2628 = vshrl.u32 %v2627, 7
        %v2629 = vsub.s32 0, %v2628
        %v2630 = vrot.slane %v2087, %v2629
        %v2631 = vlaneseq
        %v2632 = vshrl.u32 %v2631, 7
        %v2633 = vsub.s32 0, %v2632
        %v2634 = vrot.slane %v2101, %v2633
        %v2635 = vlaneseq
        %v2636 = vshrl.u32 %v2635, 7
        %v2637 = vsub.s32 0, %v2636
        %v2638 = vrot.slane %v2109, %v2637
        %v2639 = vlaneseq
        %v2640 = vshrl.u32 %v2639, 7
        %v2641 = vsub.s32 0, %v2640
        %v2642 = vrot.slane %v2111, %v2641
        %v2643 = vlaneseq
        %v2644 = vshrl.u32 %v2643, 7
        %v2645 = vsub.s32 0, %v2644
        %v2646 = vrot.slane %v2094, %v2645
        %v2647 = vlaneseq
        %v2648 = vshrl.u32 %v2647, 7
        %v2649 = vsub.s32 0, %v2648
        %v2650 = vrot.slane %v2108, %v2649
        %v2651 = vlaneseq
        %v2652 = vshrl.u32 %v2651, 7
        %v2653 = vsub.s32 0, %v2652
        %v2654 = vrot.slane %v2110, %v2653
        %v2655 = vlaneseq
        %v2656 = vshrl.u32 %v2655, 7
        %v2657 = vsub.s32 0, %v2656
        %v2658 = vrot.slane %v2112, %v2657
        %v2659 = vlaneseq
        %v2660 = vshrl.u32 %v2659, 7
        %v2661 = vsub.s32 0, %v2660
        %v2662 = vrot.slane %v2136, %v2661
        %v2663 = vlaneseq
        %v2664 = vshrl.u32 %v2663, 7
        %v2665 = vsub.s32 0, %v2664
        %v2666 = vrot.slane %v2150, %v2665
        %v2667 = vlaneseq
        %v2668 = vshrl.u32 %v2667, 7
        %v2669 = vsub.s32 0, %v2668
        %v2670 = vrot.slane %v2158, %v2669
        %v2671 = vlaneseq
        %v2672 = vshrl.u32 %v2671, 7
        %v2673 = vsub.s32 0, %v2672
        %v2674 = vrot.slane %v2160, %v2673
        %v2675 = vlaneseq
        %v2676 = vshrl.u32 %v2675, 7
        %v2677 = vsub.s32 0, %v2676
        %v2678 = vrot.slane %v2143, %v2677
        %v2679 = vlaneseq
        %v2680 = vshrl.u32 %v2679, 7
        %v2681 = vsub.s32 0, %v2680
        %v2682 = vrot.slane %v2157, %v2681
        %v2683 = vlaneseq
        %v2684 = vshrl.u32 %v2683, 7
        %v2685 = vsub.s32 0, %v2684
        %v2686 = vrot.slane %v2159, %v2685
        %v2687 = vlaneseq
        %v2688 = vshrl.u32 %v2687, 7
        %v2689 = vsub.s32 0, %v2688
        %v2690 = vrot.slane %v2161, %v2689
        %v2691 = vlaneseq
        %v2692 = vshrl.u32 %v2691, 7
        %v2693 = vsub.s32 0, %v2692
        %v2694 = vrot.slane %v2185, %v2693
        %v2695 = vlaneseq
        %v2696 = vshrl.u32 %v2695, 7
        %v2697 = vsub.s32 0, %v2696
        %v2698 = vrot.slane %v2199, %v2697
        %v2699 = vlaneseq
        %v2700 = vshrl.u32 %v2699, 7
        %v2701 = vsub.s32 0, %v2700
        %v2702 = vrot.slane %v2207, %v2701
        %v2703 = vlaneseq
        %v2704 = vshrl.u32 %v2703, 7
        %v2705 = vsub.s32 0, %v2704
        %v2706 = vrot.slane %v2209, %v2705
        %v2707 = vlaneseq
        %v2708 = vshrl.u32 %v2707, 7
        %v2709 = vsub.s32 0, %v2708
        %v2710 = vrot.slane %v2192, %v2709
        %v2711 = vlaneseq
        %v2712 = vshrl.u32 %v2711, 7
        %v2713 = vsub.s32 0, %v2712
        %v2714 = vrot.slane %v2206, %v2713
        %v2715 = vlaneseq
        %v2716 = vshrl.u32 %v2715, 7
        %v2717 = vsub.s32 0, %v2716
        %v2718 = vrot.slane %v2208, %v2717
        %v2719 = vlaneseq
        %v2720 = vshrl.u32 %v2719, 7
        %v2721 = vsub.s32 0, %v2720
        %v2722 = vrot.slane %v2210, %v2721
        %v2851 = vsel %vm337, %v522, %v2214
        %v2852 = vsel %vm337, %v536, %v2218
        %v2853 = vsel %vm337, %v544, %v2222
        %v2854 = vsel %vm337, %v546, %v2226
        %v2855 = vsel %vm337, %v529, %v2230
        %v2856 = vsel %vm337, %v543, %v2234
        %v2857 = vsel %vm337, %v545, %v2238
        %v2858 = vsel %vm337, %v547, %v2242
        %v2859 = vsel %vm337, %v571, %v2246
        %v2860 = vsel %vm337, %v585, %v2250
        %v2861 = vsel %vm337, %v593, %v2254
        %v2862 = vsel %vm337, %v595, %v2258
        %v2863 = vsel %vm337, %v578, %v2262
        %v2864 = vsel %vm337, %v592, %v2266
        %v2865 = vsel %vm337, %v594, %v2270
        %v2866 = vsel %vm337, %v596, %v2274
        %v2867 = vsel %vm337, %v620, %v2278
        %v2868 = vsel %vm337, %v634, %v2282
        %v2869 = vsel %vm337, %v642, %v2286
        %v2870 = vsel %vm337, %v644, %v2290
        %v2871 = vsel %vm337, %v627, %v2294
        %v2872 = vsel %vm337, %v641, %v2298
        %v2873 = vsel %vm337, %v643, %v2302
        %v2874 = vsel %vm337, %v645, %v2306
        %v2875 = vsel %vm337, %v669, %v2310
        %v2876 = vsel %vm337, %v683, %v2314
        %v2877 = vsel %vm337, %v691, %v2318
        %v2878 = vsel %vm337, %v693, %v2322
        %v2879 = vsel %vm337, %v676, %v2326
        %v2880 = vsel %vm337, %v690, %v2330
        %v2881 = vsel %vm337, %v692, %v2334
        %v2882 = vsel %vm337, %v694, %v2338
        %v2883 = vsel %vm337, %v718, %v2342
        %v2884 = vsel %vm337, %v732, %v2346
        %v2885 = vsel %vm337, %v740, %v2350
        %v2886 = vsel %vm337, %v742, %v2354
        %v2887 = vsel %vm337, %v725, %v2358
        %v2888 = vsel %vm337, %v739, %v2362
        %v2889 = vsel %vm337, %v741, %v2366
        %v2890 = vsel %vm337, %v743, %v2370
        %v2891 = vsel %vm337, %v767, %v2374
        %v2892 = vsel %vm337, %v781, %v2378
        %v2893 = vsel %vm337, %v789, %v2382
        %v2894 = vsel %vm337, %v791, %v2386
        %v2895 = vsel %vm337, %v774, %v2390
        %v2896 = vsel %vm337, %v788, %v2394
        %v2897 = vsel %vm337, %v790, %v2398
        %v2898 = vsel %vm337, %v792, %v2402
        %v2899 = vsel %vm337, %v816, %v2406
        %v2900 = vsel %vm337, %v830, %v2410
        %v2901 = vsel %vm337, %v838, %v2414
        %v2902 = vsel %vm337, %v840, %v2418
        %v2903 = vsel %vm337, %v823, %v2422
        %v2904 = vsel %vm337, %v837, %v2426
        %v2905 = vsel %vm337, %v839, %v2430
        %v2906 = vsel %vm337, %v841, %v2434
        %v2907 = vsel %vm337, %v865, %v2438
        %v2908 = vsel %vm337, %v879, %v2442
        %v2909 = vsel %vm337, %v887, %v2446
        %v2910 = vsel %vm337, %v889, %v2450
        %v2911 = vsel %vm337, %v872, %v2454
        %v2912 = vsel %vm337, %v886, %v2458
        %v2913 = vsel %vm337, %v888, %v2462
        %v2914 = vsel %vm337, %v890, %v2466
        %v2915 = vsel %vm337, %v914, %v2470
        %v2916 = vsel %vm337, %v928, %v2474
        %v2917 = vsel %vm337, %v936, %v2478
        %v2918 = vsel %vm337, %v938, %v2482
        %v2919 = vsel %vm337, %v921, %v2486
        %v2920 = vsel %vm337, %v935, %v2490
        %v2921 = vsel %vm337, %v937, %v2494
        %v2922 = vsel %vm337, %v939, %v2498
        %v2923 = vsel %vm337, %v963, %v2502
        %v2924 = vsel %vm337, %v977, %v2506
        %v2925 = vsel %vm337, %v985, %v2510
        %v2926 = vsel %vm337, %v987, %v2514
        %v2927 = vsel %vm337, %v970, %v2518
        %v2928 = vsel %vm337, %v984, %v2522
        %v2929 = vsel %vm337, %v986, %v2526
        %v2930 = vsel %vm337, %v988, %v2530
        %v2931 = vsel %vm337, %v1012, %v2534
        %v2932 = vsel %vm337, %v1026, %v2538
        %v2933 = vsel %vm337, %v1034, %v2542
        %v2934 = vsel %vm337, %v1036, %v2546
        %v2935 = vsel %vm337, %v1019, %v2550
        %v2936 = vsel %vm337, %v1033, %v2554
        %v2937 = vsel %vm337, %v1035, %v2558
        %v2938 = vsel %vm337, %v1037, %v2562
        %v2939 = vsel %vm337, %v1061, %v2566
        %v2940 = vsel %vm337, %v1075, %v2570
        %v2941 = vsel %vm337, %v1083, %v2574
        %v2942 = vsel %vm337, %v1085, %v2578
        %v2943 = vsel %vm337, %v1068, %v2582
        %v2944 = vsel %vm337, %v1082, %v2586
        %v2945 = vsel %vm337, %v1084, %v2590
        %v2946 = vsel %vm337, %v1086, %v2594
        %v2947 = vsel %vm337, %v1110, %v2598
        %v2948 = vsel %vm337, %v1124, %v2602
        %v2949 = vsel %vm337, %v1132, %v2606
        %v2950 = vsel %vm337, %v1134, %v2610
        %v2951 = vsel %vm337, %v1117, %v2614
        %v2952 = vsel %vm337, %v1131, %v2618
        %v2953 = vsel %vm337, %v1133, %v2622
        %v2954 = vsel %vm337, %v1135, %v2626
        %v2955 = vsel %vm337, %v1159, %v2630
        %v2956 = vsel %vm337, %v1173, %v2634
        %v2957 = vsel %vm337, %v1181, %v2638
        %v2958 = vsel %vm337, %v1183, %v2642
        %v2959 = vsel %vm337, %v1166, %v2646
        %v2960 = vsel %vm337, %v1180, %v2650
        %v2961 = vsel %vm337, %v1182, %v2654
        %v2962 = vsel %vm337, %v1184, %v2658
        %v2963 = vsel %vm337, %v1208, %v2662
        %v2964 = vsel %vm337, %v1222, %v2666
        %v2965 = vsel %vm337, %v1230, %v2670
        %v2966 = vsel %vm337, %v1232, %v2674
        %v2967 = vsel %vm337, %v1215, %v2678
        %v2968 = vsel %vm337, %v1229, %v2682
        %v2969 = vsel %vm337, %v1231, %v2686
        %v2970 = vsel %vm337, %v1233, %v2690
        %v2971 = vsel %vm337, %v1257, %v2694
        %v2972 = vsel %vm337, %v1271, %v2698
        %v2973 = vsel %vm337, %v1279, %v2702
        %v2974 = vsel %vm337, %v1281, %v2706
        %v2975 = vsel %vm337, %v1264, %v2710
        %v2976 = vsel %vm337, %v1278, %v2714
        %v2977 = vsel %vm337, %v1280, %v2718
        %v2978 = vsel %vm337, %v1282, %v2722
        %2979 = vst [vmem:[#allocation2] sm:$0xf] 0
        %2980 = vst [vmem:[#allocation2 + $0x4] sm:$0xf] 0
        %2981 = vst [vmem:[#allocation2 + $0x8] sm:$0x1] 0
        %s2982 = scalar_lea.vmem [#allocation2], 204
        %2983 = vst [vmem:[%s2982] sm:$0xf] 0
        %2984 = vst [vmem:[%s2982 + $0x4] sm:$0xf] 0
        %2985 = vst [vmem:[%s2982 + $0x8] sm:$0x1] 0
        %vm2986 = vcmask 1040384
        %vm2987 = vsmask.f32 256
        %vm2988 = vmand %vm2986, %vm2987
        %v2989 = vld [vmem:[#allocation2] sm:$0x1]
        %v2990 = vsel %vm2988, 0, %v2989
        %2991 = vst [vmem:[#allocation2] sm:$0x1] %v2990
        %v2992 = vld [vmem:[#allocation2 + $0xc] sm:$0x1]
        %v2993 = vsel %vm2988, 0, %v2992
        %2994 = vst [vmem:[#allocation2 + $0xc] sm:$0x1] %v2993
        %v2995 = vld [vmem:[#allocation2 + $0x18] sm:$0x1]
        %v2996 = vsel %vm2988, 0, %v2995
        %2997 = vst [vmem:[#allocation2 + $0x18] sm:$0x1] %v2996
        %v2998 = vld [vmem:[#allocation2 + $0x24] sm:$0x1]
        %v2999 = vsel %vm2988, 0, %v2998
        %3000 = vst [vmem:[#allocation2 + $0x24] sm:$0x1] %v2999
        %v3001 = vld [vmem:[#allocation2 + $0x30] sm:$0x1]
        %v3002 = vsel %vm2988, 0, %v3001
        %3003 = vst [vmem:[#allocation2 + $0x30] sm:$0x1] %v3002
        %v3004 = vld [vmem:[#allocation2 + $0x3c] sm:$0x1]
        %v3005 = vsel %vm2988, 0, %v3004
        %3006 = vst [vmem:[#allocation2 + $0x3c] sm:$0x1] %v3005
        %v3007 = vld [vmem:[#allocation2 + $0x48] sm:$0x1]
        %v3008 = vsel %vm2988, 0, %v3007
        %3009 = vst [vmem:[#allocation2 + $0x48] sm:$0x1] %v3008
        %v3010 = vld [vmem:[#allocation2 + $0x54] sm:$0x1]
        %v3011 = vsel %vm2988, 0, %v3010
        %3012 = vst [vmem:[#allocation2 + $0x54] sm:$0x1] %v3011
        %v3013 = vld [vmem:[#allocation2 + $0x60] sm:$0x1]
        %v3014 = vsel %vm2988, 0, %v3013
        %3015 = vst [vmem:[#allocation2 + $0x60] sm:$0x1] %v3014
        %v3016 = vld [vmem:[#allocation2 + $0x6c] sm:$0x1]
        %v3017 = vsel %vm2988, 0, %v3016
        %3018 = vst [vmem:[#allocation2 + $0x6c] sm:$0x1] %v3017
        %v3019 = vld [vmem:[#allocation2 + $0x78] sm:$0x1]
        %v3020 = vsel %vm2988, 0, %v3019
        %3021 = vst [vmem:[#allocation2 + $0x78] sm:$0x1] %v3020
        %v3022 = vld [vmem:[#allocation2 + $0x84] sm:$0x1]
        %v3023 = vsel %vm2988, 0, %v3022
        %3024 = vst [vmem:[#allocation2 + $0x84] sm:$0x1] %v3023
        %v3025 = vld [vmem:[#allocation2 + $0x90] sm:$0x1]
        %v3026 = vsel %vm2988, 0, %v3025
        %3027 = vst [vmem:[#allocation2 + $0x90] sm:$0x1] %v3026
        %v3028 = vld [vmem:[#allocation2 + $0x9c] sm:$0x1]
        %v3029 = vsel %vm2988, 0, %v3028
        %3030 = vst [vmem:[#allocation2 + $0x9c] sm:$0x1] %v3029
        %v3031 = vld [vmem:[#allocation2 + $0xa8] sm:$0x1]
        %v3032 = vsel %vm2988, 0, %v3031
        %3033 = vst [vmem:[#allocation2 + $0xa8] sm:$0x1] %v3032
        %v3034 = vld [vmem:[#allocation2 + $0xb4] sm:$0x1]
        %v3035 = vsel %vm2988, 0, %v3034
        %3036 = vst [vmem:[#allocation2 + $0xb4] sm:$0x1] %v3035
        %v3037 = vld [vmem:[#allocation2 + $0xc0] sm:$0x1]
        %v3038 = vsel %vm2988, 0, %v3037
        %3039 = vst [vmem:[#allocation2 + $0xc0] sm:$0x1] %v3038
        %v3040 = vld [vmem:[#allocation2 + $0xcc] sm:$0x1]
        %v3041 = vsel %vm2988, 0, %v3040
        %3042 = vst [vmem:[#allocation2 + $0xcc] sm:$0x1] %v3041
        %vm3043 = vsmask.f32 7938
        %vm3044 = vmand %vm2986, %vm3043
        %v3045 = vld [vmem:[#allocation2 + $0x8] sm:$0x1]
        %v3046 = vsel %vm3044, 0, %v3045
        %3047 = vst [vmem:[#allocation2 + $0x8] sm:$0x1] %v3046
        %v3048 = vld [vmem:[#allocation2 + $0x14] sm:$0x1]
        %v3049 = vsel %vm3044, 0, %v3048
        %3050 = vst [vmem:[#allocation2 + $0x14] sm:$0x1] %v3049
        %v3051 = vld [vmem:[#allocation2 + $0x20] sm:$0x1]
        %v3052 = vsel %vm3044, 0, %v3051
        %3053 = vst [vmem:[#allocation2 + $0x20] sm:$0x1] %v3052
        %v3054 = vld [vmem:[#allocation2 + $0x2c] sm:$0x1]
        %v3055 = vsel %vm3044, 0, %v3054
        %3056 = vst [vmem:[#allocation2 + $0x2c] sm:$0x1] %v3055
        %v3057 = vld [vmem:[#allocation2 + $0x38] sm:$0x1]
        %v3058 = vsel %vm3044, 0, %v3057
        %3059 = vst [vmem:[#allocation2 + $0x38] sm:$0x1] %v3058
        %v3060 = vld [vmem:[#allocation2 + $0x44] sm:$0x1]
        %v3061 = vsel %vm3044, 0, %v3060
        %3062 = vst [vmem:[#allocation2 + $0x44] sm:$0x1] %v3061
        %v3063 = vld [vmem:[#allocation2 + $0x50] sm:$0x1]
        %v3064 = vsel %vm3044, 0, %v3063
        %3065 = vst [vmem:[#allocation2 + $0x50] sm:$0x1] %v3064
        %v3066 = vld [vmem:[#allocation2 + $0x5c] sm:$0x1]
        %v3067 = vsel %vm3044, 0, %v3066
        %3068 = vst [vmem:[#allocation2 + $0x5c] sm:$0x1] %v3067
        %v3069 = vld [vmem:[#allocation2 + $0x68] sm:$0x1]
        %v3070 = vsel %vm3044, 0, %v3069
        %3071 = vst [vmem:[#allocation2 + $0x68] sm:$0x1] %v3070
        %v3072 = vld [vmem:[#allocation2 + $0x74] sm:$0x1]
        %v3073 = vsel %vm3044, 0, %v3072
        %3074 = vst [vmem:[#allocation2 + $0x74] sm:$0x1] %v3073
        %v3075 = vld [vmem:[#allocation2 + $0x80] sm:$0x1]
        %v3076 = vsel %vm3044, 0, %v3075
        %3077 = vst [vmem:[#allocation2 + $0x80] sm:$0x1] %v3076
        %v3078 = vld [vmem:[#allocation2 + $0x8c] sm:$0x1]
        %v3079 = vsel %vm3044, 0, %v3078
        %3080 = vst [vmem:[#allocation2 + $0x8c] sm:$0x1] %v3079
        %v3081 = vld [vmem:[#allocation2 + $0x98] sm:$0x1]
        %v3082 = vsel %vm3044, 0, %v3081
        %3083 = vst [vmem:[#allocation2 + $0x98] sm:$0x1] %v3082
        %v3084 = vld [vmem:[#allocation2 + $0xa4] sm:$0x1]
        %v3085 = vsel %vm3044, 0, %v3084
        %3086 = vst [vmem:[#allocation2 + $0xa4] sm:$0x1] %v3085
        %v3087 = vld [vmem:[#allocation2 + $0xb0] sm:$0x1]
        %v3088 = vsel %vm3044, 0, %v3087
        %3089 = vst [vmem:[#allocation2 + $0xb0] sm:$0x1] %v3088
        %v3090 = vld [vmem:[#allocation2 + $0xbc] sm:$0x1]
        %v3091 = vsel %vm3044, 0, %v3090
        %3092 = vst [vmem:[#allocation2 + $0xbc] sm:$0x1] %v3091
        %v3093 = vld [vmem:[#allocation2 + $0xc8] sm:$0x1]
        %v3094 = vsel %vm3044, 0, %v3093
        %3095 = vst [vmem:[#allocation2 + $0xc8] sm:$0x1] %v3094
        %v3096 = vld [vmem:[#allocation2 + $0xd4] sm:$0x1]
        %v3097 = vsel %vm3044, 0, %v3096
        %3098 = vst [vmem:[#allocation2 + $0xd4] sm:$0x1] %v3097
        %v3227 = vcombine.low %v2851, %v2852
        %v3228 = vcombine.low %v2853, %v2854
        %v3230 = vunpack.c.l.s4 1983009808
        %v3231 = vunpack.c.0.s8 %v3230
        %v3232 = vlaneseq
        %v3233 = vshrl.u32 %v3232, 7
        %v3234 = vsub.s32 %v3231, %v3233
        %v3235 = vrot.slane %v3227, %v3234
        %v3237 = vunpack.c.l.s4 1983009808
        %v3238 = vunpack.c.0.s8 %v3237
        %v3239 = vlaneseq
        %v3240 = vshrl.u32 %v3239, 7
        %v3241 = vsub.s32 %v3238, %v3240
        %v3242 = vrot.slane %v3228, %v3241
        %v3243 = vcombine.low %v3235, %v3242
        %v3244 = vcombine.low %v2855, %v2856
        %v3245 = vcombine.low %v2857, %v2858
        %v3247 = vunpack.c.l.s4 1983009808
        %v3248 = vunpack.c.0.s8 %v3247
        %v3249 = vlaneseq
        %v3250 = vshrl.u32 %v3249, 7
        %v3251 = vsub.s32 %v3248, %v3250
        %v3252 = vrot.slane %v3244, %v3251
        %v3254 = vunpack.c.l.s4 1983009808
        %v3255 = vunpack.c.0.s8 %v3254
        %v3256 = vlaneseq
        %v3257 = vshrl.u32 %v3256, 7
        %v3258 = vsub.s32 %v3255, %v3257
        %v3259 = vrot.slane %v3245, %v3258
        %v3260 = vcombine.low %v3252, %v3259
        %v3261 = vcombine.low %v2859, %v2860
        %v3262 = vcombine.low %v2861, %v2862
        %v3264 = vunpack.c.l.s4 1983009808
        %v3265 = vunpack.c.0.s8 %v3264
        %v3266 = vlaneseq
        %v3267 = vshrl.u32 %v3266, 7
        %v3268 = vsub.s32 %v3265, %v3267
        %v3269 = vrot.slane %v3261, %v3268
        %v3271 = vunpack.c.l.s4 1983009808
        %v3272 = vunpack.c.0.s8 %v3271
        %v3273 = vlaneseq
        %v3274 = vshrl.u32 %v3273, 7
        %v3275 = vsub.s32 %v3272, %v3274
        %v3276 = vrot.slane %v3262, %v3275
        %v3277 = vcombine.low %v3269, %v3276
        %v3278 = vcombine.low %v2863, %v2864
        %v3279 = vcombine.low %v2865, %v2866
        %v3281 = vunpack.c.l.s4 1983009808
        %v3282 = vunpack.c.0.s8 %v3281
        %v3283 = vlaneseq
        %v3284 = vshrl.u32 %v3283, 7
        %v3285 = vsub.s32 %v3282, %v3284
        %v3286 = vrot.slane %v3278, %v3285
        %v3288 = vunpack.c.l.s4 1983009808
        %v3289 = vunpack.c.0.s8 %v3288
        %v3290 = vlaneseq
        %v3291 = vshrl.u32 %v3290, 7
        %v3292 = vsub.s32 %v3289, %v3291
        %v3293 = vrot.slane %v3279, %v3292
        %v3294 = vcombine.low %v3286, %v3293
        %v3295 = vcombine.low %v2867, %v2868
        %v3296 = vcombine.low %v2869, %v2870
        %v3298 = vunpack.c.l.s4 1983009808
        %v3299 = vunpack.c.0.s8 %v3298
        %v3300 = vlaneseq
        %v3301 = vshrl.u32 %v3300, 7
        %v3302 = vsub.s32 %v3299, %v3301
        %v3303 = vrot.slane %v3295, %v3302
        %v3305 = vunpack.c.l.s4 1983009808
        %v3306 = vunpack.c.0.s8 %v3305
        %v3307 = vlaneseq
        %v3308 = vshrl.u32 %v3307, 7
        %v3309 = vsub.s32 %v3306, %v3308
        %v3310 = vrot.slane %v3296, %v3309
        %v3311 = vcombine.low %v3303, %v3310
        %v3312 = vcombine.low %v2871, %v2872
        %v3313 = vcombine.low %v2873, %v2874
        %v3315 = vunpack.c.l.s4 1983009808
        %v3316 = vunpack.c.0.s8 %v3315
        %v3317 = vlaneseq
        %v3318 = vshrl.u32 %v3317, 7
        %v3319 = vsub.s32 %v3316, %v3318
        %v3320 = vrot.slane %v3312, %v3319
        %v3322 = vunpack.c.l.s4 1983009808
        %v3323 = vunpack.c.0.s8 %v3322
        %v3324 = vlaneseq
        %v3325 = vshrl.u32 %v3324, 7
        %v3326 = vsub.s32 %v3323, %v3325
        %v3327 = vrot.slane %v3313, %v3326
        %v3328 = vcombine.low %v3320, %v3327
        %v3329 = vcombine.low %v2875, %v2876
        %v3330 = vcombine.low %v2877, %v2878
        %v3332 = vunpack.c.l.s4 1983009808
        %v3333 = vunpack.c.0.s8 %v3332
        %v3334 = vlaneseq
        %v3335 = vshrl.u32 %v3334, 7
        %v3336 = vsub.s32 %v3333, %v3335
        %v3337 = vrot.slane %v3329, %v3336
        %v3339 = vunpack.c.l.s4 1983009808
        %v3340 = vunpack.c.0.s8 %v3339
        %v3341 = vlaneseq
        %v3342 = vshrl.u32 %v3341, 7
        %v3343 = vsub.s32 %v3340, %v3342
        %v3344 = vrot.slane %v3330, %v3343
        %v3345 = vcombine.low %v3337, %v3344
        %v3346 = vcombine.low %v2879, %v2880
        %v3347 = vcombine.low %v2881, %v2882
        %v3349 = vunpack.c.l.s4 1983009808
        %v3350 = vunpack.c.0.s8 %v3349
        %v3351 = vlaneseq
        %v3352 = vshrl.u32 %v3351, 7
        %v3353 = vsub.s32 %v3350, %v3352
        %v3354 = vrot.slane %v3346, %v3353
        %v3356 = vunpack.c.l.s4 1983009808
        %v3357 = vunpack.c.0.s8 %v3356
        %v3358 = vlaneseq
        %v3359 = vshrl.u32 %v3358, 7
        %v3360 = vsub.s32 %v3357, %v3359
        %v3361 = vrot.slane %v3347, %v3360
        %v3362 = vcombine.low %v3354, %v3361
        %v3363 = vcombine.low %v2883, %v2884
        %v3364 = vcombine.low %v2885, %v2886
        %v3366 = vunpack.c.l.s4 1983009808
        %v3367 = vunpack.c.0.s8 %v3366
        %v3368 = vlaneseq
        %v3369 = vshrl.u32 %v3368, 7
        %v3370 = vsub.s32 %v3367, %v3369
        %v3371 = vrot.slane %v3363, %v3370
        %v3373 = vunpack.c.l.s4 1983009808
        %v3374 = vunpack.c.0.s8 %v3373
        %v3375 = vlaneseq
        %v3376 = vshrl.u32 %v3375, 7
        %v3377 = vsub.s32 %v3374, %v3376
        %v3378 = vrot.slane %v3364, %v3377
        %v3379 = vcombine.low %v3371, %v3378
        %v3380 = vcombine.low %v2887, %v2888
        %v3381 = vcombine.low %v2889, %v2890
        %v3383 = vunpack.c.l.s4 1983009808
        %v3384 = vunpack.c.0.s8 %v3383
        %v3385 = vlaneseq
        %v3386 = vshrl.u32 %v3385, 7
        %v3387 = vsub.s32 %v3384, %v3386
        %v3388 = vrot.slane %v3380, %v3387
        %v3390 = vunpack.c.l.s4 1983009808
        %v3391 = vunpack.c.0.s8 %v3390
        %v3392 = vlaneseq
        %v3393 = vshrl.u32 %v3392, 7
        %v3394 = vsub.s32 %v3391, %v3393
        %v3395 = vrot.slane %v3381, %v3394
        %v3396 = vcombine.low %v3388, %v3395
        %v3397 = vcombine.low %v2891, %v2892
        %v3398 = vcombine.low %v2893, %v2894
        %v3400 = vunpack.c.l.s4 1983009808
        %v3401 = vunpack.c.0.s8 %v3400
        %v3402 = vlaneseq
        %v3403 = vshrl.u32 %v3402, 7
        %v3404 = vsub.s32 %v3401, %v3403
        %v3405 = vrot.slane %v3397, %v3404
        %v3407 = vunpack.c.l.s4 1983009808
        %v3408 = vunpack.c.0.s8 %v3407
        %v3409 = vlaneseq
        %v3410 = vshrl.u32 %v3409, 7
        %v3411 = vsub.s32 %v3408, %v3410
        %v3412 = vrot.slane %v3398, %v3411
        %v3413 = vcombine.low %v3405, %v3412
        %v3414 = vcombine.low %v2895, %v2896
        %v3415 = vcombine.low %v2897, %v2898
        %v3417 = vunpack.c.l.s4 1983009808
        %v3418 = vunpack.c.0.s8 %v3417
        %v3419 = vlaneseq
        %v3420 = vshrl.u32 %v3419, 7
        %v3421 = vsub.s32 %v3418, %v3420
        %v3422 = vrot.slane %v3414, %v3421
        %v3424 = vunpack.c.l.s4 1983009808
        %v3425 = vunpack.c.0.s8 %v3424
        %v3426 = vlaneseq
        %v3427 = vshrl.u32 %v3426, 7
        %v3428 = vsub.s32 %v3425, %v3427
        %v3429 = vrot.slane %v3415, %v3428
        %v3430 = vcombine.low %v3422, %v3429
        %v3431 = vcombine.low %v2899, %v2900
        %v3432 = vcombine.low %v2901, %v2902
        %v3434 = vunpack.c.l.s4 1983009808
        %v3435 = vunpack.c.0.s8 %v3434
        %v3436 = vlaneseq
        %v3437 = vshrl.u32 %v3436, 7
        %v3438 = vsub.s32 %v3435, %v3437
        %v3439 = vrot.slane %v3431, %v3438
        %v3441 = vunpack.c.l.s4 1983009808
        %v3442 = vunpack.c.0.s8 %v3441
        %v3443 = vlaneseq
        %v3444 = vshrl.u32 %v3443, 7
        %v3445 = vsub.s32 %v3442, %v3444
        %v3446 = vrot.slane %v3432, %v3445
        %v3447 = vcombine.low %v3439, %v3446
        %v3448 = vcombine.low %v2903, %v2904
        %v3449 = vcombine.low %v2905, %v2906
        %v3451 = vunpack.c.l.s4 1983009808
        %v3452 = vunpack.c.0.s8 %v3451
        %v3453 = vlaneseq
        %v3454 = vshrl.u32 %v3453, 7
        %v3455 = vsub.s32 %v3452, %v3454
        %v3456 = vrot.slane %v3448, %v3455
        %v3458 = vunpack.c.l.s4 1983009808
        %v3459 = vunpack.c.0.s8 %v3458
        %v3460 = vlaneseq
        %v3461 = vshrl.u32 %v3460, 7
        %v3462 = vsub.s32 %v3459, %v3461
        %v3463 = vrot.slane %v3449, %v3462
        %v3464 = vcombine.low %v3456, %v3463
        %v3465 = vcombine.low %v2907, %v2908
        %v3466 = vcombine.low %v2909, %v2910
        %v3468 = vunpack.c.l.s4 1983009808
        %v3469 = vunpack.c.0.s8 %v3468
        %v3470 = vlaneseq
        %v3471 = vshrl.u32 %v3470, 7
        %v3472 = vsub.s32 %v3469, %v3471
        %v3473 = vrot.slane %v3465, %v3472
        %v3475 = vunpack.c.l.s4 1983009808
        %v3476 = vunpack.c.0.s8 %v3475
        %v3477 = vlaneseq
        %v3478 = vshrl.u32 %v3477, 7
        %v3479 = vsub.s32 %v3476, %v3478
        %v3480 = vrot.slane %v3466, %v3479
        %v3481 = vcombine.low %v3473, %v3480
        %v3482 = vcombine.low %v2911, %v2912
        %v3483 = vcombine.low %v2913, %v2914
        %v3485 = vunpack.c.l.s4 1983009808
        %v3486 = vunpack.c.0.s8 %v3485
        %v3487 = vlaneseq
        %v3488 = vshrl.u32 %v3487, 7
        %v3489 = vsub.s32 %v3486, %v3488
        %v3490 = vrot.slane %v3482, %v3489
        %v3492 = vunpack.c.l.s4 1983009808
        %v3493 = vunpack.c.0.s8 %v3492
        %v3494 = vlaneseq
        %v3495 = vshrl.u32 %v3494, 7
        %v3496 = vsub.s32 %v3493, %v3495
        %v3497 = vrot.slane %v3483, %v3496
        %v3498 = vcombine.low %v3490, %v3497
        %v3499 = vcombine.low %v2915, %v2916
        %v3500 = vcombine.low %v2917, %v2918
        %v3502 = vunpack.c.l.s4 1983009808
        %v3503 = vunpack.c.0.s8 %v3502
        %v3504 = vlaneseq
        %v3505 = vshrl.u32 %v3504, 7
        %v3506 = vsub.s32 %v3503, %v3505
        %v3507 = vrot.slane %v3499, %v3506
        %v3509 = vunpack.c.l.s4 1983009808
        %v3510 = vunpack.c.0.s8 %v3509
        %v3511 = vlaneseq
        %v3512 = vshrl.u32 %v3511, 7
        %v3513 = vsub.s32 %v3510, %v3512
        %v3514 = vrot.slane %v3500, %v3513
        %v3515 = vcombine.low %v3507, %v3514
        %v3516 = vcombine.low %v2919, %v2920
        %v3517 = vcombine.low %v2921, %v2922
        %v3519 = vunpack.c.l.s4 1983009808
        %v3520 = vunpack.c.0.s8 %v3519
        %v3521 = vlaneseq
        %v3522 = vshrl.u32 %v3521, 7
        %v3523 = vsub.s32 %v3520, %v3522
        %v3524 = vrot.slane %v3516, %v3523
        %v3526 = vunpack.c.l.s4 1983009808
        %v3527 = vunpack.c.0.s8 %v3526
        %v3528 = vlaneseq
        %v3529 = vshrl.u32 %v3528, 7
        %v3530 = vsub.s32 %v3527, %v3529
        %v3531 = vrot.slane %v3517, %v3530
        %v3532 = vcombine.low %v3524, %v3531
        %v3533 = vcombine.low %v2923, %v2924
        %v3534 = vcombine.low %v2925, %v2926
        %v3536 = vunpack.c.l.s4 1983009808
        %v3537 = vunpack.c.0.s8 %v3536
        %v3538 = vlaneseq
        %v3539 = vshrl.u32 %v3538, 7
        %v3540 = vsub.s32 %v3537, %v3539
        %v3541 = vrot.slane %v3533, %v3540
        %v3543 = vunpack.c.l.s4 1983009808
        %v3544 = vunpack.c.0.s8 %v3543
        %v3545 = vlaneseq
        %v3546 = vshrl.u32 %v3545, 7
        %v3547 = vsub.s32 %v3544, %v3546
        %v3548 = vrot.slane %v3534, %v3547
        %v3549 = vcombine.low %v3541, %v3548
        %v3550 = vcombine.low %v2927, %v2928
        %v3551 = vcombine.low %v2929, %v2930
        %v3553 = vunpack.c.l.s4 1983009808
        %v3554 = vunpack.c.0.s8 %v3553
        %v3555 = vlaneseq
        %v3556 = vshrl.u32 %v3555, 7
        %v3557 = vsub.s32 %v3554, %v3556
        %v3558 = vrot.slane %v3550, %v3557
        %v3560 = vunpack.c.l.s4 1983009808
        %v3561 = vunpack.c.0.s8 %v3560
        %v3562 = vlaneseq
        %v3563 = vshrl.u32 %v3562, 7
        %v3564 = vsub.s32 %v3561, %v3563
        %v3565 = vrot.slane %v3551, %v3564
        %v3566 = vcombine.low %v3558, %v3565
        %v3567 = vcombine.low %v2931, %v2932
        %v3568 = vcombine.low %v2933, %v2934
        %v3570 = vunpack.c.l.s4 1983009808
        %v3571 = vunpack.c.0.s8 %v3570
        %v3572 = vlaneseq
        %v3573 = vshrl.u32 %v3572, 7
        %v3574 = vsub.s32 %v3571, %v3573
        %v3575 = vrot.slane %v3567, %v3574
        %v3577 = vunpack.c.l.s4 1983009808
        %v3578 = vunpack.c.0.s8 %v3577
        %v3579 = vlaneseq
        %v3580 = vshrl.u32 %v3579, 7
        %v3581 = vsub.s32 %v3578, %v3580
        %v3582 = vrot.slane %v3568, %v3581
        %v3583 = vcombine.low %v3575, %v3582
        %v3584 = vcombine.low %v2935, %v2936
        %v3585 = vcombine.low %v2937, %v2938
        %v3587 = vunpack.c.l.s4 1983009808
        %v3588 = vunpack.c.0.s8 %v3587
        %v3589 = vlaneseq
        %v3590 = vshrl.u32 %v3589, 7
        %v3591 = vsub.s32 %v3588, %v3590
        %v3592 = vrot.slane %v3584, %v3591
        %v3594 = vunpack.c.l.s4 1983009808
        %v3595 = vunpack.c.0.s8 %v3594
        %v3596 = vlaneseq
        %v3597 = vshrl.u32 %v3596, 7
        %v3598 = vsub.s32 %v3595, %v3597
        %v3599 = vrot.slane %v3585, %v3598
        %v3600 = vcombine.low %v3592, %v3599
        %v3601 = vcombine.low %v2939, %v2940
        %v3602 = vcombine.low %v2941, %v2942
        %v3604 = vunpack.c.l.s4 1983009808
        %v3605 = vunpack.c.0.s8 %v3604
        %v3606 = vlaneseq
        %v3607 = vshrl.u32 %v3606, 7
        %v3608 = vsub.s32 %v3605, %v3607
        %v3609 = vrot.slane %v3601, %v3608
        %v3611 = vunpack.c.l.s4 1983009808
        %v3612 = vunpack.c.0.s8 %v3611
        %v3613 = vlaneseq
        %v3614 = vshrl.u32 %v3613, 7
        %v3615 = vsub.s32 %v3612, %v3614
        %v3616 = vrot.slane %v3602, %v3615
        %v3617 = vcombine.low %v3609, %v3616
        %v3618 = vcombine.low %v2943, %v2944
        %v3619 = vcombine.low %v2945, %v2946
        %v3621 = vunpack.c.l.s4 1983009808
        %v3622 = vunpack.c.0.s8 %v3621
        %v3623 = vlaneseq
        %v3624 = vshrl.u32 %v3623, 7
        %v3625 = vsub.s32 %v3622, %v3624
        %v3626 = vrot.slane %v3618, %v3625
        %v3628 = vunpack.c.l.s4 1983009808
        %v3629 = vunpack.c.0.s8 %v3628
        %v3630 = vlaneseq
        %v3631 = vshrl.u32 %v3630, 7
        %v3632 = vsub.s32 %v3629, %v3631
        %v3633 = vrot.slane %v3619, %v3632
        %v3634 = vcombine.low %v3626, %v3633
        %v3635 = vcombine.low %v2947, %v2948
        %v3636 = vcombine.low %v2949, %v2950
        %v3638 = vunpack.c.l.s4 1983009808
        %v3639 = vunpack.c.0.s8 %v3638
        %v3640 = vlaneseq
        %v3641 = vshrl.u32 %v3640, 7
        %v3642 = vsub.s32 %v3639, %v3641
        %v3643 = vrot.slane %v3635, %v3642
        %v3645 = vunpack.c.l.s4 1983009808
        %v3646 = vunpack.c.0.s8 %v3645
        %v3647 = vlaneseq
        %v3648 = vshrl.u32 %v3647, 7
        %v3649 = vsub.s32 %v3646, %v3648
        %v3650 = vrot.slane %v3636, %v3649
        %v3651 = vcombine.low %v3643, %v3650
        %v3652 = vcombine.low %v2951, %v2952
        %v3653 = vcombine.low %v2953, %v2954
        %v3655 = vunpack.c.l.s4 1983009808
        %v3656 = vunpack.c.0.s8 %v3655
        %v3657 = vlaneseq
        %v3658 = vshrl.u32 %v3657, 7
        %v3659 = vsub.s32 %v3656, %v3658
        %v3660 = vrot.slane %v3652, %v3659
        %v3662 = vunpack.c.l.s4 1983009808
        %v3663 = vunpack.c.0.s8 %v3662
        %v3664 = vlaneseq
        %v3665 = vshrl.u32 %v3664, 7
        %v3666 = vsub.s32 %v3663, %v3665
        %v3667 = vrot.slane %v3653, %v3666
        %v3668 = vcombine.low %v3660, %v3667
        %v3669 = vcombine.low %v2955, %v2956
        %v3670 = vcombine.low %v2957, %v2958
        %v3672 = vunpack.c.l.s4 1983009808
        %v3673 = vunpack.c.0.s8 %v3672
        %v3674 = vlaneseq
        %v3675 = vshrl.u32 %v3674, 7
        %v3676 = vsub.s32 %v3673, %v3675
        %v3677 = vrot.slane %v3669, %v3676
        %v3679 = vunpack.c.l.s4 1983009808
        %v3680 = vunpack.c.0.s8 %v3679
        %v3681 = vlaneseq
        %v3682 = vshrl.u32 %v3681, 7
        %v3683 = vsub.s32 %v3680, %v3682
        %v3684 = vrot.slane %v3670, %v3683
        %v3685 = vcombine.low %v3677, %v3684
        %v3686 = vcombine.low %v2959, %v2960
        %v3687 = vcombine.low %v2961, %v2962
        %v3689 = vunpack.c.l.s4 1983009808
        %v3690 = vunpack.c.0.s8 %v3689
        %v3691 = vlaneseq
        %v3692 = vshrl.u32 %v3691, 7
        %v3693 = vsub.s32 %v3690, %v3692
        %v3694 = vrot.slane %v3686, %v3693
        %v3696 = vunpack.c.l.s4 1983009808
        %v3697 = vunpack.c.0.s8 %v3696
        %v3698 = vlaneseq
        %v3699 = vshrl.u32 %v3698, 7
        %v3700 = vsub.s32 %v3697, %v3699
        %v3701 = vrot.slane %v3687, %v3700
        %v3702 = vcombine.low %v3694, %v3701
        %v3703 = vcombine.low %v2963, %v2964
        %v3704 = vcombine.low %v2965, %v2966
        %v3706 = vunpack.c.l.s4 1983009808
        %v3707 = vunpack.c.0.s8 %v3706
        %v3708 = vlaneseq
        %v3709 = vshrl.u32 %v3708, 7
        %v3710 = vsub.s32 %v3707, %v3709
        %v3711 = vrot.slane %v3703, %v3710
        %v3713 = vunpack.c.l.s4 1983009808
        %v3714 = vunpack.c.0.s8 %v3713
        %v3715 = vlaneseq
        %v3716 = vshrl.u32 %v3715, 7
        %v3717 = vsub.s32 %v3714, %v3716
        %v3718 = vrot.slane %v3704, %v3717
        %v3719 = vcombine.low %v3711, %v3718
        %v3720 = vcombine.low %v2967, %v2968
        %v3721 = vcombine.low %v2969, %v2970
        %v3723 = vunpack.c.l.s4 1983009808
        %v3724 = vunpack.c.0.s8 %v3723
        %v3725 = vlaneseq
        %v3726 = vshrl.u32 %v3725, 7
        %v3727 = vsub.s32 %v3724, %v3726
        %v3728 = vrot.slane %v3720, %v3727
        %v3730 = vunpack.c.l.s4 1983009808
        %v3731 = vunpack.c.0.s8 %v3730
        %v3732 = vlaneseq
        %v3733 = vshrl.u32 %v3732, 7
        %v3734 = vsub.s32 %v3731, %v3733
        %v3735 = vrot.slane %v3721, %v3734
        %v3736 = vcombine.low %v3728, %v3735
        %v3737 = vcombine.low %v2971, %v2972
        %v3738 = vcombine.low %v2973, %v2974
        %v3740 = vunpack.c.l.s4 1983009808
        %v3741 = vunpack.c.0.s8 %v3740
        %v3742 = vlaneseq
        %v3743 = vshrl.u32 %v3742, 7
        %v3744 = vsub.s32 %v3741, %v3743
        %v3745 = vrot.slane %v3737, %v3744
        %v3747 = vunpack.c.l.s4 1983009808
        %v3748 = vunpack.c.0.s8 %v3747
        %v3749 = vlaneseq
        %v3750 = vshrl.u32 %v3749, 7
        %v3751 = vsub.s32 %v3748, %v3750
        %v3752 = vrot.slane %v3738, %v3751
        %v3753 = vcombine.low %v3745, %v3752
        %v3754 = vcombine.low %v2975, %v2976
        %v3755 = vcombine.low %v2977, %v2978
        %v3757 = vunpack.c.l.s4 1983009808
        %v3758 = vunpack.c.0.s8 %v3757
        %v3759 = vlaneseq
        %v3760 = vshrl.u32 %v3759, 7
        %v3761 = vsub.s32 %v3758, %v3760
        %v3762 = vrot.slane %v3754, %v3761
        %v3764 = vunpack.c.l.s4 1983009808
        %v3765 = vunpack.c.0.s8 %v3764
        %v3766 = vlaneseq
        %v3767 = vshrl.u32 %v3766, 7
        %v3768 = vsub.s32 %v3765, %v3767
        %v3769 = vrot.slane %v3755, %v3768
        %v3770 = vcombine.low %v3762, %v3769
        %3771 = vrot.lane.b32.xlu0 %v3243, 64
        %v3772 = vpop.permute.xlu0 %3771
        %3773 = vrot.lane.b32.xlu0 %v3260, 64
        %v3774 = vpop.permute.xlu0 %3773
        %3775 = vrot.lane.b32.xlu0 %v3277, 64
        %v3776 = vpop.permute.xlu0 %3775
        %3777 = vrot.lane.b32.xlu0 %v3294, 64
        %v3778 = vpop.permute.xlu0 %3777
        %3779 = vrot.lane.b32.xlu0 %v3311, 64
        %v3780 = vpop.permute.xlu0 %3779
        %3781 = vrot.lane.b32.xlu0 %v3328, 64
        %v3782 = vpop.permute.xlu0 %3781
        %3783 = vrot.lane.b32.xlu0 %v3345, 64
        %v3784 = vpop.permute.xlu0 %3783
        %3785 = vrot.lane.b32.xlu0 %v3362, 64
        %v3786 = vpop.permute.xlu0 %3785
        %3787 = vrot.lane.b32.xlu0 %v3379, 64
        %v3788 = vpop.permute.xlu0 %3787
        %3789 = vrot.lane.b32.xlu0 %v3396, 64
        %v3790 = vpop.permute.xlu0 %3789
        %3791 = vrot.lane.b32.xlu0 %v3413, 64
        %v3792 = vpop.permute.xlu0 %3791
        %3793 = vrot.lane.b32.xlu0 %v3430, 64
        %v3794 = vpop.permute.xlu0 %3793
        %3795 = vrot.lane.b32.xlu0 %v3447, 64
        %v3796 = vpop.permute.xlu0 %3795
        %3797 = vrot.lane.b32.xlu0 %v3464, 64
        %v3798 = vpop.permute.xlu0 %3797
        %3799 = vrot.lane.b32.xlu0 %v3481, 64
        %v3800 = vpop.permute.xlu0 %3799
        %3801 = vrot.lane.b32.xlu0 %v3498, 64
        %v3802 = vpop.permute.xlu0 %3801
        %3803 = vrot.lane.b32.xlu0 %v3515, 64
        %v3804 = vpop.permute.xlu0 %3803
        %3805 = vrot.lane.b32.xlu0 %v3532, 64
        %v3806 = vpop.permute.xlu0 %3805
        %3807 = vrot.lane.b32.xlu0 %v3549, 64
        %v3808 = vpop.permute.xlu0 %3807
        %3809 = vrot.lane.b32.xlu0 %v3566, 64
        %v3810 = vpop.permute.xlu0 %3809
        %3811 = vrot.lane.b32.xlu0 %v3583, 64
        %v3812 = vpop.permute.xlu0 %3811
        %3813 = vrot.lane.b32.xlu0 %v3600, 64
        %v3814 = vpop.permute.xlu0 %3813
        %3815 = vrot.lane.b32.xlu0 %v3617, 64
        %v3816 = vpop.permute.xlu0 %3815
        %3817 = vrot.lane.b32.xlu0 %v3634, 64
        %v3818 = vpop.permute.xlu0 %3817
        %3819 = vrot.lane.b32.xlu0 %v3651, 64
        %v3820 = vpop.permute.xlu0 %3819
        %3821 = vrot.lane.b32.xlu0 %v3668, 64
        %v3822 = vpop.permute.xlu0 %3821
        %3823 = vrot.lane.b32.xlu0 %v3685, 64
        %v3824 = vpop.permute.xlu0 %3823
        %3825 = vrot.lane.b32.xlu0 %v3702, 64
        %v3826 = vpop.permute.xlu0 %3825
        %3827 = vrot.lane.b32.xlu0 %v3719, 64
        %v3828 = vpop.permute.xlu0 %3827
        %3829 = vrot.lane.b32.xlu0 %v3736, 64
        %v3830 = vpop.permute.xlu0 %3829
        %3831 = vrot.lane.b32.xlu0 %v3753, 64
        %v3832 = vpop.permute.xlu0 %3831
        %3833 = vrot.lane.b32.xlu0 %v3770, 64
        %v3834 = vpop.permute.xlu0 %3833
        %vm3867 = vcmask 523264
        %v3868 = vsel %vm3867, %v217, %v3772
        %v3869 = vsel %vm3867, %v218, %v3774
        %v3870 = vsel %vm3867, %v219, %v3776
        %v3871 = vsel %vm3867, %v220, %v3778
        %v3872 = vsel %vm3867, %v221, %v3780
        %v3873 = vsel %vm3867, %v222, %v3782
        %v3874 = vsel %vm3867, %v223, %v3784
        %v3875 = vsel %vm3867, %v224, %v3786
        %v3876 = vsel %vm3867, %v225, %v3788
        %v3877 = vsel %vm3867, %v226, %v3790
        %v3878 = vsel %vm3867, %v227, %v3792
        %v3879 = vsel %vm3867, %v228, %v3794
        %v3880 = vsel %vm3867, %v229, %v3796
        %v3881 = vsel %vm3867, %v230, %v3798
        %v3882 = vsel %vm3867, %v231, %v3800
        %v3883 = vsel %vm3867, %v232, %v3802
        %v3884 = vsel %vm3867, %v233, %v3804
        %v3885 = vsel %vm3867, %v234, %v3806
        %v3886 = vsel %vm3867, %v235, %v3808
        %v3887 = vsel %vm3867, %v236, %v3810
        %v3888 = vsel %vm3867, %v237, %v3812
        %v3889 = vsel %vm3867, %v238, %v3814
        %v3890 = vsel %vm3867, %v239, %v3816
        %v3891 = vsel %vm3867, %v240, %v3818
        %v3892 = vsel %vm3867, %v241, %v3820
        %v3893 = vsel %vm3867, %v242, %v3822
        %v3894 = vsel %vm3867, %v243, %v3824
        %v3895 = vsel %vm3867, %v244, %v3826
        %v3896 = vsel %vm3867, %v245, %v3828
        %v3897 = vsel %vm3867, %v246, %v3830
        %v3898 = vsel %vm3867, %v247, %v3832
        %v3899 = vsel %vm3867, %v248, %v3834
        %v3900 = vpack.c.bf16 %v3869, %v3868
        %v3901 = vpack.c.bf16 %v3871, %v3870
        %v3902 = vpack.c.bf16 %v3873, %v3872
        %v3903 = vpack.c.bf16 %v3875, %v3874
        %v3904 = vpack.c.bf16 %v3877, %v3876
        %v3905 = vpack.c.bf16 %v3879, %v3878
        %v3906 = vpack.c.bf16 %v3881, %v3880
        %v3907 = vpack.c.bf16 %v3883, %v3882
        %v3908 = vpack.c.bf16 %v3885, %v3884
        %v3909 = vpack.c.bf16 %v3887, %v3886
        %v3910 = vpack.c.bf16 %v3889, %v3888
        %v3911 = vpack.c.bf16 %v3891, %v3890
        %v3912 = vpack.c.bf16 %v3893, %v3892
        %v3913 = vpack.c.bf16 %v3895, %v3894
        %v3914 = vpack.c.bf16 %v3897, %v3896
        %v3915 = vpack.c.bf16 %v3899, %v3898
        %v3932 = vunpack.c.l.b16 %v3900
        %v3933 = vunpack.c.h.b16 %v3900
        %v3934 = vunpack.c.l.b16 %v3901
        %v3935 = vunpack.c.h.b16 %v3901
        %v3936 = vunpack.c.l.b16 %v3902
        %v3937 = vunpack.c.h.b16 %v3902
        %v3938 = vunpack.c.l.b16 %v3903
        %v3939 = vunpack.c.h.b16 %v3903
        %v3940 = vunpack.c.l.b16 %v3904
        %v3941 = vunpack.c.h.b16 %v3904
        %v3942 = vunpack.c.l.b16 %v3905
        %v3943 = vunpack.c.h.b16 %v3905
        %v3944 = vunpack.c.l.b16 %v3906
        %v3945 = vunpack.c.h.b16 %v3906
        %v3946 = vunpack.c.l.b16 %v3907
        %v3947 = vunpack.c.h.b16 %v3907
        %v3948 = vunpack.c.l.b16 %v3908
        %v3949 = vunpack.c.h.b16 %v3908
        %v3950 = vunpack.c.l.b16 %v3909
        %v3951 = vunpack.c.h.b16 %v3909
        %v3952 = vunpack.c.l.b16 %v3910
        %v3953 = vunpack.c.h.b16 %v3910
        %v3954 = vunpack.c.l.b16 %v3911
        %v3955 = vunpack.c.h.b16 %v3911
        %v3956 = vunpack.c.l.b16 %v3912
        %v3957 = vunpack.c.h.b16 %v3912
        %v3958 = vunpack.c.l.b16 %v3913
        %v3959 = vunpack.c.h.b16 %v3913
        %v3960 = vunpack.c.l.b16 %v3914
        %v3961 = vunpack.c.h.b16 %v3914
        %v3962 = vunpack.c.l.b16 %v3915
        %v3963 = vunpack.c.h.b16 %v3915
        %v3964 = vpack.c.b16 %v3932, %v3932
        %v3965 = vpack.c.b16 %v3933, %v3933
        %v3966 = vpack.c.b16 %v3934, %v3934
        %v3967 = vpack.c.b16 %v3935, %v3935
        %v3968 = vpack.c.b16 %v3936, %v3936
        %v3969 = vpack.c.b16 %v3937, %v3937
        %v3970 = vpack.c.b16 %v3938, %v3938
        %v3971 = vpack.c.b16 %v3939, %v3939
        %v3972 = vpack.c.b16 %v3940, %v3940
        %v3973 = vpack.c.b16 %v3941, %v3941
        %v3974 = vpack.c.b16 %v3942, %v3942
        %v3975 = vpack.c.b16 %v3943, %v3943
        %v3976 = vpack.c.b16 %v3944, %v3944
        %v3977 = vpack.c.b16 %v3945, %v3945
        %v3978 = vpack.c.b16 %v3946, %v3946
        %v3979 = vpack.c.b16 %v3947, %v3947
        %v3980 = vpack.c.b16 %v3948, %v3948
        %v3981 = vpack.c.b16 %v3949, %v3949
        %v3982 = vpack.c.b16 %v3950, %v3950
        %v3983 = vpack.c.b16 %v3951, %v3951
        %v3984 = vpack.c.b16 %v3952, %v3952
        %v3985 = vpack.c.b16 %v3953, %v3953
        %v3986 = vpack.c.b16 %v3954, %v3954
        %v3987 = vpack.c.b16 %v3955, %v3955
        %v3988 = vpack.c.b16 %v3956, %v3956
        %v3989 = vpack.c.b16 %v3957, %v3957
        %v3990 = vpack.c.b16 %v3958, %v3958
        %v3991 = vpack.c.b16 %v3959, %v3959
        %v3992 = vpack.c.b16 %v3960, %v3960
        %v3993 = vpack.c.b16 %v3961, %v3961
        %v3994 = vpack.c.b16 %v3962, %v3962
        %v3995 = vpack.c.b16 %v3963, %v3963
        %vm3996 = vsmask.f32 4368
        %vm3997 = vmor %vm2987, %vm3996
        %v3999 = vshrl.u32 %v3964, 16
        %v4001 = vrot.slane %v3999, 7
        %v4002 = vshll.u32 %v3964, 16
        %v4004 = vor.u32 %v4001, %v4002
        %v4005 = vrot.slane %v4001, 4
        %v4007 = vshrl.u32 %v3965, 16
        %v4009 = vrot.slane %v4007, 7
        %v4010 = vshll.u32 %v3965, 16
        %v4012 = vor.u32 %v4009, %v4010
        %v4013 = vsel %vm3997, %v4005, %v4012
        %v4014 = vrot.slane %v4009, 4
        %v4016 = vshrl.u32 %v3966, 16
        %v4018 = vrot.slane %v4016, 7
        %v4019 = vshll.u32 %v3966, 16
        %v4021 = vor.u32 %v4018, %v4019
        %v4022 = vrot.slane %v4018, 4
        %v4024 = vshrl.u32 %v3967, 16
        %v4026 = vrot.slane %v4024, 7
        %v4027 = vshll.u32 %v3967, 16
        %v4029 = vor.u32 %v4026, %v4027
        %v4030 = vsel %vm3997, %v4022, %v4029
        %v4031 = vrot.slane %v4026, 4
        %v4033 = vshrl.u32 %v3968, 16
        %v4035 = vrot.slane %v4033, 7
        %v4036 = vshll.u32 %v3968, 16
        %v4038 = vor.u32 %v4035, %v4036
        %v4039 = vrot.slane %v4035, 4
        %v4041 = vshrl.u32 %v3969, 16
        %v4043 = vrot.slane %v4041, 7
        %v4044 = vshll.u32 %v3969, 16
        %v4046 = vor.u32 %v4043, %v4044
        %v4047 = vsel %vm3997, %v4039, %v4046
        %v4048 = vrot.slane %v4043, 4
        %v4050 = vshrl.u32 %v3970, 16
        %v4052 = vrot.slane %v4050, 7
        %v4053 = vshll.u32 %v3970, 16
        %v4055 = vor.u32 %v4052, %v4053
        %v4056 = vrot.slane %v4052, 4
        %v4058 = vshrl.u32 %v3971, 16
        %v4060 = vrot.slane %v4058, 7
        %v4061 = vshll.u32 %v3971, 16
        %v4063 = vor.u32 %v4060, %v4061
        %v4064 = vsel %vm3997, %v4056, %v4063
        %v4065 = vrot.slane %v4060, 4
        %v4067 = vshrl.u32 %v3972, 16
        %v4069 = vrot.slane %v4067, 7
        %v4070 = vshll.u32 %v3972, 16
        %v4072 = vor.u32 %v4069, %v4070
        %v4073 = vrot.slane %v4069, 4
        %v4075 = vshrl.u32 %v3973, 16
        %v4077 = vrot.slane %v4075, 7
        %v4078 = vshll.u32 %v3973, 16
        %v4080 = vor.u32 %v4077, %v4078
        %v4081 = vsel %vm3997, %v4073, %v4080
        %v4082 = vrot.slane %v4077, 4
        %v4084 = vshrl.u32 %v3974, 16
        %v4086 = vrot.slane %v4084, 7
        %v4087 = vshll.u32 %v3974, 16
        %v4089 = vor.u32 %v4086, %v4087
        %v4090 = vrot.slane %v4086, 4
        %v4092 = vshrl.u32 %v3975, 16
        %v4094 = vrot.slane %v4092, 7
        %v4095 = vshll.u32 %v3975, 16
        %v4097 = vor.u32 %v4094, %v4095
        %v4098 = vsel %vm3997, %v4090, %v4097
        %v4099 = vrot.slane %v4094, 4
        %v4101 = vshrl.u32 %v3976, 16
        %v4103 = vrot.slane %v4101, 7
        %v4104 = vshll.u32 %v3976, 16
        %v4106 = vor.u32 %v4103, %v4104
        %v4107 = vrot.slane %v4103, 4
        %v4109 = vshrl.u32 %v3977, 16
        %v4111 = vrot.slane %v4109, 7
        %v4112 = vshll.u32 %v3977, 16
        %v4114 = vor.u32 %v4111, %v4112
        %v4115 = vsel %vm3997, %v4107, %v4114
        %v4116 = vrot.slane %v4111, 4
        %v4118 = vshrl.u32 %v3978, 16
        %v4120 = vrot.slane %v4118, 7
        %v4121 = vshll.u32 %v3978, 16
        %v4123 = vor.u32 %v4120, %v4121
        %v4124 = vrot.slane %v4120, 4
        %v4126 = vshrl.u32 %v3979, 16
        %v4128 = vrot.slane %v4126, 7
        %v4129 = vshll.u32 %v3979, 16
        %v4131 = vor.u32 %v4128, %v4129
        %v4132 = vsel %vm3997, %v4124, %v4131
        %v4133 = vrot.slane %v4128, 4
        %v4135 = vshrl.u32 %v3980, 16
        %v4137 = vrot.slane %v4135, 7
        %v4138 = vshll.u32 %v3980, 16
        %v4140 = vor.u32 %v4137, %v4138
        %v4141 = vrot.slane %v4137, 4
        %v4143 = vshrl.u32 %v3981, 16
        %v4145 = vrot.slane %v4143, 7
        %v4146 = vshll.u32 %v3981, 16
        %v4148 = vor.u32 %v4145, %v4146
        %v4149 = vsel %vm3997, %v4141, %v4148
        %v4150 = vrot.slane %v4145, 4
        %v4152 = vshrl.u32 %v3982, 16
        %v4154 = vrot.slane %v4152, 7
        %v4155 = vshll.u32 %v3982, 16
        %v4157 = vor.u32 %v4154, %v4155
        %v4158 = vrot.slane %v4154, 4
        %v4160 = vshrl.u32 %v3983, 16
        %v4162 = vrot.slane %v4160, 7
        %v4163 = vshll.u32 %v3983, 16
        %v4165 = vor.u32 %v4162, %v4163
        %v4166 = vsel %vm3997, %v4158, %v4165
        %v4167 = vrot.slane %v4162, 4
        %v4169 = vshrl.u32 %v3984, 16
        %v4171 = vrot.slane %v4169, 7
        %v4172 = vshll.u32 %v3984, 16
        %v4174 = vor.u32 %v4171, %v4172
        %v4175 = vrot.slane %v4171, 4
        %v4177 = vshrl.u32 %v3985, 16
        %v4179 = vrot.slane %v4177, 7
        %v4180 = vshll.u32 %v3985, 16
        %v4182 = vor.u32 %v4179, %v4180
        %v4183 = vsel %vm3997, %v4175, %v4182
        %v4184 = vrot.slane %v4179, 4
        %v4186 = vshrl.u32 %v3986, 16
        %v4188 = vrot.slane %v4186, 7
        %v4189 = vshll.u32 %v3986, 16
        %v4191 = vor.u32 %v4188, %v4189
        %v4192 = vrot.slane %v4188, 4
        %v4194 = vshrl.u32 %v3987, 16
        %v4196 = vrot.slane %v4194, 7
        %v4197 = vshll.u32 %v3987, 16
        %v4199 = vor.u32 %v4196, %v4197
        %v4200 = vsel %vm3997, %v4192, %v4199
        %v4201 = vrot.slane %v4196, 4
        %v4203 = vshrl.u32 %v3988, 16
        %v4205 = vrot.slane %v4203, 7
        %v4206 = vshll.u32 %v3988, 16
        %v4208 = vor.u32 %v4205, %v4206
        %v4209 = vrot.slane %v4205, 4
        %v4211 = vshrl.u32 %v3989, 16
        %v4213 = vrot.slane %v4211, 7
        %v4214 = vshll.u32 %v3989, 16
        %v4216 = vor.u32 %v4213, %v4214
        %v4217 = vsel %vm3997, %v4209, %v4216
        %v4218 = vrot.slane %v4213, 4
        %v4220 = vshrl.u32 %v3990, 16
        %v4222 = vrot.slane %v4220, 7
        %v4223 = vshll.u32 %v3990, 16
        %v4225 = vor.u32 %v4222, %v4223
        %v4226 = vrot.slane %v4222, 4
        %v4228 = vshrl.u32 %v3991, 16
        %v4230 = vrot.slane %v4228, 7
        %v4231 = vshll.u32 %v3991, 16
        %v4233 = vor.u32 %v4230, %v4231
        %v4234 = vsel %vm3997, %v4226, %v4233
        %v4235 = vrot.slane %v4230, 4
        %v4237 = vshrl.u32 %v3992, 16
        %v4239 = vrot.slane %v4237, 7
        %v4240 = vshll.u32 %v3992, 16
        %v4242 = vor.u32 %v4239, %v4240
        %v4243 = vrot.slane %v4239, 4
        %v4245 = vshrl.u32 %v3993, 16
        %v4247 = vrot.slane %v4245, 7
        %v4248 = vshll.u32 %v3993, 16
        %v4250 = vor.u32 %v4247, %v4248
        %v4251 = vsel %vm3997, %v4243, %v4250
        %v4252 = vrot.slane %v4247, 4
        %v4254 = vshrl.u32 %v3994, 16
        %v4256 = vrot.slane %v4254, 7
        %v4257 = vshll.u32 %v3994, 16
        %v4259 = vor.u32 %v4256, %v4257
        %v4260 = vrot.slane %v4256, 4
        %v4262 = vshrl.u32 %v3995, 16
        %v4264 = vrot.slane %v4262, 7
        %v4265 = vshll.u32 %v3995, 16
        %v4267 = vor.u32 %v4264, %v4265
        %v4268 = vsel %vm3997, %v4260, %v4267
        %v4269 = vrot.slane %v4264, 4
        %s4318 = scalar_lea.vmem [#allocation2], 12
        %vm4319 = vcmask 1043456
        %vm4320 = vmand %vm4319, %vm3043
        %v4321 = vld [vmem:[%s4318] sm:$0xf]
        %v4322 = vsel %vm4320, %v4004, %v4321
        %4323 = vst [vmem:[%s4318] sm:$0xf] %v4322
        %4324 = vst [vmem:[%s4318 + $0x4] sm:$0xf] %v4013
        %v4325 = vld [vmem:[%s4318 + $0x8] sm:$0x1]
        %v4326 = vsel %vm2988, %v4014, %v4325
        %4327 = vst [vmem:[%s4318 + $0x8] sm:$0x1] %v4326
        %v4328 = vld [vmem:[%s4318 + $0xc] sm:$0xf]
        %v4329 = vsel %vm4320, %v4021, %v4328
        %4330 = vst [vmem:[%s4318 + $0xc] sm:$0xf] %v4329
        %4331 = vst [vmem:[%s4318 + $0x10] sm:$0xf] %v4030
        %v4332 = vld [vmem:[%s4318 + $0x14] sm:$0x1]
        %v4333 = vsel %vm2988, %v4031, %v4332
        %4334 = vst [vmem:[%s4318 + $0x14] sm:$0x1] %v4333
        %v4335 = vld [vmem:[%s4318 + $0x18] sm:$0xf]
        %v4336 = vsel %vm4320, %v4038, %v4335
        %4337 = vst [vmem:[%s4318 + $0x18] sm:$0xf] %v4336
        %4338 = vst [vmem:[%s4318 + $0x1c] sm:$0xf] %v4047
        %v4339 = vld [vmem:[%s4318 + $0x20] sm:$0x1]
        %v4340 = vsel %vm2988, %v4048, %v4339
        %4341 = vst [vmem:[%s4318 + $0x20] sm:$0x1] %v4340
        %v4342 = vld [vmem:[%s4318 + $0x24] sm:$0xf]
        %v4343 = vsel %vm4320, %v4055, %v4342
        %4344 = vst [vmem:[%s4318 + $0x24] sm:$0xf] %v4343
        %4345 = vst [vmem:[%s4318 + $0x28] sm:$0xf] %v4064
        %v4346 = vld [vmem:[%s4318 + $0x2c] sm:$0x1]
        %v4347 = vsel %vm2988, %v4065, %v4346
        %4348 = vst [vmem:[%s4318 + $0x2c] sm:$0x1] %v4347
        %v4349 = vld [vmem:[%s4318 + $0x30] sm:$0xf]
        %v4350 = vsel %vm4320, %v4072, %v4349
        %4351 = vst [vmem:[%s4318 + $0x30] sm:$0xf] %v4350
        %4352 = vst [vmem:[%s4318 + $0x34] sm:$0xf] %v4081
        %v4353 = vld [vmem:[%s4318 + $0x38] sm:$0x1]
        %v4354 = vsel %vm2988, %v4082, %v4353
        %4355 = vst [vmem:[%s4318 + $0x38] sm:$0x1] %v4354
        %v4356 = vld [vmem:[%s4318 + $0x3c] sm:$0xf]
        %v4357 = vsel %vm4320, %v4089, %v4356
        %4358 = vst [vmem:[%s4318 + $0x3c] sm:$0xf] %v4357
        %4359 = vst [vmem:[%s4318 + $0x40] sm:$0xf] %v4098
        %v4360 = vld [vmem:[%s4318 + $0x44] sm:$0x1]
        %v4361 = vsel %vm2988, %v4099, %v4360
        %4362 = vst [vmem:[%s4318 + $0x44] sm:$0x1] %v4361
        %v4363 = vld [vmem:[%s4318 + $0x48] sm:$0xf]
        %v4364 = vsel %vm4320, %v4106, %v4363
        %4365 = vst [vmem:[%s4318 + $0x48] sm:$0xf] %v4364
        %4366 = vst [vmem:[%s4318 + $0x4c] sm:$0xf] %v4115
        %v4367 = vld [vmem:[%s4318 + $0x50] sm:$0x1]
        %v4368 = vsel %vm2988, %v4116, %v4367
        %4369 = vst [vmem:[%s4318 + $0x50] sm:$0x1] %v4368
        %v4370 = vld [vmem:[%s4318 + $0x54] sm:$0xf]
        %v4371 = vsel %vm4320, %v4123, %v4370
        %4372 = vst [vmem:[%s4318 + $0x54] sm:$0xf] %v4371
        %4373 = vst [vmem:[%s4318 + $0x58] sm:$0xf] %v4132
        %v4374 = vld [vmem:[%s4318 + $0x5c] sm:$0x1]
        %v4375 = vsel %vm2988, %v4133, %v4374
        %4376 = vst [vmem:[%s4318 + $0x5c] sm:$0x1] %v4375
        %v4377 = vld [vmem:[%s4318 + $0x60] sm:$0xf]
        %v4378 = vsel %vm4320, %v4140, %v4377
        %4379 = vst [vmem:[%s4318 + $0x60] sm:$0xf] %v4378
        %4380 = vst [vmem:[%s4318 + $0x64] sm:$0xf] %v4149
        %v4381 = vld [vmem:[%s4318 + $0x68] sm:$0x1]
        %v4382 = vsel %vm2988, %v4150, %v4381
        %4383 = vst [vmem:[%s4318 + $0x68] sm:$0x1] %v4382
        %v4384 = vld [vmem:[%s4318 + $0x6c] sm:$0xf]
        %v4385 = vsel %vm4320, %v4157, %v4384
        %4386 = vst [vmem:[%s4318 + $0x6c] sm:$0xf] %v4385
        %4387 = vst [vmem:[%s4318 + $0x70] sm:$0xf] %v4166
        %v4388 = vld [vmem:[%s4318 + $0x74] sm:$0x1]
        %v4389 = vsel %vm2988, %v4167, %v4388
        %4390 = vst [vmem:[%s4318 + $0x74] sm:$0x1] %v4389
        %v4391 = vld [vmem:[%s4318 + $0x78] sm:$0xf]
        %v4392 = vsel %vm4320, %v4174, %v4391
        %4393 = vst [vmem:[%s4318 + $0x78] sm:$0xf] %v4392
        %4394 = vst [vmem:[%s4318 + $0x7c] sm:$0xf] %v4183
        %v4395 = vld [vmem:[%s4318 + $0x80] sm:$0x1]
        %v4396 = vsel %vm2988, %v4184, %v4395
        %4397 = vst [vmem:[%s4318 + $0x80] sm:$0x1] %v4396
        %v4398 = vld [vmem:[%s4318 + $0x84] sm:$0xf]
        %v4399 = vsel %vm4320, %v4191, %v4398
        %4400 = vst [vmem:[%s4318 + $0x84] sm:$0xf] %v4399
        %4401 = vst [vmem:[%s4318 + $0x88] sm:$0xf] %v4200
        %v4402 = vld [vmem:[%s4318 + $0x8c] sm:$0x1]
        %v4403 = vsel %vm2988, %v4201, %v4402
        %4404 = vst [vmem:[%s4318 + $0x8c] sm:$0x1] %v4403
        %v4405 = vld [vmem:[%s4318 + $0x90] sm:$0xf]
        %v4406 = vsel %vm4320, %v4208, %v4405
        %4407 = vst [vmem:[%s4318 + $0x90] sm:$0xf] %v4406
        %4408 = vst [vmem:[%s4318 + $0x94] sm:$0xf] %v4217
        %v4409 = vld [vmem:[%s4318 + $0x98] sm:$0x1]
        %v4410 = vsel %vm2988, %v4218, %v4409
        %4411 = vst [vmem:[%s4318 + $0x98] sm:$0x1] %v4410
        %v4412 = vld [vmem:[%s4318 + $0x9c] sm:$0xf]
        %v4413 = vsel %vm4320, %v4225, %v4412
        %4414 = vst [vmem:[%s4318 + $0x9c] sm:$0xf] %v4413
        %4415 = vst [vmem:[%s4318 + $0xa0] sm:$0xf] %v4234
        %v4416 = vld [vmem:[%s4318 + $0xa4] sm:$0x1]
        %v4417 = vsel %vm2988, %v4235, %v4416
        %4418 = vst [vmem:[%s4318 + $0xa4] sm:$0x1] %v4417
        %v4419 = vld [vmem:[%s4318 + $0xa8] sm:$0xf]
        %v4420 = vsel %vm4320, %v4242, %v4419
        %4421 = vst [vmem:[%s4318 + $0xa8] sm:$0xf] %v4420
        %4422 = vst [vmem:[%s4318 + $0xac] sm:$0xf] %v4251
        %v4423 = vld [vmem:[%s4318 + $0xb0] sm:$0x1]
        %v4424 = vsel %vm2988, %v4252, %v4423
        %4425 = vst [vmem:[%s4318 + $0xb0] sm:$0x1] %v4424
        %v4426 = vld [vmem:[%s4318 + $0xb4] sm:$0xf]
        %v4427 = vsel %vm4320, %v4259, %v4426
        %4428 = vst [vmem:[%s4318 + $0xb4] sm:$0xf] %v4427
        %4429 = vst [vmem:[%s4318 + $0xb8] sm:$0xf] %v4268
        %v4430 = vld [vmem:[%s4318 + $0xbc] sm:$0x1]
        %v4431 = vsel %vm2988, %v4269, %v4430
        %4432 = vst [vmem:[%s4318 + $0xbc] sm:$0x1] %v4431
        %v4433 = vld [vmem:[#allocation2] sm:$0xf]
        %v4434 = vld [vmem:[#allocation2 + $0x4] sm:$0xf]
        %v4435 = vld [vmem:[#allocation2 + $0xc] sm:$0xf]
        %v4436 = vld [vmem:[#allocation2 + $0x10] sm:$0xf]
        %v4437 = vld [vmem:[#allocation2 + $0x18] sm:$0xf]
        %v4438 = vld [vmem:[#allocation2 + $0x1c] sm:$0xf]
        %v4439 = vld [vmem:[#allocation2 + $0x24] sm:$0xf]
        %v4440 = vld [vmem:[#allocation2 + $0x28] sm:$0xf]
        %v4441 = vld [vmem:[#allocation2 + $0x30] sm:$0xf]
        %v4442 = vld [vmem:[#allocation2 + $0x34] sm:$0xf]
        %v4443 = vld [vmem:[#allocation2 + $0x3c] sm:$0xf]
        %v4444 = vld [vmem:[#allocation2 + $0x40] sm:$0xf]
        %v4445 = vld [vmem:[#allocation2 + $0x48] sm:$0xf]
        %v4446 = vld [vmem:[#allocation2 + $0x4c] sm:$0xf]
        %v4447 = vld [vmem:[#allocation2 + $0x54] sm:$0xf]
        %v4448 = vld [vmem:[#allocation2 + $0x58] sm:$0xf]
        %v4449 = vld [vmem:[#allocation2 + $0x60] sm:$0xf]
        %v4450 = vld [vmem:[#allocation2 + $0x64] sm:$0xf]
        %v4451 = vld [vmem:[#allocation2 + $0x6c] sm:$0xf]
        %v4452 = vld [vmem:[#allocation2 + $0x70] sm:$0xf]
        %v4453 = vld [vmem:[#allocation2 + $0x78] sm:$0xf]
        %v4454 = vld [vmem:[#allocation2 + $0x7c] sm:$0xf]
        %v4455 = vld [vmem:[#allocation2 + $0x84] sm:$0xf]
        %v4456 = vld [vmem:[#allocation2 + $0x88] sm:$0xf]
        %v4457 = vld [vmem:[#allocation2 + $0x90] sm:$0xf]
        %v4458 = vld [vmem:[#allocation2 + $0x94] sm:$0xf]
        %v4459 = vld [vmem:[#allocation2 + $0x9c] sm:$0xf]
        %v4460 = vld [vmem:[#allocation2 + $0xa0] sm:$0xf]
        %v4461 = vld [vmem:[#allocation2 + $0xa8] sm:$0xf]
        %v4462 = vld [vmem:[#allocation2 + $0xac] sm:$0xf]
        %v4463 = vld [vmem:[#allocation2 + $0xb4] sm:$0xf]
        %v4464 = vld [vmem:[#allocation2 + $0xb8] sm:$0xf]
        %v4465 = vld [vmem:[%s2] sm:$0xf]
        %v4466 = vld [vmem:[%s2 + $0x4] sm:$0xf]
        %v4467 = vld [vmem:[%s2 + $0x8] sm:$0xf]
        %v4468 = vld [vmem:[%s2 + $0xc] sm:$0xf]
        %v4469 = vld [vmem:[%s2 + $0x10] sm:$0xf]
        %v4470 = vld [vmem:[%s2 + $0x14] sm:$0xf]
        %v4471 = vld [vmem:[%s2 + $0x18] sm:$0xf]
        %v4472 = vld [vmem:[%s2 + $0x1c] sm:$0xf]
        %v4473 = vld [vmem:[%s2 + $0x20] sm:$0xf]
        %v4474 = vld [vmem:[%s2 + $0x24] sm:$0xf]
        %v4475 = vld [vmem:[%s2 + $0x28] sm:$0xf]
        %v4476 = vld [vmem:[%s2 + $0x2c] sm:$0xf]
        %v4477 = vld [vmem:[%s2 + $0x30] sm:$0xf]
        %v4478 = vld [vmem:[%s2 + $0x34] sm:$0xf]
        %v4479 = vld [vmem:[%s2 + $0x38] sm:$0xf]
        %v4480 = vld [vmem:[%s2 + $0x3c] sm:$0xf]
        %v4481 = vld [vmem:[#allocation2 + $0x8] sm:$0x1]
        %v4482 = vld [vmem:[#allocation2 + $0x14] sm:$0x1]
        %v4483 = vld [vmem:[#allocation2 + $0x20] sm:$0x1]
        %v4484 = vld [vmem:[#allocation2 + $0x2c] sm:$0x1]
        %v4485 = vld [vmem:[#allocation2 + $0x38] sm:$0x1]
        %v4486 = vld [vmem:[#allocation2 + $0x44] sm:$0x1]
        %v4487 = vld [vmem:[#allocation2 + $0x50] sm:$0x1]
        %v4488 = vld [vmem:[#allocation2 + $0x5c] sm:$0x1]
        %v4489 = vld [vmem:[#allocation2 + $0x68] sm:$0x1]
        %v4490 = vld [vmem:[#allocation2 + $0x74] sm:$0x1]
        %v4491 = vld [vmem:[#allocation2 + $0x80] sm:$0x1]
        %v4492 = vld [vmem:[#allocation2 + $0x8c] sm:$0x1]
        %v4493 = vld [vmem:[#allocation2 + $0x98] sm:$0x1]
        %v4494 = vld [vmem:[#allocation2 + $0xa4] sm:$0x1]
        %v4495 = vld [vmem:[#allocation2 + $0xb0] sm:$0x1]
        %v4496 = vld [vmem:[#allocation2 + $0xbc] sm:$0x1]
        %vm4497 = vsmask.f32 3328
        %vm4498 = vsmask.f32 7440
        %vm4499 = vmor %vm4497, %vm4498
        %v4501 = vshrl.u32 %v4433, 16
        %v4503 = vrot.slane %v4501, 4
        %v4504 = vshll.u32 %v4433, 16
        %v4506 = vrot.slane %v4504, 5
        %v4507 = vor.u32 %v4503, %v4506
        %v4508 = vrot.slane %v4507, 4
        %v4510 = vshll.u32 %v4434, 16
        %v4512 = vrot.slane %v4510, 5
        %v4513 = vsel %vm4499, %v4508, %v4512
        %v4514 = vshrl.u32 %v4434, 16
        %v4516 = vrot.slane %v4514, 4
        %v4517 = vor.u32 %v4516, %v4512
        %v4518 = vrot.slane %v4517, 4
        %v4520 = vshll.u32 %v4481, 16
        %v4522 = vrot.slane %v4520, 5
        %v4523 = vsel %vm4499, %v4518, %v4522
        %v4525 = vshrl.u32 %v4435, 16
        %v4527 = vrot.slane %v4525, 4
        %v4528 = vshll.u32 %v4435, 16
        %v4530 = vrot.slane %v4528, 5
        %v4531 = vor.u32 %v4527, %v4530
        %v4532 = vrot.slane %v4531, 4
        %v4534 = vshll.u32 %v4436, 16
        %v4536 = vrot.slane %v4534, 5
        %v4537 = vsel %vm4499, %v4532, %v4536
        %v4538 = vshrl.u32 %v4436, 16
        %v4540 = vrot.slane %v4538, 4
        %v4541 = vor.u32 %v4540, %v4536
        %v4542 = vrot.slane %v4541, 4
        %v4544 = vshll.u32 %v4482, 16
        %v4546 = vrot.slane %v4544, 5
        %v4547 = vsel %vm4499, %v4542, %v4546
        %v4549 = vshrl.u32 %v4437, 16
        %v4551 = vrot.slane %v4549, 4
        %v4552 = vshll.u32 %v4437, 16
        %v4554 = vrot.slane %v4552, 5
        %v4555 = vor.u32 %v4551, %v4554
        %v4556 = vrot.slane %v4555, 4
        %v4558 = vshll.u32 %v4438, 16
        %v4560 = vrot.slane %v4558, 5
        %v4561 = vsel %vm4499, %v4556, %v4560
        %v4562 = vshrl.u32 %v4438, 16
        %v4564 = vrot.slane %v4562, 4
        %v4565 = vor.u32 %v4564, %v4560
        %v4566 = vrot.slane %v4565, 4
        %v4568 = vshll.u32 %v4483, 16
        %v4570 = vrot.slane %v4568, 5
        %v4571 = vsel %vm4499, %v4566, %v4570
        %v4573 = vshrl.u32 %v4439, 16
        %v4575 = vrot.slane %v4573, 4
        %v4576 = vshll.u32 %v4439, 16
        %v4578 = vrot.slane %v4576, 5
        %v4579 = vor.u32 %v4575, %v4578
        %v4580 = vrot.slane %v4579, 4
        %v4582 = vshll.u32 %v4440, 16
        %v4584 = vrot.slane %v4582, 5
        %v4585 = vsel %vm4499, %v4580, %v4584
        %v4586 = vshrl.u32 %v4440, 16
        %v4588 = vrot.slane %v4586, 4
        %v4589 = vor.u32 %v4588, %v4584
        %v4590 = vrot.slane %v4589, 4
        %v4592 = vshll.u32 %v4484, 16
        %v4594 = vrot.slane %v4592, 5
        %v4595 = vsel %vm4499, %v4590, %v4594
        %v4597 = vshrl.u32 %v4441, 16
        %v4599 = vrot.slane %v4597, 4
        %v4600 = vshll.u32 %v4441, 16
        %v4602 = vrot.slane %v4600, 5
        %v4603 = vor.u32 %v4599, %v4602
        %v4604 = vrot.slane %v4603, 4
        %v4606 = vshll.u32 %v4442, 16
        %v4608 = vrot.slane %v4606, 5
        %v4609 = vsel %vm4499, %v4604, %v4608
        %v4610 = vshrl.u32 %v4442, 16
        %v4612 = vrot.slane %v4610, 4
        %v4613 = vor.u32 %v4612, %v4608
        %v4614 = vrot.slane %v4613, 4
        %v4616 = vshll.u32 %v4485, 16
        %v4618 = vrot.slane %v4616, 5
        %v4619 = vsel %vm4499, %v4614, %v4618
        %v4621 = vshrl.u32 %v4443, 16
        %v4623 = vrot.slane %v4621, 4
        %v4624 = vshll.u32 %v4443, 16
        %v4626 = vrot.slane %v4624, 5
        %v4627 = vor.u32 %v4623, %v4626
        %v4628 = vrot.slane %v4627, 4
        %v4630 = vshll.u32 %v4444, 16
        %v4632 = vrot.slane %v4630, 5
        %v4633 = vsel %vm4499, %v4628, %v4632
        %v4634 = vshrl.u32 %v4444, 16
        %v4636 = vrot.slane %v4634, 4
        %v4637 = vor.u32 %v4636, %v4632
        %v4638 = vrot.slane %v4637, 4
        %v4640 = vshll.u32 %v4486, 16
        %v4642 = vrot.slane %v4640, 5
        %v4643 = vsel %vm4499, %v4638, %v4642
        %v4645 = vshrl.u32 %v4445, 16
        %v4647 = vrot.slane %v4645, 4
        %v4648 = vshll.u32 %v4445, 16
        %v4650 = vrot.slane %v4648, 5
        %v4651 = vor.u32 %v4647, %v4650
        %v4652 = vrot.slane %v4651, 4
        %v4654 = vshll.u32 %v4446, 16
        %v4656 = vrot.slane %v4654, 5
        %v4657 = vsel %vm4499, %v4652, %v4656
        %v4658 = vshrl.u32 %v4446, 16
        %v4660 = vrot.slane %v4658, 4
        %v4661 = vor.u32 %v4660, %v4656
        %v4662 = vrot.slane %v4661, 4
        %v4664 = vshll.u32 %v4487, 16
        %v4666 = vrot.slane %v4664, 5
        %v4667 = vsel %vm4499, %v4662, %v4666
        %v4669 = vshrl.u32 %v4447, 16
        %v4671 = vrot.slane %v4669, 4
        %v4672 = vshll.u32 %v4447, 16
        %v4674 = vrot.slane %v4672, 5
        %v4675 = vor.u32 %v4671, %v4674
        %v4676 = vrot.slane %v4675, 4
        %v4678 = vshll.u32 %v4448, 16
        %v4680 = vrot.slane %v4678, 5
        %v4681 = vsel %vm4499, %v4676, %v4680
        %v4682 = vshrl.u32 %v4448, 16
        %v4684 = vrot.slane %v4682, 4
        %v4685 = vor.u32 %v4684, %v4680
        %v4686 = vrot.slane %v4685, 4
        %v4688 = vshll.u32 %v4488, 16
        %v4690 = vrot.slane %v4688, 5
        %v4691 = vsel %vm4499, %v4686, %v4690
        %v4693 = vshrl.u32 %v4449, 16
        %v4695 = vrot.slane %v4693, 4
        %v4696 = vshll.u32 %v4449, 16
        %v4698 = vrot.slane %v4696, 5
        %v4699 = vor.u32 %v4695, %v4698
        %v4700 = vrot.slane %v4699, 4
        %v4702 = vshll.u32 %v4450, 16
        %v4704 = vrot.slane %v4702, 5
        %v4705 = vsel %vm4499, %v4700, %v4704
        %v4706 = vshrl.u32 %v4450, 16
        %v4708 = vrot.slane %v4706, 4
        %v4709 = vor.u32 %v4708, %v4704
        %v4710 = vrot.slane %v4709, 4
        %v4712 = vshll.u32 %v4489, 16
        %v4714 = vrot.slane %v4712, 5
        %v4715 = vsel %vm4499, %v4710, %v4714
        %v4717 = vshrl.u32 %v4451, 16
        %v4719 = vrot.slane %v4717, 4
        %v4720 = vshll.u32 %v4451, 16
        %v4722 = vrot.slane %v4720, 5
        %v4723 = vor.u32 %v4719, %v4722
        %v4724 = vrot.slane %v4723, 4
        %v4726 = vshll.u32 %v4452, 16
        %v4728 = vrot.slane %v4726, 5
        %v4729 = vsel %vm4499, %v4724, %v4728
        %v4730 = vshrl.u32 %v4452, 16
        %v4732 = vrot.slane %v4730, 4
        %v4733 = vor.u32 %v4732, %v4728
        %v4734 = vrot.slane %v4733, 4
        %v4736 = vshll.u32 %v4490, 16
        %v4738 = vrot.slane %v4736, 5
        %v4739 = vsel %vm4499, %v4734, %v4738
        %v4741 = vshrl.u32 %v4453, 16
        %v4743 = vrot.slane %v4741, 4
        %v4744 = vshll.u32 %v4453, 16
        %v4746 = vrot.slane %v4744, 5
        %v4747 = vor.u32 %v4743, %v4746
        %v4748 = vrot.slane %v4747, 4
        %v4750 = vshll.u32 %v4454, 16
        %v4752 = vrot.slane %v4750, 5
        %v4753 = vsel %vm4499, %v4748, %v4752
        %v4754 = vshrl.u32 %v4454, 16
        %v4756 = vrot.slane %v4754, 4
        %v4757 = vor.u32 %v4756, %v4752
        %v4758 = vrot.slane %v4757, 4
        %v4760 = vshll.u32 %v4491, 16
        %v4762 = vrot.slane %v4760, 5
        %v4763 = vsel %vm4499, %v4758, %v4762
        %v4765 = vshrl.u32 %v4455, 16
        %v4767 = vrot.slane %v4765, 4
        %v4768 = vshll.u32 %v4455, 16
        %v4770 = vrot.slane %v4768, 5
        %v4771 = vor.u32 %v4767, %v4770
        %v4772 = vrot.slane %v4771, 4
        %v4774 = vshll.u32 %v4456, 16
        %v4776 = vrot.slane %v4774, 5
        %v4777 = vsel %vm4499, %v4772, %v4776
        %v4778 = vshrl.u32 %v4456, 16
        %v4780 = vrot.slane %v4778, 4
        %v4781 = vor.u32 %v4780, %v4776
        %v4782 = vrot.slane %v4781, 4
        %v4784 = vshll.u32 %v4492, 16
        %v4786 = vrot.slane %v4784, 5
        %v4787 = vsel %vm4499, %v4782, %v4786
        %v4789 = vshrl.u32 %v4457, 16
        %v4791 = vrot.slane %v4789, 4
        %v4792 = vshll.u32 %v4457, 16
        %v4794 = vrot.slane %v4792, 5
        %v4795 = vor.u32 %v4791, %v4794
        %v4796 = vrot.slane %v4795, 4
        %v4798 = vshll.u32 %v4458, 16
        %v4800 = vrot.slane %v4798, 5
        %v4801 = vsel %vm4499, %v4796, %v4800
        %v4802 = vshrl.u32 %v4458, 16
        %v4804 = vrot.slane %v4802, 4
        %v4805 = vor.u32 %v4804, %v4800
        %v4806 = vrot.slane %v4805, 4
        %v4808 = vshll.u32 %v4493, 16
        %v4810 = vrot.slane %v4808, 5
        %v4811 = vsel %vm4499, %v4806, %v4810
        %v4813 = vshrl.u32 %v4459, 16
        %v4815 = vrot.slane %v4813, 4
        %v4816 = vshll.u32 %v4459, 16
        %v4818 = vrot.slane %v4816, 5
        %v4819 = vor.u32 %v4815, %v4818
        %v4820 = vrot.slane %v4819, 4
        %v4822 = vshll.u32 %v4460, 16
        %v4824 = vrot.slane %v4822, 5
        %v4825 = vsel %vm4499, %v4820, %v4824
        %v4826 = vshrl.u32 %v4460, 16
        %v4828 = vrot.slane %v4826, 4
        %v4829 = vor.u32 %v4828, %v4824
        %v4830 = vrot.slane %v4829, 4
        %v4832 = vshll.u32 %v4494, 16
        %v4834 = vrot.slane %v4832, 5
        %v4835 = vsel %vm4499, %v4830, %v4834
        %v4837 = vshrl.u32 %v4461, 16
        %v4839 = vrot.slane %v4837, 4
        %v4840 = vshll.u32 %v4461, 16
        %v4842 = vrot.slane %v4840, 5
        %v4843 = vor.u32 %v4839, %v4842
        %v4844 = vrot.slane %v4843, 4
        %v4846 = vshll.u32 %v4462, 16
        %v4848 = vrot.slane %v4846, 5
        %v4849 = vsel %vm4499, %v4844, %v4848
        %v4850 = vshrl.u32 %v4462, 16
        %v4852 = vrot.slane %v4850, 4
        %v4853 = vor.u32 %v4852, %v4848
        %v4854 = vrot.slane %v4853, 4
        %v4856 = vshll.u32 %v4495, 16
        %v4858 = vrot.slane %v4856, 5
        %v4859 = vsel %vm4499, %v4854, %v4858
        %v4861 = vshrl.u32 %v4463, 16
        %v4863 = vrot.slane %v4861, 4
        %v4864 = vshll.u32 %v4463, 16
        %v4866 = vrot.slane %v4864, 5
        %v4867 = vor.u32 %v4863, %v4866
        %v4868 = vrot.slane %v4867, 4
        %v4870 = vshll.u32 %v4464, 16
        %v4872 = vrot.slane %v4870, 5
        %v4873 = vsel %vm4499, %v4868, %v4872
        %v4874 = vshrl.u32 %v4464, 16
        %v4876 = vrot.slane %v4874, 4
        %v4877 = vor.u32 %v4876, %v4872
        %v4878 = vrot.slane %v4877, 4
        %v4880 = vshll.u32 %v4496, 16
        %v4882 = vrot.slane %v4880, 5
        %v4883 = vsel %vm4499, %v4878, %v4882
        %s4884 = scalar_lea.vmem %s2, 64
        %v4885 = vld [vmem:[%s4884] sm:$0xf]
        %v4886 = vld [vmem:[%s4884 + $0x4] sm:$0xf]
        %v4887 = vld [vmem:[%s4884 + $0x8] sm:$0xf]
        %v4888 = vld [vmem:[%s4884 + $0xc] sm:$0xf]
        %v4889 = vld [vmem:[%s4884 + $0x10] sm:$0xf]
        %v4890 = vld [vmem:[%s4884 + $0x14] sm:$0xf]
        %v4891 = vld [vmem:[%s4884 + $0x18] sm:$0xf]
        %v4892 = vld [vmem:[%s4884 + $0x1c] sm:$0xf]
        %v4893 = vld [vmem:[%s4884 + $0x20] sm:$0xf]
        %v4894 = vld [vmem:[%s4884 + $0x24] sm:$0xf]
        %v4895 = vld [vmem:[%s4884 + $0x28] sm:$0xf]
        %v4896 = vld [vmem:[%s4884 + $0x2c] sm:$0xf]
        %v4897 = vld [vmem:[%s4884 + $0x30] sm:$0xf]
        %v4898 = vld [vmem:[%s4884 + $0x34] sm:$0xf]
        %v4899 = vld [vmem:[%s4884 + $0x38] sm:$0xf]
        %v4900 = vld [vmem:[%s4884 + $0x3c] sm:$0xf]
        %v4901 = vunpack.c.l.b16 %v4513
        %v4902 = vunpack.c.l.b16 %v4523
        %v4903 = vunpack.c.l.b16 %v4537
        %v4904 = vunpack.c.l.b16 %v4547
        %v4905 = vunpack.c.l.b16 %v4561
        %v4906 = vunpack.c.l.b16 %v4571
        %v4907 = vunpack.c.l.b16 %v4585
        %v4908 = vunpack.c.l.b16 %v4595
        %v4909 = vunpack.c.l.b16 %v4609
        %v4910 = vunpack.c.l.b16 %v4619
        %v4911 = vunpack.c.l.b16 %v4633
        %v4912 = vunpack.c.l.b16 %v4643
        %v4913 = vunpack.c.l.b16 %v4657
        %v4914 = vunpack.c.l.b16 %v4667
        %v4915 = vunpack.c.l.b16 %v4681
        %v4916 = vunpack.c.l.b16 %v4691
        %v4917 = vunpack.c.l.b16 %v4705
        %v4918 = vunpack.c.l.b16 %v4715
        %v4919 = vunpack.c.l.b16 %v4729
        %v4920 = vunpack.c.l.b16 %v4739
        %v4921 = vunpack.c.l.b16 %v4753
        %v4922 = vunpack.c.l.b16 %v4763
        %v4923 = vunpack.c.l.b16 %v4777
        %v4924 = vunpack.c.l.b16 %v4787
        %v4925 = vunpack.c.l.b16 %v4801
        %v4926 = vunpack.c.l.b16 %v4811
        %v4927 = vunpack.c.l.b16 %v4825
        %v4928 = vunpack.c.l.b16 %v4835
        %v4929 = vunpack.c.l.b16 %v4849
        %v4930 = vunpack.c.l.b16 %v4859
        %v4931 = vunpack.c.l.b16 %v4873
        %v4932 = vunpack.c.l.b16 %v4883
        %v4933 = vpack.c.b16 %v4902, %v4901
        %v4934 = vpack.c.b16 %v4904, %v4903
        %v4935 = vpack.c.b16 %v4906, %v4905
        %v4936 = vpack.c.b16 %v4908, %v4907
        %v4937 = vpack.c.b16 %v4910, %v4909
        %v4938 = vpack.c.b16 %v4912, %v4911
        %v4939 = vpack.c.b16 %v4914, %v4913
        %v4940 = vpack.c.b16 %v4916, %v4915
        %v4941 = vpack.c.b16 %v4918, %v4917
        %v4942 = vpack.c.b16 %v4920, %v4919
        %v4943 = vpack.c.b16 %v4922, %v4921
        %v4944 = vpack.c.b16 %v4924, %v4923
        %v4945 = vpack.c.b16 %v4926, %v4925
        %v4946 = vpack.c.b16 %v4928, %v4927
        %v4947 = vpack.c.b16 %v4930, %v4929
        %v4948 = vpack.c.b16 %v4932, %v4931
        %v4981 = vunpack.c.l.b16 %v4885
        %v4982 = vunpack.c.l.b16 %v4886
        %v4983 = vunpack.c.l.b16 %v4887
        %v4984 = vunpack.c.l.b16 %v4888
        %v4985 = vunpack.c.l.b16 %v4889
        %v4986 = vunpack.c.l.b16 %v4890
        %v4987 = vunpack.c.l.b16 %v4891
        %v4988 = vunpack.c.l.b16 %v4892
        %v4989 = vunpack.c.l.b16 %v4893
        %v4990 = vunpack.c.l.b16 %v4894
        %v4991 = vunpack.c.l.b16 %v4895
        %v4992 = vunpack.c.l.b16 %v4896
        %v4993 = vunpack.c.l.b16 %v4897
        %v4994 = vunpack.c.l.b16 %v4898
        %v4995 = vunpack.c.l.b16 %v4899
        %v4996 = vunpack.c.l.b16 %v4900
        %v4997 = vpack.c.b16 %v4982, %v4981
        %v4998 = vpack.c.b16 %v4984, %v4983
        %v4999 = vpack.c.b16 %v4986, %v4985
        %v5000 = vpack.c.b16 %v4988, %v4987
        %v5001 = vpack.c.b16 %v4990, %v4989
        %v5002 = vpack.c.b16 %v4992, %v4991
        %v5003 = vpack.c.b16 %v4994, %v4993
        %v5004 = vpack.c.b16 %v4996, %v4995
        %5013 = vmatprep.subr.bf16.mxu0 0
        %5014 = vmatpush1.bf16.msra.mxu0 %v5004
        %5015 = vmatprep.subr.bf16.mxu0 0
        %5016 = vmatpush1.bf16.msra.mxu0 %v5003
        %5017 = vmatprep.subr.bf16.mxu0 0
        %5018 = vmatpush1.bf16.msra.mxu0 %v5002
        %5019 = vmatprep.subr.bf16.mxu0 0
        %5020 = vmatpush1.bf16.msra.mxu0 %v5001
        %5021 = vmatprep.subr.bf16.mxu0 0
        %5022 = vmatpush1.bf16.msra.mxu0 %v5000
        %5023 = vmatprep.subr.bf16.mxu0 0
        %5024 = vmatpush1.bf16.msra.mxu0 %v4999
        %5025 = vmatprep.subr.bf16.mxu0 0
        %5026 = vmatpush1.bf16.msra.mxu0 %v4998
        %5027 = vmatprep.subr.bf16.mxu0 0
        %5028 = vmatpush1.bf16.msra.mxu0 %v4997
        %5029 = vmatprep.subr.bf16.mxu0 0
        %5030 = vmatpush2.bf16.msra.mxu0 0
        %5031 = vmatprep.subr.bf16.mxu0 0
        %5032 = vmatpush2.bf16.msra.mxu0 0
        %5033 = vmatprep.subr.bf16.mxu0 0
        %5034 = vmatpush2.bf16.msra.mxu0 0
        %5035 = vmatprep.subr.bf16.mxu0 0
        %5036 = vmatpush2.bf16.msra.mxu0 0
        %5037 = vmatprep.subr.bf16.mxu0 0
        %5038 = vmatpush2.bf16.msra.mxu0 0
        %5039 = vmatprep.subr.bf16.mxu0 0
        %5040 = vmatpush2.bf16.msra.mxu0 0
        %5041 = vmatprep.subr.bf16.mxu0 0
        %5042 = vmatpush2.bf16.msra.mxu0 0
        %5043 = vmatprep.subr.bf16.mxu0 0
        %5044 = vmatpush2.bf16.msra.mxu0 0
        %5045 = vmatprep.mubr.bf16.mxu0 0
        %5046 = vmatmul.mubr.bf16.gmra.mxu0 %v4933
        %v5047 = vpop.f32.mrf.mxu0
        %v5048 = vadd.f32 0.0, %v5047
        %v5049 = vpop.f32.mrf.mxu0
        %v5050 = vpop.f32.mrf.mxu0
        %v5051 = vadd.f32 0.0, %v5050
        %v5052 = vpop.f32.mrf.mxu0
        %5053 = vmatprep.mubr.bf16.mxu0 0
        %5054 = vmatmul.mubr.bf16.gmra.mxu0 %v4934
        %v5055 = vpop.f32.mrf.mxu0
        %v5056 = vadd.f32 0.0, %v5055
        %v5057 = vpop.f32.mrf.mxu0
        %v5058 = vpop.f32.mrf.mxu0
        %v5059 = vadd.f32 0.0, %v5058
        %v5060 = vpop.f32.mrf.mxu0
        %5061 = vmatprep.mubr.bf16.mxu0 0
        %5062 = vmatmul.mubr.bf16.gmra.mxu0 %v4935
        %v5063 = vpop.f32.mrf.mxu0
        %v5064 = vadd.f32 0.0, %v5063
        %v5065 = vpop.f32.mrf.mxu0
        %v5066 = vpop.f32.mrf.mxu0
        %v5067 = vadd.f32 0.0, %v5066
        %v5068 = vpop.f32.mrf.mxu0
        %5069 = vmatprep.mubr.bf16.mxu0 0
        %5070 = vmatmul.mubr.bf16.gmra.mxu0 %v4936
        %v5071 = vpop.f32.mrf.mxu0
        %v5072 = vadd.f32 0.0, %v5071
        %v5073 = vpop.f32.mrf.mxu0
        %v5074 = vpop.f32.mrf.mxu0
        %v5075 = vadd.f32 0.0, %v5074
        %v5076 = vpop.f32.mrf.mxu0
        %5077 = vmatprep.mubr.bf16.mxu0 0
        %5078 = vmatmul.mubr.bf16.gmra.mxu0 %v4937
        %v5079 = vpop.f32.mrf.mxu0
        %v5080 = vadd.f32 0.0, %v5079
        %v5081 = vpop.f32.mrf.mxu0
        %v5082 = vpop.f32.mrf.mxu0
        %v5083 = vadd.f32 0.0, %v5082
        %v5084 = vpop.f32.mrf.mxu0
        %5085 = vmatprep.mubr.bf16.mxu0 0
        %5086 = vmatmul.mubr.bf16.gmra.mxu0 %v4938
        %v5087 = vpop.f32.mrf.mxu0
        %v5088 = vadd.f32 0.0, %v5087
        %v5089 = vpop.f32.mrf.mxu0
        %v5090 = vpop.f32.mrf.mxu0
        %v5091 = vadd.f32 0.0, %v5090
        %v5092 = vpop.f32.mrf.mxu0
        %5093 = vmatprep.mubr.bf16.mxu0 0
        %5094 = vmatmul.mubr.bf16.gmra.mxu0 %v4939
        %v5095 = vpop.f32.mrf.mxu0
        %v5096 = vadd.f32 0.0, %v5095
        %v5097 = vpop.f32.mrf.mxu0
        %v5098 = vpop.f32.mrf.mxu0
        %v5099 = vadd.f32 0.0, %v5098
        %v5100 = vpop.f32.mrf.mxu0
        %5101 = vmatprep.mubr.bf16.mxu0 0
        %5102 = vmatmul.mubr.bf16.gmra.mxu0 %v4940
        %v5103 = vpop.f32.mrf.mxu0
        %v5104 = vadd.f32 0.0, %v5103
        %v5105 = vpop.f32.mrf.mxu0
        %v5106 = vpop.f32.mrf.mxu0
        %v5107 = vadd.f32 0.0, %v5106
        %v5108 = vpop.f32.mrf.mxu0
        %5109 = vmatprep.mubr.bf16.mxu0 0
        %5110 = vmatmul.mubr.bf16.gmra.mxu0 %v4941
        %v5111 = vpop.f32.mrf.mxu0
        %v5112 = vadd.f32 0.0, %v5111
        %v5113 = vpop.f32.mrf.mxu0
        %v5114 = vpop.f32.mrf.mxu0
        %v5115 = vadd.f32 0.0, %v5114
        %v5116 = vpop.f32.mrf.mxu0
        %5117 = vmatprep.mubr.bf16.mxu0 0
        %5118 = vmatmul.mubr.bf16.gmra.mxu0 %v4942
        %v5119 = vpop.f32.mrf.mxu0
        %v5120 = vadd.f32 0.0, %v5119
        %v5121 = vpop.f32.mrf.mxu0
        %v5122 = vpop.f32.mrf.mxu0
        %v5123 = vadd.f32 0.0, %v5122
        %v5124 = vpop.f32.mrf.mxu0
        %5125 = vmatprep.mubr.bf16.mxu0 0
        %5126 = vmatmul.mubr.bf16.gmra.mxu0 %v4943
        %v5127 = vpop.f32.mrf.mxu0
        %v5128 = vadd.f32 0.0, %v5127
        %v5129 = vpop.f32.mrf.mxu0
        %v5130 = vpop.f32.mrf.mxu0
        %v5131 = vadd.f32 0.0, %v5130
        %v5132 = vpop.f32.mrf.mxu0
        %5133 = vmatprep.mubr.bf16.mxu0 0
        %5134 = vmatmul.mubr.bf16.gmra.mxu0 %v4944
        %v5135 = vpop.f32.mrf.mxu0
        %v5136 = vadd.f32 0.0, %v5135
        %v5137 = vpop.f32.mrf.mxu0
        %v5138 = vpop.f32.mrf.mxu0
        %v5139 = vadd.f32 0.0, %v5138
        %v5140 = vpop.f32.mrf.mxu0
        %5141 = vmatprep.mubr.bf16.mxu0 0
        %5142 = vmatmul.mubr.bf16.gmra.mxu0 %v4945
        %v5143 = vpop.f32.mrf.mxu0
        %v5144 = vadd.f32 0.0, %v5143
        %v5145 = vpop.f32.mrf.mxu0
        %v5146 = vpop.f32.mrf.mxu0
        %v5147 = vadd.f32 0.0, %v5146
        %v5148 = vpop.f32.mrf.mxu0
        %5149 = vmatprep.mubr.bf16.mxu0 0
        %5150 = vmatmul.mubr.bf16.gmra.mxu0 %v4946
        %v5151 = vpop.f32.mrf.mxu0
        %v5152 = vadd.f32 0.0, %v5151
        %v5153 = vpop.f32.mrf.mxu0
        %v5154 = vpop.f32.mrf.mxu0
        %v5155 = vadd.f32 0.0, %v5154
        %v5156 = vpop.f32.mrf.mxu0
        %5157 = vmatprep.mubr.bf16.mxu0 0
        %5158 = vmatmul.mubr.bf16.gmra.mxu0 %v4947
        %v5159 = vpop.f32.mrf.mxu0
        %v5160 = vadd.f32 0.0, %v5159
        %v5161 = vpop.f32.mrf.mxu0
        %v5162 = vpop.f32.mrf.mxu0
        %v5163 = vadd.f32 0.0, %v5162
        %v5164 = vpop.f32.mrf.mxu0
        %5165 = vmatprep.mubr.bf16.mxu0 0
        %5166 = vmatmul.mubr.bf16.gmra.mxu0 %v4948
        %v5167 = vpop.f32.mrf.mxu0
        %v5168 = vadd.f32 0.0, %v5167
        %v5169 = vpop.f32.mrf.mxu0
        %v5170 = vpop.f32.mrf.mxu0
        %v5171 = vadd.f32 0.0, %v5170
        %v5172 = vpop.f32.mrf.mxu0
        %5173 = vdwg.mxu0
        %v5206 = vunpack.c.l.b16 %v4433
        %v5207 = vunpack.c.l.b16 %v4434
        %v5208 = vunpack.c.l.b16 %v4435
        %v5209 = vunpack.c.l.b16 %v4436
        %v5210 = vunpack.c.l.b16 %v4437
        %v5211 = vunpack.c.l.b16 %v4438
        %v5212 = vunpack.c.l.b16 %v4439
        %v5213 = vunpack.c.l.b16 %v4440
        %v5214 = vunpack.c.l.b16 %v4441
        %v5215 = vunpack.c.l.b16 %v4442
        %v5216 = vunpack.c.l.b16 %v4443
        %v5217 = vunpack.c.l.b16 %v4444
        %v5218 = vunpack.c.l.b16 %v4445
        %v5219 = vunpack.c.l.b16 %v4446
        %v5220 = vunpack.c.l.b16 %v4447
        %v5221 = vunpack.c.l.b16 %v4448
        %v5222 = vunpack.c.l.b16 %v4449
        %v5223 = vunpack.c.l.b16 %v4450
        %v5224 = vunpack.c.l.b16 %v4451
        %v5225 = vunpack.c.l.b16 %v4452
        %v5226 = vunpack.c.l.b16 %v4453
        %v5227 = vunpack.c.l.b16 %v4454
        %v5228 = vunpack.c.l.b16 %v4455
        %v5229 = vunpack.c.l.b16 %v4456
        %v5230 = vunpack.c.l.b16 %v4457
        %v5231 = vunpack.c.l.b16 %v4458
        %v5232 = vunpack.c.l.b16 %v4459
        %v5233 = vunpack.c.l.b16 %v4460
        %v5234 = vunpack.c.l.b16 %v4461
        %v5235 = vunpack.c.l.b16 %v4462
        %v5236 = vunpack.c.l.b16 %v4463
        %v5237 = vunpack.c.l.b16 %v4464
        %v5238 = vpack.c.b16 %v5207, %v5206
        %v5239 = vpack.c.b16 %v5209, %v5208
        %v5240 = vpack.c.b16 %v5211, %v5210
        %v5241 = vpack.c.b16 %v5213, %v5212
        %v5242 = vpack.c.b16 %v5215, %v5214
        %v5243 = vpack.c.b16 %v5217, %v5216
        %v5244 = vpack.c.b16 %v5219, %v5218
        %v5245 = vpack.c.b16 %v5221, %v5220
        %v5246 = vpack.c.b16 %v5223, %v5222
        %v5247 = vpack.c.b16 %v5225, %v5224
        %v5248 = vpack.c.b16 %v5227, %v5226
        %v5249 = vpack.c.b16 %v5229, %v5228
        %v5250 = vpack.c.b16 %v5231, %v5230
        %v5251 = vpack.c.b16 %v5233, %v5232
        %v5252 = vpack.c.b16 %v5235, %v5234
        %v5253 = vpack.c.b16 %v5237, %v5236
        %v5286 = vunpack.c.l.b16 %v4465
        %v5287 = vunpack.c.l.b16 %v4466
        %v5288 = vunpack.c.l.b16 %v4467
        %v5289 = vunpack.c.l.b16 %v4468
        %v5290 = vunpack.c.l.b16 %v4469
        %v5291 = vunpack.c.l.b16 %v4470
        %v5292 = vunpack.c.l.b16 %v4471
        %v5293 = vunpack.c.l.b16 %v4472
        %v5294 = vunpack.c.l.b16 %v4473
        %v5295 = vunpack.c.l.b16 %v4474
        %v5296 = vunpack.c.l.b16 %v4475
        %v5297 = vunpack.c.l.b16 %v4476
        %v5298 = vunpack.c.l.b16 %v4477
        %v5299 = vunpack.c.l.b16 %v4478
        %v5300 = vunpack.c.l.b16 %v4479
        %v5301 = vunpack.c.l.b16 %v4480
        %v5302 = vpack.c.b16 %v5287, %v5286
        %v5303 = vpack.c.b16 %v5289, %v5288
        %v5304 = vpack.c.b16 %v5291, %v5290
        %v5305 = vpack.c.b16 %v5293, %v5292
        %v5306 = vpack.c.b16 %v5295, %v5294
        %v5307 = vpack.c.b16 %v5297, %v5296
        %v5308 = vpack.c.b16 %v5299, %v5298
        %v5309 = vpack.c.b16 %v5301, %v5300
        %5318 = vmatprep.subr.bf16.mxu0 0
        %5319 = vmatpush1.bf16.msra.mxu0 %v5309
        %5320 = vmatprep.subr.bf16.mxu0 0
        %5321 = vmatpush1.bf16.msra.mxu0 %v5308
        %5322 = vmatprep.subr.bf16.mxu0 0
        %5323 = vmatpush1.bf16.msra.mxu0 %v5307
        %5324 = vmatprep.subr.bf16.mxu0 0
        %5325 = vmatpush1.bf16.msra.mxu0 %v5306
        %5326 = vmatprep.subr.bf16.mxu0 0
        %5327 = vmatpush1.bf16.msra.mxu0 %v5305
        %5328 = vmatprep.subr.bf16.mxu0 0
        %5329 = vmatpush1.bf16.msra.mxu0 %v5304
        %5330 = vmatprep.subr.bf16.mxu0 0
        %5331 = vmatpush1.bf16.msra.mxu0 %v5303
        %5332 = vmatprep.subr.bf16.mxu0 0
        %5333 = vmatpush1.bf16.msra.mxu0 %v5302
        %5334 = vmatprep.subr.bf16.mxu0 0
        %5335 = vmatpush2.bf16.msra.mxu0 0
        %5336 = vmatprep.subr.bf16.mxu0 0
        %5337 = vmatpush2.bf16.msra.mxu0 0
        %5338 = vmatprep.subr.bf16.mxu0 0
        %5339 = vmatpush2.bf16.msra.mxu0 0
        %5340 = vmatprep.subr.bf16.mxu0 0
        %5341 = vmatpush2.bf16.msra.mxu0 0
        %5342 = vmatprep.subr.bf16.mxu0 0
        %5343 = vmatpush2.bf16.msra.mxu0 0
        %5344 = vmatprep.subr.bf16.mxu0 0
        %5345 = vmatpush2.bf16.msra.mxu0 0
        %5346 = vmatprep.subr.bf16.mxu0 0
        %5347 = vmatpush2.bf16.msra.mxu0 0
        %5348 = vmatprep.subr.bf16.mxu0 0
        %5349 = vmatpush2.bf16.msra.mxu0 0
        %5350 = vmatprep.mubr.bf16.mxu0 0
        %5351 = vmatmul.mubr.bf16.gmra.mxu0 %v5238
        %v5352 = vpop.f32.mrf.mxu0
        %v5353 = vadd.f32 %v5048, %v5352
        %v5354 = vpop.f32.mrf.mxu0
        %v5355 = vpop.f32.mrf.mxu0
        %v5356 = vadd.f32 %v5051, %v5355
        %v5357 = vpop.f32.mrf.mxu0
        %5358 = vmatprep.mubr.bf16.mxu0 0
        %5359 = vmatmul.mubr.bf16.gmra.mxu0 %v5239
        %v5360 = vpop.f32.mrf.mxu0
        %v5361 = vadd.f32 %v5056, %v5360
        %v5362 = vpop.f32.mrf.mxu0
        %v5363 = vpop.f32.mrf.mxu0
        %v5364 = vadd.f32 %v5059, %v5363
        %v5365 = vpop.f32.mrf.mxu0
        %5366 = vmatprep.mubr.bf16.mxu0 0
        %5367 = vmatmul.mubr.bf16.gmra.mxu0 %v5240
        %v5368 = vpop.f32.mrf.mxu0
        %v5369 = vadd.f32 %v5064, %v5368
        %v5370 = vpop.f32.mrf.mxu0
        %v5371 = vpop.f32.mrf.mxu0
        %v5372 = vadd.f32 %v5067, %v5371
        %v5373 = vpop.f32.mrf.mxu0
        %5374 = vmatprep.mubr.bf16.mxu0 0
        %5375 = vmatmul.mubr.bf16.gmra.mxu0 %v5241
        %v5376 = vpop.f32.mrf.mxu0
        %v5377 = vadd.f32 %v5072, %v5376
        %v5378 = vpop.f32.mrf.mxu0
        %v5379 = vpop.f32.mrf.mxu0
        %v5380 = vadd.f32 %v5075, %v5379
        %v5381 = vpop.f32.mrf.mxu0
        %5382 = vmatprep.mubr.bf16.mxu0 0
        %5383 = vmatmul.mubr.bf16.gmra.mxu0 %v5242
        %v5384 = vpop.f32.mrf.mxu0
        %v5385 = vadd.f32 %v5080, %v5384
        %v5386 = vpop.f32.mrf.mxu0
        %v5387 = vpop.f32.mrf.mxu0
        %v5388 = vadd.f32 %v5083, %v5387
        %v5389 = vpop.f32.mrf.mxu0
        %5390 = vmatprep.mubr.bf16.mxu0 0
        %5391 = vmatmul.mubr.bf16.gmra.mxu0 %v5243
        %v5392 = vpop.f32.mrf.mxu0
        %v5393 = vadd.f32 %v5088, %v5392
        %v5394 = vpop.f32.mrf.mxu0
        %v5395 = vpop.f32.mrf.mxu0
        %v5396 = vadd.f32 %v5091, %v5395
        %v5397 = vpop.f32.mrf.mxu0
        %5398 = vmatprep.mubr.bf16.mxu0 0
        %5399 = vmatmul.mubr.bf16.gmra.mxu0 %v5244
        %v5400 = vpop.f32.mrf.mxu0
        %v5401 = vadd.f32 %v5096, %v5400
        %v5402 = vpop.f32.mrf.mxu0
        %v5403 = vpop.f32.mrf.mxu0
        %v5404 = vadd.f32 %v5099, %v5403
        %v5405 = vpop.f32.mrf.mxu0
        %5406 = vmatprep.mubr.bf16.mxu0 0
        %5407 = vmatmul.mubr.bf16.gmra.mxu0 %v5245
        %v5408 = vpop.f32.mrf.mxu0
        %v5409 = vadd.f32 %v5104, %v5408
        %v5410 = vpop.f32.mrf.mxu0
        %v5411 = vpop.f32.mrf.mxu0
        %v5412 = vadd.f32 %v5107, %v5411
        %v5413 = vpop.f32.mrf.mxu0
        %5414 = vmatprep.mubr.bf16.mxu0 0
        %5415 = vmatmul.mubr.bf16.gmra.mxu0 %v5246
        %v5416 = vpop.f32.mrf.mxu0
        %v5417 = vadd.f32 %v5112, %v5416
        %v5418 = vpop.f32.mrf.mxu0
        %v5419 = vpop.f32.mrf.mxu0
        %v5420 = vadd.f32 %v5115, %v5419
        %v5421 = vpop.f32.mrf.mxu0
        %5422 = vmatprep.mubr.bf16.mxu0 0
        %5423 = vmatmul.mubr.bf16.gmra.mxu0 %v5247
        %v5424 = vpop.f32.mrf.mxu0
        %v5425 = vadd.f32 %v5120, %v5424
        %v5426 = vpop.f32.mrf.mxu0
        %v5427 = vpop.f32.mrf.mxu0
        %v5428 = vadd.f32 %v5123, %v5427
        %v5429 = vpop.f32.mrf.mxu0
        %5430 = vmatprep.mubr.bf16.mxu0 0
        %5431 = vmatmul.mubr.bf16.gmra.mxu0 %v5248
        %v5432 = vpop.f32.mrf.mxu0
        %v5433 = vadd.f32 %v5128, %v5432
        %v5434 = vpop.f32.mrf.mxu0
        %v5435 = vpop.f32.mrf.mxu0
        %v5436 = vadd.f32 %v5131, %v5435
        %v5437 = vpop.f32.mrf.mxu0
        %5438 = vmatprep.mubr.bf16.mxu0 0
        %5439 = vmatmul.mubr.bf16.gmra.mxu0 %v5249
        %v5440 = vpop.f32.mrf.mxu0
        %v5441 = vadd.f32 %v5136, %v5440
        %v5442 = vpop.f32.mrf.mxu0
        %v5443 = vpop.f32.mrf.mxu0
        %v5444 = vadd.f32 %v5139, %v5443
        %v5445 = vpop.f32.mrf.mxu0
        %5446 = vmatprep.mubr.bf16.mxu0 0
        %5447 = vmatmul.mubr.bf16.gmra.mxu0 %v5250
        %v5448 = vpop.f32.mrf.mxu0
        %v5449 = vadd.f32 %v5144, %v5448
        %v5450 = vpop.f32.mrf.mxu0
        %v5451 = vpop.f32.mrf.mxu0
        %v5452 = vadd.f32 %v5147, %v5451
        %v5453 = vpop.f32.mrf.mxu0
        %5454 = vmatprep.mubr.bf16.mxu0 0
        %5455 = vmatmul.mubr.bf16.gmra.mxu0 %v5251
        %v5456 = vpop.f32.mrf.mxu0
        %v5457 = vadd.f32 %v5152, %v5456
        %v5458 = vpop.f32.mrf.mxu0
        %v5459 = vpop.f32.mrf.mxu0
        %v5460 = vadd.f32 %v5155, %v5459
        %v5461 = vpop.f32.mrf.mxu0
        %5462 = vmatprep.mubr.bf16.mxu0 0
        %5463 = vmatmul.mubr.bf16.gmra.mxu0 %v5252
        %v5464 = vpop.f32.mrf.mxu0
        %v5465 = vadd.f32 %v5160, %v5464
        %v5466 = vpop.f32.mrf.mxu0
        %v5467 = vpop.f32.mrf.mxu0
        %v5468 = vadd.f32 %v5163, %v5467
        %v5469 = vpop.f32.mrf.mxu0
        %5470 = vmatprep.mubr.bf16.mxu0 0
        %5471 = vmatmul.mubr.bf16.gmra.mxu0 %v5253
        %v5472 = vpop.f32.mrf.mxu0
        %v5473 = vadd.f32 %v5168, %v5472
        %v5474 = vpop.f32.mrf.mxu0
        %v5475 = vpop.f32.mrf.mxu0
        %v5476 = vadd.f32 %v5171, %v5475
        %v5477 = vpop.f32.mrf.mxu0
        %5478 = vdwg.mxu0
        %v5479 = vld [vmem:[#allocation2] sm:$0xe]
        %v5480 = vld [vmem:[#allocation2 + $0xc] sm:$0xe]
        %v5481 = vld [vmem:[#allocation2 + $0x18] sm:$0xe]
        %v5482 = vld [vmem:[#allocation2 + $0x24] sm:$0xe]
        %v5483 = vld [vmem:[#allocation2 + $0x30] sm:$0xe]
        %v5484 = vld [vmem:[#allocation2 + $0x3c] sm:$0xe]
        %v5485 = vld [vmem:[#allocation2 + $0x48] sm:$0xe]
        %v5486 = vld [vmem:[#allocation2 + $0x54] sm:$0xe]
        %v5487 = vld [vmem:[#allocation2 + $0x60] sm:$0xe]
        %v5488 = vld [vmem:[#allocation2 + $0x6c] sm:$0xe]
        %v5489 = vld [vmem:[#allocation2 + $0x78] sm:$0xe]
        %v5490 = vld [vmem:[#allocation2 + $0x84] sm:$0xe]
        %v5491 = vld [vmem:[#allocation2 + $0x90] sm:$0xe]
        %v5492 = vld [vmem:[#allocation2 + $0x9c] sm:$0xe]
        %v5493 = vld [vmem:[#allocation2 + $0xa8] sm:$0xe]
        %v5494 = vld [vmem:[#allocation2 + $0xb4] sm:$0xe]
        %vm5527 = vcmask 1042432
        %vm5528 = vcmask 1046532
        %vm5529 = vmor %vm5527, %vm5528
        %v5530 = vrot.slane %v5479, 5
        %v5531 = vrot.slane %v5530, 4
        %v5532 = vrot.slane %v4434, 5
        %v5533 = vsel %vm5529, %v5531, %v5532
        %v5534 = vrot.slane %v5532, 4
        %v5535 = vrot.slane %v4481, 5
        %v5536 = vsel %vm5529, %v5534, %v5535
        %v5537 = vrot.slane %v5480, 5
        %v5538 = vrot.slane %v5537, 4
        %v5539 = vrot.slane %v4436, 5
        %v5540 = vsel %vm5529, %v5538, %v5539
        %v5541 = vrot.slane %v5539, 4
        %v5542 = vrot.slane %v4482, 5
        %v5543 = vsel %vm5529, %v5541, %v5542
        %v5544 = vrot.slane %v5481, 5
        %v5545 = vrot.slane %v5544, 4
        %v5546 = vrot.slane %v4438, 5
        %v5547 = vsel %vm5529, %v5545, %v5546
        %v5548 = vrot.slane %v5546, 4
        %v5549 = vrot.slane %v4483, 5
        %v5550 = vsel %vm5529, %v5548, %v5549
        %v5551 = vrot.slane %v5482, 5
        %v5552 = vrot.slane %v5551, 4
        %v5553 = vrot.slane %v4440, 5
        %v5554 = vsel %vm5529, %v5552, %v5553
        %v5555 = vrot.slane %v5553, 4
        %v5556 = vrot.slane %v4484, 5
        %v5557 = vsel %vm5529, %v5555, %v5556
        %v5558 = vrot.slane %v5483, 5
        %v5559 = vrot.slane %v5558, 4
        %v5560 = vrot.slane %v4442, 5
        %v5561 = vsel %vm5529, %v5559, %v5560
        %v5562 = vrot.slane %v5560, 4
        %v5563 = vrot.slane %v4485, 5
        %v5564 = vsel %vm5529, %v5562, %v5563
        %v5565 = vrot.slane %v5484, 5
        %v5566 = vrot.slane %v5565, 4
        %v5567 = vrot.slane %v4444, 5
        %v5568 = vsel %vm5529, %v5566, %v5567
        %v5569 = vrot.slane %v5567, 4
        %v5570 = vrot.slane %v4486, 5
        %v5571 = vsel %vm5529, %v5569, %v5570
        %v5572 = vrot.slane %v5485, 5
        %v5573 = vrot.slane %v5572, 4
        %v5574 = vrot.slane %v4446, 5
        %v5575 = vsel %vm5529, %v5573, %v5574
        %v5576 = vrot.slane %v5574, 4
        %v5577 = vrot.slane %v4487, 5
        %v5578 = vsel %vm5529, %v5576, %v5577
        %v5579 = vrot.slane %v5486, 5
        %v5580 = vrot.slane %v5579, 4
        %v5581 = vrot.slane %v4448, 5
        %v5582 = vsel %vm5529, %v5580, %v5581
        %v5583 = vrot.slane %v5581, 4
        %v5584 = vrot.slane %v4488, 5
        %v5585 = vsel %vm5529, %v5583, %v5584
        %v5586 = vrot.slane %v5487, 5
        %v5587 = vrot.slane %v5586, 4
        %v5588 = vrot.slane %v4450, 5
        %v5589 = vsel %vm5529, %v5587, %v5588
        %v5590 = vrot.slane %v5588, 4
        %v5591 = vrot.slane %v4489, 5
        %v5592 = vsel %vm5529, %v5590, %v5591
        %v5593 = vrot.slane %v5488, 5
        %v5594 = vrot.slane %v5593, 4
        %v5595 = vrot.slane %v4452, 5
        %v5596 = vsel %vm5529, %v5594, %v5595
        %v5597 = vrot.slane %v5595, 4
        %v5598 = vrot.slane %v4490, 5
        %v5599 = vsel %vm5529, %v5597, %v5598
        %v5600 = vrot.slane %v5489, 5
        %v5601 = vrot.slane %v5600, 4
        %v5602 = vrot.slane %v4454, 5
        %v5603 = vsel %vm5529, %v5601, %v5602
        %v5604 = vrot.slane %v5602, 4
        %v5605 = vrot.slane %v4491, 5
        %v5606 = vsel %vm5529, %v5604, %v5605
        %v5607 = vrot.slane %v5490, 5
        %v5608 = vrot.slane %v5607, 4
        %v5609 = vrot.slane %v4456, 5
        %v5610 = vsel %vm5529, %v5608, %v5609
        %v5611 = vrot.slane %v5609, 4
        %v5612 = vrot.slane %v4492, 5
        %v5613 = vsel %vm5529, %v5611, %v5612
        %v5614 = vrot.slane %v5491, 5
        %v5615 = vrot.slane %v5614, 4
        %v5616 = vrot.slane %v4458, 5
        %v5617 = vsel %vm5529, %v5615, %v5616
        %v5618 = vrot.slane %v5616, 4
        %v5619 = vrot.slane %v4493, 5
        %v5620 = vsel %vm5529, %v5618, %v5619
        %v5621 = vrot.slane %v5492, 5
        %v5622 = vrot.slane %v5621, 4
        %v5623 = vrot.slane %v4460, 5
        %v5624 = vsel %vm5529, %v5622, %v5623
        %v5625 = vrot.slane %v5623, 4
        %v5626 = vrot.slane %v4494, 5
        %v5627 = vsel %vm5529, %v5625, %v5626
        %v5628 = vrot.slane %v5493, 5
        %v5629 = vrot.slane %v5628, 4
        %v5630 = vrot.slane %v4462, 5
        %v5631 = vsel %vm5529, %v5629, %v5630
        %v5632 = vrot.slane %v5630, 4
        %v5633 = vrot.slane %v4495, 5
        %v5634 = vsel %vm5529, %v5632, %v5633
        %v5635 = vrot.slane %v5494, 5
        %v5636 = vrot.slane %v5635, 4
        %v5637 = vrot.slane %v4464, 5
        %v5638 = vsel %vm5529, %v5636, %v5637
        %v5639 = vrot.slane %v5637, 4
        %v5640 = vrot.slane %v4496, 5
        %v5641 = vsel %vm5529, %v5639, %v5640
        %s5642 = scalar_lea.vmem %s2, 128
        %v5643 = vld [vmem:[%s5642] sm:$0xf]
        %v5644 = vld [vmem:[%s5642 + $0x4] sm:$0xf]
        %v5645 = vld [vmem:[%s5642 + $0x8] sm:$0xf]
        %v5646 = vld [vmem:[%s5642 + $0xc] sm:$0xf]
        %v5647 = vld [vmem:[%s5642 + $0x10] sm:$0xf]
        %v5648 = vld [vmem:[%s5642 + $0x14] sm:$0xf]
        %v5649 = vld [vmem:[%s5642 + $0x18] sm:$0xf]
        %v5650 = vld [vmem:[%s5642 + $0x1c] sm:$0xf]
        %v5651 = vld [vmem:[%s5642 + $0x20] sm:$0xf]
        %v5652 = vld [vmem:[%s5642 + $0x24] sm:$0xf]
        %v5653 = vld [vmem:[%s5642 + $0x28] sm:$0xf]
        %v5654 = vld [vmem:[%s5642 + $0x2c] sm:$0xf]
        %v5655 = vld [vmem:[%s5642 + $0x30] sm:$0xf]
        %v5656 = vld [vmem:[%s5642 + $0x34] sm:$0xf]
        %v5657 = vld [vmem:[%s5642 + $0x38] sm:$0xf]
        %v5658 = vld [vmem:[%s5642 + $0x3c] sm:$0xf]
        %v5659 = vunpack.c.l.b16 %v5533
        %v5660 = vunpack.c.l.b16 %v5536
        %v5661 = vunpack.c.l.b16 %v5540
        %v5662 = vunpack.c.l.b16 %v5543
        %v5663 = vunpack.c.l.b16 %v5547
        %v5664 = vunpack.c.l.b16 %v5550
        %v5665 = vunpack.c.l.b16 %v5554
        %v5666 = vunpack.c.l.b16 %v5557
        %v5667 = vunpack.c.l.b16 %v5561
        %v5668 = vunpack.c.l.b16 %v5564
        %v5669 = vunpack.c.l.b16 %v5568
        %v5670 = vunpack.c.l.b16 %v5571
        %v5671 = vunpack.c.l.b16 %v5575
        %v5672 = vunpack.c.l.b16 %v5578
        %v5673 = vunpack.c.l.b16 %v5582
        %v5674 = vunpack.c.l.b16 %v5585
        %v5675 = vunpack.c.l.b16 %v5589
        %v5676 = vunpack.c.l.b16 %v5592
        %v5677 = vunpack.c.l.b16 %v5596
        %v5678 = vunpack.c.l.b16 %v5599
        %v5679 = vunpack.c.l.b16 %v5603
        %v5680 = vunpack.c.l.b16 %v5606
        %v5681 = vunpack.c.l.b16 %v5610
        %v5682 = vunpack.c.l.b16 %v5613
        %v5683 = vunpack.c.l.b16 %v5617
        %v5684 = vunpack.c.l.b16 %v5620
        %v5685 = vunpack.c.l.b16 %v5624
        %v5686 = vunpack.c.l.b16 %v5627
        %v5687 = vunpack.c.l.b16 %v5631
        %v5688 = vunpack.c.l.b16 %v5634
        %v5689 = vunpack.c.l.b16 %v5638
        %v5690 = vunpack.c.l.b16 %v5641
        %v5691 = vpack.c.b16 %v5660, %v5659
        %v5692 = vpack.c.b16 %v5662, %v5661
        %v5693 = vpack.c.b16 %v5664, %v5663
        %v5694 = vpack.c.b16 %v5666, %v5665
        %v5695 = vpack.c.b16 %v5668, %v5667
        %v5696 = vpack.c.b16 %v5670, %v5669
        %v5697 = vpack.c.b16 %v5672, %v5671
        %v5698 = vpack.c.b16 %v5674, %v5673
        %v5699 = vpack.c.b16 %v5676, %v5675
        %v5700 = vpack.c.b16 %v5678, %v5677
        %v5701 = vpack.c.b16 %v5680, %v5679
        %v5702 = vpack.c.b16 %v5682, %v5681
        %v5703 = vpack.c.b16 %v5684, %v5683
        %v5704 = vpack.c.b16 %v5686, %v5685
        %v5705 = vpack.c.b16 %v5688, %v5687
        %v5706 = vpack.c.b16 %v5690, %v5689
        %v5739 = vunpack.c.l.b16 %v5643
        %v5740 = vunpack.c.l.b16 %v5644
        %v5741 = vunpack.c.l.b16 %v5645
        %v5742 = vunpack.c.l.b16 %v5646
        %v5743 = vunpack.c.l.b16 %v5647
        %v5744 = vunpack.c.l.b16 %v5648
        %v5745 = vunpack.c.l.b16 %v5649
        %v5746 = vunpack.c.l.b16 %v5650
        %v5747 = vunpack.c.l.b16 %v5651
        %v5748 = vunpack.c.l.b16 %v5652
        %v5749 = vunpack.c.l.b16 %v5653
        %v5750 = vunpack.c.l.b16 %v5654
        %v5751 = vunpack.c.l.b16 %v5655
        %v5752 = vunpack.c.l.b16 %v5656
        %v5753 = vunpack.c.l.b16 %v5657
        %v5754 = vunpack.c.l.b16 %v5658
        %v5755 = vpack.c.b16 %v5740, %v5739
        %v5756 = vpack.c.b16 %v5742, %v5741
        %v5757 = vpack.c.b16 %v5744, %v5743
        %v5758 = vpack.c.b16 %v5746, %v5745
        %v5759 = vpack.c.b16 %v5748, %v5747
        %v5760 = vpack.c.b16 %v5750, %v5749
        %v5761 = vpack.c.b16 %v5752, %v5751
        %v5762 = vpack.c.b16 %v5754, %v5753
        %5771 = vmatprep.subr.bf16.mxu0 0
        %5772 = vmatpush1.bf16.msra.mxu0 %v5762
        %5773 = vmatprep.subr.bf16.mxu0 0
        %5774 = vmatpush1.bf16.msra.mxu0 %v5761
        %5775 = vmatprep.subr.bf16.mxu0 0
        %5776 = vmatpush1.bf16.msra.mxu0 %v5760
        %5777 = vmatprep.subr.bf16.mxu0 0
        %5778 = vmatpush1.bf16.msra.mxu0 %v5759
        %5779 = vmatprep.subr.bf16.mxu0 0
        %5780 = vmatpush1.bf16.msra.mxu0 %v5758
        %5781 = vmatprep.subr.bf16.mxu0 0
        %5782 = vmatpush1.bf16.msra.mxu0 %v5757
        %5783 = vmatprep.subr.bf16.mxu0 0
        %5784 = vmatpush1.bf16.msra.mxu0 %v5756
        %5785 = vmatprep.subr.bf16.mxu0 0
        %5786 = vmatpush1.bf16.msra.mxu0 %v5755
        %5787 = vmatprep.subr.bf16.mxu0 0
        %5788 = vmatpush2.bf16.msra.mxu0 0
        %5789 = vmatprep.subr.bf16.mxu0 0
        %5790 = vmatpush2.bf16.msra.mxu0 0
        %5791 = vmatprep.subr.bf16.mxu0 0
        %5792 = vmatpush2.bf16.msra.mxu0 0
        %5793 = vmatprep.subr.bf16.mxu0 0
        %5794 = vmatpush2.bf16.msra.mxu0 0
        %5795 = vmatprep.subr.bf16.mxu0 0
        %5796 = vmatpush2.bf16.msra.mxu0 0
        %5797 = vmatprep.subr.bf16.mxu0 0
        %5798 = vmatpush2.bf16.msra.mxu0 0
        %5799 = vmatprep.subr.bf16.mxu0 0
        %5800 = vmatpush2.bf16.msra.mxu0 0
        %5801 = vmatprep.subr.bf16.mxu0 0
        %5802 = vmatpush2.bf16.msra.mxu0 0
        %5803 = vmatprep.mubr.bf16.mxu0 0
        %5804 = vmatmul.mubr.bf16.gmra.mxu0 %v5691
        %v5805 = vpop.f32.mrf.mxu0
        %v5806 = vadd.f32 0.0, %v5805
        %v5807 = vpop.f32.mrf.mxu0
        %v5808 = vpop.f32.mrf.mxu0
        %v5809 = vadd.f32 0.0, %v5808
        %v5810 = vpop.f32.mrf.mxu0
        %5811 = vmatprep.mubr.bf16.mxu0 0
        %5812 = vmatmul.mubr.bf16.gmra.mxu0 %v5692
        %v5813 = vpop.f32.mrf.mxu0
        %v5814 = vadd.f32 0.0, %v5813
        %v5815 = vpop.f32.mrf.mxu0
        %v5816 = vpop.f32.mrf.mxu0
        %v5817 = vadd.f32 0.0, %v5816
        %v5818 = vpop.f32.mrf.mxu0
        %5819 = vmatprep.mubr.bf16.mxu0 0
        %5820 = vmatmul.mubr.bf16.gmra.mxu0 %v5693
        %v5821 = vpop.f32.mrf.mxu0
        %v5822 = vadd.f32 0.0, %v5821
        %v5823 = vpop.f32.mrf.mxu0
        %v5824 = vpop.f32.mrf.mxu0
        %v5825 = vadd.f32 0.0, %v5824
        %v5826 = vpop.f32.mrf.mxu0
        %5827 = vmatprep.mubr.bf16.mxu0 0
        %5828 = vmatmul.mubr.bf16.gmra.mxu0 %v5694
        %v5829 = vpop.f32.mrf.mxu0
        %v5830 = vadd.f32 0.0, %v5829
        %v5831 = vpop.f32.mrf.mxu0
        %v5832 = vpop.f32.mrf.mxu0
        %v5833 = vadd.f32 0.0, %v5832
        %v5834 = vpop.f32.mrf.mxu0
        %5835 = vmatprep.mubr.bf16.mxu0 0
        %5836 = vmatmul.mubr.bf16.gmra.mxu0 %v5695
        %v5837 = vpop.f32.mrf.mxu0
        %v5838 = vadd.f32 0.0, %v5837
        %v5839 = vpop.f32.mrf.mxu0
        %v5840 = vpop.f32.mrf.mxu0
        %v5841 = vadd.f32 0.0, %v5840
        %v5842 = vpop.f32.mrf.mxu0
        %5843 = vmatprep.mubr.bf16.mxu0 0
        %5844 = vmatmul.mubr.bf16.gmra.mxu0 %v5696
        %v5845 = vpop.f32.mrf.mxu0
        %v5846 = vadd.f32 0.0, %v5845
        %v5847 = vpop.f32.mrf.mxu0
        %v5848 = vpop.f32.mrf.mxu0
        %v5849 = vadd.f32 0.0, %v5848
        %v5850 = vpop.f32.mrf.mxu0
        %5851 = vmatprep.mubr.bf16.mxu0 0
        %5852 = vmatmul.mubr.bf16.gmra.mxu0 %v5697
        %v5853 = vpop.f32.mrf.mxu0
        %v5854 = vadd.f32 0.0, %v5853
        %v5855 = vpop.f32.mrf.mxu0
        %v5856 = vpop.f32.mrf.mxu0
        %v5857 = vadd.f32 0.0, %v5856
        %v5858 = vpop.f32.mrf.mxu0
        %5859 = vmatprep.mubr.bf16.mxu0 0
        %5860 = vmatmul.mubr.bf16.gmra.mxu0 %v5698
        %v5861 = vpop.f32.mrf.mxu0
        %v5862 = vadd.f32 0.0, %v5861
        %v5863 = vpop.f32.mrf.mxu0
        %v5864 = vpop.f32.mrf.mxu0
        %v5865 = vadd.f32 0.0, %v5864
        %v5866 = vpop.f32.mrf.mxu0
        %5867 = vmatprep.mubr.bf16.mxu0 0
        %5868 = vmatmul.mubr.bf16.gmra.mxu0 %v5699
        %v5869 = vpop.f32.mrf.mxu0
        %v5870 = vadd.f32 0.0, %v5869
        %v5871 = vpop.f32.mrf.mxu0
        %v5872 = vpop.f32.mrf.mxu0
        %v5873 = vadd.f32 0.0, %v5872
        %v5874 = vpop.f32.mrf.mxu0
        %5875 = vmatprep.mubr.bf16.mxu0 0
        %5876 = vmatmul.mubr.bf16.gmra.mxu0 %v5700
        %v5877 = vpop.f32.mrf.mxu0
        %v5878 = vadd.f32 0.0, %v5877
        %v5879 = vpop.f32.mrf.mxu0
        %v5880 = vpop.f32.mrf.mxu0
        %v5881 = vadd.f32 0.0, %v5880
        %v5882 = vpop.f32.mrf.mxu0
        %5883 = vmatprep.mubr.bf16.mxu0 0
        %5884 = vmatmul.mubr.bf16.gmra.mxu0 %v5701
        %v5885 = vpop.f32.mrf.mxu0
        %v5886 = vadd.f32 0.0, %v5885
        %v5887 = vpop.f32.mrf.mxu0
        %v5888 = vpop.f32.mrf.mxu0
        %v5889 = vadd.f32 0.0, %v5888
        %v5890 = vpop.f32.mrf.mxu0
        %5891 = vmatprep.mubr.bf16.mxu0 0
        %5892 = vmatmul.mubr.bf16.gmra.mxu0 %v5702
        %v5893 = vpop.f32.mrf.mxu0
        %v5894 = vadd.f32 0.0, %v5893
        %v5895 = vpop.f32.mrf.mxu0
        %v5896 = vpop.f32.mrf.mxu0
        %v5897 = vadd.f32 0.0, %v5896
        %v5898 = vpop.f32.mrf.mxu0
        %5899 = vmatprep.mubr.bf16.mxu0 0
        %5900 = vmatmul.mubr.bf16.gmra.mxu0 %v5703
        %v5901 = vpop.f32.mrf.mxu0
        %v5902 = vadd.f32 0.0, %v5901
        %v5903 = vpop.f32.mrf.mxu0
        %v5904 = vpop.f32.mrf.mxu0
        %v5905 = vadd.f32 0.0, %v5904
        %v5906 = vpop.f32.mrf.mxu0
        %5907 = vmatprep.mubr.bf16.mxu0 0
        %5908 = vmatmul.mubr.bf16.gmra.mxu0 %v5704
        %v5909 = vpop.f32.mrf.mxu0
        %v5910 = vadd.f32 0.0, %v5909
        %v5911 = vpop.f32.mrf.mxu0
        %v5912 = vpop.f32.mrf.mxu0
        %v5913 = vadd.f32 0.0, %v5912
        %v5914 = vpop.f32.mrf.mxu0
        %5915 = vmatprep.mubr.bf16.mxu0 0
        %5916 = vmatmul.mubr.bf16.gmra.mxu0 %v5705
        %v5917 = vpop.f32.mrf.mxu0
        %v5918 = vadd.f32 0.0, %v5917
        %v5919 = vpop.f32.mrf.mxu0
        %v5920 = vpop.f32.mrf.mxu0
        %v5921 = vadd.f32 0.0, %v5920
        %v5922 = vpop.f32.mrf.mxu0
        %5923 = vmatprep.mubr.bf16.mxu0 0
        %5924 = vmatmul.mubr.bf16.gmra.mxu0 %v5706
        %v5925 = vpop.f32.mrf.mxu0
        %v5926 = vadd.f32 0.0, %v5925
        %v5927 = vpop.f32.mrf.mxu0
        %v5928 = vpop.f32.mrf.mxu0
        %v5929 = vadd.f32 0.0, %v5928
        %v5930 = vpop.f32.mrf.mxu0
        %5931 = vdwg.mxu0
        %v5932 = vadd.f32 %v5353, %v5806
        %v5933 = vadd.f32 %v5356, %v5809
        %v5934 = vadd.f32 %v5361, %v5814
        %v5935 = vadd.f32 %v5364, %v5817
        %v5936 = vadd.f32 %v5369, %v5822
        %v5937 = vadd.f32 %v5372, %v5825
        %v5938 = vadd.f32 %v5377, %v5830
        %v5939 = vadd.f32 %v5380, %v5833
        %v5940 = vadd.f32 %v5385, %v5838
        %v5941 = vadd.f32 %v5388, %v5841
        %v5942 = vadd.f32 %v5393, %v5846
        %v5943 = vadd.f32 %v5396, %v5849
        %v5944 = vadd.f32 %v5401, %v5854
        %v5945 = vadd.f32 %v5404, %v5857
        %v5946 = vadd.f32 %v5409, %v5862
        %v5947 = vadd.f32 %v5412, %v5865
        %v5948 = vadd.f32 %v5417, %v5870
        %v5949 = vadd.f32 %v5420, %v5873
        %v5950 = vadd.f32 %v5425, %v5878
        %v5951 = vadd.f32 %v5428, %v5881
        %v5952 = vadd.f32 %v5433, %v5886
        %v5953 = vadd.f32 %v5436, %v5889
        %v5954 = vadd.f32 %v5441, %v5894
        %v5955 = vadd.f32 %v5444, %v5897
        %v5956 = vadd.f32 %v5449, %v5902
        %v5957 = vadd.f32 %v5452, %v5905
        %v5958 = vadd.f32 %v5457, %v5910
        %v5959 = vadd.f32 %v5460, %v5913
        %v5960 = vadd.f32 %v5465, %v5918
        %v5961 = vadd.f32 %v5468, %v5921
        %v5962 = vadd.f32 %v5473, %v5926
        %v5963 = vadd.f32 %v5476, %v5929
        %v5964 = vld [vmem:[%s4318] sm:$0xf]
        %v5965 = vld [vmem:[%s4318 + $0x4] sm:$0xf]
        %v5966 = vld [vmem:[%s4318 + $0xc] sm:$0xf]
        %v5967 = vld [vmem:[%s4318 + $0x10] sm:$0xf]
        %v5968 = vld [vmem:[%s4318 + $0x18] sm:$0xf]
        %v5969 = vld [vmem:[%s4318 + $0x1c] sm:$0xf]
        %v5970 = vld [vmem:[%s4318 + $0x24] sm:$0xf]
        %v5971 = vld [vmem:[%s4318 + $0x28] sm:$0xf]
        %v5972 = vld [vmem:[%s4318 + $0x30] sm:$0xf]
        %v5973 = vld [vmem:[%s4318 + $0x34] sm:$0xf]
        %v5974 = vld [vmem:[%s4318 + $0x3c] sm:$0xf]
        %v5975 = vld [vmem:[%s4318 + $0x40] sm:$0xf]
        %v5976 = vld [vmem:[%s4318 + $0x48] sm:$0xf]
        %v5977 = vld [vmem:[%s4318 + $0x4c] sm:$0xf]
        %v5978 = vld [vmem:[%s4318 + $0x54] sm:$0xf]
        %v5979 = vld [vmem:[%s4318 + $0x58] sm:$0xf]
        %v5980 = vld [vmem:[%s4318 + $0x60] sm:$0xf]
        %v5981 = vld [vmem:[%s4318 + $0x64] sm:$0xf]
        %v5982 = vld [vmem:[%s4318 + $0x6c] sm:$0xf]
        %v5983 = vld [vmem:[%s4318 + $0x70] sm:$0xf]
        %v5984 = vld [vmem:[%s4318 + $0x78] sm:$0xf]
        %v5985 = vld [vmem:[%s4318 + $0x7c] sm:$0xf]
        %v5986 = vld [vmem:[%s4318 + $0x84] sm:$0xf]
        %v5987 = vld [vmem:[%s4318 + $0x88] sm:$0xf]
        %v5988 = vld [vmem:[%s4318 + $0x90] sm:$0xf]
        %v5989 = vld [vmem:[%s4318 + $0x94] sm:$0xf]
        %v5990 = vld [vmem:[%s4318 + $0x9c] sm:$0xf]
        %v5991 = vld [vmem:[%s4318 + $0xa0] sm:$0xf]
        %v5992 = vld [vmem:[%s4318 + $0xa8] sm:$0xf]
        %v5993 = vld [vmem:[%s4318 + $0xac] sm:$0xf]
        %v5994 = vld [vmem:[%s4318 + $0xb4] sm:$0xf]
        %v5995 = vld [vmem:[%s4318 + $0xb8] sm:$0xf]
        %s5996 = scalar_lea.vmem %s2, 192
        %v5997 = vld [vmem:[%s5996] sm:$0xf]
        %v5998 = vld [vmem:[%s5996 + $0x4] sm:$0xf]
        %v5999 = vld [vmem:[%s5996 + $0x8] sm:$0xf]
        %v6000 = vld [vmem:[%s5996 + $0xc] sm:$0xf]
        %v6001 = vld [vmem:[%s5996 + $0x10] sm:$0xf]
        %v6002 = vld [vmem:[%s5996 + $0x14] sm:$0xf]
        %v6003 = vld [vmem:[%s5996 + $0x18] sm:$0xf]
        %v6004 = vld [vmem:[%s5996 + $0x1c] sm:$0xf]
        %v6005 = vld [vmem:[%s5996 + $0x20] sm:$0xf]
        %v6006 = vld [vmem:[%s5996 + $0x24] sm:$0xf]
        %v6007 = vld [vmem:[%s5996 + $0x28] sm:$0xf]
        %v6008 = vld [vmem:[%s5996 + $0x2c] sm:$0xf]
        %v6009 = vld [vmem:[%s5996 + $0x30] sm:$0xf]
        %v6010 = vld [vmem:[%s5996 + $0x34] sm:$0xf]
        %v6011 = vld [vmem:[%s5996 + $0x38] sm:$0xf]
        %v6012 = vld [vmem:[%s5996 + $0x3c] sm:$0xf]
        %v6045 = vunpack.c.l.b16 %v5964
        %v6046 = vunpack.c.l.b16 %v5965
        %v6047 = vunpack.c.l.b16 %v5966
        %v6048 = vunpack.c.l.b16 %v5967
        %v6049 = vunpack.c.l.b16 %v5968
        %v6050 = vunpack.c.l.b16 %v5969
        %v6051 = vunpack.c.l.b16 %v5970
        %v6052 = vunpack.c.l.b16 %v5971
        %v6053 = vunpack.c.l.b16 %v5972
        %v6054 = vunpack.c.l.b16 %v5973
        %v6055 = vunpack.c.l.b16 %v5974
        %v6056 = vunpack.c.l.b16 %v5975
        %v6057 = vunpack.c.l.b16 %v5976
        %v6058 = vunpack.c.l.b16 %v5977
        %v6059 = vunpack.c.l.b16 %v5978
        %v6060 = vunpack.c.l.b16 %v5979
        %v6061 = vunpack.c.l.b16 %v5980
        %v6062 = vunpack.c.l.b16 %v5981
        %v6063 = vunpack.c.l.b16 %v5982
        %v6064 = vunpack.c.l.b16 %v5983
        %v6065 = vunpack.c.l.b16 %v5984
        %v6066 = vunpack.c.l.b16 %v5985
        %v6067 = vunpack.c.l.b16 %v5986
        %v6068 = vunpack.c.l.b16 %v5987
        %v6069 = vunpack.c.l.b16 %v5988
        %v6070 = vunpack.c.l.b16 %v5989
        %v6071 = vunpack.c.l.b16 %v5990
        %v6072 = vunpack.c.l.b16 %v5991
        %v6073 = vunpack.c.l.b16 %v5992
        %v6074 = vunpack.c.l.b16 %v5993
        %v6075 = vunpack.c.l.b16 %v5994
        %v6076 = vunpack.c.l.b16 %v5995
        %v6077 = vpack.c.b16 %v6046, %v6045
        %v6078 = vpack.c.b16 %v6048, %v6047
        %v6079 = vpack.c.b16 %v6050, %v6049
        %v6080 = vpack.c.b16 %v6052, %v6051
        %v6081 = vpack.c.b16 %v6054, %v6053
        %v6082 = vpack.c.b16 %v6056, %v6055
        %v6083 = vpack.c.b16 %v6058, %v6057
        %v6084 = vpack.c.b16 %v6060, %v6059
        %v6085 = vpack.c.b16 %v6062, %v6061
        %v6086 = vpack.c.b16 %v6064, %v6063
        %v6087 = vpack.c.b16 %v6066, %v6065
        %v6088 = vpack.c.b16 %v6068, %v6067
        %v6089 = vpack.c.b16 %v6070, %v6069
        %v6090 = vpack.c.b16 %v6072, %v6071
        %v6091 = vpack.c.b16 %v6074, %v6073
        %v6092 = vpack.c.b16 %v6076, %v6075
        %v6125 = vunpack.c.l.b16 %v5997
        %v6126 = vunpack.c.l.b16 %v5998
        %v6127 = vunpack.c.l.b16 %v5999
        %v6128 = vunpack.c.l.b16 %v6000
        %v6129 = vunpack.c.l.b16 %v6001
        %v6130 = vunpack.c.l.b16 %v6002
        %v6131 = vunpack.c.l.b16 %v6003
        %v6132 = vunpack.c.l.b16 %v6004
        %v6133 = vunpack.c.l.b16 %v6005
        %v6134 = vunpack.c.l.b16 %v6006
        %v6135 = vunpack.c.l.b16 %v6007
        %v6136 = vunpack.c.l.b16 %v6008
        %v6137 = vunpack.c.l.b16 %v6009
        %v6138 = vunpack.c.l.b16 %v6010
        %v6139 = vunpack.c.l.b16 %v6011
        %v6140 = vunpack.c.l.b16 %v6012
        %v6141 = vpack.c.b16 %v6126, %v6125
        %v6142 = vpack.c.b16 %v6128, %v6127
        %v6143 = vpack.c.b16 %v6130, %v6129
        %v6144 = vpack.c.b16 %v6132, %v6131
        %v6145 = vpack.c.b16 %v6134, %v6133
        %v6146 = vpack.c.b16 %v6136, %v6135
        %v6147 = vpack.c.b16 %v6138, %v6137
        %v6148 = vpack.c.b16 %v6140, %v6139
        %6157 = vmatprep.subr.bf16.mxu0 0
        %6158 = vmatpush1.bf16.msra.mxu0 %v6148
        %6159 = vmatprep.subr.bf16.mxu0 0
        %6160 = vmatpush1.bf16.msra.mxu0 %v6147
        %6161 = vmatprep.subr.bf16.mxu0 0
        %6162 = vmatpush1.bf16.msra.mxu0 %v6146
        %6163 = vmatprep.subr.bf16.mxu0 0
        %6164 = vmatpush1.bf16.msra.mxu0 %v6145
        %6165 = vmatprep.subr.bf16.mxu0 0
        %6166 = vmatpush1.bf16.msra.mxu0 %v6144
        %6167 = vmatprep.subr.bf16.mxu0 0
        %6168 = vmatpush1.bf16.msra.mxu0 %v6143
        %6169 = vmatprep.subr.bf16.mxu0 0
        %6170 = vmatpush1.bf16.msra.mxu0 %v6142
        %6171 = vmatprep.subr.bf16.mxu0 0
        %6172 = vmatpush1.bf16.msra.mxu0 %v6141
        %6173 = vmatprep.subr.bf16.mxu0 0
        %6174 = vmatpush2.bf16.msra.mxu0 0
        %6175 = vmatprep.subr.bf16.mxu0 0
        %6176 = vmatpush2.bf16.msra.mxu0 0
        %6177 = vmatprep.subr.bf16.mxu0 0
        %6178 = vmatpush2.bf16.msra.mxu0 0
        %6179 = vmatprep.subr.bf16.mxu0 0
        %6180 = vmatpush2.bf16.msra.mxu0 0
        %6181 = vmatprep.subr.bf16.mxu0 0
        %6182 = vmatpush2.bf16.msra.mxu0 0
        %6183 = vmatprep.subr.bf16.mxu0 0
        %6184 = vmatpush2.bf16.msra.mxu0 0
        %6185 = vmatprep.subr.bf16.mxu0 0
        %6186 = vmatpush2.bf16.msra.mxu0 0
        %6187 = vmatprep.subr.bf16.mxu0 0
        %6188 = vmatpush2.bf16.msra.mxu0 0
        %6189 = vmatprep.mubr.bf16.mxu0 0
        %6190 = vmatmul.mubr.bf16.gmra.mxu0 %v6077
        %v6191 = vpop.f32.mrf.mxu0
        %v6192 = vadd.f32 0.0, %v6191
        %v6193 = vpop.f32.mrf.mxu0
        %v6194 = vpop.f32.mrf.mxu0
        %v6195 = vadd.f32 0.0, %v6194
        %v6196 = vpop.f32.mrf.mxu0
        %6197 = vmatprep.mubr.bf16.mxu0 0
        %6198 = vmatmul.mubr.bf16.gmra.mxu0 %v6078
        %v6199 = vpop.f32.mrf.mxu0
        %v6200 = vadd.f32 0.0, %v6199
        %v6201 = vpop.f32.mrf.mxu0
        %v6202 = vpop.f32.mrf.mxu0
        %v6203 = vadd.f32 0.0, %v6202
        %v6204 = vpop.f32.mrf.mxu0
        %6205 = vmatprep.mubr.bf16.mxu0 0
        %6206 = vmatmul.mubr.bf16.gmra.mxu0 %v6079
        %v6207 = vpop.f32.mrf.mxu0
        %v6208 = vadd.f32 0.0, %v6207
        %v6209 = vpop.f32.mrf.mxu0
        %v6210 = vpop.f32.mrf.mxu0
        %v6211 = vadd.f32 0.0, %v6210
        %v6212 = vpop.f32.mrf.mxu0
        %6213 = vmatprep.mubr.bf16.mxu0 0
        %6214 = vmatmul.mubr.bf16.gmra.mxu0 %v6080
        %v6215 = vpop.f32.mrf.mxu0
        %v6216 = vadd.f32 0.0, %v6215
        %v6217 = vpop.f32.mrf.mxu0
        %v6218 = vpop.f32.mrf.mxu0
        %v6219 = vadd.f32 0.0, %v6218
        %v6220 = vpop.f32.mrf.mxu0
        %6221 = vmatprep.mubr.bf16.mxu0 0
        %6222 = vmatmul.mubr.bf16.gmra.mxu0 %v6081
        %v6223 = vpop.f32.mrf.mxu0
        %v6224 = vadd.f32 0.0, %v6223
        %v6225 = vpop.f32.mrf.mxu0
        %v6226 = vpop.f32.mrf.mxu0
        %v6227 = vadd.f32 0.0, %v6226
        %v6228 = vpop.f32.mrf.mxu0
        %6229 = vmatprep.mubr.bf16.mxu0 0
        %6230 = vmatmul.mubr.bf16.gmra.mxu0 %v6082
        %v6231 = vpop.f32.mrf.mxu0
        %v6232 = vadd.f32 0.0, %v6231
        %v6233 = vpop.f32.mrf.mxu0
        %v6234 = vpop.f32.mrf.mxu0
        %v6235 = vadd.f32 0.0, %v6234
        %v6236 = vpop.f32.mrf.mxu0
        %6237 = vmatprep.mubr.bf16.mxu0 0
        %6238 = vmatmul.mubr.bf16.gmra.mxu0 %v6083
        %v6239 = vpop.f32.mrf.mxu0
        %v6240 = vadd.f32 0.0, %v6239
        %v6241 = vpop.f32.mrf.mxu0
        %v6242 = vpop.f32.mrf.mxu0
        %v6243 = vadd.f32 0.0, %v6242
        %v6244 = vpop.f32.mrf.mxu0
        %6245 = vmatprep.mubr.bf16.mxu0 0
        %6246 = vmatmul.mubr.bf16.gmra.mxu0 %v6084
        %v6247 = vpop.f32.mrf.mxu0
        %v6248 = vadd.f32 0.0, %v6247
        %v6249 = vpop.f32.mrf.mxu0
        %v6250 = vpop.f32.mrf.mxu0
        %v6251 = vadd.f32 0.0, %v6250
        %v6252 = vpop.f32.mrf.mxu0
        %6253 = vmatprep.mubr.bf16.mxu0 0
        %6254 = vmatmul.mubr.bf16.gmra.mxu0 %v6085
        %v6255 = vpop.f32.mrf.mxu0
        %v6256 = vadd.f32 0.0, %v6255
        %v6257 = vpop.f32.mrf.mxu0
        %v6258 = vpop.f32.mrf.mxu0
        %v6259 = vadd.f32 0.0, %v6258
        %v6260 = vpop.f32.mrf.mxu0
        %6261 = vmatprep.mubr.bf16.mxu0 0
        %6262 = vmatmul.mubr.bf16.gmra.mxu0 %v6086
        %v6263 = vpop.f32.mrf.mxu0
        %v6264 = vadd.f32 0.0, %v6263
        %v6265 = vpop.f32.mrf.mxu0
        %v6266 = vpop.f32.mrf.mxu0
        %v6267 = vadd.f32 0.0, %v6266
        %v6268 = vpop.f32.mrf.mxu0
        %6269 = vmatprep.mubr.bf16.mxu0 0
        %6270 = vmatmul.mubr.bf16.gmra.mxu0 %v6087
        %v6271 = vpop.f32.mrf.mxu0
        %v6272 = vadd.f32 0.0, %v6271
        %v6273 = vpop.f32.mrf.mxu0
        %v6274 = vpop.f32.mrf.mxu0
        %v6275 = vadd.f32 0.0, %v6274
        %v6276 = vpop.f32.mrf.mxu0
        %6277 = vmatprep.mubr.bf16.mxu0 0
        %6278 = vmatmul.mubr.bf16.gmra.mxu0 %v6088
        %v6279 = vpop.f32.mrf.mxu0
        %v6280 = vadd.f32 0.0, %v6279
        %v6281 = vpop.f32.mrf.mxu0
        %v6282 = vpop.f32.mrf.mxu0
        %v6283 = vadd.f32 0.0, %v6282
        %v6284 = vpop.f32.mrf.mxu0
        %6285 = vmatprep.mubr.bf16.mxu0 0
        %6286 = vmatmul.mubr.bf16.gmra.mxu0 %v6089
        %v6287 = vpop.f32.mrf.mxu0
        %v6288 = vadd.f32 0.0, %v6287
        %v6289 = vpop.f32.mrf.mxu0
        %v6290 = vpop.f32.mrf.mxu0
        %v6291 = vadd.f32 0.0, %v6290
        %v6292 = vpop.f32.mrf.mxu0
        %6293 = vmatprep.mubr.bf16.mxu0 0
        %6294 = vmatmul.mubr.bf16.gmra.mxu0 %v6090
        %v6295 = vpop.f32.mrf.mxu0
        %v6296 = vadd.f32 0.0, %v6295
        %v6297 = vpop.f32.mrf.mxu0
        %v6298 = vpop.f32.mrf.mxu0
        %v6299 = vadd.f32 0.0, %v6298
        %v6300 = vpop.f32.mrf.mxu0
        %6301 = vmatprep.mubr.bf16.mxu0 0
        %6302 = vmatmul.mubr.bf16.gmra.mxu0 %v6091
        %v6303 = vpop.f32.mrf.mxu0
        %v6304 = vadd.f32 0.0, %v6303
        %v6305 = vpop.f32.mrf.mxu0
        %v6306 = vpop.f32.mrf.mxu0
        %v6307 = vadd.f32 0.0, %v6306
        %v6308 = vpop.f32.mrf.mxu0
        %6309 = vmatprep.mubr.bf16.mxu0 0
        %6310 = vmatmul.mubr.bf16.gmra.mxu0 %v6092
        %v6311 = vpop.f32.mrf.mxu0
        %v6312 = vadd.f32 0.0, %v6311
        %v6313 = vpop.f32.mrf.mxu0
        %v6314 = vpop.f32.mrf.mxu0
        %v6315 = vadd.f32 0.0, %v6314
        %v6316 = vpop.f32.mrf.mxu0
        %6317 = vdwg.mxu0
        %v6318 = vadd.f32 %v5932, %v6192
        %v6319 = vadd.f32 %v5933, %v6195
        %v6320 = vadd.f32 %v5934, %v6200
        %v6321 = vadd.f32 %v5935, %v6203
        %v6322 = vadd.f32 %v5936, %v6208
        %v6323 = vadd.f32 %v5937, %v6211
        %v6324 = vadd.f32 %v5938, %v6216
        %v6325 = vadd.f32 %v5939, %v6219
        %v6326 = vadd.f32 %v5940, %v6224
        %v6327 = vadd.f32 %v5941, %v6227
        %v6328 = vadd.f32 %v5942, %v6232
        %v6329 = vadd.f32 %v5943, %v6235
        %v6330 = vadd.f32 %v5944, %v6240
        %v6331 = vadd.f32 %v5945, %v6243
        %v6332 = vadd.f32 %v5946, %v6248
        %v6333 = vadd.f32 %v5947, %v6251
        %v6334 = vadd.f32 %v5948, %v6256
        %v6335 = vadd.f32 %v5949, %v6259
        %v6336 = vadd.f32 %v5950, %v6264
        %v6337 = vadd.f32 %v5951, %v6267
        %v6338 = vadd.f32 %v5952, %v6272
        %v6339 = vadd.f32 %v5953, %v6275
        %v6340 = vadd.f32 %v5954, %v6280
        %v6341 = vadd.f32 %v5955, %v6283
        %v6342 = vadd.f32 %v5956, %v6288
        %v6343 = vadd.f32 %v5957, %v6291
        %v6344 = vadd.f32 %v5958, %v6296
        %v6345 = vadd.f32 %v5959, %v6299
        %v6346 = vadd.f32 %v5960, %v6304
        %v6347 = vadd.f32 %v5961, %v6307
        %v6348 = vadd.f32 %v5962, %v6312
        %v6349 = vadd.f32 %v5963, %v6315
        %v6350 = vld [vmem:[%s4318] sm:$0xf]
        %v6351 = vld [vmem:[%s4318 + $0x4] sm:$0xf]
        %v6352 = vld [vmem:[%s4318 + $0x8] sm:$0x1]
        %v6353 = vld [vmem:[%s4318 + $0xc] sm:$0xf]
        %v6354 = vld [vmem:[%s4318 + $0x10] sm:$0xf]
        %v6355 = vld [vmem:[%s4318 + $0x14] sm:$0x1]
        %v6356 = vld [vmem:[%s4318 + $0x18] sm:$0xf]
        %v6357 = vld [vmem:[%s4318 + $0x1c] sm:$0xf]
        %v6358 = vld [vmem:[%s4318 + $0x20] sm:$0x1]
        %v6359 = vld [vmem:[%s4318 + $0x24] sm:$0xf]
        %v6360 = vld [vmem:[%s4318 + $0x28] sm:$0xf]
        %v6361 = vld [vmem:[%s4318 + $0x2c] sm:$0x1]
        %v6362 = vld [vmem:[%s4318 + $0x30] sm:$0xf]
        %v6363 = vld [vmem:[%s4318 + $0x34] sm:$0xf]
        %v6364 = vld [vmem:[%s4318 + $0x38] sm:$0x1]
        %v6365 = vld [vmem:[%s4318 + $0x3c] sm:$0xf]
        %v6366 = vld [vmem:[%s4318 + $0x40] sm:$0xf]
        %v6367 = vld [vmem:[%s4318 + $0x44] sm:$0x1]
        %v6368 = vld [vmem:[%s4318 + $0x48] sm:$0xf]
        %v6369 = vld [vmem:[%s4318 + $0x4c] sm:$0xf]
        %v6370 = vld [vmem:[%s4318 + $0x50] sm:$0x1]
        %v6371 = vld [vmem:[%s4318 + $0x54] sm:$0xf]
        %v6372 = vld [vmem:[%s4318 + $0x58] sm:$0xf]
        %v6373 = vld [vmem:[%s4318 + $0x5c] sm:$0x1]
        %v6374 = vld [vmem:[%s4318 + $0x60] sm:$0xf]
        %v6375 = vld [vmem:[%s4318 + $0x64] sm:$0xf]
        %v6376 = vld [vmem:[%s4318 + $0x68] sm:$0x1]
        %v6377 = vld [vmem:[%s4318 + $0x6c] sm:$0xf]
        %v6378 = vld [vmem:[%s4318 + $0x70] sm:$0xf]
        %v6379 = vld [vmem:[%s4318 + $0x74] sm:$0x1]
        %v6380 = vld [vmem:[%s4318 + $0x78] sm:$0xf]
        %v6381 = vld [vmem:[%s4318 + $0x7c] sm:$0xf]
        %v6382 = vld [vmem:[%s4318 + $0x80] sm:$0x1]
        %v6383 = vld [vmem:[%s4318 + $0x84] sm:$0xf]
        %v6384 = vld [vmem:[%s4318 + $0x88] sm:$0xf]
        %v6385 = vld [vmem:[%s4318 + $0x8c] sm:$0x1]
        %v6386 = vld [vmem:[%s4318 + $0x90] sm:$0xf]
        %v6387 = vld [vmem:[%s4318 + $0x94] sm:$0xf]
        %v6388 = vld [vmem:[%s4318 + $0x98] sm:$0x1]
        %v6389 = vld [vmem:[%s4318 + $0x9c] sm:$0xf]
        %v6390 = vld [vmem:[%s4318 + $0xa0] sm:$0xf]
        %v6391 = vld [vmem:[%s4318 + $0xa4] sm:$0x1]
        %v6392 = vld [vmem:[%s4318 + $0xa8] sm:$0xf]
        %v6393 = vld [vmem:[%s4318 + $0xac] sm:$0xf]
        %v6394 = vld [vmem:[%s4318 + $0xb0] sm:$0x1]
        %v6395 = vld [vmem:[%s4318 + $0xb4] sm:$0xf]
        %v6396 = vld [vmem:[%s4318 + $0xb8] sm:$0xf]
        %v6397 = vld [vmem:[%s4318 + $0xbc] sm:$0x1]
        %v6399 = vshrl.u32 %v6350, 16
        %v6401 = vrot.slane %v6399, 4
        %v6402 = vshll.u32 %v6350, 16
        %v6404 = vrot.slane %v6402, 5
        %v6405 = vor.u32 %v6401, %v6404
        %v6406 = vrot.slane %v6405, 4
        %v6408 = vshll.u32 %v6351, 16
        %v6410 = vrot.slane %v6408, 5
        %v6411 = vsel %vm4499, %v6406, %v6410
        %v6412 = vshrl.u32 %v6351, 16
        %v6414 = vrot.slane %v6412, 4
        %v6415 = vor.u32 %v6414, %v6410
        %v6416 = vrot.slane %v6415, 4
        %v6418 = vshll.u32 %v6352, 16
        %v6420 = vrot.slane %v6418, 5
        %v6421 = vsel %vm4499, %v6416, %v6420
        %v6423 = vshrl.u32 %v6353, 16
        %v6425 = vrot.slane %v6423, 4
        %v6426 = vshll.u32 %v6353, 16
        %v6428 = vrot.slane %v6426, 5
        %v6429 = vor.u32 %v6425, %v6428
        %v6430 = vrot.slane %v6429, 4
        %v6432 = vshll.u32 %v6354, 16
        %v6434 = vrot.slane %v6432, 5
        %v6435 = vsel %vm4499, %v6430, %v6434
        %v6436 = vshrl.u32 %v6354, 16
        %v6438 = vrot.slane %v6436, 4
        %v6439 = vor.u32 %v6438, %v6434
        %v6440 = vrot.slane %v6439, 4
        %v6442 = vshll.u32 %v6355, 16
        %v6444 = vrot.slane %v6442, 5
        %v6445 = vsel %vm4499, %v6440, %v6444
        %v6447 = vshrl.u32 %v6356, 16
        %v6449 = vrot.slane %v6447, 4
        %v6450 = vshll.u32 %v6356, 16
        %v6452 = vrot.slane %v6450, 5
        %v6453 = vor.u32 %v6449, %v6452
        %v6454 = vrot.slane %v6453, 4
        %v6456 = vshll.u32 %v6357, 16
        %v6458 = vrot.slane %v6456, 5
        %v6459 = vsel %vm4499, %v6454, %v6458
        %v6460 = vshrl.u32 %v6357, 16
        %v6462 = vrot.slane %v6460, 4
        %v6463 = vor.u32 %v6462, %v6458
        %v6464 = vrot.slane %v6463, 4
        %v6466 = vshll.u32 %v6358, 16
        %v6468 = vrot.slane %v6466, 5
        %v6469 = vsel %vm4499, %v6464, %v6468
        %v6471 = vshrl.u32 %v6359, 16
        %v6473 = vrot.slane %v6471, 4
        %v6474 = vshll.u32 %v6359, 16
        %v6476 = vrot.slane %v6474, 5
        %v6477 = vor.u32 %v6473, %v6476
        %v6478 = vrot.slane %v6477, 4
        %v6480 = vshll.u32 %v6360, 16
        %v6482 = vrot.slane %v6480, 5
        %v6483 = vsel %vm4499, %v6478, %v6482
        %v6484 = vshrl.u32 %v6360, 16
        %v6486 = vrot.slane %v6484, 4
        %v6487 = vor.u32 %v6486, %v6482
        %v6488 = vrot.slane %v6487, 4
        %v6490 = vshll.u32 %v6361, 16
        %v6492 = vrot.slane %v6490, 5
        %v6493 = vsel %vm4499, %v6488, %v6492
        %v6495 = vshrl.u32 %v6362, 16
        %v6497 = vrot.slane %v6495, 4
        %v6498 = vshll.u32 %v6362, 16
        %v6500 = vrot.slane %v6498, 5
        %v6501 = vor.u32 %v6497, %v6500
        %v6502 = vrot.slane %v6501, 4
        %v6504 = vshll.u32 %v6363, 16
        %v6506 = vrot.slane %v6504, 5
        %v6507 = vsel %vm4499, %v6502, %v6506
        %v6508 = vshrl.u32 %v6363, 16
        %v6510 = vrot.slane %v6508, 4
        %v6511 = vor.u32 %v6510, %v6506
        %v6512 = vrot.slane %v6511, 4
        %v6514 = vshll.u32 %v6364, 16
        %v6516 = vrot.slane %v6514, 5
        %v6517 = vsel %vm4499, %v6512, %v6516
        %v6519 = vshrl.u32 %v6365, 16
        %v6521 = vrot.slane %v6519, 4
        %v6522 = vshll.u32 %v6365, 16
        %v6524 = vrot.slane %v6522, 5
        %v6525 = vor.u32 %v6521, %v6524
        %v6526 = vrot.slane %v6525, 4
        %v6528 = vshll.u32 %v6366, 16
        %v6530 = vrot.slane %v6528, 5
        %v6531 = vsel %vm4499, %v6526, %v6530
        %v6532 = vshrl.u32 %v6366, 16
        %v6534 = vrot.slane %v6532, 4
        %v6535 = vor.u32 %v6534, %v6530
        %v6536 = vrot.slane %v6535, 4
        %v6538 = vshll.u32 %v6367, 16
        %v6540 = vrot.slane %v6538, 5
        %v6541 = vsel %vm4499, %v6536, %v6540
        %v6543 = vshrl.u32 %v6368, 16
        %v6545 = vrot.slane %v6543, 4
        %v6546 = vshll.u32 %v6368, 16
        %v6548 = vrot.slane %v6546, 5
        %v6549 = vor.u32 %v6545, %v6548
        %v6550 = vrot.slane %v6549, 4
        %v6552 = vshll.u32 %v6369, 16
        %v6554 = vrot.slane %v6552, 5
        %v6555 = vsel %vm4499, %v6550, %v6554
        %v6556 = vshrl.u32 %v6369, 16
        %v6558 = vrot.slane %v6556, 4
        %v6559 = vor.u32 %v6558, %v6554
        %v6560 = vrot.slane %v6559, 4
        %v6562 = vshll.u32 %v6370, 16
        %v6564 = vrot.slane %v6562, 5
        %v6565 = vsel %vm4499, %v6560, %v6564
        %v6567 = vshrl.u32 %v6371, 16
        %v6569 = vrot.slane %v6567, 4
        %v6570 = vshll.u32 %v6371, 16
        %v6572 = vrot.slane %v6570, 5
        %v6573 = vor.u32 %v6569, %v6572
        %v6574 = vrot.slane %v6573, 4
        %v6576 = vshll.u32 %v6372, 16
        %v6578 = vrot.slane %v6576, 5
        %v6579 = vsel %vm4499, %v6574, %v6578
        %v6580 = vshrl.u32 %v6372, 16
        %v6582 = vrot.slane %v6580, 4
        %v6583 = vor.u32 %v6582, %v6578
        %v6584 = vrot.slane %v6583, 4
        %v6586 = vshll.u32 %v6373, 16
        %v6588 = vrot.slane %v6586, 5
        %v6589 = vsel %vm4499, %v6584, %v6588
        %v6591 = vshrl.u32 %v6374, 16
        %v6593 = vrot.slane %v6591, 4
        %v6594 = vshll.u32 %v6374, 16
        %v6596 = vrot.slane %v6594, 5
        %v6597 = vor.u32 %v6593, %v6596
        %v6598 = vrot.slane %v6597, 4
        %v6600 = vshll.u32 %v6375, 16
        %v6602 = vrot.slane %v6600, 5
        %v6603 = vsel %vm4499, %v6598, %v6602
        %v6604 = vshrl.u32 %v6375, 16
        %v6606 = vrot.slane %v6604, 4
        %v6607 = vor.u32 %v6606, %v6602
        %v6608 = vrot.slane %v6607, 4
        %v6610 = vshll.u32 %v6376, 16
        %v6612 = vrot.slane %v6610, 5
        %v6613 = vsel %vm4499, %v6608, %v6612
        %v6615 = vshrl.u32 %v6377, 16
        %v6617 = vrot.slane %v6615, 4
        %v6618 = vshll.u32 %v6377, 16
        %v6620 = vrot.slane %v6618, 5
        %v6621 = vor.u32 %v6617, %v6620
        %v6622 = vrot.slane %v6621, 4
        %v6624 = vshll.u32 %v6378, 16
        %v6626 = vrot.slane %v6624, 5
        %v6627 = vsel %vm4499, %v6622, %v6626
        %v6628 = vshrl.u32 %v6378, 16
        %v6630 = vrot.slane %v6628, 4
        %v6631 = vor.u32 %v6630, %v6626
        %v6632 = vrot.slane %v6631, 4
        %v6634 = vshll.u32 %v6379, 16
        %v6636 = vrot.slane %v6634, 5
        %v6637 = vsel %vm4499, %v6632, %v6636
        %v6639 = vshrl.u32 %v6380, 16
        %v6641 = vrot.slane %v6639, 4
        %v6642 = vshll.u32 %v6380, 16
        %v6644 = vrot.slane %v6642, 5
        %v6645 = vor.u32 %v6641, %v6644
        %v6646 = vrot.slane %v6645, 4
        %v6648 = vshll.u32 %v6381, 16
        %v6650 = vrot.slane %v6648, 5
        %v6651 = vsel %vm4499, %v6646, %v6650
        %v6652 = vshrl.u32 %v6381, 16
        %v6654 = vrot.slane %v6652, 4
        %v6655 = vor.u32 %v6654, %v6650
        %v6656 = vrot.slane %v6655, 4
        %v6658 = vshll.u32 %v6382, 16
        %v6660 = vrot.slane %v6658, 5
        %v6661 = vsel %vm4499, %v6656, %v6660
        %v6663 = vshrl.u32 %v6383, 16
        %v6665 = vrot.slane %v6663, 4
        %v6666 = vshll.u32 %v6383, 16
        %v6668 = vrot.slane %v6666, 5
        %v6669 = vor.u32 %v6665, %v6668
        %v6670 = vrot.slane %v6669, 4
        %v6672 = vshll.u32 %v6384, 16
        %v6674 = vrot.slane %v6672, 5
        %v6675 = vsel %vm4499, %v6670, %v6674
        %v6676 = vshrl.u32 %v6384, 16
        %v6678 = vrot.slane %v6676, 4
        %v6679 = vor.u32 %v6678, %v6674
        %v6680 = vrot.slane %v6679, 4
        %v6682 = vshll.u32 %v6385, 16
        %v6684 = vrot.slane %v6682, 5
        %v6685 = vsel %vm4499, %v6680, %v6684
        %v6687 = vshrl.u32 %v6386, 16
        %v6689 = vrot.slane %v6687, 4
        %v6690 = vshll.u32 %v6386, 16
        %v6692 = vrot.slane %v6690, 5
        %v6693 = vor.u32 %v6689, %v6692
        %v6694 = vrot.slane %v6693, 4
        %v6696 = vshll.u32 %v6387, 16
        %v6698 = vrot.slane %v6696, 5
        %v6699 = vsel %vm4499, %v6694, %v6698
        %v6700 = vshrl.u32 %v6387, 16
        %v6702 = vrot.slane %v6700, 4
        %v6703 = vor.u32 %v6702, %v6698
        %v6704 = vrot.slane %v6703, 4
        %v6706 = vshll.u32 %v6388, 16
        %v6708 = vrot.slane %v6706, 5
        %v6709 = vsel %vm4499, %v6704, %v6708
        %v6711 = vshrl.u32 %v6389, 16
        %v6713 = vrot.slane %v6711, 4
        %v6714 = vshll.u32 %v6389, 16
        %v6716 = vrot.slane %v6714, 5
        %v6717 = vor.u32 %v6713, %v6716
        %v6718 = vrot.slane %v6717, 4
        %v6720 = vshll.u32 %v6390, 16
        %v6722 = vrot.slane %v6720, 5
        %v6723 = vsel %vm4499, %v6718, %v6722
        %v6724 = vshrl.u32 %v6390, 16
        %v6726 = vrot.slane %v6724, 4
        %v6727 = vor.u32 %v6726, %v6722
        %v6728 = vrot.slane %v6727, 4
        %v6730 = vshll.u32 %v6391, 16
        %v6732 = vrot.slane %v6730, 5
        %v6733 = vsel %vm4499, %v6728, %v6732
        %v6735 = vshrl.u32 %v6392, 16
        %v6737 = vrot.slane %v6735, 4
        %v6738 = vshll.u32 %v6392, 16
        %v6740 = vrot.slane %v6738, 5
        %v6741 = vor.u32 %v6737, %v6740
        %v6742 = vrot.slane %v6741, 4
        %v6744 = vshll.u32 %v6393, 16
        %v6746 = vrot.slane %v6744, 5
        %v6747 = vsel %vm4499, %v6742, %v6746
        %v6748 = vshrl.u32 %v6393, 16
        %v6750 = vrot.slane %v6748, 4
        %v6751 = vor.u32 %v6750, %v6746
        %v6752 = vrot.slane %v6751, 4
        %v6754 = vshll.u32 %v6394, 16
        %v6756 = vrot.slane %v6754, 5
        %v6757 = vsel %vm4499, %v6752, %v6756
        %v6759 = vshrl.u32 %v6395, 16
        %v6761 = vrot.slane %v6759, 4
        %v6762 = vshll.u32 %v6395, 16
        %v6764 = vrot.slane %v6762, 5
        %v6765 = vor.u32 %v6761, %v6764
        %v6766 = vrot.slane %v6765, 4
        %v6768 = vshll.u32 %v6396, 16
        %v6770 = vrot.slane %v6768, 5
        %v6771 = vsel %vm4499, %v6766, %v6770
        %v6772 = vshrl.u32 %v6396, 16
        %v6774 = vrot.slane %v6772, 4
        %v6775 = vor.u32 %v6774, %v6770
        %v6776 = vrot.slane %v6775, 4
        %v6778 = vshll.u32 %v6397, 16
        %v6780 = vrot.slane %v6778, 5
        %v6781 = vsel %vm4499, %v6776, %v6780
        %s6782 = scalar_lea.vmem %s2, 256
        %v6783 = vld [vmem:[%s6782] sm:$0xf]
        %v6784 = vld [vmem:[%s6782 + $0x4] sm:$0xf]
        %v6785 = vld [vmem:[%s6782 + $0x8] sm:$0xf]
        %v6786 = vld [vmem:[%s6782 + $0xc] sm:$0xf]
        %v6787 = vld [vmem:[%s6782 + $0x10] sm:$0xf]
        %v6788 = vld [vmem:[%s6782 + $0x14] sm:$0xf]
        %v6789 = vld [vmem:[%s6782 + $0x18] sm:$0xf]
        %v6790 = vld [vmem:[%s6782 + $0x1c] sm:$0xf]
        %v6791 = vld [vmem:[%s6782 + $0x20] sm:$0xf]
        %v6792 = vld [vmem:[%s6782 + $0x24] sm:$0xf]
        %v6793 = vld [vmem:[%s6782 + $0x28] sm:$0xf]
        %v6794 = vld [vmem:[%s6782 + $0x2c] sm:$0xf]
        %v6795 = vld [vmem:[%s6782 + $0x30] sm:$0xf]
        %v6796 = vld [vmem:[%s6782 + $0x34] sm:$0xf]
        %v6797 = vld [vmem:[%s6782 + $0x38] sm:$0xf]
        %v6798 = vld [vmem:[%s6782 + $0x3c] sm:$0xf]
        %v6799 = vunpack.c.l.b16 %v6411
        %v6800 = vunpack.c.l.b16 %v6421
        %v6801 = vunpack.c.l.b16 %v6435
        %v6802 = vunpack.c.l.b16 %v6445
        %v6803 = vunpack.c.l.b16 %v6459
        %v6804 = vunpack.c.l.b16 %v6469
        %v6805 = vunpack.c.l.b16 %v6483
        %v6806 = vunpack.c.l.b16 %v6493
        %v6807 = vunpack.c.l.b16 %v6507
        %v6808 = vunpack.c.l.b16 %v6517
        %v6809 = vunpack.c.l.b16 %v6531
        %v6810 = vunpack.c.l.b16 %v6541
        %v6811 = vunpack.c.l.b16 %v6555
        %v6812 = vunpack.c.l.b16 %v6565
        %v6813 = vunpack.c.l.b16 %v6579
        %v6814 = vunpack.c.l.b16 %v6589
        %v6815 = vunpack.c.l.b16 %v6603
        %v6816 = vunpack.c.l.b16 %v6613
        %v6817 = vunpack.c.l.b16 %v6627
        %v6818 = vunpack.c.l.b16 %v6637
        %v6819 = vunpack.c.l.b16 %v6651
        %v6820 = vunpack.c.l.b16 %v6661
        %v6821 = vunpack.c.l.b16 %v6675
        %v6822 = vunpack.c.l.b16 %v6685
        %v6823 = vunpack.c.l.b16 %v6699
        %v6824 = vunpack.c.l.b16 %v6709
        %v6825 = vunpack.c.l.b16 %v6723
        %v6826 = vunpack.c.l.b16 %v6733
        %v6827 = vunpack.c.l.b16 %v6747
        %v6828 = vunpack.c.l.b16 %v6757
        %v6829 = vunpack.c.l.b16 %v6771
        %v6830 = vunpack.c.l.b16 %v6781
        %v6831 = vpack.c.b16 %v6800, %v6799
        %v6832 = vpack.c.b16 %v6802, %v6801
        %v6833 = vpack.c.b16 %v6804, %v6803
        %v6834 = vpack.c.b16 %v6806, %v6805
        %v6835 = vpack.c.b16 %v6808, %v6807
        %v6836 = vpack.c.b16 %v6810, %v6809
        %v6837 = vpack.c.b16 %v6812, %v6811
        %v6838 = vpack.c.b16 %v6814, %v6813
        %v6839 = vpack.c.b16 %v6816, %v6815
        %v6840 = vpack.c.b16 %v6818, %v6817
        %v6841 = vpack.c.b16 %v6820, %v6819
        %v6842 = vpack.c.b16 %v6822, %v6821
        %v6843 = vpack.c.b16 %v6824, %v6823
        %v6844 = vpack.c.b16 %v6826, %v6825
        %v6845 = vpack.c.b16 %v6828, %v6827
        %v6846 = vpack.c.b16 %v6830, %v6829
        %v6879 = vunpack.c.l.b16 %v6783
        %v6880 = vunpack.c.l.b16 %v6784
        %v6881 = vunpack.c.l.b16 %v6785
        %v6882 = vunpack.c.l.b16 %v6786
        %v6883 = vunpack.c.l.b16 %v6787
        %v6884 = vunpack.c.l.b16 %v6788
        %v6885 = vunpack.c.l.b16 %v6789
        %v6886 = vunpack.c.l.b16 %v6790
        %v6887 = vunpack.c.l.b16 %v6791
        %v6888 = vunpack.c.l.b16 %v6792
        %v6889 = vunpack.c.l.b16 %v6793
        %v6890 = vunpack.c.l.b16 %v6794
        %v6891 = vunpack.c.l.b16 %v6795
        %v6892 = vunpack.c.l.b16 %v6796
        %v6893 = vunpack.c.l.b16 %v6797
        %v6894 = vunpack.c.l.b16 %v6798
        %v6895 = vpack.c.b16 %v6880, %v6879
        %v6896 = vpack.c.b16 %v6882, %v6881
        %v6897 = vpack.c.b16 %v6884, %v6883
        %v6898 = vpack.c.b16 %v6886, %v6885
        %v6899 = vpack.c.b16 %v6888, %v6887
        %v6900 = vpack.c.b16 %v6890, %v6889
        %v6901 = vpack.c.b16 %v6892, %v6891
        %v6902 = vpack.c.b16 %v6894, %v6893
        %6911 = vmatprep.subr.bf16.mxu0 0
        %6912 = vmatpush1.bf16.msra.mxu0 %v6902
        %6913 = vmatprep.subr.bf16.mxu0 0
        %6914 = vmatpush1.bf16.msra.mxu0 %v6901
        %6915 = vmatprep.subr.bf16.mxu0 0
        %6916 = vmatpush1.bf16.msra.mxu0 %v6900
        %6917 = vmatprep.subr.bf16.mxu0 0
        %6918 = vmatpush1.bf16.msra.mxu0 %v6899
        %6919 = vmatprep.subr.bf16.mxu0 0
        %6920 = vmatpush1.bf16.msra.mxu0 %v6898
        %6921 = vmatprep.subr.bf16.mxu0 0
        %6922 = vmatpush1.bf16.msra.mxu0 %v6897
        %6923 = vmatprep.subr.bf16.mxu0 0
        %6924 = vmatpush1.bf16.msra.mxu0 %v6896
        %6925 = vmatprep.subr.bf16.mxu0 0
        %6926 = vmatpush1.bf16.msra.mxu0 %v6895
        %6927 = vmatprep.subr.bf16.mxu0 0
        %6928 = vmatpush2.bf16.msra.mxu0 0
        %6929 = vmatprep.subr.bf16.mxu0 0
        %6930 = vmatpush2.bf16.msra.mxu0 0
        %6931 = vmatprep.subr.bf16.mxu0 0
        %6932 = vmatpush2.bf16.msra.mxu0 0
        %6933 = vmatprep.subr.bf16.mxu0 0
        %6934 = vmatpush2.bf16.msra.mxu0 0
        %6935 = vmatprep.subr.bf16.mxu0 0
        %6936 = vmatpush2.bf16.msra.mxu0 0
        %6937 = vmatprep.subr.bf16.mxu0 0
        %6938 = vmatpush2.bf16.msra.mxu0 0
        %6939 = vmatprep.subr.bf16.mxu0 0
        %6940 = vmatpush2.bf16.msra.mxu0 0
        %6941 = vmatprep.subr.bf16.mxu0 0
        %6942 = vmatpush2.bf16.msra.mxu0 0
        %6943 = vmatprep.mubr.bf16.mxu0 0
        %6944 = vmatmul.mubr.bf16.gmra.mxu0 %v6831
        %v6945 = vpop.f32.mrf.mxu0
        %v6946 = vadd.f32 0.0, %v6945
        %v6947 = vpop.f32.mrf.mxu0
        %v6948 = vpop.f32.mrf.mxu0
        %v6949 = vadd.f32 0.0, %v6948
        %v6950 = vpop.f32.mrf.mxu0
        %6951 = vmatprep.mubr.bf16.mxu0 0
        %6952 = vmatmul.mubr.bf16.gmra.mxu0 %v6832
        %v6953 = vpop.f32.mrf.mxu0
        %v6954 = vadd.f32 0.0, %v6953
        %v6955 = vpop.f32.mrf.mxu0
        %v6956 = vpop.f32.mrf.mxu0
        %v6957 = vadd.f32 0.0, %v6956
        %v6958 = vpop.f32.mrf.mxu0
        %6959 = vmatprep.mubr.bf16.mxu0 0
        %6960 = vmatmul.mubr.bf16.gmra.mxu0 %v6833
        %v6961 = vpop.f32.mrf.mxu0
        %v6962 = vadd.f32 0.0, %v6961
        %v6963 = vpop.f32.mrf.mxu0
        %v6964 = vpop.f32.mrf.mxu0
        %v6965 = vadd.f32 0.0, %v6964
        %v6966 = vpop.f32.mrf.mxu0
        %6967 = vmatprep.mubr.bf16.mxu0 0
        %6968 = vmatmul.mubr.bf16.gmra.mxu0 %v6834
        %v6969 = vpop.f32.mrf.mxu0
        %v6970 = vadd.f32 0.0, %v6969
        %v6971 = vpop.f32.mrf.mxu0
        %v6972 = vpop.f32.mrf.mxu0
        %v6973 = vadd.f32 0.0, %v6972
        %v6974 = vpop.f32.mrf.mxu0
        %6975 = vmatprep.mubr.bf16.mxu0 0
        %6976 = vmatmul.mubr.bf16.gmra.mxu0 %v6835
        %v6977 = vpop.f32.mrf.mxu0
        %v6978 = vadd.f32 0.0, %v6977
        %v6979 = vpop.f32.mrf.mxu0
        %v6980 = vpop.f32.mrf.mxu0
        %v6981 = vadd.f32 0.0, %v6980
        %v6982 = vpop.f32.mrf.mxu0
        %6983 = vmatprep.mubr.bf16.mxu0 0
        %6984 = vmatmul.mubr.bf16.gmra.mxu0 %v6836
        %v6985 = vpop.f32.mrf.mxu0
        %v6986 = vadd.f32 0.0, %v6985
        %v6987 = vpop.f32.mrf.mxu0
        %v6988 = vpop.f32.mrf.mxu0
        %v6989 = vadd.f32 0.0, %v6988
        %v6990 = vpop.f32.mrf.mxu0
        %6991 = vmatprep.mubr.bf16.mxu0 0
        %6992 = vmatmul.mubr.bf16.gmra.mxu0 %v6837
        %v6993 = vpop.f32.mrf.mxu0
        %v6994 = vadd.f32 0.0, %v6993
        %v6995 = vpop.f32.mrf.mxu0
        %v6996 = vpop.f32.mrf.mxu0
        %v6997 = vadd.f32 0.0, %v6996
        %v6998 = vpop.f32.mrf.mxu0
        %6999 = vmatprep.mubr.bf16.mxu0 0
        %7000 = vmatmul.mubr.bf16.gmra.mxu0 %v6838
        %v7001 = vpop.f32.mrf.mxu0
        %v7002 = vadd.f32 0.0, %v7001
        %v7003 = vpop.f32.mrf.mxu0
        %v7004 = vpop.f32.mrf.mxu0
        %v7005 = vadd.f32 0.0, %v7004
        %v7006 = vpop.f32.mrf.mxu0
        %7007 = vmatprep.mubr.bf16.mxu0 0
        %7008 = vmatmul.mubr.bf16.gmra.mxu0 %v6839
        %v7009 = vpop.f32.mrf.mxu0
        %v7010 = vadd.f32 0.0, %v7009
        %v7011 = vpop.f32.mrf.mxu0
        %v7012 = vpop.f32.mrf.mxu0
        %v7013 = vadd.f32 0.0, %v7012
        %v7014 = vpop.f32.mrf.mxu0
        %7015 = vmatprep.mubr.bf16.mxu0 0
        %7016 = vmatmul.mubr.bf16.gmra.mxu0 %v6840
        %v7017 = vpop.f32.mrf.mxu0
        %v7018 = vadd.f32 0.0, %v7017
        %v7019 = vpop.f32.mrf.mxu0
        %v7020 = vpop.f32.mrf.mxu0
        %v7021 = vadd.f32 0.0, %v7020
        %v7022 = vpop.f32.mrf.mxu0
        %7023 = vmatprep.mubr.bf16.mxu0 0
        %7024 = vmatmul.mubr.bf16.gmra.mxu0 %v6841
        %v7025 = vpop.f32.mrf.mxu0
        %v7026 = vadd.f32 0.0, %v7025
        %v7027 = vpop.f32.mrf.mxu0
        %v7028 = vpop.f32.mrf.mxu0
        %v7029 = vadd.f32 0.0, %v7028
        %v7030 = vpop.f32.mrf.mxu0
        %7031 = vmatprep.mubr.bf16.mxu0 0
        %7032 = vmatmul.mubr.bf16.gmra.mxu0 %v6842
        %v7033 = vpop.f32.mrf.mxu0
        %v7034 = vadd.f32 0.0, %v7033
        %v7035 = vpop.f32.mrf.mxu0
        %v7036 = vpop.f32.mrf.mxu0
        %v7037 = vadd.f32 0.0, %v7036
        %v7038 = vpop.f32.mrf.mxu0
        %7039 = vmatprep.mubr.bf16.mxu0 0
        %7040 = vmatmul.mubr.bf16.gmra.mxu0 %v6843
        %v7041 = vpop.f32.mrf.mxu0
        %v7042 = vadd.f32 0.0, %v7041
        %v7043 = vpop.f32.mrf.mxu0
        %v7044 = vpop.f32.mrf.mxu0
        %v7045 = vadd.f32 0.0, %v7044
        %v7046 = vpop.f32.mrf.mxu0
        %7047 = vmatprep.mubr.bf16.mxu0 0
        %7048 = vmatmul.mubr.bf16.gmra.mxu0 %v6844
        %v7049 = vpop.f32.mrf.mxu0
        %v7050 = vadd.f32 0.0, %v7049
        %v7051 = vpop.f32.mrf.mxu0
        %v7052 = vpop.f32.mrf.mxu0
        %v7053 = vadd.f32 0.0, %v7052
        %v7054 = vpop.f32.mrf.mxu0
        %7055 = vmatprep.mubr.bf16.mxu0 0
        %7056 = vmatmul.mubr.bf16.gmra.mxu0 %v6845
        %v7057 = vpop.f32.mrf.mxu0
        %v7058 = vadd.f32 0.0, %v7057
        %v7059 = vpop.f32.mrf.mxu0
        %v7060 = vpop.f32.mrf.mxu0
        %v7061 = vadd.f32 0.0, %v7060
        %v7062 = vpop.f32.mrf.mxu0
        %7063 = vmatprep.mubr.bf16.mxu0 0
        %7064 = vmatmul.mubr.bf16.gmra.mxu0 %v6846
        %v7065 = vpop.f32.mrf.mxu0
        %v7066 = vadd.f32 0.0, %v7065
        %v7067 = vpop.f32.mrf.mxu0
        %v7068 = vpop.f32.mrf.mxu0
        %v7069 = vadd.f32 0.0, %v7068
        %v7070 = vpop.f32.mrf.mxu0
        %7071 = vdwg.mxu0
        %v7072 = vadd.f32 %v6318, %v6946
        %v7073 = vadd.f32 %v6319, %v6949
        %v7074 = vadd.f32 %v6320, %v6954
        %v7075 = vadd.f32 %v6321, %v6957
        %v7076 = vadd.f32 %v6322, %v6962
        %v7077 = vadd.f32 %v6323, %v6965
        %v7078 = vadd.f32 %v6324, %v6970
        %v7079 = vadd.f32 %v6325, %v6973
        %v7080 = vadd.f32 %v6326, %v6978
        %v7081 = vadd.f32 %v6327, %v6981
        %v7082 = vadd.f32 %v6328, %v6986
        %v7083 = vadd.f32 %v6329, %v6989
        %v7084 = vadd.f32 %v6330, %v6994
        %v7085 = vadd.f32 %v6331, %v6997
        %v7086 = vadd.f32 %v6332, %v7002
        %v7087 = vadd.f32 %v6333, %v7005
        %v7088 = vadd.f32 %v6334, %v7010
        %v7089 = vadd.f32 %v6335, %v7013
        %v7090 = vadd.f32 %v6336, %v7018
        %v7091 = vadd.f32 %v6337, %v7021
        %v7092 = vadd.f32 %v6338, %v7026
        %v7093 = vadd.f32 %v6339, %v7029
        %v7094 = vadd.f32 %v6340, %v7034
        %v7095 = vadd.f32 %v6341, %v7037
        %v7096 = vadd.f32 %v6342, %v7042
        %v7097 = vadd.f32 %v6343, %v7045
        %v7098 = vadd.f32 %v6344, %v7050
        %v7099 = vadd.f32 %v6345, %v7053
        %v7100 = vadd.f32 %v6346, %v7058
        %v7101 = vadd.f32 %v6347, %v7061
        %v7102 = vadd.f32 %v6348, %v7066
        %v7103 = vadd.f32 %v6349, %v7069
        %v7104 = vld [vmem:[%s4318] sm:$0xe]
        %v7105 = vld [vmem:[%s4318 + $0xc] sm:$0xe]
        %v7106 = vld [vmem:[%s4318 + $0x18] sm:$0xe]
        %v7107 = vld [vmem:[%s4318 + $0x24] sm:$0xe]
        %v7108 = vld [vmem:[%s4318 + $0x30] sm:$0xe]
        %v7109 = vld [vmem:[%s4318 + $0x3c] sm:$0xe]
        %v7110 = vld [vmem:[%s4318 + $0x48] sm:$0xe]
        %v7111 = vld [vmem:[%s4318 + $0x54] sm:$0xe]
        %v7112 = vld [vmem:[%s4318 + $0x60] sm:$0xe]
        %v7113 = vld [vmem:[%s4318 + $0x6c] sm:$0xe]
        %v7114 = vld [vmem:[%s4318 + $0x78] sm:$0xe]
        %v7115 = vld [vmem:[%s4318 + $0x84] sm:$0xe]
        %v7116 = vld [vmem:[%s4318 + $0x90] sm:$0xe]
        %v7117 = vld [vmem:[%s4318 + $0x9c] sm:$0xe]
        %v7118 = vld [vmem:[%s4318 + $0xa8] sm:$0xe]
        %v7119 = vld [vmem:[%s4318 + $0xb4] sm:$0xe]
        %v7168 = vrot.slane %v7104, 5
        %v7169 = vrot.slane %v7168, 4
        %v7170 = vrot.slane %v6351, 5
        %v7171 = vsel %vm5529, %v7169, %v7170
        %v7172 = vrot.slane %v7170, 4
        %v7173 = vrot.slane %v6352, 5
        %v7174 = vsel %vm5529, %v7172, %v7173
        %v7175 = vrot.slane %v7105, 5
        %v7176 = vrot.slane %v7175, 4
        %v7177 = vrot.slane %v6354, 5
        %v7178 = vsel %vm5529, %v7176, %v7177
        %v7179 = vrot.slane %v7177, 4
        %v7180 = vrot.slane %v6355, 5
        %v7181 = vsel %vm5529, %v7179, %v7180
        %v7182 = vrot.slane %v7106, 5
        %v7183 = vrot.slane %v7182, 4
        %v7184 = vrot.slane %v6357, 5
        %v7185 = vsel %vm5529, %v7183, %v7184
        %v7186 = vrot.slane %v7184, 4
        %v7187 = vrot.slane %v6358, 5
        %v7188 = vsel %vm5529, %v7186, %v7187
        %v7189 = vrot.slane %v7107, 5
        %v7190 = vrot.slane %v7189, 4
        %v7191 = vrot.slane %v6360, 5
        %v7192 = vsel %vm5529, %v7190, %v7191
        %v7193 = vrot.slane %v7191, 4
        %v7194 = vrot.slane %v6361, 5
        %v7195 = vsel %vm5529, %v7193, %v7194
        %v7196 = vrot.slane %v7108, 5
        %v7197 = vrot.slane %v7196, 4
        %v7198 = vrot.slane %v6363, 5
        %v7199 = vsel %vm5529, %v7197, %v7198
        %v7200 = vrot.slane %v7198, 4
        %v7201 = vrot.slane %v6364, 5
        %v7202 = vsel %vm5529, %v7200, %v7201
        %v7203 = vrot.slane %v7109, 5
        %v7204 = vrot.slane %v7203, 4
        %v7205 = vrot.slane %v6366, 5
        %v7206 = vsel %vm5529, %v7204, %v7205
        %v7207 = vrot.slane %v7205, 4
        %v7208 = vrot.slane %v6367, 5
        %v7209 = vsel %vm5529, %v7207, %v7208
        %v7210 = vrot.slane %v7110, 5
        %v7211 = vrot.slane %v7210, 4
        %v7212 = vrot.slane %v6369, 5
        %v7213 = vsel %vm5529, %v7211, %v7212
        %v7214 = vrot.slane %v7212, 4
        %v7215 = vrot.slane %v6370, 5
        %v7216 = vsel %vm5529, %v7214, %v7215
        %v7217 = vrot.slane %v7111, 5
        %v7218 = vrot.slane %v7217, 4
        %v7219 = vrot.slane %v6372, 5
        %v7220 = vsel %vm5529, %v7218, %v7219
        %v7221 = vrot.slane %v7219, 4
        %v7222 = vrot.slane %v6373, 5
        %v7223 = vsel %vm5529, %v7221, %v7222
        %v7224 = vrot.slane %v7112, 5
        %v7225 = vrot.slane %v7224, 4
        %v7226 = vrot.slane %v6375, 5
        %v7227 = vsel %vm5529, %v7225, %v7226
        %v7228 = vrot.slane %v7226, 4
        %v7229 = vrot.slane %v6376, 5
        %v7230 = vsel %vm5529, %v7228, %v7229
        %v7231 = vrot.slane %v7113, 5
        %v7232 = vrot.slane %v7231, 4
        %v7233 = vrot.slane %v6378, 5
        %v7234 = vsel %vm5529, %v7232, %v7233
        %v7235 = vrot.slane %v7233, 4
        %v7236 = vrot.slane %v6379, 5
        %v7237 = vsel %vm5529, %v7235, %v7236
        %v7238 = vrot.slane %v7114, 5
        %v7239 = vrot.slane %v7238, 4
        %v7240 = vrot.slane %v6381, 5
        %v7241 = vsel %vm5529, %v7239, %v7240
        %v7242 = vrot.slane %v7240, 4
        %v7243 = vrot.slane %v6382, 5
        %v7244 = vsel %vm5529, %v7242, %v7243
        %v7245 = vrot.slane %v7115, 5
        %v7246 = vrot.slane %v7245, 4
        %v7247 = vrot.slane %v6384, 5
        %v7248 = vsel %vm5529, %v7246, %v7247
        %v7249 = vrot.slane %v7247, 4
        %v7250 = vrot.slane %v6385, 5
        %v7251 = vsel %vm5529, %v7249, %v7250
        %v7252 = vrot.slane %v7116, 5
        %v7253 = vrot.slane %v7252, 4
        %v7254 = vrot.slane %v6387, 5
        %v7255 = vsel %vm5529, %v7253, %v7254
        %v7256 = vrot.slane %v7254, 4
        %v7257 = vrot.slane %v6388, 5
        %v7258 = vsel %vm5529, %v7256, %v7257
        %v7259 = vrot.slane %v7117, 5
        %v7260 = vrot.slane %v7259, 4
        %v7261 = vrot.slane %v6390, 5
        %v7262 = vsel %vm5529, %v7260, %v7261
        %v7263 = vrot.slane %v7261, 4
        %v7264 = vrot.slane %v6391, 5
        %v7265 = vsel %vm5529, %v7263, %v7264
        %v7266 = vrot.slane %v7118, 5
        %v7267 = vrot.slane %v7266, 4
        %v7268 = vrot.slane %v6393, 5
        %v7269 = vsel %vm5529, %v7267, %v7268
        %v7270 = vrot.slane %v7268, 4
        %v7271 = vrot.slane %v6394, 5
        %v7272 = vsel %vm5529, %v7270, %v7271
        %v7273 = vrot.slane %v7119, 5
        %v7274 = vrot.slane %v7273, 4
        %v7275 = vrot.slane %v6396, 5
        %v7276 = vsel %vm5529, %v7274, %v7275
        %v7277 = vrot.slane %v7275, 4
        %v7278 = vrot.slane %v6397, 5
        %v7279 = vsel %vm5529, %v7277, %v7278
        %s7280 = scalar_lea.vmem %s2, 320
        %v7281 = vld [vmem:[%s7280] sm:$0xf]
        %v7282 = vld [vmem:[%s7280 + $0x4] sm:$0xf]
        %v7283 = vld [vmem:[%s7280 + $0x8] sm:$0xf]
        %v7284 = vld [vmem:[%s7280 + $0xc] sm:$0xf]
        %v7285 = vld [vmem:[%s7280 + $0x10] sm:$0xf]
        %v7286 = vld [vmem:[%s7280 + $0x14] sm:$0xf]
        %v7287 = vld [vmem:[%s7280 + $0x18] sm:$0xf]
        %v7288 = vld [vmem:[%s7280 + $0x1c] sm:$0xf]
        %v7289 = vld [vmem:[%s7280 + $0x20] sm:$0xf]
        %v7290 = vld [vmem:[%s7280 + $0x24] sm:$0xf]
        %v7291 = vld [vmem:[%s7280 + $0x28] sm:$0xf]
        %v7292 = vld [vmem:[%s7280 + $0x2c] sm:$0xf]
        %v7293 = vld [vmem:[%s7280 + $0x30] sm:$0xf]
        %v7294 = vld [vmem:[%s7280 + $0x34] sm:$0xf]
        %v7295 = vld [vmem:[%s7280 + $0x38] sm:$0xf]
        %v7296 = vld [vmem:[%s7280 + $0x3c] sm:$0xf]
        %v7297 = vunpack.c.l.b16 %v7171
        %v7298 = vunpack.c.l.b16 %v7174
        %v7299 = vunpack.c.l.b16 %v7178
        %v7300 = vunpack.c.l.b16 %v7181
        %v7301 = vunpack.c.l.b16 %v7185
        %v7302 = vunpack.c.l.b16 %v7188
        %v7303 = vunpack.c.l.b16 %v7192
        %v7304 = vunpack.c.l.b16 %v7195
        %v7305 = vunpack.c.l.b16 %v7199
        %v7306 = vunpack.c.l.b16 %v7202
        %v7307 = vunpack.c.l.b16 %v7206
        %v7308 = vunpack.c.l.b16 %v7209
        %v7309 = vunpack.c.l.b16 %v7213
        %v7310 = vunpack.c.l.b16 %v7216
        %v7311 = vunpack.c.l.b16 %v7220
        %v7312 = vunpack.c.l.b16 %v7223
        %v7313 = vunpack.c.l.b16 %v7227
        %v7314 = vunpack.c.l.b16 %v7230
        %v7315 = vunpack.c.l.b16 %v7234
        %v7316 = vunpack.c.l.b16 %v7237
        %v7317 = vunpack.c.l.b16 %v7241
        %v7318 = vunpack.c.l.b16 %v7244
        %v7319 = vunpack.c.l.b16 %v7248
        %v7320 = vunpack.c.l.b16 %v7251
        %v7321 = vunpack.c.l.b16 %v7255
        %v7322 = vunpack.c.l.b16 %v7258
        %v7323 = vunpack.c.l.b16 %v7262
        %v7324 = vunpack.c.l.b16 %v7265
        %v7325 = vunpack.c.l.b16 %v7269
        %v7326 = vunpack.c.l.b16 %v7272
        %v7327 = vunpack.c.l.b16 %v7276
        %v7328 = vunpack.c.l.b16 %v7279
        %v7329 = vpack.c.b16 %v7298, %v7297
        %v7330 = vpack.c.b16 %v7300, %v7299
        %v7331 = vpack.c.b16 %v7302, %v7301
        %v7332 = vpack.c.b16 %v7304, %v7303
        %v7333 = vpack.c.b16 %v7306, %v7305
        %v7334 = vpack.c.b16 %v7308, %v7307
        %v7335 = vpack.c.b16 %v7310, %v7309
        %v7336 = vpack.c.b16 %v7312, %v7311
        %v7337 = vpack.c.b16 %v7314, %v7313
        %v7338 = vpack.c.b16 %v7316, %v7315
        %v7339 = vpack.c.b16 %v7318, %v7317
        %v7340 = vpack.c.b16 %v7320, %v7319
        %v7341 = vpack.c.b16 %v7322, %v7321
        %v7342 = vpack.c.b16 %v7324, %v7323
        %v7343 = vpack.c.b16 %v7326, %v7325
        %v7344 = vpack.c.b16 %v7328, %v7327
        %v7377 = vunpack.c.l.b16 %v7281
        %v7378 = vunpack.c.l.b16 %v7282
        %v7379 = vunpack.c.l.b16 %v7283
        %v7380 = vunpack.c.l.b16 %v7284
        %v7381 = vunpack.c.l.b16 %v7285
        %v7382 = vunpack.c.l.b16 %v7286
        %v7383 = vunpack.c.l.b16 %v7287
        %v7384 = vunpack.c.l.b16 %v7288
        %v7385 = vunpack.c.l.b16 %v7289
        %v7386 = vunpack.c.l.b16 %v7290
        %v7387 = vunpack.c.l.b16 %v7291
        %v7388 = vunpack.c.l.b16 %v7292
        %v7389 = vunpack.c.l.b16 %v7293
        %v7390 = vunpack.c.l.b16 %v7294
        %v7391 = vunpack.c.l.b16 %v7295
        %v7392 = vunpack.c.l.b16 %v7296
        %v7393 = vpack.c.b16 %v7378, %v7377
        %v7394 = vpack.c.b16 %v7380, %v7379
        %v7395 = vpack.c.b16 %v7382, %v7381
        %v7396 = vpack.c.b16 %v7384, %v7383
        %v7397 = vpack.c.b16 %v7386, %v7385
        %v7398 = vpack.c.b16 %v7388, %v7387
        %v7399 = vpack.c.b16 %v7390, %v7389
        %v7400 = vpack.c.b16 %v7392, %v7391
        %7409 = vmatprep.subr.bf16.mxu0 0
        %7410 = vmatpush1.bf16.msra.mxu0 %v7400
        %7411 = vmatprep.subr.bf16.mxu0 0
        %7412 = vmatpush1.bf16.msra.mxu0 %v7399
        %7413 = vmatprep.subr.bf16.mxu0 0
        %7414 = vmatpush1.bf16.msra.mxu0 %v7398
        %7415 = vmatprep.subr.bf16.mxu0 0
        %7416 = vmatpush1.bf16.msra.mxu0 %v7397
        %7417 = vmatprep.subr.bf16.mxu0 0
        %7418 = vmatpush1.bf16.msra.mxu0 %v7396
        %7419 = vmatprep.subr.bf16.mxu0 0
        %7420 = vmatpush1.bf16.msra.mxu0 %v7395
        %7421 = vmatprep.subr.bf16.mxu0 0
        %7422 = vmatpush1.bf16.msra.mxu0 %v7394
        %7423 = vmatprep.subr.bf16.mxu0 0
        %7424 = vmatpush1.bf16.msra.mxu0 %v7393
        %7425 = vmatprep.subr.bf16.mxu0 0
        %7426 = vmatpush2.bf16.msra.mxu0 0
        %7427 = vmatprep.subr.bf16.mxu0 0
        %7428 = vmatpush2.bf16.msra.mxu0 0
        %7429 = vmatprep.subr.bf16.mxu0 0
        %7430 = vmatpush2.bf16.msra.mxu0 0
        %7431 = vmatprep.subr.bf16.mxu0 0
        %7432 = vmatpush2.bf16.msra.mxu0 0
        %7433 = vmatprep.subr.bf16.mxu0 0
        %7434 = vmatpush2.bf16.msra.mxu0 0
        %7435 = vmatprep.subr.bf16.mxu0 0
        %7436 = vmatpush2.bf16.msra.mxu0 0
        %7437 = vmatprep.subr.bf16.mxu0 0
        %7438 = vmatpush2.bf16.msra.mxu0 0
        %7439 = vmatprep.subr.bf16.mxu0 0
        %7440 = vmatpush2.bf16.msra.mxu0 0
        %7441 = vmatprep.mubr.bf16.mxu0 0
        %7442 = vmatmul.mubr.bf16.gmra.mxu0 %v7329
        %v7443 = vpop.f32.mrf.mxu0
        %v7444 = vadd.f32 0.0, %v7443
        %v7445 = vpop.f32.mrf.mxu0
        %v7446 = vpop.f32.mrf.mxu0
        %v7447 = vadd.f32 0.0, %v7446
        %v7448 = vpop.f32.mrf.mxu0
        %7449 = vmatprep.mubr.bf16.mxu0 0
        %7450 = vmatmul.mubr.bf16.gmra.mxu0 %v7330
        %v7451 = vpop.f32.mrf.mxu0
        %v7452 = vadd.f32 0.0, %v7451
        %v7453 = vpop.f32.mrf.mxu0
        %v7454 = vpop.f32.mrf.mxu0
        %v7455 = vadd.f32 0.0, %v7454
        %v7456 = vpop.f32.mrf.mxu0
        %7457 = vmatprep.mubr.bf16.mxu0 0
        %7458 = vmatmul.mubr.bf16.gmra.mxu0 %v7331
        %v7459 = vpop.f32.mrf.mxu0
        %v7460 = vadd.f32 0.0, %v7459
        %v7461 = vpop.f32.mrf.mxu0
        %v7462 = vpop.f32.mrf.mxu0
        %v7463 = vadd.f32 0.0, %v7462
        %v7464 = vpop.f32.mrf.mxu0
        %7465 = vmatprep.mubr.bf16.mxu0 0
        %7466 = vmatmul.mubr.bf16.gmra.mxu0 %v7332
        %v7467 = vpop.f32.mrf.mxu0
        %v7468 = vadd.f32 0.0, %v7467
        %v7469 = vpop.f32.mrf.mxu0
        %v7470 = vpop.f32.mrf.mxu0
        %v7471 = vadd.f32 0.0, %v7470
        %v7472 = vpop.f32.mrf.mxu0
        %7473 = vmatprep.mubr.bf16.mxu0 0
        %7474 = vmatmul.mubr.bf16.gmra.mxu0 %v7333
        %v7475 = vpop.f32.mrf.mxu0
        %v7476 = vadd.f32 0.0, %v7475
        %v7477 = vpop.f32.mrf.mxu0
        %v7478 = vpop.f32.mrf.mxu0
        %v7479 = vadd.f32 0.0, %v7478
        %v7480 = vpop.f32.mrf.mxu0
        %7481 = vmatprep.mubr.bf16.mxu0 0
        %7482 = vmatmul.mubr.bf16.gmra.mxu0 %v7334
        %v7483 = vpop.f32.mrf.mxu0
        %v7484 = vadd.f32 0.0, %v7483
        %v7485 = vpop.f32.mrf.mxu0
        %v7486 = vpop.f32.mrf.mxu0
        %v7487 = vadd.f32 0.0, %v7486
        %v7488 = vpop.f32.mrf.mxu0
        %7489 = vmatprep.mubr.bf16.mxu0 0
        %7490 = vmatmul.mubr.bf16.gmra.mxu0 %v7335
        %v7491 = vpop.f32.mrf.mxu0
        %v7492 = vadd.f32 0.0, %v7491
        %v7493 = vpop.f32.mrf.mxu0
        %v7494 = vpop.f32.mrf.mxu0
        %v7495 = vadd.f32 0.0, %v7494
        %v7496 = vpop.f32.mrf.mxu0
        %7497 = vmatprep.mubr.bf16.mxu0 0
        %7498 = vmatmul.mubr.bf16.gmra.mxu0 %v7336
        %v7499 = vpop.f32.mrf.mxu0
        %v7500 = vadd.f32 0.0, %v7499
        %v7501 = vpop.f32.mrf.mxu0
        %v7502 = vpop.f32.mrf.mxu0
        %v7503 = vadd.f32 0.0, %v7502
        %v7504 = vpop.f32.mrf.mxu0
        %7505 = vmatprep.mubr.bf16.mxu0 0
        %7506 = vmatmul.mubr.bf16.gmra.mxu0 %v7337
        %v7507 = vpop.f32.mrf.mxu0
        %v7508 = vadd.f32 0.0, %v7507
        %v7509 = vpop.f32.mrf.mxu0
        %v7510 = vpop.f32.mrf.mxu0
        %v7511 = vadd.f32 0.0, %v7510
        %v7512 = vpop.f32.mrf.mxu0
        %7513 = vmatprep.mubr.bf16.mxu0 0
        %7514 = vmatmul.mubr.bf16.gmra.mxu0 %v7338
        %v7515 = vpop.f32.mrf.mxu0
        %v7516 = vadd.f32 0.0, %v7515
        %v7517 = vpop.f32.mrf.mxu0
        %v7518 = vpop.f32.mrf.mxu0
        %v7519 = vadd.f32 0.0, %v7518
        %v7520 = vpop.f32.mrf.mxu0
        %7521 = vmatprep.mubr.bf16.mxu0 0
        %7522 = vmatmul.mubr.bf16.gmra.mxu0 %v7339
        %v7523 = vpop.f32.mrf.mxu0
        %v7524 = vadd.f32 0.0, %v7523
        %v7525 = vpop.f32.mrf.mxu0
        %v7526 = vpop.f32.mrf.mxu0
        %v7527 = vadd.f32 0.0, %v7526
        %v7528 = vpop.f32.mrf.mxu0
        %7529 = vmatprep.mubr.bf16.mxu0 0
        %7530 = vmatmul.mubr.bf16.gmra.mxu0 %v7340
        %v7531 = vpop.f32.mrf.mxu0
        %v7532 = vadd.f32 0.0, %v7531
        %v7533 = vpop.f32.mrf.mxu0
        %v7534 = vpop.f32.mrf.mxu0
        %v7535 = vadd.f32 0.0, %v7534
        %v7536 = vpop.f32.mrf.mxu0
        %7537 = vmatprep.mubr.bf16.mxu0 0
        %7538 = vmatmul.mubr.bf16.gmra.mxu0 %v7341
        %v7539 = vpop.f32.mrf.mxu0
        %v7540 = vadd.f32 0.0, %v7539
        %v7541 = vpop.f32.mrf.mxu0
        %v7542 = vpop.f32.mrf.mxu0
        %v7543 = vadd.f32 0.0, %v7542
        %v7544 = vpop.f32.mrf.mxu0
        %7545 = vmatprep.mubr.bf16.mxu0 0
        %7546 = vmatmul.mubr.bf16.gmra.mxu0 %v7342
        %v7547 = vpop.f32.mrf.mxu0
        %v7548 = vadd.f32 0.0, %v7547
        %v7549 = vpop.f32.mrf.mxu0
        %v7550 = vpop.f32.mrf.mxu0
        %v7551 = vadd.f32 0.0, %v7550
        %v7552 = vpop.f32.mrf.mxu0
        %7553 = vmatprep.mubr.bf16.mxu0 0
        %7554 = vmatmul.mubr.bf16.gmra.mxu0 %v7343
        %v7555 = vpop.f32.mrf.mxu0
        %v7556 = vadd.f32 0.0, %v7555
        %v7557 = vpop.f32.mrf.mxu0
        %v7558 = vpop.f32.mrf.mxu0
        %v7559 = vadd.f32 0.0, %v7558
        %v7560 = vpop.f32.mrf.mxu0
        %7561 = vmatprep.mubr.bf16.mxu0 0
        %7562 = vmatmul.mubr.bf16.gmra.mxu0 %v7344
        %v7563 = vpop.f32.mrf.mxu0
        %v7564 = vadd.f32 0.0, %v7563
        %v7565 = vpop.f32.mrf.mxu0
        %v7566 = vpop.f32.mrf.mxu0
        %v7567 = vadd.f32 0.0, %v7566
        %v7568 = vpop.f32.mrf.mxu0
        %7569 = vdwg.mxu0
        %v7570 = vadd.f32 %v7072, %v7444
        %v7571 = vadd.f32 %v7073, %v7447
        %v7572 = vadd.f32 %v7074, %v7452
        %v7573 = vadd.f32 %v7075, %v7455
        %v7574 = vadd.f32 %v7076, %v7460
        %v7575 = vadd.f32 %v7077, %v7463
        %v7576 = vadd.f32 %v7078, %v7468
        %v7577 = vadd.f32 %v7079, %v7471
        %v7578 = vadd.f32 %v7080, %v7476
        %v7579 = vadd.f32 %v7081, %v7479
        %v7580 = vadd.f32 %v7082, %v7484
        %v7581 = vadd.f32 %v7083, %v7487
        %v7582 = vadd.f32 %v7084, %v7492
        %v7583 = vadd.f32 %v7085, %v7495
        %v7584 = vadd.f32 %v7086, %v7500
        %v7585 = vadd.f32 %v7087, %v7503
        %v7586 = vadd.f32 %v7088, %v7508
        %v7587 = vadd.f32 %v7089, %v7511
        %v7588 = vadd.f32 %v7090, %v7516
        %v7589 = vadd.f32 %v7091, %v7519
        %v7590 = vadd.f32 %v7092, %v7524
        %v7591 = vadd.f32 %v7093, %v7527
        %v7592 = vadd.f32 %v7094, %v7532
        %v7593 = vadd.f32 %v7095, %v7535
        %v7594 = vadd.f32 %v7096, %v7540
        %v7595 = vadd.f32 %v7097, %v7543
        %v7596 = vadd.f32 %v7098, %v7548
        %v7597 = vadd.f32 %v7099, %v7551
        %v7598 = vadd.f32 %v7100, %v7556
        %v7599 = vadd.f32 %v7101, %v7559
        %v7600 = vadd.f32 %v7102, %v7564
        %v7601 = vadd.f32 %v7103, %v7567
        %s7602 = scalar_lea.vmem [#allocation2], 24
        %v7603 = vld [vmem:[%s7602] sm:$0xf]
        %v7604 = vld [vmem:[%s7602 + $0x4] sm:$0xf]
        %v7605 = vld [vmem:[%s7602 + $0xc] sm:$0xf]
        %v7606 = vld [vmem:[%s7602 + $0x10] sm:$0xf]
        %v7607 = vld [vmem:[%s7602 + $0x18] sm:$0xf]
        %v7608 = vld [vmem:[%s7602 + $0x1c] sm:$0xf]
        %v7609 = vld [vmem:[%s7602 + $0x24] sm:$0xf]
        %v7610 = vld [vmem:[%s7602 + $0x28] sm:$0xf]
        %v7611 = vld [vmem:[%s7602 + $0x30] sm:$0xf]
        %v7612 = vld [vmem:[%s7602 + $0x34] sm:$0xf]
        %v7613 = vld [vmem:[%s7602 + $0x3c] sm:$0xf]
        %v7614 = vld [vmem:[%s7602 + $0x40] sm:$0xf]
        %v7615 = vld [vmem:[%s7602 + $0x48] sm:$0xf]
        %v7616 = vld [vmem:[%s7602 + $0x4c] sm:$0xf]
        %v7617 = vld [vmem:[%s7602 + $0x54] sm:$0xf]
        %v7618 = vld [vmem:[%s7602 + $0x58] sm:$0xf]
        %v7619 = vld [vmem:[%s7602 + $0x60] sm:$0xf]
        %v7620 = vld [vmem:[%s7602 + $0x64] sm:$0xf]
        %v7621 = vld [vmem:[%s7602 + $0x6c] sm:$0xf]
        %v7622 = vld [vmem:[%s7602 + $0x70] sm:$0xf]
        %v7623 = vld [vmem:[%s7602 + $0x78] sm:$0xf]
        %v7624 = vld [vmem:[%s7602 + $0x7c] sm:$0xf]
        %v7625 = vld [vmem:[%s7602 + $0x84] sm:$0xf]
        %v7626 = vld [vmem:[%s7602 + $0x88] sm:$0xf]
        %v7627 = vld [vmem:[%s7602 + $0x90] sm:$0xf]
        %v7628 = vld [vmem:[%s7602 + $0x94] sm:$0xf]
        %v7629 = vld [vmem:[%s7602 + $0x9c] sm:$0xf]
        %v7630 = vld [vmem:[%s7602 + $0xa0] sm:$0xf]
        %v7631 = vld [vmem:[%s7602 + $0xa8] sm:$0xf]
        %v7632 = vld [vmem:[%s7602 + $0xac] sm:$0xf]
        %v7633 = vld [vmem:[%s7602 + $0xb4] sm:$0xf]
        %v7634 = vld [vmem:[%s7602 + $0xb8] sm:$0xf]
        %s7635 = scalar_lea.vmem %s2, 384
        %v7636 = vld [vmem:[%s7635] sm:$0xf]
        %v7637 = vld [vmem:[%s7635 + $0x4] sm:$0xf]
        %v7638 = vld [vmem:[%s7635 + $0x8] sm:$0xf]
        %v7639 = vld [vmem:[%s7635 + $0xc] sm:$0xf]
        %v7640 = vld [vmem:[%s7635 + $0x10] sm:$0xf]
        %v7641 = vld [vmem:[%s7635 + $0x14] sm:$0xf]
        %v7642 = vld [vmem:[%s7635 + $0x18] sm:$0xf]
        %v7643 = vld [vmem:[%s7635 + $0x1c] sm:$0xf]
        %v7644 = vld [vmem:[%s7635 + $0x20] sm:$0xf]
        %v7645 = vld [vmem:[%s7635 + $0x24] sm:$0xf]
        %v7646 = vld [vmem:[%s7635 + $0x28] sm:$0xf]
        %v7647 = vld [vmem:[%s7635 + $0x2c] sm:$0xf]
        %v7648 = vld [vmem:[%s7635 + $0x30] sm:$0xf]
        %v7649 = vld [vmem:[%s7635 + $0x34] sm:$0xf]
        %v7650 = vld [vmem:[%s7635 + $0x38] sm:$0xf]
        %v7651 = vld [vmem:[%s7635 + $0x3c] sm:$0xf]
        %v7684 = vunpack.c.l.b16 %v7603
        %v7685 = vunpack.c.l.b16 %v7604
        %v7686 = vunpack.c.l.b16 %v7605
        %v7687 = vunpack.c.l.b16 %v7606
        %v7688 = vunpack.c.l.b16 %v7607
        %v7689 = vunpack.c.l.b16 %v7608
        %v7690 = vunpack.c.l.b16 %v7609
        %v7691 = vunpack.c.l.b16 %v7610
        %v7692 = vunpack.c.l.b16 %v7611
        %v7693 = vunpack.c.l.b16 %v7612
        %v7694 = vunpack.c.l.b16 %v7613
        %v7695 = vunpack.c.l.b16 %v7614
        %v7696 = vunpack.c.l.b16 %v7615
        %v7697 = vunpack.c.l.b16 %v7616
        %v7698 = vunpack.c.l.b16 %v7617
        %v7699 = vunpack.c.l.b16 %v7618
        %v7700 = vunpack.c.l.b16 %v7619
        %v7701 = vunpack.c.l.b16 %v7620
        %v7702 = vunpack.c.l.b16 %v7621
        %v7703 = vunpack.c.l.b16 %v7622
        %v7704 = vunpack.c.l.b16 %v7623
        %v7705 = vunpack.c.l.b16 %v7624
        %v7706 = vunpack.c.l.b16 %v7625
        %v7707 = vunpack.c.l.b16 %v7626
        %v7708 = vunpack.c.l.b16 %v7627
        %v7709 = vunpack.c.l.b16 %v7628
        %v7710 = vunpack.c.l.b16 %v7629
        %v7711 = vunpack.c.l.b16 %v7630
        %v7712 = vunpack.c.l.b16 %v7631
        %v7713 = vunpack.c.l.b16 %v7632
        %v7714 = vunpack.c.l.b16 %v7633
        %v7715 = vunpack.c.l.b16 %v7634
        %v7716 = vpack.c.b16 %v7685, %v7684
        %v7717 = vpack.c.b16 %v7687, %v7686
        %v7718 = vpack.c.b16 %v7689, %v7688
        %v7719 = vpack.c.b16 %v7691, %v7690
        %v7720 = vpack.c.b16 %v7693, %v7692
        %v7721 = vpack.c.b16 %v7695, %v7694
        %v7722 = vpack.c.b16 %v7697, %v7696
        %v7723 = vpack.c.b16 %v7699, %v7698
        %v7724 = vpack.c.b16 %v7701, %v7700
        %v7725 = vpack.c.b16 %v7703, %v7702
        %v7726 = vpack.c.b16 %v7705, %v7704
        %v7727 = vpack.c.b16 %v7707, %v7706
        %v7728 = vpack.c.b16 %v7709, %v7708
        %v7729 = vpack.c.b16 %v7711, %v7710
        %v7730 = vpack.c.b16 %v7713, %v7712
        %v7731 = vpack.c.b16 %v7715, %v7714
        %v7764 = vunpack.c.l.b16 %v7636
        %v7765 = vunpack.c.l.b16 %v7637
        %v7766 = vunpack.c.l.b16 %v7638
        %v7767 = vunpack.c.l.b16 %v7639
        %v7768 = vunpack.c.l.b16 %v7640
        %v7769 = vunpack.c.l.b16 %v7641
        %v7770 = vunpack.c.l.b16 %v7642
        %v7771 = vunpack.c.l.b16 %v7643
        %v7772 = vunpack.c.l.b16 %v7644
        %v7773 = vunpack.c.l.b16 %v7645
        %v7774 = vunpack.c.l.b16 %v7646
        %v7775 = vunpack.c.l.b16 %v7647
        %v7776 = vunpack.c.l.b16 %v7648
        %v7777 = vunpack.c.l.b16 %v7649
        %v7778 = vunpack.c.l.b16 %v7650
        %v7779 = vunpack.c.l.b16 %v7651
        %v7780 = vpack.c.b16 %v7765, %v7764
        %v7781 = vpack.c.b16 %v7767, %v7766
        %v7782 = vpack.c.b16 %v7769, %v7768
        %v7783 = vpack.c.b16 %v7771, %v7770
        %v7784 = vpack.c.b16 %v7773, %v7772
        %v7785 = vpack.c.b16 %v7775, %v7774
        %v7786 = vpack.c.b16 %v7777, %v7776
        %v7787 = vpack.c.b16 %v7779, %v7778
        %7796 = vmatprep.subr.bf16.mxu0 0
        %7797 = vmatpush1.bf16.msra.mxu0 %v7787
        %7798 = vmatprep.subr.bf16.mxu0 0
        %7799 = vmatpush1.bf16.msra.mxu0 %v7786
        %7800 = vmatprep.subr.bf16.mxu0 0
        %7801 = vmatpush1.bf16.msra.mxu0 %v7785
        %7802 = vmatprep.subr.bf16.mxu0 0
        %7803 = vmatpush1.bf16.msra.mxu0 %v7784
        %7804 = vmatprep.subr.bf16.mxu0 0
        %7805 = vmatpush1.bf16.msra.mxu0 %v7783
        %7806 = vmatprep.subr.bf16.mxu0 0
        %7807 = vmatpush1.bf16.msra.mxu0 %v7782
        %7808 = vmatprep.subr.bf16.mxu0 0
        %7809 = vmatpush1.bf16.msra.mxu0 %v7781
        %7810 = vmatprep.subr.bf16.mxu0 0
        %7811 = vmatpush1.bf16.msra.mxu0 %v7780
        %7812 = vmatprep.subr.bf16.mxu0 0
        %7813 = vmatpush2.bf16.msra.mxu0 0
        %7814 = vmatprep.subr.bf16.mxu0 0
        %7815 = vmatpush2.bf16.msra.mxu0 0
        %7816 = vmatprep.subr.bf16.mxu0 0
        %7817 = vmatpush2.bf16.msra.mxu0 0
        %7818 = vmatprep.subr.bf16.mxu0 0
        %7819 = vmatpush2.bf16.msra.mxu0 0
        %7820 = vmatprep.subr.bf16.mxu0 0
        %7821 = vmatpush2.bf16.msra.mxu0 0
        %7822 = vmatprep.subr.bf16.mxu0 0
        %7823 = vmatpush2.bf16.msra.mxu0 0
        %7824 = vmatprep.subr.bf16.mxu0 0
        %7825 = vmatpush2.bf16.msra.mxu0 0
        %7826 = vmatprep.subr.bf16.mxu0 0
        %7827 = vmatpush2.bf16.msra.mxu0 0
        %7828 = vmatprep.mubr.bf16.mxu0 0
        %7829 = vmatmul.mubr.bf16.gmra.mxu0 %v7716
        %v7830 = vpop.f32.mrf.mxu0
        %v7831 = vadd.f32 0.0, %v7830
        %v7832 = vpop.f32.mrf.mxu0
        %v7833 = vpop.f32.mrf.mxu0
        %v7834 = vadd.f32 0.0, %v7833
        %v7835 = vpop.f32.mrf.mxu0
        %7836 = vmatprep.mubr.bf16.mxu0 0
        %7837 = vmatmul.mubr.bf16.gmra.mxu0 %v7717
        %v7838 = vpop.f32.mrf.mxu0
        %v7839 = vadd.f32 0.0, %v7838
        %v7840 = vpop.f32.mrf.mxu0
        %v7841 = vpop.f32.mrf.mxu0
        %v7842 = vadd.f32 0.0, %v7841
        %v7843 = vpop.f32.mrf.mxu0
        %7844 = vmatprep.mubr.bf16.mxu0 0
        %7845 = vmatmul.mubr.bf16.gmra.mxu0 %v7718
        %v7846 = vpop.f32.mrf.mxu0
        %v7847 = vadd.f32 0.0, %v7846
        %v7848 = vpop.f32.mrf.mxu0
        %v7849 = vpop.f32.mrf.mxu0
        %v7850 = vadd.f32 0.0, %v7849
        %v7851 = vpop.f32.mrf.mxu0
        %7852 = vmatprep.mubr.bf16.mxu0 0
        %7853 = vmatmul.mubr.bf16.gmra.mxu0 %v7719
        %v7854 = vpop.f32.mrf.mxu0
        %v7855 = vadd.f32 0.0, %v7854
        %v7856 = vpop.f32.mrf.mxu0
        %v7857 = vpop.f32.mrf.mxu0
        %v7858 = vadd.f32 0.0, %v7857
        %v7859 = vpop.f32.mrf.mxu0
        %7860 = vmatprep.mubr.bf16.mxu0 0
        %7861 = vmatmul.mubr.bf16.gmra.mxu0 %v7720
        %v7862 = vpop.f32.mrf.mxu0
        %v7863 = vadd.f32 0.0, %v7862
        %v7864 = vpop.f32.mrf.mxu0
        %v7865 = vpop.f32.mrf.mxu0
        %v7866 = vadd.f32 0.0, %v7865
        %v7867 = vpop.f32.mrf.mxu0
        %7868 = vmatprep.mubr.bf16.mxu0 0
        %7869 = vmatmul.mubr.bf16.gmra.mxu0 %v7721
        %v7870 = vpop.f32.mrf.mxu0
        %v7871 = vadd.f32 0.0, %v7870
        %v7872 = vpop.f32.mrf.mxu0
        %v7873 = vpop.f32.mrf.mxu0
        %v7874 = vadd.f32 0.0, %v7873
        %v7875 = vpop.f32.mrf.mxu0
        %7876 = vmatprep.mubr.bf16.mxu0 0
        %7877 = vmatmul.mubr.bf16.gmra.mxu0 %v7722
        %v7878 = vpop.f32.mrf.mxu0
        %v7879 = vadd.f32 0.0, %v7878
        %v7880 = vpop.f32.mrf.mxu0
        %v7881 = vpop.f32.mrf.mxu0
        %v7882 = vadd.f32 0.0, %v7881
        %v7883 = vpop.f32.mrf.mxu0
        %7884 = vmatprep.mubr.bf16.mxu0 0
        %7885 = vmatmul.mubr.bf16.gmra.mxu0 %v7723
        %v7886 = vpop.f32.mrf.mxu0
        %v7887 = vadd.f32 0.0, %v7886
        %v7888 = vpop.f32.mrf.mxu0
        %v7889 = vpop.f32.mrf.mxu0
        %v7890 = vadd.f32 0.0, %v7889
        %v7891 = vpop.f32.mrf.mxu0
        %7892 = vmatprep.mubr.bf16.mxu0 0
        %7893 = vmatmul.mubr.bf16.gmra.mxu0 %v7724
        %v7894 = vpop.f32.mrf.mxu0
        %v7895 = vadd.f32 0.0, %v7894
        %v7896 = vpop.f32.mrf.mxu0
        %v7897 = vpop.f32.mrf.mxu0
        %v7898 = vadd.f32 0.0, %v7897
        %v7899 = vpop.f32.mrf.mxu0
        %7900 = vmatprep.mubr.bf16.mxu0 0
        %7901 = vmatmul.mubr.bf16.gmra.mxu0 %v7725
        %v7902 = vpop.f32.mrf.mxu0
        %v7903 = vadd.f32 0.0, %v7902
        %v7904 = vpop.f32.mrf.mxu0
        %v7905 = vpop.f32.mrf.mxu0
        %v7906 = vadd.f32 0.0, %v7905
        %v7907 = vpop.f32.mrf.mxu0
        %7908 = vmatprep.mubr.bf16.mxu0 0
        %7909 = vmatmul.mubr.bf16.gmra.mxu0 %v7726
        %v7910 = vpop.f32.mrf.mxu0
        %v7911 = vadd.f32 0.0, %v7910
        %v7912 = vpop.f32.mrf.mxu0
        %v7913 = vpop.f32.mrf.mxu0
        %v7914 = vadd.f32 0.0, %v7913
        %v7915 = vpop.f32.mrf.mxu0
        %7916 = vmatprep.mubr.bf16.mxu0 0
        %7917 = vmatmul.mubr.bf16.gmra.mxu0 %v7727
        %v7918 = vpop.f32.mrf.mxu0
        %v7919 = vadd.f32 0.0, %v7918
        %v7920 = vpop.f32.mrf.mxu0
        %v7921 = vpop.f32.mrf.mxu0
        %v7922 = vadd.f32 0.0, %v7921
        %v7923 = vpop.f32.mrf.mxu0
        %7924 = vmatprep.mubr.bf16.mxu0 0
        %7925 = vmatmul.mubr.bf16.gmra.mxu0 %v7728
        %v7926 = vpop.f32.mrf.mxu0
        %v7927 = vadd.f32 0.0, %v7926
        %v7928 = vpop.f32.mrf.mxu0
        %v7929 = vpop.f32.mrf.mxu0
        %v7930 = vadd.f32 0.0, %v7929
        %v7931 = vpop.f32.mrf.mxu0
        %7932 = vmatprep.mubr.bf16.mxu0 0
        %7933 = vmatmul.mubr.bf16.gmra.mxu0 %v7729
        %v7934 = vpop.f32.mrf.mxu0
        %v7935 = vadd.f32 0.0, %v7934
        %v7936 = vpop.f32.mrf.mxu0
        %v7937 = vpop.f32.mrf.mxu0
        %v7938 = vadd.f32 0.0, %v7937
        %v7939 = vpop.f32.mrf.mxu0
        %7940 = vmatprep.mubr.bf16.mxu0 0
        %7941 = vmatmul.mubr.bf16.gmra.mxu0 %v7730
        %v7942 = vpop.f32.mrf.mxu0
        %v7943 = vadd.f32 0.0, %v7942
        %v7944 = vpop.f32.mrf.mxu0
        %v7945 = vpop.f32.mrf.mxu0
        %v7946 = vadd.f32 0.0, %v7945
        %v7947 = vpop.f32.mrf.mxu0
        %7948 = vmatprep.mubr.bf16.mxu0 0
        %7949 = vmatmul.mubr.bf16.gmra.mxu0 %v7731
        %v7950 = vpop.f32.mrf.mxu0
        %v7951 = vadd.f32 0.0, %v7950
        %v7952 = vpop.f32.mrf.mxu0
        %v7953 = vpop.f32.mrf.mxu0
        %v7954 = vadd.f32 0.0, %v7953
        %v7955 = vpop.f32.mrf.mxu0
        %7956 = vdwg.mxu0
        %v7957 = vadd.f32 %v7570, %v7831
        %v7958 = vadd.f32 %v7571, %v7834
        %v7959 = vadd.f32 %v7572, %v7839
        %v7960 = vadd.f32 %v7573, %v7842
        %v7961 = vadd.f32 %v7574, %v7847
        %v7962 = vadd.f32 %v7575, %v7850
        %v7963 = vadd.f32 %v7576, %v7855
        %v7964 = vadd.f32 %v7577, %v7858
        %v7965 = vadd.f32 %v7578, %v7863
        %v7966 = vadd.f32 %v7579, %v7866
        %v7967 = vadd.f32 %v7580, %v7871
        %v7968 = vadd.f32 %v7581, %v7874
        %v7969 = vadd.f32 %v7582, %v7879
        %v7970 = vadd.f32 %v7583, %v7882
        %v7971 = vadd.f32 %v7584, %v7887
        %v7972 = vadd.f32 %v7585, %v7890
        %v7973 = vadd.f32 %v7586, %v7895
        %v7974 = vadd.f32 %v7587, %v7898
        %v7975 = vadd.f32 %v7588, %v7903
        %v7976 = vadd.f32 %v7589, %v7906
        %v7977 = vadd.f32 %v7590, %v7911
        %v7978 = vadd.f32 %v7591, %v7914
        %v7979 = vadd.f32 %v7592, %v7919
        %v7980 = vadd.f32 %v7593, %v7922
        %v7981 = vadd.f32 %v7594, %v7927
        %v7982 = vadd.f32 %v7595, %v7930
        %v7983 = vadd.f32 %v7596, %v7935
        %v7984 = vadd.f32 %v7597, %v7938
        %v7985 = vadd.f32 %v7598, %v7943
        %v7986 = vadd.f32 %v7599, %v7946
        %v7987 = vadd.f32 %v7600, %v7951
        %v7988 = vadd.f32 %v7601, %v7954
        %v7989 = vld [vmem:[%s7602] sm:$0xf]
        %v7990 = vld [vmem:[%s7602 + $0x4] sm:$0xf]
        %v7991 = vld [vmem:[%s7602 + $0x8] sm:$0x1]
        %v7992 = vld [vmem:[%s7602 + $0xc] sm:$0xf]
        %v7993 = vld [vmem:[%s7602 + $0x10] sm:$0xf]
        %v7994 = vld [vmem:[%s7602 + $0x14] sm:$0x1]
        %v7995 = vld [vmem:[%s7602 + $0x18] sm:$0xf]
        %v7996 = vld [vmem:[%s7602 + $0x1c] sm:$0xf]
        %v7997 = vld [vmem:[%s7602 + $0x20] sm:$0x1]
        %v7998 = vld [vmem:[%s7602 + $0x24] sm:$0xf]
        %v7999 = vld [vmem:[%s7602 + $0x28] sm:$0xf]
        %v8000 = vld [vmem:[%s7602 + $0x2c] sm:$0x1]
        %v8001 = vld [vmem:[%s7602 + $0x30] sm:$0xf]
        %v8002 = vld [vmem:[%s7602 + $0x34] sm:$0xf]
        %v8003 = vld [vmem:[%s7602 + $0x38] sm:$0x1]
        %v8004 = vld [vmem:[%s7602 + $0x3c] sm:$0xf]
        %v8005 = vld [vmem:[%s7602 + $0x40] sm:$0xf]
        %v8006 = vld [vmem:[%s7602 + $0x44] sm:$0x1]
        %v8007 = vld [vmem:[%s7602 + $0x48] sm:$0xf]
        %v8008 = vld [vmem:[%s7602 + $0x4c] sm:$0xf]
        %v8009 = vld [vmem:[%s7602 + $0x50] sm:$0x1]
        %v8010 = vld [vmem:[%s7602 + $0x54] sm:$0xf]
        %v8011 = vld [vmem:[%s7602 + $0x58] sm:$0xf]
        %v8012 = vld [vmem:[%s7602 + $0x5c] sm:$0x1]
        %v8013 = vld [vmem:[%s7602 + $0x60] sm:$0xf]
        %v8014 = vld [vmem:[%s7602 + $0x64] sm:$0xf]
        %v8015 = vld [vmem:[%s7602 + $0x68] sm:$0x1]
        %v8016 = vld [vmem:[%s7602 + $0x6c] sm:$0xf]
        %v8017 = vld [vmem:[%s7602 + $0x70] sm:$0xf]
        %v8018 = vld [vmem:[%s7602 + $0x74] sm:$0x1]
        %v8019 = vld [vmem:[%s7602 + $0x78] sm:$0xf]
        %v8020 = vld [vmem:[%s7602 + $0x7c] sm:$0xf]
        %v8021 = vld [vmem:[%s7602 + $0x80] sm:$0x1]
        %v8022 = vld [vmem:[%s7602 + $0x84] sm:$0xf]
        %v8023 = vld [vmem:[%s7602 + $0x88] sm:$0xf]
        %v8024 = vld [vmem:[%s7602 + $0x8c] sm:$0x1]
        %v8025 = vld [vmem:[%s7602 + $0x90] sm:$0xf]
        %v8026 = vld [vmem:[%s7602 + $0x94] sm:$0xf]
        %v8027 = vld [vmem:[%s7602 + $0x98] sm:$0x1]
        %v8028 = vld [vmem:[%s7602 + $0x9c] sm:$0xf]
        %v8029 = vld [vmem:[%s7602 + $0xa0] sm:$0xf]
        %v8030 = vld [vmem:[%s7602 + $0xa4] sm:$0x1]
        %v8031 = vld [vmem:[%s7602 + $0xa8] sm:$0xf]
        %v8032 = vld [vmem:[%s7602 + $0xac] sm:$0xf]
        %v8033 = vld [vmem:[%s7602 + $0xb0] sm:$0x1]
        %v8034 = vld [vmem:[%s7602 + $0xb4] sm:$0xf]
        %v8035 = vld [vmem:[%s7602 + $0xb8] sm:$0xf]
        %v8036 = vld [vmem:[%s7602 + $0xbc] sm:$0x1]
        %v8038 = vshrl.u32 %v7989, 16
        %v8040 = vrot.slane %v8038, 4
        %v8041 = vshll.u32 %v7989, 16
        %v8043 = vrot.slane %v8041, 5
        %v8044 = vor.u32 %v8040, %v8043
        %v8045 = vrot.slane %v8044, 4
        %v8047 = vshll.u32 %v7990, 16
        %v8049 = vrot.slane %v8047, 5
        %v8050 = vsel %vm4499, %v8045, %v8049
        %v8051 = vshrl.u32 %v7990, 16
        %v8053 = vrot.slane %v8051, 4
        %v8054 = vor.u32 %v8053, %v8049
        %v8055 = vrot.slane %v8054, 4
        %v8057 = vshll.u32 %v7991, 16
        %v8059 = vrot.slane %v8057, 5
        %v8060 = vsel %vm4499, %v8055, %v8059
        %v8062 = vshrl.u32 %v7992, 16
        %v8064 = vrot.slane %v8062, 4
        %v8065 = vshll.u32 %v7992, 16
        %v8067 = vrot.slane %v8065, 5
        %v8068 = vor.u32 %v8064, %v8067
        %v8069 = vrot.slane %v8068, 4
        %v8071 = vshll.u32 %v7993, 16
        %v8073 = vrot.slane %v8071, 5
        %v8074 = vsel %vm4499, %v8069, %v8073
        %v8075 = vshrl.u32 %v7993, 16
        %v8077 = vrot.slane %v8075, 4
        %v8078 = vor.u32 %v8077, %v8073
        %v8079 = vrot.slane %v8078, 4
        %v8081 = vshll.u32 %v7994, 16
        %v8083 = vrot.slane %v8081, 5
        %v8084 = vsel %vm4499, %v8079, %v8083
        %v8086 = vshrl.u32 %v7995, 16
        %v8088 = vrot.slane %v8086, 4
        %v8089 = vshll.u32 %v7995, 16
        %v8091 = vrot.slane %v8089, 5
        %v8092 = vor.u32 %v8088, %v8091
        %v8093 = vrot.slane %v8092, 4
        %v8095 = vshll.u32 %v7996, 16
        %v8097 = vrot.slane %v8095, 5
        %v8098 = vsel %vm4499, %v8093, %v8097
        %v8099 = vshrl.u32 %v7996, 16
        %v8101 = vrot.slane %v8099, 4
        %v8102 = vor.u32 %v8101, %v8097
        %v8103 = vrot.slane %v8102, 4
        %v8105 = vshll.u32 %v7997, 16
        %v8107 = vrot.slane %v8105, 5
        %v8108 = vsel %vm4499, %v8103, %v8107
        %v8110 = vshrl.u32 %v7998, 16
        %v8112 = vrot.slane %v8110, 4
        %v8113 = vshll.u32 %v7998, 16
        %v8115 = vrot.slane %v8113, 5
        %v8116 = vor.u32 %v8112, %v8115
        %v8117 = vrot.slane %v8116, 4
        %v8119 = vshll.u32 %v7999, 16
        %v8121 = vrot.slane %v8119, 5
        %v8122 = vsel %vm4499, %v8117, %v8121
        %v8123 = vshrl.u32 %v7999, 16
        %v8125 = vrot.slane %v8123, 4
        %v8126 = vor.u32 %v8125, %v8121
        %v8127 = vrot.slane %v8126, 4
        %v8129 = vshll.u32 %v8000, 16
        %v8131 = vrot.slane %v8129, 5
        %v8132 = vsel %vm4499, %v8127, %v8131
        %v8134 = vshrl.u32 %v8001, 16
        %v8136 = vrot.slane %v8134, 4
        %v8137 = vshll.u32 %v8001, 16
        %v8139 = vrot.slane %v8137, 5
        %v8140 = vor.u32 %v8136, %v8139
        %v8141 = vrot.slane %v8140, 4
        %v8143 = vshll.u32 %v8002, 16
        %v8145 = vrot.slane %v8143, 5
        %v8146 = vsel %vm4499, %v8141, %v8145
        %v8147 = vshrl.u32 %v8002, 16
        %v8149 = vrot.slane %v8147, 4
        %v8150 = vor.u32 %v8149, %v8145
        %v8151 = vrot.slane %v8150, 4
        %v8153 = vshll.u32 %v8003, 16
        %v8155 = vrot.slane %v8153, 5
        %v8156 = vsel %vm4499, %v8151, %v8155
        %v8158 = vshrl.u32 %v8004, 16
        %v8160 = vrot.slane %v8158, 4
        %v8161 = vshll.u32 %v8004, 16
        %v8163 = vrot.slane %v8161, 5
        %v8164 = vor.u32 %v8160, %v8163
        %v8165 = vrot.slane %v8164, 4
        %v8167 = vshll.u32 %v8005, 16
        %v8169 = vrot.slane %v8167, 5
        %v8170 = vsel %vm4499, %v8165, %v8169
        %v8171 = vshrl.u32 %v8005, 16
        %v8173 = vrot.slane %v8171, 4
        %v8174 = vor.u32 %v8173, %v8169
        %v8175 = vrot.slane %v8174, 4
        %v8177 = vshll.u32 %v8006, 16
        %v8179 = vrot.slane %v8177, 5
        %v8180 = vsel %vm4499, %v8175, %v8179
        %v8182 = vshrl.u32 %v8007, 16
        %v8184 = vrot.slane %v8182, 4
        %v8185 = vshll.u32 %v8007, 16
        %v8187 = vrot.slane %v8185, 5
        %v8188 = vor.u32 %v8184, %v8187
        %v8189 = vrot.slane %v8188, 4
        %v8191 = vshll.u32 %v8008, 16
        %v8193 = vrot.slane %v8191, 5
        %v8194 = vsel %vm4499, %v8189, %v8193
        %v8195 = vshrl.u32 %v8008, 16
        %v8197 = vrot.slane %v8195, 4
        %v8198 = vor.u32 %v8197, %v8193
        %v8199 = vrot.slane %v8198, 4
        %v8201 = vshll.u32 %v8009, 16
        %v8203 = vrot.slane %v8201, 5
        %v8204 = vsel %vm4499, %v8199, %v8203
        %v8206 = vshrl.u32 %v8010, 16
        %v8208 = vrot.slane %v8206, 4
        %v8209 = vshll.u32 %v8010, 16
        %v8211 = vrot.slane %v8209, 5
        %v8212 = vor.u32 %v8208, %v8211
        %v8213 = vrot.slane %v8212, 4
        %v8215 = vshll.u32 %v8011, 16
        %v8217 = vrot.slane %v8215, 5
        %v8218 = vsel %vm4499, %v8213, %v8217
        %v8219 = vshrl.u32 %v8011, 16
        %v8221 = vrot.slane %v8219, 4
        %v8222 = vor.u32 %v8221, %v8217
        %v8223 = vrot.slane %v8222, 4
        %v8225 = vshll.u32 %v8012, 16
        %v8227 = vrot.slane %v8225, 5
        %v8228 = vsel %vm4499, %v8223, %v8227
        %v8230 = vshrl.u32 %v8013, 16
        %v8232 = vrot.slane %v8230, 4
        %v8233 = vshll.u32 %v8013, 16
        %v8235 = vrot.slane %v8233, 5
        %v8236 = vor.u32 %v8232, %v8235
        %v8237 = vrot.slane %v8236, 4
        %v8239 = vshll.u32 %v8014, 16
        %v8241 = vrot.slane %v8239, 5
        %v8242 = vsel %vm4499, %v8237, %v8241
        %v8243 = vshrl.u32 %v8014, 16
        %v8245 = vrot.slane %v8243, 4
        %v8246 = vor.u32 %v8245, %v8241
        %v8247 = vrot.slane %v8246, 4
        %v8249 = vshll.u32 %v8015, 16
        %v8251 = vrot.slane %v8249, 5
        %v8252 = vsel %vm4499, %v8247, %v8251
        %v8254 = vshrl.u32 %v8016, 16
        %v8256 = vrot.slane %v8254, 4
        %v8257 = vshll.u32 %v8016, 16
        %v8259 = vrot.slane %v8257, 5
        %v8260 = vor.u32 %v8256, %v8259
        %v8261 = vrot.slane %v8260, 4
        %v8263 = vshll.u32 %v8017, 16
        %v8265 = vrot.slane %v8263, 5
        %v8266 = vsel %vm4499, %v8261, %v8265
        %v8267 = vshrl.u32 %v8017, 16
        %v8269 = vrot.slane %v8267, 4
        %v8270 = vor.u32 %v8269, %v8265
        %v8271 = vrot.slane %v8270, 4
        %v8273 = vshll.u32 %v8018, 16
        %v8275 = vrot.slane %v8273, 5
        %v8276 = vsel %vm4499, %v8271, %v8275
        %v8278 = vshrl.u32 %v8019, 16
        %v8280 = vrot.slane %v8278, 4
        %v8281 = vshll.u32 %v8019, 16
        %v8283 = vrot.slane %v8281, 5
        %v8284 = vor.u32 %v8280, %v8283
        %v8285 = vrot.slane %v8284, 4
        %v8287 = vshll.u32 %v8020, 16
        %v8289 = vrot.slane %v8287, 5
        %v8290 = vsel %vm4499, %v8285, %v8289
        %v8291 = vshrl.u32 %v8020, 16
        %v8293 = vrot.slane %v8291, 4
        %v8294 = vor.u32 %v8293, %v8289
        %v8295 = vrot.slane %v8294, 4
        %v8297 = vshll.u32 %v8021, 16
        %v8299 = vrot.slane %v8297, 5
        %v8300 = vsel %vm4499, %v8295, %v8299
        %v8302 = vshrl.u32 %v8022, 16
        %v8304 = vrot.slane %v8302, 4
        %v8305 = vshll.u32 %v8022, 16
        %v8307 = vrot.slane %v8305, 5
        %v8308 = vor.u32 %v8304, %v8307
        %v8309 = vrot.slane %v8308, 4
        %v8311 = vshll.u32 %v8023, 16
        %v8313 = vrot.slane %v8311, 5
        %v8314 = vsel %vm4499, %v8309, %v8313
        %v8315 = vshrl.u32 %v8023, 16
        %v8317 = vrot.slane %v8315, 4
        %v8318 = vor.u32 %v8317, %v8313
        %v8319 = vrot.slane %v8318, 4
        %v8321 = vshll.u32 %v8024, 16
        %v8323 = vrot.slane %v8321, 5
        %v8324 = vsel %vm4499, %v8319, %v8323
        %v8326 = vshrl.u32 %v8025, 16
        %v8328 = vrot.slane %v8326, 4
        %v8329 = vshll.u32 %v8025, 16
        %v8331 = vrot.slane %v8329, 5
        %v8332 = vor.u32 %v8328, %v8331
        %v8333 = vrot.slane %v8332, 4
        %v8335 = vshll.u32 %v8026, 16
        %v8337 = vrot.slane %v8335, 5
        %v8338 = vsel %vm4499, %v8333, %v8337
        %v8339 = vshrl.u32 %v8026, 16
        %v8341 = vrot.slane %v8339, 4
        %v8342 = vor.u32 %v8341, %v8337
        %v8343 = vrot.slane %v8342, 4
        %v8345 = vshll.u32 %v8027, 16
        %v8347 = vrot.slane %v8345, 5
        %v8348 = vsel %vm4499, %v8343, %v8347
        %v8350 = vshrl.u32 %v8028, 16
        %v8352 = vrot.slane %v8350, 4
        %v8353 = vshll.u32 %v8028, 16
        %v8355 = vrot.slane %v8353, 5
        %v8356 = vor.u32 %v8352, %v8355
        %v8357 = vrot.slane %v8356, 4
        %v8359 = vshll.u32 %v8029, 16
        %v8361 = vrot.slane %v8359, 5
        %v8362 = vsel %vm4499, %v8357, %v8361
        %v8363 = vshrl.u32 %v8029, 16
        %v8365 = vrot.slane %v8363, 4
        %v8366 = vor.u32 %v8365, %v8361
        %v8367 = vrot.slane %v8366, 4
        %v8369 = vshll.u32 %v8030, 16
        %v8371 = vrot.slane %v8369, 5
        %v8372 = vsel %vm4499, %v8367, %v8371
        %v8374 = vshrl.u32 %v8031, 16
        %v8376 = vrot.slane %v8374, 4
        %v8377 = vshll.u32 %v8031, 16
        %v8379 = vrot.slane %v8377, 5
        %v8380 = vor.u32 %v8376, %v8379
        %v8381 = vrot.slane %v8380, 4
        %v8383 = vshll.u32 %v8032, 16
        %v8385 = vrot.slane %v8383, 5
        %v8386 = vsel %vm4499, %v8381, %v8385
        %v8387 = vshrl.u32 %v8032, 16
        %v8389 = vrot.slane %v8387, 4
        %v8390 = vor.u32 %v8389, %v8385
        %v8391 = vrot.slane %v8390, 4
        %v8393 = vshll.u32 %v8033, 16
        %v8395 = vrot.slane %v8393, 5
        %v8396 = vsel %vm4499, %v8391, %v8395
        %v8398 = vshrl.u32 %v8034, 16
        %v8400 = vrot.slane %v8398, 4
        %v8401 = vshll.u32 %v8034, 16
        %v8403 = vrot.slane %v8401, 5
        %v8404 = vor.u32 %v8400, %v8403
        %v8405 = vrot.slane %v8404, 4
        %v8407 = vshll.u32 %v8035, 16
        %v8409 = vrot.slane %v8407, 5
        %v8410 = vsel %vm4499, %v8405, %v8409
        %v8411 = vshrl.u32 %v8035, 16
        %v8413 = vrot.slane %v8411, 4
        %v8414 = vor.u32 %v8413, %v8409
        %v8415 = vrot.slane %v8414, 4
        %v8417 = vshll.u32 %v8036, 16
        %v8419 = vrot.slane %v8417, 5
        %v8420 = vsel %vm4499, %v8415, %v8419
        %s8421 = scalar_lea.vmem %s2, 448
        %v8422 = vld [vmem:[%s8421] sm:$0xf]
        %v8423 = vld [vmem:[%s8421 + $0x4] sm:$0xf]
        %v8424 = vld [vmem:[%s8421 + $0x8] sm:$0xf]
        %v8425 = vld [vmem:[%s8421 + $0xc] sm:$0xf]
        %v8426 = vld [vmem:[%s8421 + $0x10] sm:$0xf]
        %v8427 = vld [vmem:[%s8421 + $0x14] sm:$0xf]
        %v8428 = vld [vmem:[%s8421 + $0x18] sm:$0xf]
        %v8429 = vld [vmem:[%s8421 + $0x1c] sm:$0xf]
        %v8430 = vld [vmem:[%s8421 + $0x20] sm:$0xf]
        %v8431 = vld [vmem:[%s8421 + $0x24] sm:$0xf]
        %v8432 = vld [vmem:[%s8421 + $0x28] sm:$0xf]
        %v8433 = vld [vmem:[%s8421 + $0x2c] sm:$0xf]
        %v8434 = vld [vmem:[%s8421 + $0x30] sm:$0xf]
        %v8435 = vld [vmem:[%s8421 + $0x34] sm:$0xf]
        %v8436 = vld [vmem:[%s8421 + $0x38] sm:$0xf]
        %v8437 = vld [vmem:[%s8421 + $0x3c] sm:$0xf]
        %v8438 = vunpack.c.l.b16 %v8050
        %v8439 = vunpack.c.l.b16 %v8060
        %v8440 = vunpack.c.l.b16 %v8074
        %v8441 = vunpack.c.l.b16 %v8084
        %v8442 = vunpack.c.l.b16 %v8098
        %v8443 = vunpack.c.l.b16 %v8108
        %v8444 = vunpack.c.l.b16 %v8122
        %v8445 = vunpack.c.l.b16 %v8132
        %v8446 = vunpack.c.l.b16 %v8146
        %v8447 = vunpack.c.l.b16 %v8156
        %v8448 = vunpack.c.l.b16 %v8170
        %v8449 = vunpack.c.l.b16 %v8180
        %v8450 = vunpack.c.l.b16 %v8194
        %v8451 = vunpack.c.l.b16 %v8204
        %v8452 = vunpack.c.l.b16 %v8218
        %v8453 = vunpack.c.l.b16 %v8228
        %v8454 = vunpack.c.l.b16 %v8242
        %v8455 = vunpack.c.l.b16 %v8252
        %v8456 = vunpack.c.l.b16 %v8266
        %v8457 = vunpack.c.l.b16 %v8276
        %v8458 = vunpack.c.l.b16 %v8290
        %v8459 = vunpack.c.l.b16 %v8300
        %v8460 = vunpack.c.l.b16 %v8314
        %v8461 = vunpack.c.l.b16 %v8324
        %v8462 = vunpack.c.l.b16 %v8338
        %v8463 = vunpack.c.l.b16 %v8348
        %v8464 = vunpack.c.l.b16 %v8362
        %v8465 = vunpack.c.l.b16 %v8372
        %v8466 = vunpack.c.l.b16 %v8386
        %v8467 = vunpack.c.l.b16 %v8396
        %v8468 = vunpack.c.l.b16 %v8410
        %v8469 = vunpack.c.l.b16 %v8420
        %v8470 = vpack.c.b16 %v8439, %v8438
        %v8471 = vpack.c.b16 %v8441, %v8440
        %v8472 = vpack.c.b16 %v8443, %v8442
        %v8473 = vpack.c.b16 %v8445, %v8444
        %v8474 = vpack.c.b16 %v8447, %v8446
        %v8475 = vpack.c.b16 %v8449, %v8448
        %v8476 = vpack.c.b16 %v8451, %v8450
        %v8477 = vpack.c.b16 %v8453, %v8452
        %v8478 = vpack.c.b16 %v8455, %v8454
        %v8479 = vpack.c.b16 %v8457, %v8456
        %v8480 = vpack.c.b16 %v8459, %v8458
        %v8481 = vpack.c.b16 %v8461, %v8460
        %v8482 = vpack.c.b16 %v8463, %v8462
        %v8483 = vpack.c.b16 %v8465, %v8464
        %v8484 = vpack.c.b16 %v8467, %v8466
        %v8485 = vpack.c.b16 %v8469, %v8468
        %v8518 = vunpack.c.l.b16 %v8422
        %v8519 = vunpack.c.l.b16 %v8423
        %v8520 = vunpack.c.l.b16 %v8424
        %v8521 = vunpack.c.l.b16 %v8425
        %v8522 = vunpack.c.l.b16 %v8426
        %v8523 = vunpack.c.l.b16 %v8427
        %v8524 = vunpack.c.l.b16 %v8428
        %v8525 = vunpack.c.l.b16 %v8429
        %v8526 = vunpack.c.l.b16 %v8430
        %v8527 = vunpack.c.l.b16 %v8431
        %v8528 = vunpack.c.l.b16 %v8432
        %v8529 = vunpack.c.l.b16 %v8433
        %v8530 = vunpack.c.l.b16 %v8434
        %v8531 = vunpack.c.l.b16 %v8435
        %v8532 = vunpack.c.l.b16 %v8436
        %v8533 = vunpack.c.l.b16 %v8437
        %v8534 = vpack.c.b16 %v8519, %v8518
        %v8535 = vpack.c.b16 %v8521, %v8520
        %v8536 = vpack.c.b16 %v8523, %v8522
        %v8537 = vpack.c.b16 %v8525, %v8524
        %v8538 = vpack.c.b16 %v8527, %v8526
        %v8539 = vpack.c.b16 %v8529, %v8528
        %v8540 = vpack.c.b16 %v8531, %v8530
        %v8541 = vpack.c.b16 %v8533, %v8532
        %8550 = vmatprep.subr.bf16.mxu0 0
        %8551 = vmatpush1.bf16.msra.mxu0 %v8541
        %8552 = vmatprep.subr.bf16.mxu0 0
        %8553 = vmatpush1.bf16.msra.mxu0 %v8540
        %8554 = vmatprep.subr.bf16.mxu0 0
        %8555 = vmatpush1.bf16.msra.mxu0 %v8539
        %8556 = vmatprep.subr.bf16.mxu0 0
        %8557 = vmatpush1.bf16.msra.mxu0 %v8538
        %8558 = vmatprep.subr.bf16.mxu0 0
        %8559 = vmatpush1.bf16.msra.mxu0 %v8537
        %8560 = vmatprep.subr.bf16.mxu0 0
        %8561 = vmatpush1.bf16.msra.mxu0 %v8536
        %8562 = vmatprep.subr.bf16.mxu0 0
        %8563 = vmatpush1.bf16.msra.mxu0 %v8535
        %8564 = vmatprep.subr.bf16.mxu0 0
        %8565 = vmatpush1.bf16.msra.mxu0 %v8534
        %8566 = vmatprep.subr.bf16.mxu0 0
        %8567 = vmatpush2.bf16.msra.mxu0 0
        %8568 = vmatprep.subr.bf16.mxu0 0
        %8569 = vmatpush2.bf16.msra.mxu0 0
        %8570 = vmatprep.subr.bf16.mxu0 0
        %8571 = vmatpush2.bf16.msra.mxu0 0
        %8572 = vmatprep.subr.bf16.mxu0 0
        %8573 = vmatpush2.bf16.msra.mxu0 0
        %8574 = vmatprep.subr.bf16.mxu0 0
        %8575 = vmatpush2.bf16.msra.mxu0 0
        %8576 = vmatprep.subr.bf16.mxu0 0
        %8577 = vmatpush2.bf16.msra.mxu0 0
        %8578 = vmatprep.subr.bf16.mxu0 0
        %8579 = vmatpush2.bf16.msra.mxu0 0
        %8580 = vmatprep.subr.bf16.mxu0 0
        %8581 = vmatpush2.bf16.msra.mxu0 0
        %8582 = vmatprep.mubr.bf16.mxu0 0
        %8583 = vmatmul.mubr.bf16.gmra.mxu0 %v8470
        %v8584 = vpop.f32.mrf.mxu0
        %v8585 = vadd.f32 0.0, %v8584
        %v8586 = vpop.f32.mrf.mxu0
        %v8587 = vpop.f32.mrf.mxu0
        %v8588 = vadd.f32 0.0, %v8587
        %v8589 = vpop.f32.mrf.mxu0
        %8590 = vmatprep.mubr.bf16.mxu0 0
        %8591 = vmatmul.mubr.bf16.gmra.mxu0 %v8471
        %v8592 = vpop.f32.mrf.mxu0
        %v8593 = vadd.f32 0.0, %v8592
        %v8594 = vpop.f32.mrf.mxu0
        %v8595 = vpop.f32.mrf.mxu0
        %v8596 = vadd.f32 0.0, %v8595
        %v8597 = vpop.f32.mrf.mxu0
        %8598 = vmatprep.mubr.bf16.mxu0 0
        %8599 = vmatmul.mubr.bf16.gmra.mxu0 %v8472
        %v8600 = vpop.f32.mrf.mxu0
        %v8601 = vadd.f32 0.0, %v8600
        %v8602 = vpop.f32.mrf.mxu0
        %v8603 = vpop.f32.mrf.mxu0
        %v8604 = vadd.f32 0.0, %v8603
        %v8605 = vpop.f32.mrf.mxu0
        %8606 = vmatprep.mubr.bf16.mxu0 0
        %8607 = vmatmul.mubr.bf16.gmra.mxu0 %v8473
        %v8608 = vpop.f32.mrf.mxu0
        %v8609 = vadd.f32 0.0, %v8608
        %v8610 = vpop.f32.mrf.mxu0
        %v8611 = vpop.f32.mrf.mxu0
        %v8612 = vadd.f32 0.0, %v8611
        %v8613 = vpop.f32.mrf.mxu0
        %8614 = vmatprep.mubr.bf16.mxu0 0
        %8615 = vmatmul.mubr.bf16.gmra.mxu0 %v8474
        %v8616 = vpop.f32.mrf.mxu0
        %v8617 = vadd.f32 0.0, %v8616
        %v8618 = vpop.f32.mrf.mxu0
        %v8619 = vpop.f32.mrf.mxu0
        %v8620 = vadd.f32 0.0, %v8619
        %v8621 = vpop.f32.mrf.mxu0
        %8622 = vmatprep.mubr.bf16.mxu0 0
        %8623 = vmatmul.mubr.bf16.gmra.mxu0 %v8475
        %v8624 = vpop.f32.mrf.mxu0
        %v8625 = vadd.f32 0.0, %v8624
        %v8626 = vpop.f32.mrf.mxu0
        %v8627 = vpop.f32.mrf.mxu0
        %v8628 = vadd.f32 0.0, %v8627
        %v8629 = vpop.f32.mrf.mxu0
        %8630 = vmatprep.mubr.bf16.mxu0 0
        %8631 = vmatmul.mubr.bf16.gmra.mxu0 %v8476
        %v8632 = vpop.f32.mrf.mxu0
        %v8633 = vadd.f32 0.0, %v8632
        %v8634 = vpop.f32.mrf.mxu0
        %v8635 = vpop.f32.mrf.mxu0
        %v8636 = vadd.f32 0.0, %v8635
        %v8637 = vpop.f32.mrf.mxu0
        %8638 = vmatprep.mubr.bf16.mxu0 0
        %8639 = vmatmul.mubr.bf16.gmra.mxu0 %v8477
        %v8640 = vpop.f32.mrf.mxu0
        %v8641 = vadd.f32 0.0, %v8640
        %v8642 = vpop.f32.mrf.mxu0
        %v8643 = vpop.f32.mrf.mxu0
        %v8644 = vadd.f32 0.0, %v8643
        %v8645 = vpop.f32.mrf.mxu0
        %8646 = vmatprep.mubr.bf16.mxu0 0
        %8647 = vmatmul.mubr.bf16.gmra.mxu0 %v8478
        %v8648 = vpop.f32.mrf.mxu0
        %v8649 = vadd.f32 0.0, %v8648
        %v8650 = vpop.f32.mrf.mxu0
        %v8651 = vpop.f32.mrf.mxu0
        %v8652 = vadd.f32 0.0, %v8651
        %v8653 = vpop.f32.mrf.mxu0
        %8654 = vmatprep.mubr.bf16.mxu0 0
        %8655 = vmatmul.mubr.bf16.gmra.mxu0 %v8479
        %v8656 = vpop.f32.mrf.mxu0
        %v8657 = vadd.f32 0.0, %v8656
        %v8658 = vpop.f32.mrf.mxu0
        %v8659 = vpop.f32.mrf.mxu0
        %v8660 = vadd.f32 0.0, %v8659
        %v8661 = vpop.f32.mrf.mxu0
        %8662 = vmatprep.mubr.bf16.mxu0 0
        %8663 = vmatmul.mubr.bf16.gmra.mxu0 %v8480
        %v8664 = vpop.f32.mrf.mxu0
        %v8665 = vadd.f32 0.0, %v8664
        %v8666 = vpop.f32.mrf.mxu0
        %v8667 = vpop.f32.mrf.mxu0
        %v8668 = vadd.f32 0.0, %v8667
        %v8669 = vpop.f32.mrf.mxu0
        %8670 = vmatprep.mubr.bf16.mxu0 0
        %8671 = vmatmul.mubr.bf16.gmra.mxu0 %v8481
        %v8672 = vpop.f32.mrf.mxu0
        %v8673 = vadd.f32 0.0, %v8672
        %v8674 = vpop.f32.mrf.mxu0
        %v8675 = vpop.f32.mrf.mxu0
        %v8676 = vadd.f32 0.0, %v8675
        %v8677 = vpop.f32.mrf.mxu0
        %8678 = vmatprep.mubr.bf16.mxu0 0
        %8679 = vmatmul.mubr.bf16.gmra.mxu0 %v8482
        %v8680 = vpop.f32.mrf.mxu0
        %v8681 = vadd.f32 0.0, %v8680
        %v8682 = vpop.f32.mrf.mxu0
        %v8683 = vpop.f32.mrf.mxu0
        %v8684 = vadd.f32 0.0, %v8683
        %v8685 = vpop.f32.mrf.mxu0
        %8686 = vmatprep.mubr.bf16.mxu0 0
        %8687 = vmatmul.mubr.bf16.gmra.mxu0 %v8483
        %v8688 = vpop.f32.mrf.mxu0
        %v8689 = vadd.f32 0.0, %v8688
        %v8690 = vpop.f32.mrf.mxu0
        %v8691 = vpop.f32.mrf.mxu0
        %v8692 = vadd.f32 0.0, %v8691
        %v8693 = vpop.f32.mrf.mxu0
        %8694 = vmatprep.mubr.bf16.mxu0 0
        %8695 = vmatmul.mubr.bf16.gmra.mxu0 %v8484
        %v8696 = vpop.f32.mrf.mxu0
        %v8697 = vadd.f32 0.0, %v8696
        %v8698 = vpop.f32.mrf.mxu0
        %v8699 = vpop.f32.mrf.mxu0
        %v8700 = vadd.f32 0.0, %v8699
        %v8701 = vpop.f32.mrf.mxu0
        %8702 = vmatprep.mubr.bf16.mxu0 0
        %8703 = vmatmul.mubr.bf16.gmra.mxu0 %v8485
        %v8704 = vpop.f32.mrf.mxu0
        %v8705 = vadd.f32 0.0, %v8704
        %v8706 = vpop.f32.mrf.mxu0
        %v8707 = vpop.f32.mrf.mxu0
        %v8708 = vadd.f32 0.0, %v8707
        %v8709 = vpop.f32.mrf.mxu0
        %8710 = vdwg.mxu0
        %v8711 = vadd.f32 %v7957, %v8585
        %v8712 = vadd.f32 %v7958, %v8588
        %v8713 = vadd.f32 %v7959, %v8593
        %v8714 = vadd.f32 %v7960, %v8596
        %v8715 = vadd.f32 %v7961, %v8601
        %v8716 = vadd.f32 %v7962, %v8604
        %v8717 = vadd.f32 %v7963, %v8609
        %v8718 = vadd.f32 %v7964, %v8612
        %v8719 = vadd.f32 %v7965, %v8617
        %v8720 = vadd.f32 %v7966, %v8620
        %v8721 = vadd.f32 %v7967, %v8625
        %v8722 = vadd.f32 %v7968, %v8628
        %v8723 = vadd.f32 %v7969, %v8633
        %v8724 = vadd.f32 %v7970, %v8636
        %v8725 = vadd.f32 %v7971, %v8641
        %v8726 = vadd.f32 %v7972, %v8644
        %v8727 = vadd.f32 %v7973, %v8649
        %v8728 = vadd.f32 %v7974, %v8652
        %v8729 = vadd.f32 %v7975, %v8657
        %v8730 = vadd.f32 %v7976, %v8660
        %v8731 = vadd.f32 %v7977, %v8665
        %v8732 = vadd.f32 %v7978, %v8668
        %v8733 = vadd.f32 %v7979, %v8673
        %v8734 = vadd.f32 %v7980, %v8676
        %v8735 = vadd.f32 %v7981, %v8681
        %v8736 = vadd.f32 %v7982, %v8684
        %v8737 = vadd.f32 %v7983, %v8689
        %v8738 = vadd.f32 %v7984, %v8692
        %v8739 = vadd.f32 %v7985, %v8697
        %v8740 = vadd.f32 %v7986, %v8700
        %v8741 = vadd.f32 %v7987, %v8705
        %v8742 = vadd.f32 %v7988, %v8708
        %v8743 = vld [vmem:[%s7602] sm:$0xe]
        %v8744 = vld [vmem:[%s7602 + $0xc] sm:$0xe]
        %v8745 = vld [vmem:[%s7602 + $0x18] sm:$0xe]
        %v8746 = vld [vmem:[%s7602 + $0x24] sm:$0xe]
        %v8747 = vld [vmem:[%s7602 + $0x30] sm:$0xe]
        %v8748 = vld [vmem:[%s7602 + $0x3c] sm:$0xe]
        %v8749 = vld [vmem:[%s7602 + $0x48] sm:$0xe]
        %v8750 = vld [vmem:[%s7602 + $0x54] sm:$0xe]
        %v8751 = vld [vmem:[%s7602 + $0x60] sm:$0xe]
        %v8752 = vld [vmem:[%s7602 + $0x6c] sm:$0xe]
        %v8753 = vld [vmem:[%s7602 + $0x78] sm:$0xe]
        %v8754 = vld [vmem:[%s7602 + $0x84] sm:$0xe]
        %v8755 = vld [vmem:[%s7602 + $0x90] sm:$0xe]
        %v8756 = vld [vmem:[%s7602 + $0x9c] sm:$0xe]
        %v8757 = vld [vmem:[%s7602 + $0xa8] sm:$0xe]
        %v8758 = vld [vmem:[%s7602 + $0xb4] sm:$0xe]
        %v8807 = vrot.slane %v8743, 5
        %v8808 = vrot.slane %v8807, 4
        %v8809 = vrot.slane %v7990, 5
        %v8810 = vsel %vm5529, %v8808, %v8809
        %v8811 = vrot.slane %v8809, 4
        %v8812 = vrot.slane %v7991, 5
        %v8813 = vsel %vm5529, %v8811, %v8812
        %v8814 = vrot.slane %v8744, 5
        %v8815 = vrot.slane %v8814, 4
        %v8816 = vrot.slane %v7993, 5
        %v8817 = vsel %vm5529, %v8815, %v8816
        %v8818 = vrot.slane %v8816, 4
        %v8819 = vrot.slane %v7994, 5
        %v8820 = vsel %vm5529, %v8818, %v8819
        %v8821 = vrot.slane %v8745, 5
        %v8822 = vrot.slane %v8821, 4
        %v8823 = vrot.slane %v7996, 5
        %v8824 = vsel %vm5529, %v8822, %v8823
        %v8825 = vrot.slane %v8823, 4
        %v8826 = vrot.slane %v7997, 5
        %v8827 = vsel %vm5529, %v8825, %v8826
        %v8828 = vrot.slane %v8746, 5
        %v8829 = vrot.slane %v8828, 4
        %v8830 = vrot.slane %v7999, 5
        %v8831 = vsel %vm5529, %v8829, %v8830
        %v8832 = vrot.slane %v8830, 4
        %v8833 = vrot.slane %v8000, 5
        %v8834 = vsel %vm5529, %v8832, %v8833
        %v8835 = vrot.slane %v8747, 5
        %v8836 = vrot.slane %v8835, 4
        %v8837 = vrot.slane %v8002, 5
        %v8838 = vsel %vm5529, %v8836, %v8837
        %v8839 = vrot.slane %v8837, 4
        %v8840 = vrot.slane %v8003, 5
        %v8841 = vsel %vm5529, %v8839, %v8840
        %v8842 = vrot.slane %v8748, 5
        %v8843 = vrot.slane %v8842, 4
        %v8844 = vrot.slane %v8005, 5
        %v8845 = vsel %vm5529, %v8843, %v8844
        %v8846 = vrot.slane %v8844, 4
        %v8847 = vrot.slane %v8006, 5
        %v8848 = vsel %vm5529, %v8846, %v8847
        %v8849 = vrot.slane %v8749, 5
        %v8850 = vrot.slane %v8849, 4
        %v8851 = vrot.slane %v8008, 5
        %v8852 = vsel %vm5529, %v8850, %v8851
        %v8853 = vrot.slane %v8851, 4
        %v8854 = vrot.slane %v8009, 5
        %v8855 = vsel %vm5529, %v8853, %v8854
        %v8856 = vrot.slane %v8750, 5
        %v8857 = vrot.slane %v8856, 4
        %v8858 = vrot.slane %v8011, 5
        %v8859 = vsel %vm5529, %v8857, %v8858
        %v8860 = vrot.slane %v8858, 4
        %v8861 = vrot.slane %v8012, 5
        %v8862 = vsel %vm5529, %v8860, %v8861
        %v8863 = vrot.slane %v8751, 5
        %v8864 = vrot.slane %v8863, 4
        %v8865 = vrot.slane %v8014, 5
        %v8866 = vsel %vm5529, %v8864, %v8865
        %v8867 = vrot.slane %v8865, 4
        %v8868 = vrot.slane %v8015, 5
        %v8869 = vsel %vm5529, %v8867, %v8868
        %v8870 = vrot.slane %v8752, 5
        %v8871 = vrot.slane %v8870, 4
        %v8872 = vrot.slane %v8017, 5
        %v8873 = vsel %vm5529, %v8871, %v8872
        %v8874 = vrot.slane %v8872, 4
        %v8875 = vrot.slane %v8018, 5
        %v8876 = vsel %vm5529, %v8874, %v8875
        %v8877 = vrot.slane %v8753, 5
        %v8878 = vrot.slane %v8877, 4
        %v8879 = vrot.slane %v8020, 5
        %v8880 = vsel %vm5529, %v8878, %v8879
        %v8881 = vrot.slane %v8879, 4
        %v8882 = vrot.slane %v8021, 5
        %v8883 = vsel %vm5529, %v8881, %v8882
        %v8884 = vrot.slane %v8754, 5
        %v8885 = vrot.slane %v8884, 4
        %v8886 = vrot.slane %v8023, 5
        %v8887 = vsel %vm5529, %v8885, %v8886
        %v8888 = vrot.slane %v8886, 4
        %v8889 = vrot.slane %v8024, 5
        %v8890 = vsel %vm5529, %v8888, %v8889
        %v8891 = vrot.slane %v8755, 5
        %v8892 = vrot.slane %v8891, 4
        %v8893 = vrot.slane %v8026, 5
        %v8894 = vsel %vm5529, %v8892, %v8893
        %v8895 = vrot.slane %v8893, 4
        %v8896 = vrot.slane %v8027, 5
        %v8897 = vsel %vm5529, %v8895, %v8896
        %v8898 = vrot.slane %v8756, 5
        %v8899 = vrot.slane %v8898, 4
        %v8900 = vrot.slane %v8029, 5
        %v8901 = vsel %vm5529, %v8899, %v8900
        %v8902 = vrot.slane %v8900, 4
        %v8903 = vrot.slane %v8030, 5
        %v8904 = vsel %vm5529, %v8902, %v8903
        %v8905 = vrot.slane %v8757, 5
        %v8906 = vrot.slane %v8905, 4
        %v8907 = vrot.slane %v8032, 5
        %v8908 = vsel %vm5529, %v8906, %v8907
        %v8909 = vrot.slane %v8907, 4
        %v8910 = vrot.slane %v8033, 5
        %v8911 = vsel %vm5529, %v8909, %v8910
        %v8912 = vrot.slane %v8758, 5
        %v8913 = vrot.slane %v8912, 4
        %v8914 = vrot.slane %v8035, 5
        %v8915 = vsel %vm5529, %v8913, %v8914
        %v8916 = vrot.slane %v8914, 4
        %v8917 = vrot.slane %v8036, 5
        %v8918 = vsel %vm5529, %v8916, %v8917
        %s8919 = scalar_lea.vmem %s2, 512
        %v8920 = vld [vmem:[%s8919] sm:$0xf]
        %v8921 = vld [vmem:[%s8919 + $0x4] sm:$0xf]
        %v8922 = vld [vmem:[%s8919 + $0x8] sm:$0xf]
        %v8923 = vld [vmem:[%s8919 + $0xc] sm:$0xf]
        %v8924 = vld [vmem:[%s8919 + $0x10] sm:$0xf]
        %v8925 = vld [vmem:[%s8919 + $0x14] sm:$0xf]
        %v8926 = vld [vmem:[%s8919 + $0x18] sm:$0xf]
        %v8927 = vld [vmem:[%s8919 + $0x1c] sm:$0xf]
        %v8928 = vld [vmem:[%s8919 + $0x20] sm:$0xf]
        %v8929 = vld [vmem:[%s8919 + $0x24] sm:$0xf]
        %v8930 = vld [vmem:[%s8919 + $0x28] sm:$0xf]
        %v8931 = vld [vmem:[%s8919 + $0x2c] sm:$0xf]
        %v8932 = vld [vmem:[%s8919 + $0x30] sm:$0xf]
        %v8933 = vld [vmem:[%s8919 + $0x34] sm:$0xf]
        %v8934 = vld [vmem:[%s8919 + $0x38] sm:$0xf]
        %v8935 = vld [vmem:[%s8919 + $0x3c] sm:$0xf]
        %v8936 = vunpack.c.l.b16 %v8810
        %v8937 = vunpack.c.l.b16 %v8813
        %v8938 = vunpack.c.l.b16 %v8817
        %v8939 = vunpack.c.l.b16 %v8820
        %v8940 = vunpack.c.l.b16 %v8824
        %v8941 = vunpack.c.l.b16 %v8827
        %v8942 = vunpack.c.l.b16 %v8831
        %v8943 = vunpack.c.l.b16 %v8834
        %v8944 = vunpack.c.l.b16 %v8838
        %v8945 = vunpack.c.l.b16 %v8841
        %v8946 = vunpack.c.l.b16 %v8845
        %v8947 = vunpack.c.l.b16 %v8848
        %v8948 = vunpack.c.l.b16 %v8852
        %v8949 = vunpack.c.l.b16 %v8855
        %v8950 = vunpack.c.l.b16 %v8859
        %v8951 = vunpack.c.l.b16 %v8862
        %v8952 = vunpack.c.l.b16 %v8866
        %v8953 = vunpack.c.l.b16 %v8869
        %v8954 = vunpack.c.l.b16 %v8873
        %v8955 = vunpack.c.l.b16 %v8876
        %v8956 = vunpack.c.l.b16 %v8880
        %v8957 = vunpack.c.l.b16 %v8883
        %v8958 = vunpack.c.l.b16 %v8887
        %v8959 = vunpack.c.l.b16 %v8890
        %v8960 = vunpack.c.l.b16 %v8894
        %v8961 = vunpack.c.l.b16 %v8897
        %v8962 = vunpack.c.l.b16 %v8901
        %v8963 = vunpack.c.l.b16 %v8904
        %v8964 = vunpack.c.l.b16 %v8908
        %v8965 = vunpack.c.l.b16 %v8911
        %v8966 = vunpack.c.l.b16 %v8915
        %v8967 = vunpack.c.l.b16 %v8918
        %v8968 = vpack.c.b16 %v8937, %v8936
        %v8969 = vpack.c.b16 %v8939, %v8938
        %v8970 = vpack.c.b16 %v8941, %v8940
        %v8971 = vpack.c.b16 %v8943, %v8942
        %v8972 = vpack.c.b16 %v8945, %v8944
        %v8973 = vpack.c.b16 %v8947, %v8946
        %v8974 = vpack.c.b16 %v8949, %v8948
        %v8975 = vpack.c.b16 %v8951, %v8950
        %v8976 = vpack.c.b16 %v8953, %v8952
        %v8977 = vpack.c.b16 %v8955, %v8954
        %v8978 = vpack.c.b16 %v8957, %v8956
        %v8979 = vpack.c.b16 %v8959, %v8958
        %v8980 = vpack.c.b16 %v8961, %v8960
        %v8981 = vpack.c.b16 %v8963, %v8962
        %v8982 = vpack.c.b16 %v8965, %v8964
        %v8983 = vpack.c.b16 %v8967, %v8966
        %v9016 = vunpack.c.l.b16 %v8920
        %v9017 = vunpack.c.l.b16 %v8921
        %v9018 = vunpack.c.l.b16 %v8922
        %v9019 = vunpack.c.l.b16 %v8923
        %v9020 = vunpack.c.l.b16 %v8924
        %v9021 = vunpack.c.l.b16 %v8925
        %v9022 = vunpack.c.l.b16 %v8926
        %v9023 = vunpack.c.l.b16 %v8927
        %v9024 = vunpack.c.l.b16 %v8928
        %v9025 = vunpack.c.l.b16 %v8929
        %v9026 = vunpack.c.l.b16 %v8930
        %v9027 = vunpack.c.l.b16 %v8931
        %v9028 = vunpack.c.l.b16 %v8932
        %v9029 = vunpack.c.l.b16 %v8933
        %v9030 = vunpack.c.l.b16 %v8934
        %v9031 = vunpack.c.l.b16 %v8935
        %v9032 = vpack.c.b16 %v9017, %v9016
        %v9033 = vpack.c.b16 %v9019, %v9018
        %v9034 = vpack.c.b16 %v9021, %v9020
        %v9035 = vpack.c.b16 %v9023, %v9022
        %v9036 = vpack.c.b16 %v9025, %v9024
        %v9037 = vpack.c.b16 %v9027, %v9026
        %v9038 = vpack.c.b16 %v9029, %v9028
        %v9039 = vpack.c.b16 %v9031, %v9030
        %9048 = vmatprep.subr.bf16.mxu0 0
        %9049 = vmatpush1.bf16.msra.mxu0 %v9039
        %9050 = vmatprep.subr.bf16.mxu0 0
        %9051 = vmatpush1.bf16.msra.mxu0 %v9038
        %9052 = vmatprep.subr.bf16.mxu0 0
        %9053 = vmatpush1.bf16.msra.mxu0 %v9037
        %9054 = vmatprep.subr.bf16.mxu0 0
        %9055 = vmatpush1.bf16.msra.mxu0 %v9036
        %9056 = vmatprep.subr.bf16.mxu0 0
        %9057 = vmatpush1.bf16.msra.mxu0 %v9035
        %9058 = vmatprep.subr.bf16.mxu0 0
        %9059 = vmatpush1.bf16.msra.mxu0 %v9034
        %9060 = vmatprep.subr.bf16.mxu0 0
        %9061 = vmatpush1.bf16.msra.mxu0 %v9033
        %9062 = vmatprep.subr.bf16.mxu0 0
        %9063 = vmatpush1.bf16.msra.mxu0 %v9032
        %9064 = vmatprep.subr.bf16.mxu0 0
        %9065 = vmatpush2.bf16.msra.mxu0 0
        %9066 = vmatprep.subr.bf16.mxu0 0
        %9067 = vmatpush2.bf16.msra.mxu0 0
        %9068 = vmatprep.subr.bf16.mxu0 0
        %9069 = vmatpush2.bf16.msra.mxu0 0
        %9070 = vmatprep.subr.bf16.mxu0 0
        %9071 = vmatpush2.bf16.msra.mxu0 0
        %9072 = vmatprep.subr.bf16.mxu0 0
        %9073 = vmatpush2.bf16.msra.mxu0 0
        %9074 = vmatprep.subr.bf16.mxu0 0
        %9075 = vmatpush2.bf16.msra.mxu0 0
        %9076 = vmatprep.subr.bf16.mxu0 0
        %9077 = vmatpush2.bf16.msra.mxu0 0
        %9078 = vmatprep.subr.bf16.mxu0 0
        %9079 = vmatpush2.bf16.msra.mxu0 0
        %9080 = vmatprep.mubr.bf16.mxu0 0
        %9081 = vmatmul.mubr.bf16.gmra.mxu0 %v8968
        %v9082 = vpop.f32.mrf.mxu0
        %v9083 = vadd.f32 0.0, %v9082
        %v9084 = vpop.f32.mrf.mxu0
        %v9085 = vpop.f32.mrf.mxu0
        %v9086 = vadd.f32 0.0, %v9085
        %v9087 = vpop.f32.mrf.mxu0
        %9088 = vmatprep.mubr.bf16.mxu0 0
        %9089 = vmatmul.mubr.bf16.gmra.mxu0 %v8969
        %v9090 = vpop.f32.mrf.mxu0
        %v9091 = vadd.f32 0.0, %v9090
        %v9092 = vpop.f32.mrf.mxu0
        %v9093 = vpop.f32.mrf.mxu0
        %v9094 = vadd.f32 0.0, %v9093
        %v9095 = vpop.f32.mrf.mxu0
        %9096 = vmatprep.mubr.bf16.mxu0 0
        %9097 = vmatmul.mubr.bf16.gmra.mxu0 %v8970
        %v9098 = vpop.f32.mrf.mxu0
        %v9099 = vadd.f32 0.0, %v9098
        %v9100 = vpop.f32.mrf.mxu0
        %v9101 = vpop.f32.mrf.mxu0
        %v9102 = vadd.f32 0.0, %v9101
        %v9103 = vpop.f32.mrf.mxu0
        %9104 = vmatprep.mubr.bf16.mxu0 0
        %9105 = vmatmul.mubr.bf16.gmra.mxu0 %v8971
        %v9106 = vpop.f32.mrf.mxu0
        %v9107 = vadd.f32 0.0, %v9106
        %v9108 = vpop.f32.mrf.mxu0
        %v9109 = vpop.f32.mrf.mxu0
        %v9110 = vadd.f32 0.0, %v9109
        %v9111 = vpop.f32.mrf.mxu0
        %9112 = vmatprep.mubr.bf16.mxu0 0
        %9113 = vmatmul.mubr.bf16.gmra.mxu0 %v8972
        %v9114 = vpop.f32.mrf.mxu0
        %v9115 = vadd.f32 0.0, %v9114
        %v9116 = vpop.f32.mrf.mxu0
        %v9117 = vpop.f32.mrf.mxu0
        %v9118 = vadd.f32 0.0, %v9117
        %v9119 = vpop.f32.mrf.mxu0
        %9120 = vmatprep.mubr.bf16.mxu0 0
        %9121 = vmatmul.mubr.bf16.gmra.mxu0 %v8973
        %v9122 = vpop.f32.mrf.mxu0
        %v9123 = vadd.f32 0.0, %v9122
        %v9124 = vpop.f32.mrf.mxu0
        %v9125 = vpop.f32.mrf.mxu0
        %v9126 = vadd.f32 0.0, %v9125
        %v9127 = vpop.f32.mrf.mxu0
        %9128 = vmatprep.mubr.bf16.mxu0 0
        %9129 = vmatmul.mubr.bf16.gmra.mxu0 %v8974
        %v9130 = vpop.f32.mrf.mxu0
        %v9131 = vadd.f32 0.0, %v9130
        %v9132 = vpop.f32.mrf.mxu0
        %v9133 = vpop.f32.mrf.mxu0
        %v9134 = vadd.f32 0.0, %v9133
        %v9135 = vpop.f32.mrf.mxu0
        %9136 = vmatprep.mubr.bf16.mxu0 0
        %9137 = vmatmul.mubr.bf16.gmra.mxu0 %v8975
        %v9138 = vpop.f32.mrf.mxu0
        %v9139 = vadd.f32 0.0, %v9138
        %v9140 = vpop.f32.mrf.mxu0
        %v9141 = vpop.f32.mrf.mxu0
        %v9142 = vadd.f32 0.0, %v9141
        %v9143 = vpop.f32.mrf.mxu0
        %9144 = vmatprep.mubr.bf16.mxu0 0
        %9145 = vmatmul.mubr.bf16.gmra.mxu0 %v8976
        %v9146 = vpop.f32.mrf.mxu0
        %v9147 = vadd.f32 0.0, %v9146
        %v9148 = vpop.f32.mrf.mxu0
        %v9149 = vpop.f32.mrf.mxu0
        %v9150 = vadd.f32 0.0, %v9149
        %v9151 = vpop.f32.mrf.mxu0
        %9152 = vmatprep.mubr.bf16.mxu0 0
        %9153 = vmatmul.mubr.bf16.gmra.mxu0 %v8977
        %v9154 = vpop.f32.mrf.mxu0
        %v9155 = vadd.f32 0.0, %v9154
        %v9156 = vpop.f32.mrf.mxu0
        %v9157 = vpop.f32.mrf.mxu0
        %v9158 = vadd.f32 0.0, %v9157
        %v9159 = vpop.f32.mrf.mxu0
        %9160 = vmatprep.mubr.bf16.mxu0 0
        %9161 = vmatmul.mubr.bf16.gmra.mxu0 %v8978
        %v9162 = vpop.f32.mrf.mxu0
        %v9163 = vadd.f32 0.0, %v9162
        %v9164 = vpop.f32.mrf.mxu0
        %v9165 = vpop.f32.mrf.mxu0
        %v9166 = vadd.f32 0.0, %v9165
        %v9167 = vpop.f32.mrf.mxu0
        %9168 = vmatprep.mubr.bf16.mxu0 0
        %9169 = vmatmul.mubr.bf16.gmra.mxu0 %v8979
        %v9170 = vpop.f32.mrf.mxu0
        %v9171 = vadd.f32 0.0, %v9170
        %v9172 = vpop.f32.mrf.mxu0
        %v9173 = vpop.f32.mrf.mxu0
        %v9174 = vadd.f32 0.0, %v9173
        %v9175 = vpop.f32.mrf.mxu0
        %9176 = vmatprep.mubr.bf16.mxu0 0
        %9177 = vmatmul.mubr.bf16.gmra.mxu0 %v8980
        %v9178 = vpop.f32.mrf.mxu0
        %v9179 = vadd.f32 0.0, %v9178
        %v9180 = vpop.f32.mrf.mxu0
        %v9181 = vpop.f32.mrf.mxu0
        %v9182 = vadd.f32 0.0, %v9181
        %v9183 = vpop.f32.mrf.mxu0
        %9184 = vmatprep.mubr.bf16.mxu0 0
        %9185 = vmatmul.mubr.bf16.gmra.mxu0 %v8981
        %v9186 = vpop.f32.mrf.mxu0
        %v9187 = vadd.f32 0.0, %v9186
        %v9188 = vpop.f32.mrf.mxu0
        %v9189 = vpop.f32.mrf.mxu0
        %v9190 = vadd.f32 0.0, %v9189
        %v9191 = vpop.f32.mrf.mxu0
        %9192 = vmatprep.mubr.bf16.mxu0 0
        %9193 = vmatmul.mubr.bf16.gmra.mxu0 %v8982
        %v9194 = vpop.f32.mrf.mxu0
        %v9195 = vadd.f32 0.0, %v9194
        %v9196 = vpop.f32.mrf.mxu0
        %v9197 = vpop.f32.mrf.mxu0
        %v9198 = vadd.f32 0.0, %v9197
        %v9199 = vpop.f32.mrf.mxu0
        %9200 = vmatprep.mubr.bf16.mxu0 0
        %9201 = vmatmul.mubr.bf16.gmra.mxu0 %v8983
        %v9202 = vpop.f32.mrf.mxu0
        %v9203 = vadd.f32 0.0, %v9202
        %v9204 = vpop.f32.mrf.mxu0
        %v9205 = vpop.f32.mrf.mxu0
        %v9206 = vadd.f32 0.0, %v9205
        %v9207 = vpop.f32.mrf.mxu0
        %9208 = vdwg.mxu0
        %v9209 = vadd.f32 %v8711, %v9083
        %v9210 = vadd.f32 %v8712, %v9086
        %v9211 = vadd.f32 %v8713, %v9091
        %v9212 = vadd.f32 %v8714, %v9094
        %v9213 = vadd.f32 %v8715, %v9099
        %v9214 = vadd.f32 %v8716, %v9102
        %v9215 = vadd.f32 %v8717, %v9107
        %v9216 = vadd.f32 %v8718, %v9110
        %v9217 = vadd.f32 %v8719, %v9115
        %v9218 = vadd.f32 %v8720, %v9118
        %v9219 = vadd.f32 %v8721, %v9123
        %v9220 = vadd.f32 %v8722, %v9126
        %v9221 = vadd.f32 %v8723, %v9131
        %v9222 = vadd.f32 %v8724, %v9134
        %v9223 = vadd.f32 %v8725, %v9139
        %v9224 = vadd.f32 %v8726, %v9142
        %v9225 = vadd.f32 %v8727, %v9147
        %v9226 = vadd.f32 %v8728, %v9150
        %v9227 = vadd.f32 %v8729, %v9155
        %v9228 = vadd.f32 %v8730, %v9158
        %v9229 = vadd.f32 %v8731, %v9163
        %v9230 = vadd.f32 %v8732, %v9166
        %v9231 = vadd.f32 %v8733, %v9171
        %v9232 = vadd.f32 %v8734, %v9174
        %v9233 = vadd.f32 %v8735, %v9179
        %v9234 = vadd.f32 %v8736, %v9182
        %v9235 = vadd.f32 %v8737, %v9187
        %v9236 = vadd.f32 %v8738, %v9190
        %v9237 = vadd.f32 %v8739, %v9195
        %v9238 = vadd.f32 %v8740, %v9198
        %v9239 = vadd.f32 %v8741, %v9203
        %v9240 = vadd.f32 %v8742, %v9206
        %v9241 = vld [vmem:[%s3] sm:$0x1]
        %v9243 = vlaneseq
        %v9244 = vshrl.u32 %v9243, 7
        %v9245 = vsub.s32 0, %v9244
        %v9246 = vrot.slane %v9241, %v9245
        %v9248 = vadd.f32 %v9209, %v9246
        %v9249 = vadd.f32 %v9210, %v9246
        %v9250 = vadd.f32 %v9211, %v9246
        %v9251 = vadd.f32 %v9212, %v9246
        %v9252 = vadd.f32 %v9213, %v9246
        %v9253 = vadd.f32 %v9214, %v9246
        %v9254 = vadd.f32 %v9215, %v9246
        %v9255 = vadd.f32 %v9216, %v9246
        %v9256 = vadd.f32 %v9217, %v9246
        %v9257 = vadd.f32 %v9218, %v9246
        %v9258 = vadd.f32 %v9219, %v9246
        %v9259 = vadd.f32 %v9220, %v9246
        %v9260 = vadd.f32 %v9221, %v9246
        %v9261 = vadd.f32 %v9222, %v9246
        %v9262 = vadd.f32 %v9223, %v9246
        %v9263 = vadd.f32 %v9224, %v9246
        %v9264 = vadd.f32 %v9225, %v9246
        %v9265 = vadd.f32 %v9226, %v9246
        %v9266 = vadd.f32 %v9227, %v9246
        %v9267 = vadd.f32 %v9228, %v9246
        %v9268 = vadd.f32 %v9229, %v9246
        %v9269 = vadd.f32 %v9230, %v9246
        %v9270 = vadd.f32 %v9231, %v9246
        %v9271 = vadd.f32 %v9232, %v9246
        %v9272 = vadd.f32 %v9233, %v9246
        %v9273 = vadd.f32 %v9234, %v9246
        %v9274 = vadd.f32 %v9235, %v9246
        %v9275 = vadd.f32 %v9236, %v9246
        %v9276 = vadd.f32 %v9237, %v9246
        %v9277 = vadd.f32 %v9238, %v9246
        %v9278 = vadd.f32 %v9239, %v9246
        %v9279 = vadd.f32 %v9240, %v9246
        %v9280 = vsub.f32 0.0, %v9248
        %v9281 = vsub.f32 0.0, %v9249
        %v9282 = vsub.f32 0.0, %v9250
        %v9283 = vsub.f32 0.0, %v9251
        %v9284 = vsub.f32 0.0, %v9252
        %v9285 = vsub.f32 0.0, %v9253
        %v9286 = vsub.f32 0.0, %v9254
        %v9287 = vsub.f32 0.0, %v9255
        %v9288 = vsub.f32 0.0, %v9256
        %v9289 = vsub.f32 0.0, %v9257
        %v9290 = vsub.f32 0.0, %v9258
        %v9291 = vsub.f32 0.0, %v9259
        %v9292 = vsub.f32 0.0, %v9260
        %v9293 = vsub.f32 0.0, %v9261
        %v9294 = vsub.f32 0.0, %v9262
        %v9295 = vsub.f32 0.0, %v9263
        %v9296 = vsub.f32 0.0, %v9264
        %v9297 = vsub.f32 0.0, %v9265
        %v9298 = vsub.f32 0.0, %v9266
        %v9299 = vsub.f32 0.0, %v9267
        %v9300 = vsub.f32 0.0, %v9268
        %v9301 = vsub.f32 0.0, %v9269
        %v9302 = vsub.f32 0.0, %v9270
        %v9303 = vsub.f32 0.0, %v9271
        %v9304 = vsub.f32 0.0, %v9272
        %v9305 = vsub.f32 0.0, %v9273
        %v9306 = vsub.f32 0.0, %v9274
        %v9307 = vsub.f32 0.0, %v9275
        %v9308 = vsub.f32 0.0, %v9276
        %v9309 = vsub.f32 0.0, %v9277
        %v9310 = vsub.f32 0.0, %v9278
        %v9311 = vsub.f32 0.0, %v9279
        %v9312 = vmul.f32 %v9280, 1.442695
        %v9313 = vpow.pop %v9312
        %v9314 = vmul.f32 %v9281, 1.442695
        %v9315 = vpow.pop %v9314
        %v9316 = vmul.f32 %v9282, 1.442695
        %v9317 = vpow.pop %v9316
        %v9318 = vmul.f32 %v9283, 1.442695
        %v9319 = vpow.pop %v9318
        %v9320 = vmul.f32 %v9284, 1.442695
        %v9321 = vpow.pop %v9320
        %v9322 = vmul.f32 %v9285, 1.442695
        %v9323 = vpow.pop %v9322
        %v9324 = vmul.f32 %v9286, 1.442695
        %v9325 = vpow.pop %v9324
        %v9326 = vmul.f32 %v9287, 1.442695
        %v9327 = vpow.pop %v9326
        %v9328 = vmul.f32 %v9288, 1.442695
        %v9329 = vpow.pop %v9328
        %v9330 = vmul.f32 %v9289, 1.442695
        %v9331 = vpow.pop %v9330
        %v9332 = vmul.f32 %v9290, 1.442695
        %v9333 = vpow.pop %v9332
        %v9334 = vmul.f32 %v9291, 1.442695
        %v9335 = vpow.pop %v9334
        %v9336 = vmul.f32 %v9292, 1.442695
        %v9337 = vpow.pop %v9336
        %v9338 = vmul.f32 %v9293, 1.442695
        %v9339 = vpow.pop %v9338
        %v9340 = vmul.f32 %v9294, 1.442695
        %v9341 = vpow.pop %v9340
        %v9342 = vmul.f32 %v9295, 1.442695
        %v9343 = vpow.pop %v9342
        %v9344 = vmul.f32 %v9296, 1.442695
        %v9345 = vpow.pop %v9344
        %v9346 = vmul.f32 %v9297, 1.442695
        %v9347 = vpow.pop %v9346
        %v9348 = vmul.f32 %v9298, 1.442695
        %v9349 = vpow.pop %v9348
        %v9350 = vmul.f32 %v9299, 1.442695
        %v9351 = vpow.pop %v9350
        %v9352 = vmul.f32 %v9300, 1.442695
        %v9353 = vpow.pop %v9352
        %v9354 = vmul.f32 %v9301, 1.442695
        %v9355 = vpow.pop %v9354
        %v9356 = vmul.f32 %v9302, 1.442695
        %v9357 = vpow.pop %v9356
        %v9358 = vmul.f32 %v9303, 1.442695
        %v9359 = vpow.pop %v9358
        %v9360 = vmul.f32 %v9304, 1.442695
        %v9361 = vpow.pop %v9360
        %v9362 = vmul.f32 %v9305, 1.442695
        %v9363 = vpow.pop %v9362
        %v9364 = vmul.f32 %v9306, 1.442695
        %v9365 = vpow.pop %v9364
        %v9366 = vmul.f32 %v9307, 1.442695
        %v9367 = vpow.pop %v9366
        %v9368 = vmul.f32 %v9308, 1.442695
        %v9369 = vpow.pop %v9368
        %v9370 = vmul.f32 %v9309, 1.442695
        %v9371 = vpow.pop %v9370
        %v9372 = vmul.f32 %v9310, 1.442695
        %v9373 = vpow.pop %v9372
        %v9374 = vmul.f32 %v9311, 1.442695
        %v9375 = vpow.pop %v9374
        %v9376 = vadd.f32 %v9313, 1.0
        %v9377 = vadd.f32 %v9315, 1.0
        %v9378 = vadd.f32 %v9317, 1.0
        %v9379 = vadd.f32 %v9319, 1.0
        %v9380 = vadd.f32 %v9321, 1.0
        %v9381 = vadd.f32 %v9323, 1.0
        %v9382 = vadd.f32 %v9325, 1.0
        %v9383 = vadd.f32 %v9327, 1.0
        %v9384 = vadd.f32 %v9329, 1.0
        %v9385 = vadd.f32 %v9331, 1.0
        %v9386 = vadd.f32 %v9333, 1.0
        %v9387 = vadd.f32 %v9335, 1.0
        %v9388 = vadd.f32 %v9337, 1.0
        %v9389 = vadd.f32 %v9339, 1.0
        %v9390 = vadd.f32 %v9341, 1.0
        %v9391 = vadd.f32 %v9343, 1.0
        %v9392 = vadd.f32 %v9345, 1.0
        %v9393 = vadd.f32 %v9347, 1.0
        %v9394 = vadd.f32 %v9349, 1.0
        %v9395 = vadd.f32 %v9351, 1.0
        %v9396 = vadd.f32 %v9353, 1.0
        %v9397 = vadd.f32 %v9355, 1.0
        %v9398 = vadd.f32 %v9357, 1.0
        %v9399 = vadd.f32 %v9359, 1.0
        %v9400 = vadd.f32 %v9361, 1.0
        %v9401 = vadd.f32 %v9363, 1.0
        %v9402 = vadd.f32 %v9365, 1.0
        %v9403 = vadd.f32 %v9367, 1.0
        %v9404 = vadd.f32 %v9369, 1.0
        %v9405 = vadd.f32 %v9371, 1.0
        %v9406 = vadd.f32 %v9373, 1.0
        %v9407 = vadd.f32 %v9375, 1.0
        %v9408 = vrcp.pop %v9376
        %v9409 = vmul.f32 1.0, %v9408
        %v9410 = vrcp.pop %v9377
        %v9411 = vmul.f32 1.0, %v9410
        %v9412 = vrcp.pop %v9378
        %v9413 = vmul.f32 1.0, %v9412
        %v9414 = vrcp.pop %v9379
        %v9415 = vmul.f32 1.0, %v9414
        %v9416 = vrcp.pop %v9380
        %v9417 = vmul.f32 1.0, %v9416
        %v9418 = vrcp.pop %v9381
        %v9419 = vmul.f32 1.0, %v9418
        %v9420 = vrcp.pop %v9382
        %v9421 = vmul.f32 1.0, %v9420
        %v9422 = vrcp.pop %v9383
        %v9423 = vmul.f32 1.0, %v9422
        %v9424 = vrcp.pop %v9384
        %v9425 = vmul.f32 1.0, %v9424
        %v9426 = vrcp.pop %v9385
        %v9427 = vmul.f32 1.0, %v9426
        %v9428 = vrcp.pop %v9386
        %v9429 = vmul.f32 1.0, %v9428
        %v9430 = vrcp.pop %v9387
        %v9431 = vmul.f32 1.0, %v9430
        %v9432 = vrcp.pop %v9388
        %v9433 = vmul.f32 1.0, %v9432
        %v9434 = vrcp.pop %v9389
        %v9435 = vmul.f32 1.0, %v9434
        %v9436 = vrcp.pop %v9390
        %v9437 = vmul.f32 1.0, %v9436
        %v9438 = vrcp.pop %v9391
        %v9439 = vmul.f32 1.0, %v9438
        %v9440 = vrcp.pop %v9392
        %v9441 = vmul.f32 1.0, %v9440
        %v9442 = vrcp.pop %v9393
        %v9443 = vmul.f32 1.0, %v9442
        %v9444 = vrcp.pop %v9394
        %v9445 = vmul.f32 1.0, %v9444
        %v9446 = vrcp.pop %v9395
        %v9447 = vmul.f32 1.0, %v9446
        %v9448 = vrcp.pop %v9396
        %v9449 = vmul.f32 1.0, %v9448
        %v9450 = vrcp.pop %v9397
        %v9451 = vmul.f32 1.0, %v9450
        %v9452 = vrcp.pop %v9398
        %v9453 = vmul.f32 1.0, %v9452
        %v9454 = vrcp.pop %v9399
        %v9455 = vmul.f32 1.0, %v9454
        %v9456 = vrcp.pop %v9400
        %v9457 = vmul.f32 1.0, %v9456
        %v9458 = vrcp.pop %v9401
        %v9459 = vmul.f32 1.0, %v9458
        %v9460 = vrcp.pop %v9402
        %v9461 = vmul.f32 1.0, %v9460
        %v9462 = vrcp.pop %v9403
        %v9463 = vmul.f32 1.0, %v9462
        %v9464 = vrcp.pop %v9404
        %v9465 = vmul.f32 1.0, %v9464
        %v9466 = vrcp.pop %v9405
        %v9467 = vmul.f32 1.0, %v9466
        %v9468 = vrcp.pop %v9406
        %v9469 = vmul.f32 1.0, %v9468
        %v9470 = vrcp.pop %v9407
        %v9471 = vmul.f32 1.0, %v9470
        %v9504 = vadd.f32 %v217, %v3243
        %v9505 = vadd.f32 %v218, %v3260
        %v9506 = vadd.f32 %v219, %v3277
        %v9507 = vadd.f32 %v220, %v3294
        %v9508 = vadd.f32 %v221, %v3311
        %v9509 = vadd.f32 %v222, %v3328
        %v9510 = vadd.f32 %v223, %v3345
        %v9511 = vadd.f32 %v224, %v3362
        %v9512 = vadd.f32 %v225, %v3379
        %v9513 = vadd.f32 %v226, %v3396
        %v9514 = vadd.f32 %v227, %v3413
        %v9515 = vadd.f32 %v228, %v3430
        %v9516 = vadd.f32 %v229, %v3447
        %v9517 = vadd.f32 %v230, %v3464
        %v9518 = vadd.f32 %v231, %v3481
        %v9519 = vadd.f32 %v232, %v3498
        %v9520 = vadd.f32 %v233, %v3515
        %v9521 = vadd.f32 %v234, %v3532
        %v9522 = vadd.f32 %v235, %v3549
        %v9523 = vadd.f32 %v236, %v3566
        %v9524 = vadd.f32 %v237, %v3583
        %v9525 = vadd.f32 %v238, %v3600
        %v9526 = vadd.f32 %v239, %v3617
        %v9527 = vadd.f32 %v240, %v3634
        %v9528 = vadd.f32 %v241, %v3651
        %v9529 = vadd.f32 %v242, %v3668
        %v9530 = vadd.f32 %v243, %v3685
        %v9531 = vadd.f32 %v244, %v3702
        %v9532 = vadd.f32 %v245, %v3719
        %v9533 = vadd.f32 %v246, %v3736
        %v9534 = vadd.f32 %v247, %v3753
        %v9535 = vadd.f32 %v248, %v3770
        %v9536 = vmul.f32 %v9504, %v9409
        %v9537 = vmul.f32 %v9505, %v9411
        %v9538 = vmul.f32 %v9506, %v9413
        %v9539 = vmul.f32 %v9507, %v9415
        %v9540 = vmul.f32 %v9508, %v9417
        %v9541 = vmul.f32 %v9509, %v9419
        %v9542 = vmul.f32 %v9510, %v9421
        %v9543 = vmul.f32 %v9511, %v9423
        %v9544 = vmul.f32 %v9512, %v9425
        %v9545 = vmul.f32 %v9513, %v9427
        %v9546 = vmul.f32 %v9514, %v9429
        %v9547 = vmul.f32 %v9515, %v9431
        %v9548 = vmul.f32 %v9516, %v9433
        %v9549 = vmul.f32 %v9517, %v9435
        %v9550 = vmul.f32 %v9518, %v9437
        %v9551 = vmul.f32 %v9519, %v9439
        %v9552 = vmul.f32 %v9520, %v9441
        %v9553 = vmul.f32 %v9521, %v9443
        %v9554 = vmul.f32 %v9522, %v9445
        %v9555 = vmul.f32 %v9523, %v9447
        %v9556 = vmul.f32 %v9524, %v9449
        %v9557 = vmul.f32 %v9525, %v9451
        %v9558 = vmul.f32 %v9526, %v9453
        %v9559 = vmul.f32 %v9527, %v9455
        %v9560 = vmul.f32 %v9528, %v9457
        %v9561 = vmul.f32 %v9529, %v9459
        %v9562 = vmul.f32 %v9530, %v9461
        %v9563 = vmul.f32 %v9531, %v9463
        %v9564 = vmul.f32 %v9532, %v9465
        %v9565 = vmul.f32 %v9533, %v9467
        %v9566 = vmul.f32 %v9534, %v9469
        %v9567 = vmul.f32 %v9535, %v9471
        %v9568 = vadd.f32 %v9536, %v9504
        %v9569 = vadd.f32 %v9537, %v9505
        %v9570 = vadd.f32 %v9538, %v9506
        %v9571 = vadd.f32 %v9539, %v9507
        %v9572 = vadd.f32 %v9540, %v9508
        %v9573 = vadd.f32 %v9541, %v9509
        %v9574 = vadd.f32 %v9542, %v9510
        %v9575 = vadd.f32 %v9543, %v9511
        %v9576 = vadd.f32 %v9544, %v9512
        %v9577 = vadd.f32 %v9545, %v9513
        %v9578 = vadd.f32 %v9546, %v9514
        %v9579 = vadd.f32 %v9547, %v9515
        %v9580 = vadd.f32 %v9548, %v9516
        %v9581 = vadd.f32 %v9549, %v9517
        %v9582 = vadd.f32 %v9550, %v9518
        %v9583 = vadd.f32 %v9551, %v9519
        %v9584 = vadd.f32 %v9552, %v9520
        %v9585 = vadd.f32 %v9553, %v9521
        %v9586 = vadd.f32 %v9554, %v9522
        %v9587 = vadd.f32 %v9555, %v9523
        %v9588 = vadd.f32 %v9556, %v9524
        %v9589 = vadd.f32 %v9557, %v9525
        %v9590 = vadd.f32 %v9558, %v9526
        %v9591 = vadd.f32 %v9559, %v9527
        %v9592 = vadd.f32 %v9560, %v9528
        %v9593 = vadd.f32 %v9561, %v9529
        %v9594 = vadd.f32 %v9562, %v9530
        %v9595 = vadd.f32 %v9563, %v9531
        %v9596 = vadd.f32 %v9564, %v9532
        %v9597 = vadd.f32 %v9565, %v9533
        %v9598 = vadd.f32 %v9566, %v9534
        %v9599 = vadd.f32 %v9567, %v9535
        %9600 = vst.msk [vmem:[%s205] sm:$0xff] %vm3867, %v9568
        %9601 = vst.msk [vmem:[%s205 + $0x8] sm:$0xff] %vm3867, %v9569
        %9602 = vst.msk [vmem:[%s205 + $0x10] sm:$0xff] %vm3867, %v9570
        %9603 = vst.msk [vmem:[%s205 + $0x18] sm:$0xff] %vm3867, %v9571
        %9604 = vst.msk [vmem:[%s205 + $0x20] sm:$0xff] %vm3867, %v9572
        %9605 = vst.msk [vmem:[%s205 + $0x28] sm:$0xff] %vm3867, %v9573
        %9606 = vst.msk [vmem:[%s205 + $0x30] sm:$0xff] %vm3867, %v9574
        %9607 = vst.msk [vmem:[%s205 + $0x38] sm:$0xff] %vm3867, %v9575
        %9608 = vst.msk [vmem:[%s205 + $0x40] sm:$0xff] %vm3867, %v9576
        %9609 = vst.msk [vmem:[%s205 + $0x48] sm:$0xff] %vm3867, %v9577
        %9610 = vst.msk [vmem:[%s205 + $0x50] sm:$0xff] %vm3867, %v9578
        %9611 = vst.msk [vmem:[%s205 + $0x58] sm:$0xff] %vm3867, %v9579
        %9612 = vst.msk [vmem:[%s205 + $0x60] sm:$0xff] %vm3867, %v9580
        %9613 = vst.msk [vmem:[%s205 + $0x68] sm:$0xff] %vm3867, %v9581
        %9614 = vst.msk [vmem:[%s205 + $0x70] sm:$0xff] %vm3867, %v9582
        %9615 = vst.msk [vmem:[%s205 + $0x78] sm:$0xff] %vm3867, %v9583
        %9616 = vst.msk [vmem:[%s205 + $0x80] sm:$0xff] %vm3867, %v9584
        %9617 = vst.msk [vmem:[%s205 + $0x88] sm:$0xff] %vm3867, %v9585
        %9618 = vst.msk [vmem:[%s205 + $0x90] sm:$0xff] %vm3867, %v9586
        %9619 = vst.msk [vmem:[%s205 + $0x98] sm:$0xff] %vm3867, %v9587
        %9620 = vst.msk [vmem:[%s205 + $0xa0] sm:$0xff] %vm3867, %v9588
        %9621 = vst.msk [vmem:[%s205 + $0xa8] sm:$0xff] %vm3867, %v9589
        %9622 = vst.msk [vmem:[%s205 + $0xb0] sm:$0xff] %vm3867, %v9590
        %9623 = vst.msk [vmem:[%s205 + $0xb8] sm:$0xff] %vm3867, %v9591
        %9624 = vst.msk [vmem:[%s205 + $0xc0] sm:$0xff] %vm3867, %v9592
        %9625 = vst.msk [vmem:[%s205 + $0xc8] sm:$0xff] %vm3867, %v9593
        %9626 = vst.msk [vmem:[%s205 + $0xd0] sm:$0xff] %vm3867, %v9594
        %9627 = vst.msk [vmem:[%s205 + $0xd8] sm:$0xff] %vm3867, %v9595
        %9628 = vst.msk [vmem:[%s205 + $0xe0] sm:$0xff] %vm3867, %v9596
        %9629 = vst.msk [vmem:[%s205 + $0xe8] sm:$0xff] %vm3867, %v9597
        %9630 = vst.msk [vmem:[%s205 + $0xf0] sm:$0xff] %vm3867, %v9598
        %9631 = vst.msk [vmem:[%s205 + $0xf8] sm:$0xff] %vm3867, %v9599
        %s9632 = sand.u32 %s120, 1
        %s9633 = scalar_lea.sflag [#allocation4], %s9632
        %s9634 = sand.u32 %s120, 1
        %s9635 = smul.addr %s9634, 256
        %s9636 = scalar_lea.vmem [#allocation3], %s9635
        // Predicated region
        $region37: #{tpu_custom_call.1} parent=35 // pred_check
          %p9637 = pneg %p130
        $region38: #{tpu_custom_call.1} parent=35 // pred_check_branch
          %9639 = sbr.rel (%p9637) target = $region40
        $region39: #{tpu_custom_call.1} parent=35 // pred_region
          %s9641 = ssub.s32 4096, 4096
          %9642 = vsyncadd %s9633, %s9641
          %s9643 = smul.addr %s18, 32
          %s9644 = smul.addr %s9643, 128
          %s9645 = scalar_lea.hbm %s4, %s9644
          %s9646 = sshll.u32 %s9636, 4
          %s9647 = int_to_ptr.vmem [resolvable:$true] %s9646
          %9652 = dma.vmem_to_hbm [thread:$0]  %s9647, 4096, %s9645, %s9633, 128, 128, 8
        $region40: #{tpu_custom_call.1} parent=35 // pred_fallthru
          _
      $region36: #{tpu_custom_call.1} parent=5 // pred_fallthru
        _
      %p9653 = scmp.le.s32.totalorder 2, %s13
      // Predicated region
      $region41: #{tpu_custom_call.1} parent=5 // pred_check
        %p9654 = pneg %p9653
      $region42: #{tpu_custom_call.1} parent=5 // pred_check_branch
        %9656 = sbr.rel (%p9654) target = $region44
      $region43: #{tpu_custom_call.1} parent=5 // pred_region
        %s9657 = ssub.s32 %s13, 2
        // Predicated region
        $region45: #{tpu_custom_call.1} parent=43 // pred_check
          %p9658 = pneg %p136
        $region46: #{tpu_custom_call.1} parent=43 // pred_check_branch
          %9660 = sbr.rel (%p9658) target = $region48
        $region47: #{tpu_custom_call.1} parent=43 // pred_region
          %s9661 = sand.u32 %s121, 1
          %s9662 = scalar_lea.sflag [#allocation4], %s9661
          %s9663 = sand.u32 %s121, 1
          %s9664 = smul.addr %s9663, 256
          %s9665 = scalar_lea.vmem [#allocation3], %s9664
          %9666 = dma.done %s9662, 4096
        $region48: #{tpu_custom_call.1} parent=43 // pred_fallthru
          _
      $region44: #{tpu_custom_call.1} parent=5 // pred_fallthru
        _
    $region6: #{tpu_custom_call.1} parent=1 // loop_footer
      %s17 = sadd.s32 1, %s13
    $region7: #{tpu_custom_call.1} parent=1 // loop_footer_branch
      %12 = sbr.rel target = $region3
    $region8: #{tpu_custom_call.1} parent=1 // loop_exit
      _
    %9667 = vsyncpa [#allocation4], 1
    %s9668 = scalar_lea.sflag [#allocation4], 1
    %9669 = vsyncpa %s9668, 1

</llo_original>
